<compile_context>
chip_gen: v7x
topology: tpu7x:2x2x1
jax: 0.10.0
libtpu: 0.0.40
codegen_flags: <defaults>
</compile_context>

<pallas_src>
import functools
from collections import namedtuple

import numpy as np
import jax
import jax.numpy as jnp
from jax import lax
from jax.experimental import pallas as pl
from jax.experimental.pallas import tpu as pltpu

LANE = 128


# ----------------------------------------------------------------------------
# generation-aware budgets
# ----------------------------------------------------------------------------

def _chip_budget():
    """(vmem_limit_bytes, conv_rows_cap, reduce_rows_cap), generation aware."""
    vmem_phys = 64 << 20  # conservative default: assume v7x (smallest VMEM)
    try:
        info = pltpu.get_tpu_info()
        v = int(getattr(info, "vmem_capacity_bytes", 0) or 0)
        if v:
            vmem_phys = v
    except Exception:
        pass
    if vmem_phys > (64 << 20):          # v5e / v6e: 128 MiB physical VMEM
        return 80 << 20, 4096, 8192
    return 44 << 20, 2048, 4096         # v7x: leave headroom under 64 MiB


_VMEM_LIMIT, _CONV_ROWS_CAP, _REDUCE_ROWS_CAP = _chip_budget()


# ----------------------------------------------------------------------------
# small helpers (trace-time / glue)
# ----------------------------------------------------------------------------

def _round_up(n, m):
    return ((n + m - 1) // m) * m


def _pad_axis(a, axis, multiple):
    pad = (-a.shape[axis]) % multiple
    if pad == 0:
        return a
    widths = [(0, 0)] * a.ndim
    widths[axis] = (0, pad)
    return jnp.pad(a, widths)


def _pick_row_tile(H, W, pool):
    """Rows per conv tile: ~<= _CONV_ROWS_CAP elements of M, divides H, even if pooling."""
    target = max(2 if pool else 1, _CONV_ROWS_CAP // max(W, 1))
    for t in range(min(H, target), 0, -1):
        if H % t == 0 and (not pool or t % 2 == 0):
            return t
    return H


def _nchw_to_nhwc_padded(x):
    """(B, C, H, W) f32 -> (B, H, W, C_pad128) bf16, zero-padded channels."""
    x = jnp.transpose(x, (0, 2, 3, 1))
    x = _pad_axis(x, 3, LANE)
    return x.astype(jnp.bfloat16)


def max_pool_2x2(x):
    """Plain-JAX 2x2 max pool (fallback only; the fused path is in the conv kernel)."""
    B, H, W, C = x.shape
    x = x[:, : (H // 2) * 2, : (W // 2) * 2, :]
    return jnp.max(x.reshape(B, H // 2, 2, W // 2, 2, C), axis=(2, 4))


# ----------------------------------------------------------------------------
# Pallas kernels
# ----------------------------------------------------------------------------

def _conv3x3_relu_kernel(xc_ref, xh1_ref, xh2_ref, w_ref, b_ref, *out_refs, pool):
    # xc_ref : (th, W, Cin_p) bf16  -- tile rows (top-halo row included via padding)
    # xh1/xh2: (1,  W, Cin_p) bf16  -- the two bottom halo rows
    # w_ref  : (3, 3*Cin_p, Cout_p) bf16 -- per kernel-column, K-packed over rows
    # b_ref  : (1, Cout_p) f32
    # out[0] : (th, W, Cout_p) bf16 ; out[1] (optional): (th//2, W//2, Cout_p) bf16
    out_ref = out_refs[0]
    th, W, cout = out_ref.shape

    # Row halo: stitch tile + 2 halo rows (leading-axis concat of aligned slabs).
    win = jnp.concatenate([xc_ref[...], xh1_ref[...], xh2_ref[...]], axis=0)

    # Fused im2col, K-packed over the 3 row taps: (th, W, 3*Cin_p).
    xcat = jnp.concatenate([win[0:th], win[1:th + 1], win[2:th + 2]], axis=-1)
    a = xcat.reshape(th * W, xcat.shape[-1])

    # One MXU matmul per kernel *column*; K = 3*Cin_p, f32 accumulation.
    z_c = jnp.dot(a, w_ref[1], preferred_element_type=jnp.float32)
    acc = z_c.reshape(th, W, cout)

    if W > 1:
        # Column +-1 shifts applied to the f32 results via XLU sublane rolls +
        # edge masks (zero padding) -- no misaligned input slice copies.
        z_l = jnp.dot(a, w_ref[0], preferred_element_type=jnp.float32).reshape(th, W, cout)
        z_r = jnp.dot(a, w_ref[2], preferred_element_type=jnp.float32).reshape(th, W, cout)
        j = lax.broadcasted_iota(jnp.int32, (1, W, 1), 1)
        acc = acc + jnp.where(j > 0, pltpu.roll(z_l, 1, 1), 0.0)
        acc = acc + jnp.where(j < W - 1, pltpu.roll(z_r, W - 1, 1), 0.0)

    act = jnp.maximum(acc + b_ref[...].reshape(1, 1, cout), 0.0)   # bias + ReLU
    out_ref[...] = act.astype(out_ref.dtype)

    if pool:
        # Fused 2x2 max-pool epilogue (saves one activation HBM pass per layer).
        r = jnp.max(act.reshape(th // 2, 2, W, cout), axis=1)
        p = jnp.max(r.reshape(th // 2, W // 2, 2, cout), axis=2)
        out_refs[1][...] = p.astype(out_refs[1].dtype)


def _gram_kernel(f_ref, o_ref, *, norm):
    # f_ref: (thw, C_p) bf16 slice of flattened feature; o_ref: (C_p, C_p) f32
    k = pl.program_id(1)

    @pl.when(k == 0)
    def _():
        o_ref[...] = jnp.zeros_like(o_ref)

    f = f_ref[...]
    o_ref[...] += lax.dot_general(
        f, f, (((0,), (0,)), ((), ())), preferred_element_type=jnp.float32)

    @pl.when(k == pl.num_programs(1) - 1)
    def _():
        o_ref[...] = o_ref[...] * norm


def _style_mse_kernel(f_ref, t_ref, o_ref, gacc_ref, *, gram_norm):
    # Fused gram + squared-error-vs-target, per-batch partial sum output.
    # f_ref: (thw, C_p) bf16, t_ref: (C_p, C_p) f32 target, o_ref: (1, 1) f32
    k = pl.program_id(1)

    @pl.when(k == 0)
    def _():
        gacc_ref[...] = jnp.zeros_like(gacc_ref)
        o_ref[...] = jnp.zeros_like(o_ref)

    f = f_ref[...]
    gacc_ref[...] += lax.dot_general(
        f, f, (((0,), (0,)), ((), ())), preferred_element_type=jnp.float32)

    @pl.when(k == pl.num_programs(1) - 1)
    def _():
        d = gacc_ref[...] * gram_norm - t_ref[...]
        o_ref[...] = jnp.sum(d * d).reshape(1, 1)


def _mse_partial_kernel(a_ref, b_ref, o_ref):
    # a_ref, b_ref: (tm, C_p) bf16 tiles; o_ref: (1, 1) f32 per-chunk partial sum
    d = a_ref[...].astype(jnp.float32) - b_ref[...].astype(jnp.float32)
    o_ref[...] = jnp.sum(d * d).reshape(1, 1)


# ----------------------------------------------------------------------------
# pallas_call wrappers
# ----------------------------------------------------------------------------

def conv3x3_relu(x, w3, bias, *, pool=False):
    """x: (B,H,W,Cin_p) bf16, w3: (3, 3*Cin_p, Cout_p) bf16, bias: (1, Cout_p) f32.
       Returns (act, pooled_or_None); 'same' padding, ReLU, optional fused 2x2 pool."""
    B, H, W, Cin_p = x.shape
    Cout_p = w3.shape[-1]
    fuse_pool = pool and H % 2 == 0 and W % 2 == 0
    th = _pick_row_tile(H, W, fuse_pool)
    nt = H // th

    # Zero-pad rows: 1 top halo row + bottom rows so row count is a multiple of th
    # (the extra zero rows double as the bottom halo).  No column padding.
    pb = th - ((H + 1) % th)
    if pb == 0:
        pb = th
    xp = jnp.pad(x, ((0, 0), (1, pb), (0, 0), (0, 0)))

    in_specs = [
        pl.BlockSpec((None, th, W, Cin_p), lambda b, t: (b, t, 0, 0)),
        pl.BlockSpec((None, 1, W, Cin_p), lambda b, t: (b, t * th + th, 0, 0)),
        pl.BlockSpec((None, 1, W, Cin_p), lambda b, t: (b, t * th + th + 1, 0, 0)),
        pl.BlockSpec((3, 3 * Cin_p, Cout_p), lambda b, t: (0, 0, 0)),
        pl.BlockSpec((1, Cout_p), lambda b, t: (0, 0)),
    ]
    out_shapes = [jax.ShapeDtypeStruct((B, H, W, Cout_p), jnp.bfloat16)]
    out_specs = [pl.BlockSpec((None, th, W, Cout_p), lambda b, t: (b, t, 0, 0))]
    if fuse_pool:
        out_shapes.append(jax.ShapeDtypeStruct((B, H // 2, W // 2, Cout_p), jnp.bfloat16))
        out_specs.append(
            pl.BlockSpec((None, th // 2, W // 2, Cout_p), lambda b, t: (b, t, 0, 0)))

    kernel = functools.partial(_conv3x3_relu_kernel, pool=fuse_pool)
    outs = pl.pallas_call(
        kernel,
        out_shape=tuple(out_shapes),
        grid=(B, nt),
        in_specs=in_specs,
        out_specs=tuple(out_specs),
        compiler_params=pltpu.CompilerParams(
            dimension_semantics=("parallel", "parallel"),
            vmem_limit_bytes=_VMEM_LIMIT),
    )(xp, xp, xp, w3, bias)

    act = outs[0]
    if fuse_pool:
        return act, outs[1]
    if pool:
        # TODO(synk): odd spatial dims -> plain-JAX fallback pool (never hit in demo).
        return act, max_pool_2x2(act)
    return act, None


def _flatten_pad_rows(feat, cap):
    """(B, H, W, Cp) -> (B, hw_padded, Cp) with zero rows; returns (f, tile, hw_padded)."""
    B, H, W, Cp = feat.shape
    hw = H * W
    f = feat.reshape(B, hw, Cp)
    tile = min(cap, _round_up(hw, 8))
    hw_p = _round_up(hw, tile)
    if hw_p != hw:
        f = jnp.pad(f, ((0, 0), (0, hw_p - hw), (0, 0)))
    return f, tile, hw_p


def gram_matrix(feat, c_true):
    """feat: (B, H, W, Cp) bf16 (padded channels are zero)
       -> (B, Cp, Cp) f32 gram, normalized by c_true*H*W (PyTorch semantics)."""
    B, H, W, Cp = feat.shape
    f, thw, hw_p = _flatten_pad_rows(feat, _REDUCE_ROWS_CAP)
    norm = 1.0 / float(c_true * H * W)
    kernel = functools.partial(_gram_kernel, norm=norm)
    return pl.pallas_call(
        kernel,
        out_shape=jax.ShapeDtypeStruct((B, Cp, Cp), jnp.float32),
        grid=(B, hw_p // thw),
        in_specs=[pl.BlockSpec((None, thw, Cp), lambda b, k: (b, k, 0))],
        out_specs=pl.BlockSpec((None, Cp, Cp), lambda b, k: (b, 0, 0)),
        compiler_params=pltpu.CompilerParams(
            dimension_semantics=("parallel", "arbitrary"),
            vmem_limit_bytes=_VMEM_LIMIT),
    )(f)


def style_mse(feat, target_gram, c_true):
    """Fused gram(feat)-vs-target MSE: mean over B * c_true^2 elements."""
    B, H, W, Cp = feat.shape
    f, thw, hw_p = _flatten_pad_rows(feat, _REDUCE_ROWS_CAP)
    gram_norm = 1.0 / float(c_true * H * W)
    inv_count = 1.0 / float(B * c_true * c_true)
    kernel = functools.partial(_style_mse_kernel, gram_norm=gram_norm)
    # Per-batch partial sums -> outer axis "parallel" (both v7x TensorCores).
    partials = pl.pallas_call(
        kernel,
        out_shape=jax.ShapeDtypeStruct((B, 1, 1), jnp.float32),
        grid=(B, hw_p // thw),
        in_specs=[
            pl.BlockSpec((None, thw, Cp), lambda b, k: (b, k, 0)),
            # broadcast the single target gram to every batch step (no jnp.tile)
            pl.BlockSpec((None, Cp, Cp), lambda b, k: (0, 0, 0)),
        ],
        out_specs=pl.BlockSpec((None, 1, 1), lambda b, k: (b, 0, 0)),
        scratch_shapes=[pltpu.VMEM((Cp, Cp), jnp.float32)],
        compiler_params=pltpu.CompilerParams(
            dimension_semantics=("parallel", "arbitrary"),
            vmem_limit_bytes=_VMEM_LIMIT),
    )(f, target_gram)
    return jnp.sum(partials) * inv_count


def feature_mse(a, b, c_true):
    """MSE over the true (unpadded) elements of two NHWC channel-padded features."""
    B, H, W, Cp = a.shape
    M = B * H * W
    a2 = a.reshape(M, Cp)
    b2 = b.reshape(M, Cp)
    tm = min(_REDUCE_ROWS_CAP, _round_up(M, 8))
    M_p = _round_up(M, tm)
    if M_p != M:
        a2 = jnp.pad(a2, ((0, M_p - M), (0, 0)))
        b2 = jnp.pad(b2, ((0, M_p - M), (0, 0)))
    nchunks = M_p // tm
    inv_count = 1.0 / float(B * c_true * H * W)
    # Per-chunk partial sums -> grid axis "parallel" (megacore-friendly).
    partials = pl.pallas_call(
        _mse_partial_kernel,
        out_shape=jax.ShapeDtypeStruct((nchunks, 1, 1), jnp.float32),
        grid=(nchunks,),
        in_specs=[pl.BlockSpec((tm, Cp), lambda i: (i, 0)),
                  pl.BlockSpec((tm, Cp), lambda i: (i, 0))],
        out_specs=pl.BlockSpec((None, 1, 1), lambda i: (i, 0, 0)),
        compiler_params=pltpu.CompilerParams(
            dimension_semantics=("parallel",),
            vmem_limit_bytes=_VMEM_LIMIT),
    )(a2, b2)
    return jnp.sum(partials) * inv_count


# ----------------------------------------------------------------------------
# VGG-like feature extractor (synthetic deterministic weights)
# ----------------------------------------------------------------------------

VggFeatures = namedtuple("VggFeatures",
                         ["conv_1", "conv_2", "conv_3", "conv_4", "conv_5"])


class Vgg19FeatureExtractor:
    """Synthetic stand-in for torchvision VGG19 slices; deterministic init."""

    def __init__(self, key, in_ch=3, chans=(8, 16, 32, 32, 32)):
        self.params = []
        c_prev = in_ch
        for c in chans:
            key, wk, bk = jax.random.split(key, 3)
            w = jax.random.normal(wk, (c, c_prev, 3, 3), jnp.float32) / np.sqrt(c_prev * 9.0)
            b = 0.01 * jax.random.normal(bk, (c,), jnp.float32)
            # Pack for the Pallas conv: (Cout,Cin,3,3) -> (kw, kh, Cin_p, Cout_p)
            # -> (3, 3*Cin_p, Cout_p): one K-packed weight matrix per kernel column.
            wt = jnp.transpose(w, (3, 2, 1, 0))
            wt = _pad_axis(_pad_axis(wt, 2, LANE), 3, LANE)
            cin_p, cout_p = wt.shape[2], wt.shape[3]
            w3 = wt.reshape(3, 3 * cin_p, cout_p).astype(jnp.bfloat16)
            bp = _pad_axis(b.reshape(1, c), 1, LANE).astype(jnp.float32)
            self.params.append((w3, bp, c))
            c_prev = c

    def __call__(self, x_nchw):
        h = _nchw_to_nhwc_padded(x_nchw)          # one-time layout conversion
        feats = []
        n = len(self.params)
        for i, (w3, bp, c) in enumerate(self.params):
            act, pooled = conv3x3_relu(h, w3, bp, pool=(i < n - 1))
            feats.append((act, c))                # keep true channel count
            h = pooled if pooled is not None else act
        return VggFeatures(*feats)


# ----------------------------------------------------------------------------
# PerceptualLoss (forward semantics of the PyTorch module)
# ----------------------------------------------------------------------------

class PerceptualLoss:
    def __init__(self, style_image, style_weight=1e10, content_weight=1e5, *, key):
        self.vgg = Vgg19FeatureExtractor(key)
        self.content_weight = content_weight
        self.style_weight = style_weight
        self.target_styles = self.generate_targets(style_image)

    def generate_targets(self, style_image):
        features = self.vgg(style_image)               # style_image: (1, C, H, W)
        return [gram_matrix(f, c) for (f, c) in features]   # each (1, Cp, Cp) f32

    def __call__(self, x, y):
        y_feat = self.vgg(y)
        x_feat = self.vgg(x)
        xf4, c4 = x_feat.conv_4
        yf4, _ = y_feat.conv_4
        content_loss = self.content_weight * feature_mse(xf4, yf4, c4)
        # gram + MSE-vs-target fused per layer; target broadcast via BlockSpec
        # (MSE averages over B*c*c elements, matching .repeat(B,1,1) semantics).
        style_terms = [style_mse(yf, tgt, c)
                       for (yf, c), tgt in zip(y_feat, self.target_styles)]
        style_loss = self.style_weight * jnp.sum(jnp.stack(style_terms))
        return content_loss, style_loss


# ----------------------------------------------------------------------------
# Demo
# ----------------------------------------------------------------------------

if __name__ == "__main__":
    key = jax.random.PRNGKey(0)
    k_style, k_x, k_y, k_vgg = jax.random.split(key, 4)

    B, C, H, W = 2, 3, 32, 32
    style_image = jax.random.uniform(k_style, (1, C, H, W), jnp.float32)
    x = jax.random.uniform(k_x, (B, C, H, W), jnp.float32)
    y = jax.random.uniform(k_y, (B, C, H, W), jnp.float32)

    loss_mod = PerceptualLoss(style_image, key=k_vgg)
    forward = jax.jit(loss_mod.__call__)
    content_loss, style_loss = forward(x, y)
    jax.block_until_ready((content_loss, style_loss))

    assert np.isfinite(np.asarray(content_loss)) and np.isfinite(np.asarray(style_loss))
    print("KERNEL_OK")
</pallas_src>

<mosaic_0001>
module attributes {stable_mosaic.version = 11 : i64} {
  func.func @_conv3x3_relu_kernel(%arg0: i32, %arg1: i32, %arg2: memref<1x32x32x128xbf16, #tpu.memory_space<vmem>>, %arg3: memref<1x1x32x128xbf16, #tpu.memory_space<vmem>>, %arg4: memref<1x1x32x128xbf16, #tpu.memory_space<vmem>>, %arg5: memref<3x384x128xbf16, #tpu.memory_space<vmem>>, %arg6: memref<1x128xf32, #tpu.memory_space<vmem>>, %arg7: memref<1x32x32x128xbf16, #tpu.memory_space<vmem>>, %arg8: memref<1x16x16x128xbf16, #tpu.memory_space<vmem>>) attributes {dimension_semantics = [#tpu.dimension_semantics<parallel>, #tpu.dimension_semantics<parallel>], iteration_bounds = array<i64: 1, 1>, scalar_prefetch = 0 : i64, scratch_operands = 0 : i64, tpu.core_type = #tpu.core_type<tc>, window_params = [{transform_indices = @transform_0, window_bounds = array<i64: 1, 32, 32, 128>}, {transform_indices = @transform_1, window_bounds = array<i64: 1, 1, 32, 128>}, {transform_indices = @transform_2, window_bounds = array<i64: 1, 1, 32, 128>}, {pipeline_mode = #tpu.pipeline_mode<synchronous>, transform_indices = @transform_3, window_bounds = array<i64: 3, 384, 128>}, {pipeline_mode = #tpu.pipeline_mode<synchronous>, transform_indices = @transform_4, window_bounds = array<i64: 1, 128>}, {transform_indices = @transform_5, window_bounds = array<i64: 1, 32, 32, 128>}, {transform_indices = @transform_6, window_bounds = array<i64: 1, 16, 16, 128>}]} {
    %c0 = arith.constant 0 : index
    %c0_0 = arith.constant 0 : index
    %c0_1 = arith.constant 0 : index
    %c0_2 = arith.constant 0 : index
    %0 = vector.load %arg2[%c0, %c0_0, %c0_1, %c0_2] : memref<1x32x32x128xbf16, #tpu.memory_space<vmem>>, vector<1x32x32x128xbf16>
    %1 = vector.shape_cast %0 : vector<1x32x32x128xbf16> to vector<32x32x128xbf16>
    %c0_3 = arith.constant 0 : index
    %c0_4 = arith.constant 0 : index
    %c0_5 = arith.constant 0 : index
    %c0_6 = arith.constant 0 : index
    %2 = vector.load %arg3[%c0_3, %c0_4, %c0_5, %c0_6] : memref<1x1x32x128xbf16, #tpu.memory_space<vmem>>, vector<1x1x32x128xbf16>
    %3 = vector.shape_cast %2 : vector<1x1x32x128xbf16> to vector<1x32x128xbf16>
    %c0_7 = arith.constant 0 : index
    %c0_8 = arith.constant 0 : index
    %c0_9 = arith.constant 0 : index
    %c0_10 = arith.constant 0 : index
    %4 = vector.load %arg4[%c0_7, %c0_8, %c0_9, %c0_10] : memref<1x1x32x128xbf16, #tpu.memory_space<vmem>>, vector<1x1x32x128xbf16>
    %5 = vector.shape_cast %4 : vector<1x1x32x128xbf16> to vector<1x32x128xbf16>
    %6 = tpu.concatenate %1, %3, %5 in 0 : vector<32x32x128xbf16>, vector<1x32x128xbf16>, vector<1x32x128xbf16> -> vector<34x32x128xbf16>
    %7 = vector.extract_strided_slice %6 {offsets = [0, 0, 0], sizes = [32, 32, 128], strides = [1, 1, 1]} : vector<34x32x128xbf16> to vector<32x32x128xbf16>
    %8 = vector.extract_strided_slice %6 {offsets = [1, 0, 0], sizes = [32, 32, 128], strides = [1, 1, 1]} : vector<34x32x128xbf16> to vector<32x32x128xbf16>
    %9 = vector.extract_strided_slice %6 {offsets = [2, 0, 0], sizes = [32, 32, 128], strides = [1, 1, 1]} : vector<34x32x128xbf16> to vector<32x32x128xbf16>
    %10 = tpu.concatenate %7, %8, %9 in 2 : vector<32x32x128xbf16>, vector<32x32x128xbf16>, vector<32x32x128xbf16> -> vector<32x32x384xbf16>
    %11 = vector.shape_cast %10 : vector<32x32x384xbf16> to vector<1024x384xbf16>
    %c1 = arith.constant 1 : index
    %c0_11 = arith.constant 0 : index
    %c0_12 = arith.constant 0 : index
    %12 = vector.load %arg5[%c1, %c0_11, %c0_12] : memref<3x384x128xbf16, #tpu.memory_space<vmem>>, vector<1x384x128xbf16>
    %13 = vector.shape_cast %12 : vector<1x384x128xbf16> to vector<384x128xbf16>
    %cst = arith.constant dense<0.000000e+00> : vector<1024x128xf32>
    %14 = tpu.matmul %11, %13, %cst {dimension_numbers = #tpu.dot_dimension_numbers<[1], [0], [0], [1], [0, 0, 1, 1], [], []>} : vector<1024x384xbf16>, vector<384x128xbf16>, vector<1024x128xf32> -> vector<1024x128xf32>
    %15 = vector.shape_cast %14 : vector<1024x128xf32> to vector<32x32x128xf32>
    %c0_13 = arith.constant 0 : index
    %c0_14 = arith.constant 0 : index
    %c0_15 = arith.constant 0 : index
    %16 = vector.load %arg5[%c0_13, %c0_14, %c0_15] : memref<3x384x128xbf16, #tpu.memory_space<vmem>>, vector<1x384x128xbf16>
    %17 = vector.shape_cast %16 : vector<1x384x128xbf16> to vector<384x128xbf16>
    %cst_16 = arith.constant dense<0.000000e+00> : vector<1024x128xf32>
    %18 = tpu.matmul %11, %17, %cst_16 {dimension_numbers = #tpu.dot_dimension_numbers<[1], [0], [0], [1], [0, 0, 1, 1], [], []>} : vector<1024x384xbf16>, vector<384x128xbf16>, vector<1024x128xf32> -> vector<1024x128xf32>
    %19 = vector.shape_cast %18 : vector<1024x128xf32> to vector<32x32x128xf32>
    %c2 = arith.constant 2 : index
    %c0_17 = arith.constant 0 : index
    %c0_18 = arith.constant 0 : index
    %20 = vector.load %arg5[%c2, %c0_17, %c0_18] : memref<3x384x128xbf16, #tpu.memory_space<vmem>>, vector<1x384x128xbf16>
    %21 = vector.shape_cast %20 : vector<1x384x128xbf16> to vector<384x128xbf16>
    %cst_19 = arith.constant dense<0.000000e+00> : vector<1024x128xf32>
    %22 = tpu.matmul %11, %21, %cst_19 {dimension_numbers = #tpu.dot_dimension_numbers<[1], [0], [0], [1], [0, 0, 1, 1], [], []>} : vector<1024x384xbf16>, vector<384x128xbf16>, vector<1024x128xf32> -> vector<1024x128xf32>
    %23 = vector.shape_cast %22 : vector<1024x128xf32> to vector<32x32x128xf32>
    %24 = tpu.iota {dimensions = array<i32: 1>} : vector<1x32x1xi32>
    %c0_i32 = arith.constant 0 : i32
    %25 = vector.broadcast %c0_i32 : i32 to vector<1x32x1xi32>
    %26 = arith.cmpi sgt, %24, %25 : vector<1x32x1xi32>
    %c1_i32 = arith.constant 1 : i32
    %27 = tpu.dynamic_rotate %19 by %c1_i32 dim 1 : vector<32x32x128xf32>, i32 -> vector<32x32x128xf32>
    %cst_20 = arith.constant 0.000000e+00 : f32
    %28 = vector.shape_cast %26 : vector<1x32x1xi1> to vector<1x32x1xi1>
    %29 = vector.broadcast %28 : vector<1x32x1xi1> to vector<32x32x128xi1>
    %30 = vector.broadcast %cst_20 : f32 to vector<32x32x128xf32>
    %31 = arith.select %29, %27, %30 : vector<32x32x128xi1>, vector<32x32x128xf32>
    %32 = arith.addf %15, %31 : vector<32x32x128xf32>
    %c31_i32 = arith.constant 31 : i32
    %33 = vector.broadcast %c31_i32 : i32 to vector<1x32x1xi32>
    %34 = arith.cmpi slt, %24, %33 : vector<1x32x1xi32>
    %c31_i32_21 = arith.constant 31 : i32
    %35 = tpu.dynamic_rotate %23 by %c31_i32_21 dim 1 : vector<32x32x128xf32>, i32 -> vector<32x32x128xf32>
    %cst_22 = arith.constant 0.000000e+00 : f32
    %36 = vector.shape_cast %34 : vector<1x32x1xi1> to vector<1x32x1xi1>
    %37 = vector.broadcast %36 : vector<1x32x1xi1> to vector<32x32x128xi1>
    %38 = vector.broadcast %cst_22 : f32 to vector<32x32x128xf32>
    %39 = arith.select %37, %35, %38 : vector<32x32x128xi1>, vector<32x32x128xf32>
    %40 = arith.addf %32, %39 : vector<32x32x128xf32>
    %c0_23 = arith.constant 0 : index
    %c0_24 = arith.constant 0 : index
    %41 = vector.load %arg6[%c0_23, %c0_24] : memref<1x128xf32, #tpu.memory_space<vmem>>, vector<1x128xf32>
    %42 = vector.shape_cast %41 : vector<1x128xf32> to vector<1x1x128xf32>
    %43 = vector.broadcast %42 : vector<1x1x128xf32> to vector<32x32x128xf32>
    %44 = arith.addf %40, %43 : vector<32x32x128xf32>
    %cst_25 = arith.constant 0.000000e+00 : f32
    %45 = vector.broadcast %cst_25 : f32 to vector<32x32x128xf32>
    %46 = arith.maximumf %44, %45 : vector<32x32x128xf32>
    %47 = arith.truncf %46 : vector<32x32x128xf32> to vector<32x32x128xbf16>
    %c0_26 = arith.constant 0 : index
    %c0_27 = arith.constant 0 : index
    %c0_28 = arith.constant 0 : index
    %c0_29 = arith.constant 0 : index
    %48 = vector.load %arg7[%c0_26, %c0_27, %c0_28, %c0_29] : memref<1x32x32x128xbf16, #tpu.memory_space<vmem>>, vector<1x32x32x128xbf16>
    %49 = vector.shape_cast %48 : vector<1x32x32x128xbf16> to vector<32x32x128xbf16>
    %50 = vector.shape_cast %47 : vector<32x32x128xbf16> to vector<1x32x32x128xbf16>
    tpu.vector_store %arg7[%c0_26, %c0_27, %c0_28, %c0_29], %50 {strides = array<i32>} : memref<1x32x32x128xbf16, #tpu.memory_space<vmem>>, vector<1x32x32x128xbf16>,
    %51 = vector.shape_cast %46 : vector<32x32x128xf32> to vector<16x2x32x128xf32>
    %cst_30 = arith.constant dense<0xFF800000> : vector<16x32x128xf32>
    %52 = vector.multi_reduction <maximumf>, %51, %cst_30 [1] : vector<16x2x32x128xf32> to vector<16x32x128xf32>
    %53 = vector.shape_cast %52 : vector<16x32x128xf32> to vector<16x16x2x128xf32>
    %cst_31 = arith.constant dense<0xFF800000> : vector<16x16x128xf32>
    %54 = vector.multi_reduction <maximumf>, %53, %cst_31 [2] : vector<16x16x2x128xf32> to vector<16x16x128xf32>
    %55 = arith.truncf %54 : vector<16x16x128xf32> to vector<16x16x128xbf16>
    %c0_32 = arith.constant 0 : index
    %c0_33 = arith.constant 0 : index
    %c0_34 = arith.constant 0 : index
    %c0_35 = arith.constant 0 : index
    %56 = vector.load %arg8[%c0_32, %c0_33, %c0_34, %c0_35] : memref<1x16x16x128xbf16, #tpu.memory_space<vmem>>, vector<1x16x16x128xbf16>
    %57 = vector.shape_cast %56 : vector<1x16x16x128xbf16> to vector<16x16x128xbf16>
    %58 = vector.shape_cast %55 : vector<16x16x128xbf16> to vector<1x16x16x128xbf16>
    tpu.vector_store %arg8[%c0_32, %c0_33, %c0_34, %c0_35], %58 {strides = array<i32>} : memref<1x16x16x128xbf16, #tpu.memory_space<vmem>>, vector<1x16x16x128xbf16>,
    return
  }
  func.func @transform_0(%arg0: i32, %arg1: i32) -> (i32, i32, i32, i32) {
    %c0_i32 = arith.constant 0 : i32
    %c0_i32_0 = arith.constant 0 : i32
    %c0_i32_1 = arith.constant 0 : i32
    return %arg0, %arg1, %c0_i32, %c0_i32_0 : i32, i32, i32, i32
  }
  func.func @transform_1(%arg0: i32, %arg1: i32) -> (i32, i32, i32, i32) {
    %c32_i32 = arith.constant 32 : i32
    %0 = arith.muli %arg1, %c32_i32 : i32
    %c32_i32_0 = arith.constant 32 : i32
    %1 = arith.addi %0, %c32_i32_0 : i32
    %c0_i32 = arith.constant 0 : i32
    %c0_i32_1 = arith.constant 0 : i32
    %c0_i32_2 = arith.constant 0 : i32
    return %arg0, %1, %c0_i32, %c0_i32_1 : i32, i32, i32, i32
  }
  func.func @transform_2(%arg0: i32, %arg1: i32) -> (i32, i32, i32, i32) {
    %c32_i32 = arith.constant 32 : i32
    %0 = arith.muli %arg1, %c32_i32 : i32
    %c32_i32_0 = arith.constant 32 : i32
    %1 = arith.addi %0, %c32_i32_0 : i32
    %c1_i32 = arith.constant 1 : i32
    %2 = arith.addi %1, %c1_i32 : i32
    %c0_i32 = arith.constant 0 : i32
    %c0_i32_1 = arith.constant 0 : i32
    %c0_i32_2 = arith.constant 0 : i32
    return %arg0, %2, %c0_i32, %c0_i32_1 : i32, i32, i32, i32
  }
  func.func @transform_3(%arg0: i32, %arg1: i32) -> (i32, i32, i32) {
    %c0_i32 = arith.constant 0 : i32
    %c0_i32_0 = arith.constant 0 : i32
    %c0_i32_1 = arith.constant 0 : i32
    %c0_i32_2 = arith.constant 0 : i32
    return %c0_i32, %c0_i32_0, %c0_i32_1 : i32, i32, i32
  }
  func.func @transform_4(%arg0: i32, %arg1: i32) -> (i32, i32) {
    %c0_i32 = arith.constant 0 : i32
    %c0_i32_0 = arith.constant 0 : i32
    %c0_i32_1 = arith.constant 0 : i32
    return %c0_i32, %c0_i32_0 : i32, i32
  }
  func.func @transform_5(%arg0: i32, %arg1: i32) -> (i32, i32, i32, i32) {
    %c0_i32 = arith.constant 0 : i32
    %c0_i32_0 = arith.constant 0 : i32
    %c0_i32_1 = arith.constant 0 : i32
    return %arg0, %arg1, %c0_i32, %c0_i32_0 : i32, i32, i32, i32
  }
  func.func @transform_6(%arg0: i32, %arg1: i32) -> (i32, i32, i32, i32) {
    %c0_i32 = arith.constant 0 : i32
    %c0_i32_0 = arith.constant 0 : i32
    %c0_i32_1 = arith.constant 0 : i32
    return %arg0, %arg1, %c0_i32, %c0_i32_0 : i32, i32, i32, i32
  }
}

</mosaic_0001>

<llo_original>
// kernel: tpu_custom_call.1
$region0: #{tpu_custom_call.1}
  #allocation0 [shape = 'u32[]', space=smem, size = 0x4, offset = 0x4, fixed_abs, tag = 'smem constant byte address 0x4 - core index']
  #allocation1 [shape = 'u32[144,128]{1,0:T(1,128)}', space=vmem, size = 0x12000, scoped, tag = 'internal scratch']
  %s0 = inlined_call_operand.hbm [shape: bf16[1,64,32,128], index: 0, kind: input, shape index: {}]
  %s1 = inlined_call_operand.hbm [shape: bf16[1,64,32,128], index: 1, kind: input, shape index: {}]
  %s2 = inlined_call_operand.hbm [shape: bf16[1,64,32,128], index: 2, kind: input, shape index: {}]
  %s3 = inlined_call_operand.hbm [shape: bf16[3,384,128], index: 3, kind: input, shape index: {}]
  %s4 = inlined_call_operand.vmem [shape: f32[1,128], index: 4, kind: input, shape index: {}]
  %s5 = inlined_call_operand.hbm [shape: bf16[1,32,32,128], index: 5, kind: output, shape index: {0}]
  %s6 = inlined_call_operand.hbm [shape: bf16[1,16,16,128], index: 6, kind: output, shape index: {1}]
  %7 = xla_tuple %s5, %s6
  %s8 = sld [smem:[#allocation0]]
  $region54: #{tpu_custom_call.1} parent=0
    _
  %s10 = ssub.s32 1, %s8
  %s11 = scalar_select 0, %s10, %s8
  $region1: #{tpu_custom_call.1} parent=0
    #allocation2 [shape = 'u8[262144]{0}', space=vmem, size = 0x40000, scoped, tag = 'input window, operand 0, single buffered']
    #allocation3 [shape = 's32[1]{0}', space=sflag, size = 0x4, scoped, tag = 'scoped memory for tpu_custom_call.1']
    #allocation4 [shape = 's32[1]{0}', space=sflag, size = 0x4, scoped, tag = 'scoped memory for tpu_custom_call.1']
    #allocation5 [shape = 'u8[8192]{0}', space=vmem, size = 0x2000, scoped, tag = 'input window, operand 1, single buffered']
    #allocation6 [shape = 's32[1]{0}', space=sflag, size = 0x4, scoped, tag = 'scoped memory for tpu_custom_call.1']
    #allocation7 [shape = 'u8[8192]{0}', space=vmem, size = 0x2000, scoped, tag = 'input window, operand 2, single buffered']
    #allocation8 [shape = 'u8[294912]{0}', space=vmem, size = 0x48000, scoped, tag = 'input window, operand 3, single buffered']
    #allocation9 [shape = 's32[1]{0}', space=sflag, size = 0x4, scoped, tag = 'scoped memory for tpu_custom_call.1']
    #allocation10 [shape = 'u8[262144]{0}', space=vmem, size = 0x40000, scoped, tag = 'output window, operand 0, single buffered']
    #allocation11 [shape = 'u8[65536]{0}', space=vmem, size = 0x10000, scoped, tag = 'output window, operand 1, single buffered']
    #allocation12 [shape = 's32[1]{0}', space=sflag, size = 0x4, scoped, tag = 'scoped memory for tpu_custom_call.1']
    %12 = vsyncpa [#allocation3], 0
    %13 = vsyncpa [#allocation6], 0
    %14 = vsyncpa [#allocation9], 0
    %15 = vsyncpa [#allocation4], 0
    %16 = vsyncpa [#allocation12], 0
    // Predicated region
    $region2: #{tpu_custom_call.1} parent=1 // pred_check
      _
    $region3: #{tpu_custom_call.1} parent=1 // pred_check_branch
      %18 = sbr.rel (0) target = $region5
    $region4: #{tpu_custom_call.1} parent=1 // pred_region
      %s20 = ssub.s32 8192, 8192
      %21 = vsyncadd [#allocation3], %s20
      %s22 = sshll.u32 [#allocation2], 4
      %s23 = int_to_ptr.vmem [resolvable:$true] %s22
      %28 = dma.hbm_to_vmem [thread:$0]  %s0, 8192, %s23, [#allocation3], 64, 64, 4
    $region5: #{tpu_custom_call.1} parent=1 // pred_fallthru
      _
    // Predicated region
    $region6: #{tpu_custom_call.1} parent=1 // pred_check
      _
    $region7: #{tpu_custom_call.1} parent=1 // pred_check_branch
      %30 = sbr.rel (0) target = $region9
    $region8: #{tpu_custom_call.1} parent=1 // pred_region
      %s31 = smul.u32 0, 32
      %s32 = sadd.s32 %s31, 32
      %s34 = ssub.s32 256, 256
      %35 = vsyncadd [#allocation6], %s34
      %s36 = smul.addr %s32, 4
      %s37 = smul.addr %s36, 64
      %s38 = scalar_lea.hbm %s1, %s37
      %s39 = sshll.u32 [#allocation5], 4
      %s40 = int_to_ptr.vmem [resolvable:$true] %s39
      %45 = dma.hbm_to_vmem [thread:$0]  %s38, 256, %s40, [#allocation6], 64, 64, 4
    $region9: #{tpu_custom_call.1} parent=1 // pred_fallthru
      _
    // Predicated region
    $region10: #{tpu_custom_call.1} parent=1 // pred_check
      _
    $region11: #{tpu_custom_call.1} parent=1 // pred_check_branch
      %47 = sbr.rel (0) target = $region13
    $region12: #{tpu_custom_call.1} parent=1 // pred_region
      %s48 = smul.u32 0, 32
      %s49 = sadd.s32 %s48, 33
      %s51 = ssub.s32 256, 256
      %52 = vsyncadd [#allocation6], %s51
      %s53 = smul.addr %s49, 4
      %s54 = smul.addr %s53, 64
      %s55 = scalar_lea.hbm %s2, %s54
      %s56 = sshll.u32 [#allocation7], 4
      %s57 = int_to_ptr.vmem [resolvable:$true] %s56
      %62 = dma.hbm_to_vmem [thread:$0]  %s55, 256, %s57, [#allocation6], 64, 64, 4
    $region13: #{tpu_custom_call.1} parent=1 // pred_fallthru
      _
    // Predicated region
    $region14: #{tpu_custom_call.1} parent=1 // pred_check
      _
    $region15: #{tpu_custom_call.1} parent=1 // pred_check_branch
      %64 = sbr.rel (0) target = $region17
    $region16: #{tpu_custom_call.1} parent=1 // pred_region
      %s66 = ssub.s32 9216, 9216
      %67 = vsyncadd [#allocation9], %s66
      %s68 = sshll.u32 [#allocation8], 4
      %s69 = int_to_ptr.vmem [resolvable:$true] %s68
      %74 = dma.hbm_to_vmem [thread:$0]  %s3, 9216, %s69, [#allocation9], 64, 64, 4
    $region17: #{tpu_custom_call.1} parent=1 // pred_fallthru
      _
    // Predicated region
    $region18: #{tpu_custom_call.1} parent=1 // pred_check
      _
    $region19: #{tpu_custom_call.1} parent=1 // pred_check_branch
      %76 = sbr.rel (0) target = $region21
    $region20: #{tpu_custom_call.1} parent=1 // pred_region
      _
    $region21: #{tpu_custom_call.1} parent=1 // pred_fallthru
      _
    // Predicated region
    $region22: #{tpu_custom_call.1} parent=1 // pred_check
      _
    $region23: #{tpu_custom_call.1} parent=1 // pred_check_branch
      %78 = sbr.rel (0) target = $region25
    $region24: #{tpu_custom_call.1} parent=1 // pred_region
      %79 = dma.done [#allocation3], 8192
    $region25: #{tpu_custom_call.1} parent=1 // pred_fallthru
      _
    // Predicated region
    $region26: #{tpu_custom_call.1} parent=1 // pred_check
      _
    $region27: #{tpu_custom_call.1} parent=1 // pred_check_branch
      %81 = sbr.rel (0) target = $region29
    $region28: #{tpu_custom_call.1} parent=1 // pred_region
      %82 = dma.done [#allocation6], 256
    $region29: #{tpu_custom_call.1} parent=1 // pred_fallthru
      _
    // Predicated region
    $region30: #{tpu_custom_call.1} parent=1 // pred_check
      _
    $region31: #{tpu_custom_call.1} parent=1 // pred_check_branch
      %84 = sbr.rel (0) target = $region33
    $region32: #{tpu_custom_call.1} parent=1 // pred_region
      %85 = dma.done [#allocation6], 256
    $region33: #{tpu_custom_call.1} parent=1 // pred_fallthru
      _
    // Predicated region
    $region34: #{tpu_custom_call.1} parent=1 // pred_check
      _
    $region35: #{tpu_custom_call.1} parent=1 // pred_check_branch
      %87 = sbr.rel (0) target = $region37
    $region36: #{tpu_custom_call.1} parent=1 // pred_region
      %88 = dma.done [#allocation9], 9216
    $region37: #{tpu_custom_call.1} parent=1 // pred_fallthru
      _
    %s89 = smul.u32 0, 32
    %s90 = sadd.s32 %s89, 32
    %s91 = smul.u32 0, 32
    %s92 = sadd.s32 %s91, 33
    %v94 = vld [vmem:[#allocation2] sm:$0xf]
    %v95 = vld [vmem:[#allocation2 + $0x4] sm:$0xf]
    %v96 = vld [vmem:[#allocation2 + $0x8] sm:$0xf]
    %v97 = vld [vmem:[#allocation2 + $0xc] sm:$0xf]
    %v98 = vld [vmem:[#allocation2 + $0x10] sm:$0xf]
    %v99 = vld [vmem:[#allocation2 + $0x14] sm:$0xf]
    %v100 = vld [vmem:[#allocation2 + $0x18] sm:$0xf]
    %v101 = vld [vmem:[#allocation2 + $0x1c] sm:$0xf]
    %v102 = vld [vmem:[#allocation2 + $0x20] sm:$0xf]
    %v103 = vld [vmem:[#allocation2 + $0x24] sm:$0xf]
    %v104 = vld [vmem:[#allocation2 + $0x28] sm:$0xf]
    %v105 = vld [vmem:[#allocation2 + $0x2c] sm:$0xf]
    %v106 = vld [vmem:[#allocation2 + $0x30] sm:$0xf]
    %v107 = vld [vmem:[#allocation2 + $0x34] sm:$0xf]
    %v108 = vld [vmem:[#allocation2 + $0x38] sm:$0xf]
    %v109 = vld [vmem:[#allocation2 + $0x3c] sm:$0xf]
    %v110 = vld [vmem:[#allocation2 + $0x40] sm:$0xf]
    %v111 = vld [vmem:[#allocation2 + $0x44] sm:$0xf]
    %v112 = vld [vmem:[#allocation2 + $0x48] sm:$0xf]
    %v113 = vld [vmem:[#allocation2 + $0x4c] sm:$0xf]
    %v114 = vld [vmem:[#allocation2 + $0x50] sm:$0xf]
    %v115 = vld [vmem:[#allocation2 + $0x54] sm:$0xf]
    %v116 = vld [vmem:[#allocation2 + $0x58] sm:$0xf]
    %v117 = vld [vmem:[#allocation2 + $0x5c] sm:$0xf]
    %v118 = vld [vmem:[#allocation2 + $0x60] sm:$0xf]
    %v119 = vld [vmem:[#allocation2 + $0x64] sm:$0xf]
    %v120 = vld [vmem:[#allocation2 + $0x68] sm:$0xf]
    %v121 = vld [vmem:[#allocation2 + $0x6c] sm:$0xf]
    %v122 = vld [vmem:[#allocation2 + $0x70] sm:$0xf]
    %v123 = vld [vmem:[#allocation2 + $0x74] sm:$0xf]
    %v124 = vld [vmem:[#allocation2 + $0x78] sm:$0xf]
    %v125 = vld [vmem:[#allocation2 + $0x7c] sm:$0xf]
    %v126 = vld [vmem:[#allocation2 + $0x80] sm:$0xf]
    %v127 = vld [vmem:[#allocation2 + $0x84] sm:$0xf]
    %v128 = vld [vmem:[#allocation2 + $0x88] sm:$0xf]
    %v129 = vld [vmem:[#allocation2 + $0x8c] sm:$0xf]
    %v130 = vld [vmem:[#allocation2 + $0x90] sm:$0xf]
    %v131 = vld [vmem:[#allocation2 + $0x94] sm:$0xf]
    %v132 = vld [vmem:[#allocation2 + $0x98] sm:$0xf]
    %v133 = vld [vmem:[#allocation2 + $0x9c] sm:$0xf]
    %v134 = vld [vmem:[#allocation2 + $0xa0] sm:$0xf]
    %v135 = vld [vmem:[#allocation2 + $0xa4] sm:$0xf]
    %v136 = vld [vmem:[#allocation2 + $0xa8] sm:$0xf]
    %v137 = vld [vmem:[#allocation2 + $0xac] sm:$0xf]
    %v138 = vld [vmem:[#allocation2 + $0xb0] sm:$0xf]
    %v139 = vld [vmem:[#allocation2 + $0xb4] sm:$0xf]
    %v140 = vld [vmem:[#allocation2 + $0xb8] sm:$0xf]
    %v141 = vld [vmem:[#allocation2 + $0xbc] sm:$0xf]
    %v142 = vld [vmem:[#allocation2 + $0xc0] sm:$0xf]
    %v143 = vld [vmem:[#allocation2 + $0xc4] sm:$0xf]
    %v144 = vld [vmem:[#allocation2 + $0xc8] sm:$0xf]
    %v145 = vld [vmem:[#allocation2 + $0xcc] sm:$0xf]
    %v146 = vld [vmem:[#allocation2 + $0xd0] sm:$0xf]
    %v147 = vld [vmem:[#allocation2 + $0xd4] sm:$0xf]
    %v148 = vld [vmem:[#allocation2 + $0xd8] sm:$0xf]
    %v149 = vld [vmem:[#allocation2 + $0xdc] sm:$0xf]
    %v150 = vld [vmem:[#allocation2 + $0xe0] sm:$0xf]
    %v151 = vld [vmem:[#allocation2 + $0xe4] sm:$0xf]
    %v152 = vld [vmem:[#allocation2 + $0xe8] sm:$0xf]
    %v153 = vld [vmem:[#allocation2 + $0xec] sm:$0xf]
    %v154 = vld [vmem:[#allocation2 + $0xf0] sm:$0xf]
    %v155 = vld [vmem:[#allocation2 + $0xf4] sm:$0xf]
    %v156 = vld [vmem:[#allocation2 + $0xf8] sm:$0xf]
    %v157 = vld [vmem:[#allocation2 + $0xfc] sm:$0xf]
    %v158 = vld [vmem:[#allocation2 + $0x100] sm:$0xf]
    %v159 = vld [vmem:[#allocation2 + $0x104] sm:$0xf]
    %v160 = vld [vmem:[#allocation2 + $0x108] sm:$0xf]
    %v161 = vld [vmem:[#allocation2 + $0x10c] sm:$0xf]
    %v162 = vld [vmem:[#allocation2 + $0x110] sm:$0xf]
    %v163 = vld [vmem:[#allocation2 + $0x114] sm:$0xf]
    %v164 = vld [vmem:[#allocation2 + $0x118] sm:$0xf]
    %v165 = vld [vmem:[#allocation2 + $0x11c] sm:$0xf]
    %v166 = vld [vmem:[#allocation2 + $0x120] sm:$0xf]
    %v167 = vld [vmem:[#allocation2 + $0x124] sm:$0xf]
    %v168 = vld [vmem:[#allocation2 + $0x128] sm:$0xf]
    %v169 = vld [vmem:[#allocation2 + $0x12c] sm:$0xf]
    %v170 = vld [vmem:[#allocation2 + $0x130] sm:$0xf]
    %v171 = vld [vmem:[#allocation2 + $0x134] sm:$0xf]
    %v172 = vld [vmem:[#allocation2 + $0x138] sm:$0xf]
    %v173 = vld [vmem:[#allocation2 + $0x13c] sm:$0xf]
    %v174 = vld [vmem:[#allocation2 + $0x140] sm:$0xf]
    %v175 = vld [vmem:[#allocation2 + $0x144] sm:$0xf]
    %v176 = vld [vmem:[#allocation2 + $0x148] sm:$0xf]
    %v177 = vld [vmem:[#allocation2 + $0x14c] sm:$0xf]
    %v178 = vld [vmem:[#allocation2 + $0x150] sm:$0xf]
    %v179 = vld [vmem:[#allocation2 + $0x154] sm:$0xf]
    %v180 = vld [vmem:[#allocation2 + $0x158] sm:$0xf]
    %v181 = vld [vmem:[#allocation2 + $0x15c] sm:$0xf]
    %v182 = vld [vmem:[#allocation2 + $0x160] sm:$0xf]
    %v183 = vld [vmem:[#allocation2 + $0x164] sm:$0xf]
    %v184 = vld [vmem:[#allocation2 + $0x168] sm:$0xf]
    %v185 = vld [vmem:[#allocation2 + $0x16c] sm:$0xf]
    %v186 = vld [vmem:[#allocation2 + $0x170] sm:$0xf]
    %v187 = vld [vmem:[#allocation2 + $0x174] sm:$0xf]
    %v188 = vld [vmem:[#allocation2 + $0x178] sm:$0xf]
    %v189 = vld [vmem:[#allocation2 + $0x17c] sm:$0xf]
    %v190 = vld [vmem:[#allocation2 + $0x180] sm:$0xf]
    %v191 = vld [vmem:[#allocation2 + $0x184] sm:$0xf]
    %v192 = vld [vmem:[#allocation2 + $0x188] sm:$0xf]
    %v193 = vld [vmem:[#allocation2 + $0x18c] sm:$0xf]
    %v194 = vld [vmem:[#allocation2 + $0x190] sm:$0xf]
    %v195 = vld [vmem:[#allocation2 + $0x194] sm:$0xf]
    %v196 = vld [vmem:[#allocation2 + $0x198] sm:$0xf]
    %v197 = vld [vmem:[#allocation2 + $0x19c] sm:$0xf]
    %v198 = vld [vmem:[#allocation2 + $0x1a0] sm:$0xf]
    %v199 = vld [vmem:[#allocation2 + $0x1a4] sm:$0xf]
    %v200 = vld [vmem:[#allocation2 + $0x1a8] sm:$0xf]
    %v201 = vld [vmem:[#allocation2 + $0x1ac] sm:$0xf]
    %v202 = vld [vmem:[#allocation2 + $0x1b0] sm:$0xf]
    %v203 = vld [vmem:[#allocation2 + $0x1b4] sm:$0xf]
    %v204 = vld [vmem:[#allocation2 + $0x1b8] sm:$0xf]
    %v205 = vld [vmem:[#allocation2 + $0x1bc] sm:$0xf]
    %v206 = vld [vmem:[#allocation2 + $0x1c0] sm:$0xf]
    %v207 = vld [vmem:[#allocation2 + $0x1c4] sm:$0xf]
    %v208 = vld [vmem:[#allocation2 + $0x1c8] sm:$0xf]
    %v209 = vld [vmem:[#allocation2 + $0x1cc] sm:$0xf]
    %v210 = vld [vmem:[#allocation2 + $0x1d0] sm:$0xf]
    %v211 = vld [vmem:[#allocation2 + $0x1d4] sm:$0xf]
    %v212 = vld [vmem:[#allocation2 + $0x1d8] sm:$0xf]
    %v213 = vld [vmem:[#allocation2 + $0x1dc] sm:$0xf]
    %v214 = vld [vmem:[#allocation2 + $0x1e0] sm:$0xf]
    %v215 = vld [vmem:[#allocation2 + $0x1e4] sm:$0xf]
    %v216 = vld [vmem:[#allocation2 + $0x1e8] sm:$0xf]
    %v217 = vld [vmem:[#allocation2 + $0x1ec] sm:$0xf]
    %v218 = vld [vmem:[#allocation2 + $0x1f0] sm:$0xf]
    %v219 = vld [vmem:[#allocation2 + $0x1f4] sm:$0xf]
    %v220 = vld [vmem:[#allocation2 + $0x1f8] sm:$0xf]
    %v221 = vld [vmem:[#allocation2 + $0x1fc] sm:$0xf]
    %v222 = vld [vmem:[#allocation5] sm:$0xf]
    %v223 = vld [vmem:[#allocation5 + $0x4] sm:$0xf]
    %v224 = vld [vmem:[#allocation5 + $0x8] sm:$0xf]
    %v225 = vld [vmem:[#allocation5 + $0xc] sm:$0xf]
    %v226 = vld [vmem:[#allocation7] sm:$0xf]
    %v227 = vld [vmem:[#allocation7 + $0x4] sm:$0xf]
    %v228 = vld [vmem:[#allocation7 + $0x8] sm:$0xf]
    %v229 = vld [vmem:[#allocation7 + $0xc] sm:$0xf]
    %v358 = vunpack.c.l.b16 %v94
    %v359 = vunpack.c.l.b16 %v95
    %v360 = vunpack.c.l.b16 %v96
    %v361 = vunpack.c.l.b16 %v97
    %v362 = vunpack.c.l.b16 %v98
    %v363 = vunpack.c.l.b16 %v99
    %v364 = vunpack.c.l.b16 %v100
    %v365 = vunpack.c.l.b16 %v101
    %v366 = vunpack.c.l.b16 %v102
    %v367 = vunpack.c.l.b16 %v103
    %v368 = vunpack.c.l.b16 %v104
    %v369 = vunpack.c.l.b16 %v105
    %v370 = vunpack.c.l.b16 %v106
    %v371 = vunpack.c.l.b16 %v107
    %v372 = vunpack.c.l.b16 %v108
    %v373 = vunpack.c.l.b16 %v109
    %v374 = vunpack.c.l.b16 %v110
    %v375 = vunpack.c.l.b16 %v111
    %v376 = vunpack.c.l.b16 %v112
    %v377 = vunpack.c.l.b16 %v113
    %v378 = vunpack.c.l.b16 %v114
    %v379 = vunpack.c.l.b16 %v115
    %v380 = vunpack.c.l.b16 %v116
    %v381 = vunpack.c.l.b16 %v117
    %v382 = vunpack.c.l.b16 %v118
    %v383 = vunpack.c.l.b16 %v119
    %v384 = vunpack.c.l.b16 %v120
    %v385 = vunpack.c.l.b16 %v121
    %v386 = vunpack.c.l.b16 %v122
    %v387 = vunpack.c.l.b16 %v123
    %v388 = vunpack.c.l.b16 %v124
    %v389 = vunpack.c.l.b16 %v125
    %v390 = vunpack.c.l.b16 %v126
    %v391 = vunpack.c.l.b16 %v127
    %v392 = vunpack.c.l.b16 %v128
    %v393 = vunpack.c.l.b16 %v129
    %v394 = vunpack.c.l.b16 %v130
    %v395 = vunpack.c.l.b16 %v131
    %v396 = vunpack.c.l.b16 %v132
    %v397 = vunpack.c.l.b16 %v133
    %v398 = vunpack.c.l.b16 %v134
    %v399 = vunpack.c.l.b16 %v135
    %v400 = vunpack.c.l.b16 %v136
    %v401 = vunpack.c.l.b16 %v137
    %v402 = vunpack.c.l.b16 %v138
    %v403 = vunpack.c.l.b16 %v139
    %v404 = vunpack.c.l.b16 %v140
    %v405 = vunpack.c.l.b16 %v141
    %v406 = vunpack.c.l.b16 %v142
    %v407 = vunpack.c.l.b16 %v143
    %v408 = vunpack.c.l.b16 %v144
    %v409 = vunpack.c.l.b16 %v145
    %v410 = vunpack.c.l.b16 %v146
    %v411 = vunpack.c.l.b16 %v147
    %v412 = vunpack.c.l.b16 %v148
    %v413 = vunpack.c.l.b16 %v149
    %v414 = vunpack.c.l.b16 %v150
    %v415 = vunpack.c.l.b16 %v151
    %v416 = vunpack.c.l.b16 %v152
    %v417 = vunpack.c.l.b16 %v153
    %v418 = vunpack.c.l.b16 %v154
    %v419 = vunpack.c.l.b16 %v155
    %v420 = vunpack.c.l.b16 %v156
    %v421 = vunpack.c.l.b16 %v157
    %v422 = vunpack.c.l.b16 %v158
    %v423 = vunpack.c.l.b16 %v159
    %v424 = vunpack.c.l.b16 %v160
    %v425 = vunpack.c.l.b16 %v161
    %v426 = vunpack.c.l.b16 %v162
    %v427 = vunpack.c.l.b16 %v163
    %v428 = vunpack.c.l.b16 %v164
    %v429 = vunpack.c.l.b16 %v165
    %v430 = vunpack.c.l.b16 %v166
    %v431 = vunpack.c.l.b16 %v167
    %v432 = vunpack.c.l.b16 %v168
    %v433 = vunpack.c.l.b16 %v169
    %v434 = vunpack.c.l.b16 %v170
    %v435 = vunpack.c.l.b16 %v171
    %v436 = vunpack.c.l.b16 %v172
    %v437 = vunpack.c.l.b16 %v173
    %v438 = vunpack.c.l.b16 %v174
    %v439 = vunpack.c.l.b16 %v175
    %v440 = vunpack.c.l.b16 %v176
    %v441 = vunpack.c.l.b16 %v177
    %v442 = vunpack.c.l.b16 %v178
    %v443 = vunpack.c.l.b16 %v179
    %v444 = vunpack.c.l.b16 %v180
    %v445 = vunpack.c.l.b16 %v181
    %v446 = vunpack.c.l.b16 %v182
    %v447 = vunpack.c.l.b16 %v183
    %v448 = vunpack.c.l.b16 %v184
    %v449 = vunpack.c.l.b16 %v185
    %v450 = vunpack.c.l.b16 %v186
    %v451 = vunpack.c.l.b16 %v187
    %v452 = vunpack.c.l.b16 %v188
    %v453 = vunpack.c.l.b16 %v189
    %v454 = vunpack.c.l.b16 %v190
    %v455 = vunpack.c.l.b16 %v191
    %v456 = vunpack.c.l.b16 %v192
    %v457 = vunpack.c.l.b16 %v193
    %v458 = vunpack.c.l.b16 %v194
    %v459 = vunpack.c.l.b16 %v195
    %v460 = vunpack.c.l.b16 %v196
    %v461 = vunpack.c.l.b16 %v197
    %v462 = vunpack.c.l.b16 %v198
    %v463 = vunpack.c.l.b16 %v199
    %v464 = vunpack.c.l.b16 %v200
    %v465 = vunpack.c.l.b16 %v201
    %v466 = vunpack.c.l.b16 %v202
    %v467 = vunpack.c.l.b16 %v203
    %v468 = vunpack.c.l.b16 %v204
    %v469 = vunpack.c.l.b16 %v205
    %v470 = vunpack.c.l.b16 %v206
    %v471 = vunpack.c.l.b16 %v207
    %v472 = vunpack.c.l.b16 %v208
    %v473 = vunpack.c.l.b16 %v209
    %v474 = vunpack.c.l.b16 %v210
    %v475 = vunpack.c.l.b16 %v211
    %v476 = vunpack.c.l.b16 %v212
    %v477 = vunpack.c.l.b16 %v213
    %v478 = vunpack.c.l.b16 %v214
    %v479 = vunpack.c.l.b16 %v215
    %v480 = vunpack.c.l.b16 %v216
    %v481 = vunpack.c.l.b16 %v217
    %v482 = vunpack.c.l.b16 %v218
    %v483 = vunpack.c.l.b16 %v219
    %v484 = vunpack.c.l.b16 %v220
    %v485 = vunpack.c.l.b16 %v221
    %v486 = vpack.c.b16 %v359, %v358
    %v487 = vpack.c.b16 %v361, %v360
    %v488 = vpack.c.b16 %v363, %v362
    %v489 = vpack.c.b16 %v365, %v364
    %v490 = vpack.c.b16 %v367, %v366
    %v491 = vpack.c.b16 %v369, %v368
    %v492 = vpack.c.b16 %v371, %v370
    %v493 = vpack.c.b16 %v373, %v372
    %v494 = vpack.c.b16 %v375, %v374
    %v495 = vpack.c.b16 %v377, %v376
    %v496 = vpack.c.b16 %v379, %v378
    %v497 = vpack.c.b16 %v381, %v380
    %v498 = vpack.c.b16 %v383, %v382
    %v499 = vpack.c.b16 %v385, %v384
    %v500 = vpack.c.b16 %v387, %v386
    %v501 = vpack.c.b16 %v389, %v388
    %v502 = vpack.c.b16 %v391, %v390
    %v503 = vpack.c.b16 %v393, %v392
    %v504 = vpack.c.b16 %v395, %v394
    %v505 = vpack.c.b16 %v397, %v396
    %v506 = vpack.c.b16 %v399, %v398
    %v507 = vpack.c.b16 %v401, %v400
    %v508 = vpack.c.b16 %v403, %v402
    %v509 = vpack.c.b16 %v405, %v404
    %v510 = vpack.c.b16 %v407, %v406
    %v511 = vpack.c.b16 %v409, %v408
    %v512 = vpack.c.b16 %v411, %v410
    %v513 = vpack.c.b16 %v413, %v412
    %v514 = vpack.c.b16 %v415, %v414
    %v515 = vpack.c.b16 %v417, %v416
    %v516 = vpack.c.b16 %v419, %v418
    %v517 = vpack.c.b16 %v421, %v420
    %v518 = vpack.c.b16 %v423, %v422
    %v519 = vpack.c.b16 %v425, %v424
    %v520 = vpack.c.b16 %v427, %v426
    %v521 = vpack.c.b16 %v429, %v428
    %v522 = vpack.c.b16 %v431, %v430
    %v523 = vpack.c.b16 %v433, %v432
    %v524 = vpack.c.b16 %v435, %v434
    %v525 = vpack.c.b16 %v437, %v436
    %v526 = vpack.c.b16 %v439, %v438
    %v527 = vpack.c.b16 %v441, %v440
    %v528 = vpack.c.b16 %v443, %v442
    %v529 = vpack.c.b16 %v445, %v444
    %v530 = vpack.c.b16 %v447, %v446
    %v531 = vpack.c.b16 %v449, %v448
    %v532 = vpack.c.b16 %v451, %v450
    %v533 = vpack.c.b16 %v453, %v452
    %v534 = vpack.c.b16 %v455, %v454
    %v535 = vpack.c.b16 %v457, %v456
    %v536 = vpack.c.b16 %v459, %v458
    %v537 = vpack.c.b16 %v461, %v460
    %v538 = vpack.c.b16 %v463, %v462
    %v539 = vpack.c.b16 %v465, %v464
    %v540 = vpack.c.b16 %v467, %v466
    %v541 = vpack.c.b16 %v469, %v468
    %v542 = vpack.c.b16 %v471, %v470
    %v543 = vpack.c.b16 %v473, %v472
    %v544 = vpack.c.b16 %v475, %v474
    %v545 = vpack.c.b16 %v477, %v476
    %v546 = vpack.c.b16 %v479, %v478
    %v547 = vpack.c.b16 %v481, %v480
    %v548 = vpack.c.b16 %v483, %v482
    %v549 = vpack.c.b16 %v485, %v484
    %v618 = vunpack.c.l.b16 %v222
    %v619 = vunpack.c.l.b16 %v223
    %v620 = vunpack.c.l.b16 %v224
    %v621 = vunpack.c.l.b16 %v225
    %v622 = vpack.c.b16 %v619, %v618
    %v623 = vpack.c.b16 %v621, %v620
    %v630 = vunpack.c.l.b16 %v226
    %v631 = vunpack.c.l.b16 %v227
    %v632 = vunpack.c.l.b16 %v228
    %v633 = vunpack.c.l.b16 %v229
    %v634 = vpack.c.b16 %v631, %v630
    %v635 = vpack.c.b16 %v633, %v632
    %s638 = scalar_lea.vmem [#allocation8], 192
    %v639 = vld [vmem:[%s638] sm:$0xf]
    %v640 = vld [vmem:[%s638 + $0x4] sm:$0xf]
    %v641 = vld [vmem:[%s638 + $0x8] sm:$0xf]
    %v642 = vld [vmem:[%s638 + $0xc] sm:$0xf]
    %v643 = vld [vmem:[%s638 + $0x10] sm:$0xf]
    %v644 = vld [vmem:[%s638 + $0x14] sm:$0xf]
    %v645 = vld [vmem:[%s638 + $0x18] sm:$0xf]
    %v646 = vld [vmem:[%s638 + $0x1c] sm:$0xf]
    %v647 = vld [vmem:[%s638 + $0x20] sm:$0xf]
    %v648 = vld [vmem:[%s638 + $0x24] sm:$0xf]
    %v649 = vld [vmem:[%s638 + $0x28] sm:$0xf]
    %v650 = vld [vmem:[%s638 + $0x2c] sm:$0xf]
    %v651 = vld [vmem:[%s638 + $0x30] sm:$0xf]
    %v652 = vld [vmem:[%s638 + $0x34] sm:$0xf]
    %v653 = vld [vmem:[%s638 + $0x38] sm:$0xf]
    %v654 = vld [vmem:[%s638 + $0x3c] sm:$0xf]
    %v655 = vld [vmem:[%s638 + $0x40] sm:$0xf]
    %v656 = vld [vmem:[%s638 + $0x44] sm:$0xf]
    %v657 = vld [vmem:[%s638 + $0x48] sm:$0xf]
    %v658 = vld [vmem:[%s638 + $0x4c] sm:$0xf]
    %v659 = vld [vmem:[%s638 + $0x50] sm:$0xf]
    %v660 = vld [vmem:[%s638 + $0x54] sm:$0xf]
    %v661 = vld [vmem:[%s638 + $0x58] sm:$0xf]
    %v662 = vld [vmem:[%s638 + $0x5c] sm:$0xf]
    %v663 = vld [vmem:[%s638 + $0x60] sm:$0xf]
    %v664 = vld [vmem:[%s638 + $0x64] sm:$0xf]
    %v665 = vld [vmem:[%s638 + $0x68] sm:$0xf]
    %v666 = vld [vmem:[%s638 + $0x6c] sm:$0xf]
    %v667 = vld [vmem:[%s638 + $0x70] sm:$0xf]
    %v668 = vld [vmem:[%s638 + $0x74] sm:$0xf]
    %v669 = vld [vmem:[%s638 + $0x78] sm:$0xf]
    %v670 = vld [vmem:[%s638 + $0x7c] sm:$0xf]
    %v671 = vld [vmem:[%s638 + $0x80] sm:$0xf]
    %v672 = vld [vmem:[%s638 + $0x84] sm:$0xf]
    %v673 = vld [vmem:[%s638 + $0x88] sm:$0xf]
    %v674 = vld [vmem:[%s638 + $0x8c] sm:$0xf]
    %v675 = vld [vmem:[%s638 + $0x90] sm:$0xf]
    %v676 = vld [vmem:[%s638 + $0x94] sm:$0xf]
    %v677 = vld [vmem:[%s638 + $0x98] sm:$0xf]
    %v678 = vld [vmem:[%s638 + $0x9c] sm:$0xf]
    %v679 = vld [vmem:[%s638 + $0xa0] sm:$0xf]
    %v680 = vld [vmem:[%s638 + $0xa4] sm:$0xf]
    %v681 = vld [vmem:[%s638 + $0xa8] sm:$0xf]
    %v682 = vld [vmem:[%s638 + $0xac] sm:$0xf]
    %v683 = vld [vmem:[%s638 + $0xb0] sm:$0xf]
    %v684 = vld [vmem:[%s638 + $0xb4] sm:$0xf]
    %v685 = vld [vmem:[%s638 + $0xb8] sm:$0xf]
    %v686 = vld [vmem:[%s638 + $0xbc] sm:$0xf]
    %v735 = vunpack.c.l.b16 %v639
    %v736 = vunpack.c.l.b16 %v640
    %v737 = vunpack.c.l.b16 %v641
    %v738 = vunpack.c.l.b16 %v642
    %v739 = vunpack.c.l.b16 %v643
    %v740 = vunpack.c.l.b16 %v644
    %v741 = vunpack.c.l.b16 %v645
    %v742 = vunpack.c.l.b16 %v646
    %v743 = vunpack.c.l.b16 %v647
    %v744 = vunpack.c.l.b16 %v648
    %v745 = vunpack.c.l.b16 %v649
    %v746 = vunpack.c.l.b16 %v650
    %v747 = vunpack.c.l.b16 %v651
    %v748 = vunpack.c.l.b16 %v652
    %v749 = vunpack.c.l.b16 %v653
    %v750 = vunpack.c.l.b16 %v654
    %v751 = vunpack.c.l.b16 %v655
    %v752 = vunpack.c.l.b16 %v656
    %v753 = vunpack.c.l.b16 %v657
    %v754 = vunpack.c.l.b16 %v658
    %v755 = vunpack.c.l.b16 %v659
    %v756 = vunpack.c.l.b16 %v660
    %v757 = vunpack.c.l.b16 %v661
    %v758 = vunpack.c.l.b16 %v662
    %v759 = vunpack.c.l.b16 %v663
    %v760 = vunpack.c.l.b16 %v664
    %v761 = vunpack.c.l.b16 %v665
    %v762 = vunpack.c.l.b16 %v666
    %v763 = vunpack.c.l.b16 %v667
    %v764 = vunpack.c.l.b16 %v668
    %v765 = vunpack.c.l.b16 %v669
    %v766 = vunpack.c.l.b16 %v670
    %v767 = vunpack.c.l.b16 %v671
    %v768 = vunpack.c.l.b16 %v672
    %v769 = vunpack.c.l.b16 %v673
    %v770 = vunpack.c.l.b16 %v674
    %v771 = vunpack.c.l.b16 %v675
    %v772 = vunpack.c.l.b16 %v676
    %v773 = vunpack.c.l.b16 %v677
    %v774 = vunpack.c.l.b16 %v678
    %v775 = vunpack.c.l.b16 %v679
    %v776 = vunpack.c.l.b16 %v680
    %v777 = vunpack.c.l.b16 %v681
    %v778 = vunpack.c.l.b16 %v682
    %v779 = vunpack.c.l.b16 %v683
    %v780 = vunpack.c.l.b16 %v684
    %v781 = vunpack.c.l.b16 %v685
    %v782 = vunpack.c.l.b16 %v686
    %v783 = vpack.c.b16 %v736, %v735
    %v784 = vpack.c.b16 %v738, %v737
    %v785 = vpack.c.b16 %v740, %v739
    %v786 = vpack.c.b16 %v742, %v741
    %v787 = vpack.c.b16 %v744, %v743
    %v788 = vpack.c.b16 %v746, %v745
    %v789 = vpack.c.b16 %v748, %v747
    %v790 = vpack.c.b16 %v750, %v749
    %v791 = vpack.c.b16 %v752, %v751
    %v792 = vpack.c.b16 %v754, %v753
    %v793 = vpack.c.b16 %v756, %v755
    %v794 = vpack.c.b16 %v758, %v757
    %v795 = vpack.c.b16 %v760, %v759
    %v796 = vpack.c.b16 %v762, %v761
    %v797 = vpack.c.b16 %v764, %v763
    %v798 = vpack.c.b16 %v766, %v765
    %v799 = vpack.c.b16 %v768, %v767
    %v800 = vpack.c.b16 %v770, %v769
    %v801 = vpack.c.b16 %v772, %v771
    %v802 = vpack.c.b16 %v774, %v773
    %v803 = vpack.c.b16 %v776, %v775
    %v804 = vpack.c.b16 %v778, %v777
    %v805 = vpack.c.b16 %v780, %v779
    %v806 = vpack.c.b16 %v782, %v781
    %831 = vmatprep.subr.bf16.mxu0 0
    %832 = vmatpush1.bf16.msra.mxu0 %v783
    %833 = vmatprep.subr.bf16.mxu0 0
    %834 = vmatpush1.bf16.msra.mxu0 %v784
    %835 = vmatprep.subr.bf16.mxu0 0
    %836 = vmatpush1.bf16.msra.mxu0 %v785
    %837 = vmatprep.subr.bf16.mxu0 0
    %838 = vmatpush1.bf16.msra.mxu0 %v786
    %839 = vmatprep.subr.bf16.mxu0 0
    %840 = vmatpush1.bf16.msra.mxu0 %v787
    %841 = vmatprep.subr.bf16.mxu0 0
    %842 = vmatpush1.bf16.msra.mxu0 %v788
    %843 = vmatprep.subr.bf16.mxu0 0
    %844 = vmatpush1.bf16.msra.mxu0 %v789
    %845 = vmatprep.subr.bf16.mxu0 0
    %846 = vmatpush1.bf16.msra.mxu0 %v790
    %847 = vmatprep.subr.bf16.mxu0 0
    %848 = vmatpush1.bf16.msra.mxu0 %v791
    %849 = vmatprep.subr.bf16.mxu0 0
    %850 = vmatpush1.bf16.msra.mxu0 %v792
    %851 = vmatprep.subr.bf16.mxu0 0
    %852 = vmatpush1.bf16.msra.mxu0 %v793
    %853 = vmatprep.subr.bf16.mxu0 0
    %854 = vmatpush1.bf16.msra.mxu0 %v794
    %855 = vmatprep.subr.bf16.mxu0 0
    %856 = vmatpush1.bf16.msra.mxu0 %v795
    %857 = vmatprep.subr.bf16.mxu0 0
    %858 = vmatpush1.bf16.msra.mxu0 %v796
    %859 = vmatprep.subr.bf16.mxu0 0
    %860 = vmatpush1.bf16.msra.mxu0 %v797
    %861 = vmatprep.subr.bf16.mxu0 0
    %862 = vmatpush1.bf16.msra.mxu0 %v798
    %863 = vmatprep.mubr.bf16.mxu0 %v488
    %864 = vmatmul.mubr.bf16.gmra.mrb[0].mxu0 %v486
    %v865 = vpop.f32.mrb[0].mxu0
    %v866 = vadd.f32 0.0, %v865
    %v867 = vpop.f32.mrb[0].mxu0
    %v868 = vpop.f32.mrb[0].mxu0
    %v869 = vadd.f32 0.0, %v868
    %v870 = vpop.f32.mrb[0].mxu0
    %871 = vmatprep.mubr.bf16.mxu0 %v489
    %872 = vmatmul.mubr.bf16.gmra.mrb[0].mxu0 %v487
    %v873 = vpop.f32.mrb[0].mxu0
    %v874 = vadd.f32 0.0, %v873
    %v875 = vpop.f32.mrb[0].mxu0
    %v876 = vpop.f32.mrb[0].mxu0
    %v877 = vadd.f32 0.0, %v876
    %v878 = vpop.f32.mrb[0].mxu0
    %879 = vmatprep.mubr.bf16.mxu0 %v490
    %880 = vmatmul.mubr.bf16.gmra.mrb[0].mxu0 %v488
    %v881 = vpop.f32.mrb[0].mxu0
    %v882 = vadd.f32 0.0, %v881
    %v883 = vpop.f32.mrb[0].mxu0
    %v884 = vpop.f32.mrb[0].mxu0
    %v885 = vadd.f32 0.0, %v884
    %v886 = vpop.f32.mrb[0].mxu0
    %887 = vmatprep.mubr.bf16.mxu0 %v491
    %888 = vmatmul.mubr.bf16.gmra.mrb[0].mxu0 %v489
    %v889 = vpop.f32.mrb[0].mxu0
    %v890 = vadd.f32 0.0, %v889
    %v891 = vpop.f32.mrb[0].mxu0
    %v892 = vpop.f32.mrb[0].mxu0
    %v893 = vadd.f32 0.0, %v892
    %v894 = vpop.f32.mrb[0].mxu0
    %895 = vmatprep.mubr.bf16.mxu0 %v492
    %896 = vmatmul.mubr.bf16.gmra.mrb[0].mxu0 %v490
    %v897 = vpop.f32.mrb[0].mxu0
    %v898 = vadd.f32 0.0, %v897
    %v899 = vpop.f32.mrb[0].mxu0
    %v900 = vpop.f32.mrb[0].mxu0
    %v901 = vadd.f32 0.0, %v900
    %v902 = vpop.f32.mrb[0].mxu0
    %903 = vmatprep.mubr.bf16.mxu0 %v493
    %904 = vmatmul.mubr.bf16.gmra.mrb[0].mxu0 %v491
    %v905 = vpop.f32.mrb[0].mxu0
    %v906 = vadd.f32 0.0, %v905
    %v907 = vpop.f32.mrb[0].mxu0
    %v908 = vpop.f32.mrb[0].mxu0
    %v909 = vadd.f32 0.0, %v908
    %v910 = vpop.f32.mrb[0].mxu0
    %911 = vmatprep.mubr.bf16.mxu0 %v494
    %912 = vmatmul.mubr.bf16.gmra.mrb[0].mxu0 %v492
    %v913 = vpop.f32.mrb[0].mxu0
    %v914 = vadd.f32 0.0, %v913
    %v915 = vpop.f32.mrb[0].mxu0
    %v916 = vpop.f32.mrb[0].mxu0
    %v917 = vadd.f32 0.0, %v916
    %v918 = vpop.f32.mrb[0].mxu0
    %919 = vmatprep.mubr.bf16.mxu0 %v495
    %920 = vmatmul.mubr.bf16.gmra.mrb[0].mxu0 %v493
    %v921 = vpop.f32.mrb[0].mxu0
    %v922 = vadd.f32 0.0, %v921
    %v923 = vpop.f32.mrb[0].mxu0
    %v924 = vpop.f32.mrb[0].mxu0
    %v925 = vadd.f32 0.0, %v924
    %v926 = vpop.f32.mrb[0].mxu0
    %927 = vmatprep.mubr.bf16.mxu0 %v496
    %928 = vmatmul.mubr.bf16.gmra.mrb[0].mxu0 %v494
    %v929 = vpop.f32.mrb[0].mxu0
    %v930 = vadd.f32 0.0, %v929
    %v931 = vpop.f32.mrb[0].mxu0
    %v932 = vpop.f32.mrb[0].mxu0
    %v933 = vadd.f32 0.0, %v932
    %v934 = vpop.f32.mrb[0].mxu0
    %935 = vmatprep.mubr.bf16.mxu0 %v497
    %936 = vmatmul.mubr.bf16.gmra.mrb[0].mxu0 %v495
    %v937 = vpop.f32.mrb[0].mxu0
    %v938 = vadd.f32 0.0, %v937
    %v939 = vpop.f32.mrb[0].mxu0
    %v940 = vpop.f32.mrb[0].mxu0
    %v941 = vadd.f32 0.0, %v940
    %v942 = vpop.f32.mrb[0].mxu0
    %943 = vmatprep.mubr.bf16.mxu0 %v498
    %944 = vmatmul.mubr.bf16.gmra.mrb[0].mxu0 %v496
    %v945 = vpop.f32.mrb[0].mxu0
    %v946 = vadd.f32 0.0, %v945
    %v947 = vpop.f32.mrb[0].mxu0
    %v948 = vpop.f32.mrb[0].mxu0
    %v949 = vadd.f32 0.0, %v948
    %v950 = vpop.f32.mrb[0].mxu0
    %951 = vmatprep.mubr.bf16.mxu0 %v499
    %952 = vmatmul.mubr.bf16.gmra.mrb[0].mxu0 %v497
    %v953 = vpop.f32.mrb[0].mxu0
    %v954 = vadd.f32 0.0, %v953
    %v955 = vpop.f32.mrb[0].mxu0
    %v956 = vpop.f32.mrb[0].mxu0
    %v957 = vadd.f32 0.0, %v956
    %v958 = vpop.f32.mrb[0].mxu0
    %959 = vmatprep.mubr.bf16.mxu0 %v500
    %960 = vmatmul.mubr.bf16.gmra.mrb[0].mxu0 %v498
    %v961 = vpop.f32.mrb[0].mxu0
    %v962 = vadd.f32 0.0, %v961
    %v963 = vpop.f32.mrb[0].mxu0
    %v964 = vpop.f32.mrb[0].mxu0
    %v965 = vadd.f32 0.0, %v964
    %v966 = vpop.f32.mrb[0].mxu0
    %967 = vmatprep.mubr.bf16.mxu0 %v501
    %968 = vmatmul.mubr.bf16.gmra.mrb[0].mxu0 %v499
    %v969 = vpop.f32.mrb[0].mxu0
    %v970 = vadd.f32 0.0, %v969
    %v971 = vpop.f32.mrb[0].mxu0
    %v972 = vpop.f32.mrb[0].mxu0
    %v973 = vadd.f32 0.0, %v972
    %v974 = vpop.f32.mrb[0].mxu0
    %975 = vmatprep.mubr.bf16.mxu0 %v502
    %976 = vmatmul.mubr.bf16.gmra.mrb[0].mxu0 %v500
    %v977 = vpop.f32.mrb[0].mxu0
    %v978 = vadd.f32 0.0, %v977
    %v979 = vpop.f32.mrb[0].mxu0
    %v980 = vpop.f32.mrb[0].mxu0
    %v981 = vadd.f32 0.0, %v980
    %v982 = vpop.f32.mrb[0].mxu0
    %983 = vmatprep.mubr.bf16.mxu0 %v503
    %984 = vmatmul.mubr.bf16.gmra.mrb[0].mxu0 %v501
    %v985 = vpop.f32.mrb[0].mxu0
    %v986 = vadd.f32 0.0, %v985
    %v987 = vpop.f32.mrb[0].mxu0
    %v988 = vpop.f32.mrb[0].mxu0
    %v989 = vadd.f32 0.0, %v988
    %v990 = vpop.f32.mrb[0].mxu0
    %991 = vmatprep.mubr.bf16.mxu0 %v504
    %992 = vmatmul.mubr.bf16.gmra.mrb[0].mxu0 %v502
    %v993 = vpop.f32.mrb[0].mxu0
    %v994 = vadd.f32 0.0, %v993
    %v995 = vpop.f32.mrb[0].mxu0
    %v996 = vpop.f32.mrb[0].mxu0
    %v997 = vadd.f32 0.0, %v996
    %v998 = vpop.f32.mrb[0].mxu0
    %999 = vmatprep.mubr.bf16.mxu0 %v505
    %1000 = vmatmul.mubr.bf16.gmra.mrb[0].mxu0 %v503
    %v1001 = vpop.f32.mrb[0].mxu0
    %v1002 = vadd.f32 0.0, %v1001
    %v1003 = vpop.f32.mrb[0].mxu0
    %v1004 = vpop.f32.mrb[0].mxu0
    %v1005 = vadd.f32 0.0, %v1004
    %v1006 = vpop.f32.mrb[0].mxu0
    %1007 = vmatprep.mubr.bf16.mxu0 %v506
    %1008 = vmatmul.mubr.bf16.gmra.mrb[0].mxu0 %v504
    %v1009 = vpop.f32.mrb[0].mxu0
    %v1010 = vadd.f32 0.0, %v1009
    %v1011 = vpop.f32.mrb[0].mxu0
    %v1012 = vpop.f32.mrb[0].mxu0
    %v1013 = vadd.f32 0.0, %v1012
    %v1014 = vpop.f32.mrb[0].mxu0
    %1015 = vmatprep.mubr.bf16.mxu0 %v507
    %1016 = vmatmul.mubr.bf16.gmra.mrb[0].mxu0 %v505
    %v1017 = vpop.f32.mrb[0].mxu0
    %v1018 = vadd.f32 0.0, %v1017
    %v1019 = vpop.f32.mrb[0].mxu0
    %v1020 = vpop.f32.mrb[0].mxu0
    %v1021 = vadd.f32 0.0, %v1020
    %v1022 = vpop.f32.mrb[0].mxu0
    %1023 = vmatprep.mubr.bf16.mxu0 %v508
    %1024 = vmatmul.mubr.bf16.gmra.mrb[0].mxu0 %v506
    %v1025 = vpop.f32.mrb[0].mxu0
    %v1026 = vadd.f32 0.0, %v1025
    %v1027 = vpop.f32.mrb[0].mxu0
    %v1028 = vpop.f32.mrb[0].mxu0
    %v1029 = vadd.f32 0.0, %v1028
    %v1030 = vpop.f32.mrb[0].mxu0
    %1031 = vmatprep.mubr.bf16.mxu0 %v509
    %1032 = vmatmul.mubr.bf16.gmra.mrb[0].mxu0 %v507
    %v1033 = vpop.f32.mrb[0].mxu0
    %v1034 = vadd.f32 0.0, %v1033
    %v1035 = vpop.f32.mrb[0].mxu0
    %v1036 = vpop.f32.mrb[0].mxu0
    %v1037 = vadd.f32 0.0, %v1036
    %v1038 = vpop.f32.mrb[0].mxu0
    %1039 = vmatprep.mubr.bf16.mxu0 %v510
    %1040 = vmatmul.mubr.bf16.gmra.mrb[0].mxu0 %v508
    %v1041 = vpop.f32.mrb[0].mxu0
    %v1042 = vadd.f32 0.0, %v1041
    %v1043 = vpop.f32.mrb[0].mxu0
    %v1044 = vpop.f32.mrb[0].mxu0
    %v1045 = vadd.f32 0.0, %v1044
    %v1046 = vpop.f32.mrb[0].mxu0
    %1047 = vmatprep.mubr.bf16.mxu0 %v511
    %1048 = vmatmul.mubr.bf16.gmra.mrb[0].mxu0 %v509
    %v1049 = vpop.f32.mrb[0].mxu0
    %v1050 = vadd.f32 0.0, %v1049
    %v1051 = vpop.f32.mrb[0].mxu0
    %v1052 = vpop.f32.mrb[0].mxu0
    %v1053 = vadd.f32 0.0, %v1052
    %v1054 = vpop.f32.mrb[0].mxu0
    %1055 = vmatprep.mubr.bf16.mxu0 %v512
    %1056 = vmatmul.mubr.bf16.gmra.mrb[0].mxu0 %v510
    %v1057 = vpop.f32.mrb[0].mxu0
    %v1058 = vadd.f32 0.0, %v1057
    %v1059 = vpop.f32.mrb[0].mxu0
    %v1060 = vpop.f32.mrb[0].mxu0
    %v1061 = vadd.f32 0.0, %v1060
    %v1062 = vpop.f32.mrb[0].mxu0
    %1063 = vmatprep.mubr.bf16.mxu0 %v513
    %1064 = vmatmul.mubr.bf16.gmra.mrb[0].mxu0 %v511
    %v1065 = vpop.f32.mrb[0].mxu0
    %v1066 = vadd.f32 0.0, %v1065
    %v1067 = vpop.f32.mrb[0].mxu0
    %v1068 = vpop.f32.mrb[0].mxu0
    %v1069 = vadd.f32 0.0, %v1068
    %v1070 = vpop.f32.mrb[0].mxu0
    %1071 = vmatprep.mubr.bf16.mxu0 %v514
    %1072 = vmatmul.mubr.bf16.gmra.mrb[0].mxu0 %v512
    %v1073 = vpop.f32.mrb[0].mxu0
    %v1074 = vadd.f32 0.0, %v1073
    %v1075 = vpop.f32.mrb[0].mxu0
    %v1076 = vpop.f32.mrb[0].mxu0
    %v1077 = vadd.f32 0.0, %v1076
    %v1078 = vpop.f32.mrb[0].mxu0
    %1079 = vmatprep.mubr.bf16.mxu0 %v515
    %1080 = vmatmul.mubr.bf16.gmra.mrb[0].mxu0 %v513
    %v1081 = vpop.f32.mrb[0].mxu0
    %v1082 = vadd.f32 0.0, %v1081
    %v1083 = vpop.f32.mrb[0].mxu0
    %v1084 = vpop.f32.mrb[0].mxu0
    %v1085 = vadd.f32 0.0, %v1084
    %v1086 = vpop.f32.mrb[0].mxu0
    %1087 = vmatprep.mubr.bf16.mxu0 %v516
    %1088 = vmatmul.mubr.bf16.gmra.mrb[0].mxu0 %v514
    %v1089 = vpop.f32.mrb[0].mxu0
    %v1090 = vadd.f32 0.0, %v1089
    %v1091 = vpop.f32.mrb[0].mxu0
    %v1092 = vpop.f32.mrb[0].mxu0
    %v1093 = vadd.f32 0.0, %v1092
    %v1094 = vpop.f32.mrb[0].mxu0
    %1095 = vmatprep.mubr.bf16.mxu0 %v517
    %1096 = vmatmul.mubr.bf16.gmra.mrb[0].mxu0 %v515
    %v1097 = vpop.f32.mrb[0].mxu0
    %v1098 = vadd.f32 0.0, %v1097
    %v1099 = vpop.f32.mrb[0].mxu0
    %v1100 = vpop.f32.mrb[0].mxu0
    %v1101 = vadd.f32 0.0, %v1100
    %v1102 = vpop.f32.mrb[0].mxu0
    %1103 = vmatprep.mubr.bf16.mxu0 %v518
    %1104 = vmatmul.mubr.bf16.gmra.mrb[0].mxu0 %v516
    %v1105 = vpop.f32.mrb[0].mxu0
    %v1106 = vadd.f32 0.0, %v1105
    %v1107 = vpop.f32.mrb[0].mxu0
    %v1108 = vpop.f32.mrb[0].mxu0
    %v1109 = vadd.f32 0.0, %v1108
    %v1110 = vpop.f32.mrb[0].mxu0
    %1111 = vmatprep.mubr.bf16.mxu0 %v519
    %1112 = vmatmul.mubr.bf16.gmra.mrb[0].mxu0 %v517
    %v1113 = vpop.f32.mrb[0].mxu0
    %v1114 = vadd.f32 0.0, %v1113
    %v1115 = vpop.f32.mrb[0].mxu0
    %v1116 = vpop.f32.mrb[0].mxu0
    %v1117 = vadd.f32 0.0, %v1116
    %v1118 = vpop.f32.mrb[0].mxu0
    %1119 = vmatprep.mubr.bf16.mxu0 %v520
    %1120 = vmatmul.mubr.bf16.gmra.mrb[0].mxu0 %v518
    %v1121 = vpop.f32.mrb[0].mxu0
    %v1122 = vadd.f32 0.0, %v1121
    %v1123 = vpop.f32.mrb[0].mxu0
    %v1124 = vpop.f32.mrb[0].mxu0
    %v1125 = vadd.f32 0.0, %v1124
    %v1126 = vpop.f32.mrb[0].mxu0
    %1127 = vmatprep.mubr.bf16.mxu0 %v521
    %1128 = vmatmul.mubr.bf16.gmra.mrb[0].mxu0 %v519
    %v1129 = vpop.f32.mrb[0].mxu0
    %v1130 = vadd.f32 0.0, %v1129
    %v1131 = vpop.f32.mrb[0].mxu0
    %v1132 = vpop.f32.mrb[0].mxu0
    %v1133 = vadd.f32 0.0, %v1132
    %v1134 = vpop.f32.mrb[0].mxu0
    %1135 = vmatprep.mubr.bf16.mxu0 %v522
    %1136 = vmatmul.mubr.bf16.gmra.mrb[0].mxu0 %v520
    %v1137 = vpop.f32.mrb[0].mxu0
    %v1138 = vadd.f32 0.0, %v1137
    %v1139 = vpop.f32.mrb[0].mxu0
    %v1140 = vpop.f32.mrb[0].mxu0
    %v1141 = vadd.f32 0.0, %v1140
    %v1142 = vpop.f32.mrb[0].mxu0
    %1143 = vmatprep.mubr.bf16.mxu0 %v523
    %1144 = vmatmul.mubr.bf16.gmra.mrb[0].mxu0 %v521
    %v1145 = vpop.f32.mrb[0].mxu0
    %v1146 = vadd.f32 0.0, %v1145
    %v1147 = vpop.f32.mrb[0].mxu0
    %v1148 = vpop.f32.mrb[0].mxu0
    %v1149 = vadd.f32 0.0, %v1148
    %v1150 = vpop.f32.mrb[0].mxu0
    %1151 = vmatprep.mubr.bf16.mxu0 %v524
    %1152 = vmatmul.mubr.bf16.gmra.mrb[0].mxu0 %v522
    %v1153 = vpop.f32.mrb[0].mxu0
    %v1154 = vadd.f32 0.0, %v1153
    %v1155 = vpop.f32.mrb[0].mxu0
    %v1156 = vpop.f32.mrb[0].mxu0
    %v1157 = vadd.f32 0.0, %v1156
    %v1158 = vpop.f32.mrb[0].mxu0
    %1159 = vmatprep.mubr.bf16.mxu0 %v525
    %1160 = vmatmul.mubr.bf16.gmra.mrb[0].mxu0 %v523
    %v1161 = vpop.f32.mrb[0].mxu0
    %v1162 = vadd.f32 0.0, %v1161
    %v1163 = vpop.f32.mrb[0].mxu0
    %v1164 = vpop.f32.mrb[0].mxu0
    %v1165 = vadd.f32 0.0, %v1164
    %v1166 = vpop.f32.mrb[0].mxu0
    %1167 = vmatprep.mubr.bf16.mxu0 %v526
    %1168 = vmatmul.mubr.bf16.gmra.mrb[0].mxu0 %v524
    %v1169 = vpop.f32.mrb[0].mxu0
    %v1170 = vadd.f32 0.0, %v1169
    %v1171 = vpop.f32.mrb[0].mxu0
    %v1172 = vpop.f32.mrb[0].mxu0
    %v1173 = vadd.f32 0.0, %v1172
    %v1174 = vpop.f32.mrb[0].mxu0
    %1175 = vmatprep.mubr.bf16.mxu0 %v527
    %1176 = vmatmul.mubr.bf16.gmra.mrb[0].mxu0 %v525
    %v1177 = vpop.f32.mrb[0].mxu0
    %v1178 = vadd.f32 0.0, %v1177
    %v1179 = vpop.f32.mrb[0].mxu0
    %v1180 = vpop.f32.mrb[0].mxu0
    %v1181 = vadd.f32 0.0, %v1180
    %v1182 = vpop.f32.mrb[0].mxu0
    %1183 = vmatprep.mubr.bf16.mxu0 %v528
    %1184 = vmatmul.mubr.bf16.gmra.mrb[0].mxu0 %v526
    %v1185 = vpop.f32.mrb[0].mxu0
    %v1186 = vadd.f32 0.0, %v1185
    %v1187 = vpop.f32.mrb[0].mxu0
    %v1188 = vpop.f32.mrb[0].mxu0
    %v1189 = vadd.f32 0.0, %v1188
    %v1190 = vpop.f32.mrb[0].mxu0
    %1191 = vmatprep.mubr.bf16.mxu0 %v529
    %1192 = vmatmul.mubr.bf16.gmra.mrb[0].mxu0 %v527
    %v1193 = vpop.f32.mrb[0].mxu0
    %v1194 = vadd.f32 0.0, %v1193
    %v1195 = vpop.f32.mrb[0].mxu0
    %v1196 = vpop.f32.mrb[0].mxu0
    %v1197 = vadd.f32 0.0, %v1196
    %v1198 = vpop.f32.mrb[0].mxu0
    %1199 = vmatprep.mubr.bf16.mxu0 %v530
    %1200 = vmatmul.mubr.bf16.gmra.mrb[0].mxu0 %v528
    %v1201 = vpop.f32.mrb[0].mxu0
    %v1202 = vadd.f32 0.0, %v1201
    %v1203 = vpop.f32.mrb[0].mxu0
    %v1204 = vpop.f32.mrb[0].mxu0
    %v1205 = vadd.f32 0.0, %v1204
    %v1206 = vpop.f32.mrb[0].mxu0
    %1207 = vmatprep.mubr.bf16.mxu0 %v531
    %1208 = vmatmul.mubr.bf16.gmra.mrb[0].mxu0 %v529
    %v1209 = vpop.f32.mrb[0].mxu0
    %v1210 = vadd.f32 0.0, %v1209
    %v1211 = vpop.f32.mrb[0].mxu0
    %v1212 = vpop.f32.mrb[0].mxu0
    %v1213 = vadd.f32 0.0, %v1212
    %v1214 = vpop.f32.mrb[0].mxu0
    %1215 = vmatprep.mubr.bf16.mxu0 %v532
    %1216 = vmatmul.mubr.bf16.gmra.mrb[0].mxu0 %v530
    %v1217 = vpop.f32.mrb[0].mxu0
    %v1218 = vadd.f32 0.0, %v1217
    %v1219 = vpop.f32.mrb[0].mxu0
    %v1220 = vpop.f32.mrb[0].mxu0
    %v1221 = vadd.f32 0.0, %v1220
    %v1222 = vpop.f32.mrb[0].mxu0
    %1223 = vmatprep.mubr.bf16.mxu0 %v533
    %1224 = vmatmul.mubr.bf16.gmra.mrb[0].mxu0 %v531
    %v1225 = vpop.f32.mrb[0].mxu0
    %v1226 = vadd.f32 0.0, %v1225
    %v1227 = vpop.f32.mrb[0].mxu0
    %v1228 = vpop.f32.mrb[0].mxu0
    %v1229 = vadd.f32 0.0, %v1228
    %v1230 = vpop.f32.mrb[0].mxu0
    %1231 = vmatprep.mubr.bf16.mxu0 %v534
    %1232 = vmatmul.mubr.bf16.gmra.mrb[0].mxu0 %v532
    %v1233 = vpop.f32.mrb[0].mxu0
    %v1234 = vadd.f32 0.0, %v1233
    %v1235 = vpop.f32.mrb[0].mxu0
    %v1236 = vpop.f32.mrb[0].mxu0
    %v1237 = vadd.f32 0.0, %v1236
    %v1238 = vpop.f32.mrb[0].mxu0
    %1239 = vmatprep.mubr.bf16.mxu0 %v535
    %1240 = vmatmul.mubr.bf16.gmra.mrb[0].mxu0 %v533
    %v1241 = vpop.f32.mrb[0].mxu0
    %v1242 = vadd.f32 0.0, %v1241
    %v1243 = vpop.f32.mrb[0].mxu0
    %v1244 = vpop.f32.mrb[0].mxu0
    %v1245 = vadd.f32 0.0, %v1244
    %v1246 = vpop.f32.mrb[0].mxu0
    %1247 = vmatprep.mubr.bf16.mxu0 %v536
    %1248 = vmatmul.mubr.bf16.gmra.mrb[0].mxu0 %v534
    %v1249 = vpop.f32.mrb[0].mxu0
    %v1250 = vadd.f32 0.0, %v1249
    %v1251 = vpop.f32.mrb[0].mxu0
    %v1252 = vpop.f32.mrb[0].mxu0
    %v1253 = vadd.f32 0.0, %v1252
    %v1254 = vpop.f32.mrb[0].mxu0
    %1255 = vmatprep.mubr.bf16.mxu0 %v537
    %1256 = vmatmul.mubr.bf16.gmra.mrb[0].mxu0 %v535
    %v1257 = vpop.f32.mrb[0].mxu0
    %v1258 = vadd.f32 0.0, %v1257
    %v1259 = vpop.f32.mrb[0].mxu0
    %v1260 = vpop.f32.mrb[0].mxu0
    %v1261 = vadd.f32 0.0, %v1260
    %v1262 = vpop.f32.mrb[0].mxu0
    %1263 = vmatprep.mubr.bf16.mxu0 %v538
    %1264 = vmatmul.mubr.bf16.gmra.mrb[0].mxu0 %v536
    %v1265 = vpop.f32.mrb[0].mxu0
    %v1266 = vadd.f32 0.0, %v1265
    %v1267 = vpop.f32.mrb[0].mxu0
    %v1268 = vpop.f32.mrb[0].mxu0
    %v1269 = vadd.f32 0.0, %v1268
    %v1270 = vpop.f32.mrb[0].mxu0
    %1271 = vmatprep.mubr.bf16.mxu0 %v539
    %1272 = vmatmul.mubr.bf16.gmra.mrb[0].mxu0 %v537
    %v1273 = vpop.f32.mrb[0].mxu0
    %v1274 = vadd.f32 0.0, %v1273
    %v1275 = vpop.f32.mrb[0].mxu0
    %v1276 = vpop.f32.mrb[0].mxu0
    %v1277 = vadd.f32 0.0, %v1276
    %v1278 = vpop.f32.mrb[0].mxu0
    %1279 = vmatprep.mubr.bf16.mxu0 %v540
    %1280 = vmatmul.mubr.bf16.gmra.mrb[0].mxu0 %v538
    %v1281 = vpop.f32.mrb[0].mxu0
    %v1282 = vadd.f32 0.0, %v1281
    %v1283 = vpop.f32.mrb[0].mxu0
    %v1284 = vpop.f32.mrb[0].mxu0
    %v1285 = vadd.f32 0.0, %v1284
    %v1286 = vpop.f32.mrb[0].mxu0
    %1287 = vmatprep.mubr.bf16.mxu0 %v541
    %1288 = vmatmul.mubr.bf16.gmra.mrb[0].mxu0 %v539
    %v1289 = vpop.f32.mrb[0].mxu0
    %v1290 = vadd.f32 0.0, %v1289
    %v1291 = vpop.f32.mrb[0].mxu0
    %v1292 = vpop.f32.mrb[0].mxu0
    %v1293 = vadd.f32 0.0, %v1292
    %v1294 = vpop.f32.mrb[0].mxu0
    %1295 = vmatprep.mubr.bf16.mxu0 %v542
    %1296 = vmatmul.mubr.bf16.gmra.mrb[0].mxu0 %v540
    %v1297 = vpop.f32.mrb[0].mxu0
    %v1298 = vadd.f32 0.0, %v1297
    %v1299 = vpop.f32.mrb[0].mxu0
    %v1300 = vpop.f32.mrb[0].mxu0
    %v1301 = vadd.f32 0.0, %v1300
    %v1302 = vpop.f32.mrb[0].mxu0
    %1303 = vmatprep.mubr.bf16.mxu0 %v543
    %1304 = vmatmul.mubr.bf16.gmra.mrb[0].mxu0 %v541
    %v1305 = vpop.f32.mrb[0].mxu0
    %v1306 = vadd.f32 0.0, %v1305
    %v1307 = vpop.f32.mrb[0].mxu0
    %v1308 = vpop.f32.mrb[0].mxu0
    %v1309 = vadd.f32 0.0, %v1308
    %v1310 = vpop.f32.mrb[0].mxu0
    %1311 = vmatprep.mubr.bf16.mxu0 %v544
    %1312 = vmatmul.mubr.bf16.gmra.mrb[0].mxu0 %v542
    %v1313 = vpop.f32.mrb[0].mxu0
    %v1314 = vadd.f32 0.0, %v1313
    %v1315 = vpop.f32.mrb[0].mxu0
    %v1316 = vpop.f32.mrb[0].mxu0
    %v1317 = vadd.f32 0.0, %v1316
    %v1318 = vpop.f32.mrb[0].mxu0
    %1319 = vmatprep.mubr.bf16.mxu0 %v545
    %1320 = vmatmul.mubr.bf16.gmra.mrb[0].mxu0 %v543
    %v1321 = vpop.f32.mrb[0].mxu0
    %v1322 = vadd.f32 0.0, %v1321
    %v1323 = vpop.f32.mrb[0].mxu0
    %v1324 = vpop.f32.mrb[0].mxu0
    %v1325 = vadd.f32 0.0, %v1324
    %v1326 = vpop.f32.mrb[0].mxu0
    %1327 = vmatprep.mubr.bf16.mxu0 %v546
    %1328 = vmatmul.mubr.bf16.gmra.mrb[0].mxu0 %v544
    %v1329 = vpop.f32.mrb[0].mxu0
    %v1330 = vadd.f32 0.0, %v1329
    %v1331 = vpop.f32.mrb[0].mxu0
    %v1332 = vpop.f32.mrb[0].mxu0
    %v1333 = vadd.f32 0.0, %v1332
    %v1334 = vpop.f32.mrb[0].mxu0
    %1335 = vmatprep.mubr.bf16.mxu0 %v547
    %1336 = vmatmul.mubr.bf16.gmra.mrb[0].mxu0 %v545
    %v1337 = vpop.f32.mrb[0].mxu0
    %v1338 = vadd.f32 0.0, %v1337
    %v1339 = vpop.f32.mrb[0].mxu0
    %v1340 = vpop.f32.mrb[0].mxu0
    %v1341 = vadd.f32 0.0, %v1340
    %v1342 = vpop.f32.mrb[0].mxu0
    %1343 = vmatprep.mubr.bf16.mxu0 %v548
    %1344 = vmatmul.mubr.bf16.gmra.mrb[0].mxu0 %v546
    %v1345 = vpop.f32.mrb[0].mxu0
    %v1346 = vadd.f32 0.0, %v1345
    %v1347 = vpop.f32.mrb[0].mxu0
    %v1348 = vpop.f32.mrb[0].mxu0
    %v1349 = vadd.f32 0.0, %v1348
    %v1350 = vpop.f32.mrb[0].mxu0
    %1351 = vmatprep.mubr.bf16.mxu0 %v549
    %1352 = vmatmul.mubr.bf16.gmra.mrb[0].mxu0 %v547
    %v1353 = vpop.f32.mrb[0].mxu0
    %v1354 = vadd.f32 0.0, %v1353
    %v1355 = vpop.f32.mrb[0].mxu0
    %v1356 = vpop.f32.mrb[0].mxu0
    %v1357 = vadd.f32 0.0, %v1356
    %v1358 = vpop.f32.mrb[0].mxu0
    %1359 = vmatprep.mubr.bf16.mxu0 %v622
    %1360 = vmatmul.mubr.bf16.gmra.mrb[0].mxu0 %v548
    %v1361 = vpop.f32.mrb[0].mxu0
    %v1362 = vadd.f32 0.0, %v1361
    %v1363 = vpop.f32.mrb[0].mxu0
    %v1364 = vpop.f32.mrb[0].mxu0
    %v1365 = vadd.f32 0.0, %v1364
    %v1366 = vpop.f32.mrb[0].mxu0
    %1367 = vmatprep.mubr.bf16.mxu0 %v623
    %1368 = vmatmul.mubr.bf16.gmra.mrb[0].mxu0 %v549
    %v1369 = vpop.f32.mrb[0].mxu0
    %v1370 = vadd.f32 0.0, %v1369
    %v1371 = vpop.f32.mrb[0].mxu0
    %v1372 = vpop.f32.mrb[0].mxu0
    %v1373 = vadd.f32 0.0, %v1372
    %v1374 = vpop.f32.mrb[0].mxu0
    %1375 = vdwg.mxu0
    %1376 = vmatprep.subr.bf16.mxu0 0
    %1377 = vmatpush1.bf16.msra.mxu0 %v799
    %1378 = vmatprep.subr.bf16.mxu0 0
    %1379 = vmatpush1.bf16.msra.mxu0 %v800
    %1380 = vmatprep.subr.bf16.mxu0 0
    %1381 = vmatpush1.bf16.msra.mxu0 %v801
    %1382 = vmatprep.subr.bf16.mxu0 0
    %1383 = vmatpush1.bf16.msra.mxu0 %v802
    %1384 = vmatprep.subr.bf16.mxu0 0
    %1385 = vmatpush1.bf16.msra.mxu0 %v803
    %1386 = vmatprep.subr.bf16.mxu0 0
    %1387 = vmatpush1.bf16.msra.mxu0 %v804
    %1388 = vmatprep.subr.bf16.mxu0 0
    %1389 = vmatpush1.bf16.msra.mxu0 %v805
    %1390 = vmatprep.subr.bf16.mxu0 0
    %1391 = vmatpush1.bf16.msra.mxu0 %v806
    %1392 = vmatprep.subr.bf16.mxu0 0
    %1393 = vmatpush1.bf16.msra.mxu0 0
    %1394 = vmatprep.subr.bf16.mxu0 0
    %1395 = vmatpush1.bf16.msra.mxu0 0
    %1396 = vmatprep.subr.bf16.mxu0 0
    %1397 = vmatpush1.bf16.msra.mxu0 0
    %1398 = vmatprep.subr.bf16.mxu0 0
    %1399 = vmatpush1.bf16.msra.mxu0 0
    %1400 = vmatprep.subr.bf16.mxu0 0
    %1401 = vmatpush1.bf16.msra.mxu0 0
    %1402 = vmatprep.subr.bf16.mxu0 0
    %1403 = vmatpush1.bf16.msra.mxu0 0
    %1404 = vmatprep.subr.bf16.mxu0 0
    %1405 = vmatpush1.bf16.msra.mxu0 0
    %1406 = vmatprep.subr.bf16.mxu0 0
    %1407 = vmatpush1.bf16.msra.mxu0 0
    %1408 = vmatprep.mubr.bf16.mxu0 0
    %1409 = vmatmul.mubr.bf16.gmra.mrb[0].mxu0 %v490
    %v1410 = vpop.f32.mrb[0].mxu0
    %v1411 = vadd.f32 %v866, %v1410
    %v1412 = vpop.f32.mrb[0].mxu0
    %v1413 = vpop.f32.mrb[0].mxu0
    %v1414 = vadd.f32 %v869, %v1413
    %v1415 = vpop.f32.mrb[0].mxu0
    %1416 = vmatprep.mubr.bf16.mxu0 0
    %1417 = vmatmul.mubr.bf16.gmra.mrb[0].mxu0 %v491
    %v1418 = vpop.f32.mrb[0].mxu0
    %v1419 = vadd.f32 %v874, %v1418
    %v1420 = vpop.f32.mrb[0].mxu0
    %v1421 = vpop.f32.mrb[0].mxu0
    %v1422 = vadd.f32 %v877, %v1421
    %v1423 = vpop.f32.mrb[0].mxu0
    %1424 = vmatprep.mubr.bf16.mxu0 0
    %1425 = vmatmul.mubr.bf16.gmra.mrb[0].mxu0 %v492
    %v1426 = vpop.f32.mrb[0].mxu0
    %v1427 = vadd.f32 %v882, %v1426
    %v1428 = vpop.f32.mrb[0].mxu0
    %v1429 = vpop.f32.mrb[0].mxu0
    %v1430 = vadd.f32 %v885, %v1429
    %v1431 = vpop.f32.mrb[0].mxu0
    %1432 = vmatprep.mubr.bf16.mxu0 0
    %1433 = vmatmul.mubr.bf16.gmra.mrb[0].mxu0 %v493
    %v1434 = vpop.f32.mrb[0].mxu0
    %v1435 = vadd.f32 %v890, %v1434
    %v1436 = vpop.f32.mrb[0].mxu0
    %v1437 = vpop.f32.mrb[0].mxu0
    %v1438 = vadd.f32 %v893, %v1437
    %v1439 = vpop.f32.mrb[0].mxu0
    %1440 = vmatprep.mubr.bf16.mxu0 0
    %1441 = vmatmul.mubr.bf16.gmra.mrb[0].mxu0 %v494
    %v1442 = vpop.f32.mrb[0].mxu0
    %v1443 = vadd.f32 %v898, %v1442
    %v1444 = vpop.f32.mrb[0].mxu0
    %v1445 = vpop.f32.mrb[0].mxu0
    %v1446 = vadd.f32 %v901, %v1445
    %v1447 = vpop.f32.mrb[0].mxu0
    %1448 = vmatprep.mubr.bf16.mxu0 0
    %1449 = vmatmul.mubr.bf16.gmra.mrb[0].mxu0 %v495
    %v1450 = vpop.f32.mrb[0].mxu0
    %v1451 = vadd.f32 %v906, %v1450
    %v1452 = vpop.f32.mrb[0].mxu0
    %v1453 = vpop.f32.mrb[0].mxu0
    %v1454 = vadd.f32 %v909, %v1453
    %v1455 = vpop.f32.mrb[0].mxu0
    %1456 = vmatprep.mubr.bf16.mxu0 0
    %1457 = vmatmul.mubr.bf16.gmra.mrb[0].mxu0 %v496
    %v1458 = vpop.f32.mrb[0].mxu0
    %v1459 = vadd.f32 %v914, %v1458
    %v1460 = vpop.f32.mrb[0].mxu0
    %v1461 = vpop.f32.mrb[0].mxu0
    %v1462 = vadd.f32 %v917, %v1461
    %v1463 = vpop.f32.mrb[0].mxu0
    %1464 = vmatprep.mubr.bf16.mxu0 0
    %1465 = vmatmul.mubr.bf16.gmra.mrb[0].mxu0 %v497
    %v1466 = vpop.f32.mrb[0].mxu0
    %v1467 = vadd.f32 %v922, %v1466
    %v1468 = vpop.f32.mrb[0].mxu0
    %v1469 = vpop.f32.mrb[0].mxu0
    %v1470 = vadd.f32 %v925, %v1469
    %v1471 = vpop.f32.mrb[0].mxu0
    %1472 = vmatprep.mubr.bf16.mxu0 0
    %1473 = vmatmul.mubr.bf16.gmra.mrb[0].mxu0 %v498
    %v1474 = vpop.f32.mrb[0].mxu0
    %v1475 = vadd.f32 %v930, %v1474
    %v1476 = vpop.f32.mrb[0].mxu0
    %v1477 = vpop.f32.mrb[0].mxu0
    %v1478 = vadd.f32 %v933, %v1477
    %v1479 = vpop.f32.mrb[0].mxu0
    %1480 = vmatprep.mubr.bf16.mxu0 0
    %1481 = vmatmul.mubr.bf16.gmra.mrb[0].mxu0 %v499
    %v1482 = vpop.f32.mrb[0].mxu0
    %v1483 = vadd.f32 %v938, %v1482
    %v1484 = vpop.f32.mrb[0].mxu0
    %v1485 = vpop.f32.mrb[0].mxu0
    %v1486 = vadd.f32 %v941, %v1485
    %v1487 = vpop.f32.mrb[0].mxu0
    %1488 = vmatprep.mubr.bf16.mxu0 0
    %1489 = vmatmul.mubr.bf16.gmra.mrb[0].mxu0 %v500
    %v1490 = vpop.f32.mrb[0].mxu0
    %v1491 = vadd.f32 %v946, %v1490
    %v1492 = vpop.f32.mrb[0].mxu0
    %v1493 = vpop.f32.mrb[0].mxu0
    %v1494 = vadd.f32 %v949, %v1493
    %v1495 = vpop.f32.mrb[0].mxu0
    %1496 = vmatprep.mubr.bf16.mxu0 0
    %1497 = vmatmul.mubr.bf16.gmra.mrb[0].mxu0 %v501
    %v1498 = vpop.f32.mrb[0].mxu0
    %v1499 = vadd.f32 %v954, %v1498
    %v1500 = vpop.f32.mrb[0].mxu0
    %v1501 = vpop.f32.mrb[0].mxu0
    %v1502 = vadd.f32 %v957, %v1501
    %v1503 = vpop.f32.mrb[0].mxu0
    %1504 = vmatprep.mubr.bf16.mxu0 0
    %1505 = vmatmul.mubr.bf16.gmra.mrb[0].mxu0 %v502
    %v1506 = vpop.f32.mrb[0].mxu0
    %v1507 = vadd.f32 %v962, %v1506
    %v1508 = vpop.f32.mrb[0].mxu0
    %v1509 = vpop.f32.mrb[0].mxu0
    %v1510 = vadd.f32 %v965, %v1509
    %v1511 = vpop.f32.mrb[0].mxu0
    %1512 = vmatprep.mubr.bf16.mxu0 0
    %1513 = vmatmul.mubr.bf16.gmra.mrb[0].mxu0 %v503
    %v1514 = vpop.f32.mrb[0].mxu0
    %v1515 = vadd.f32 %v970, %v1514
    %v1516 = vpop.f32.mrb[0].mxu0
    %v1517 = vpop.f32.mrb[0].mxu0
    %v1518 = vadd.f32 %v973, %v1517
    %v1519 = vpop.f32.mrb[0].mxu0
    %1520 = vmatprep.mubr.bf16.mxu0 0
    %1521 = vmatmul.mubr.bf16.gmra.mrb[0].mxu0 %v504
    %v1522 = vpop.f32.mrb[0].mxu0
    %v1523 = vadd.f32 %v978, %v1522
    %v1524 = vpop.f32.mrb[0].mxu0
    %v1525 = vpop.f32.mrb[0].mxu0
    %v1526 = vadd.f32 %v981, %v1525
    %v1527 = vpop.f32.mrb[0].mxu0
    %1528 = vmatprep.mubr.bf16.mxu0 0
    %1529 = vmatmul.mubr.bf16.gmra.mrb[0].mxu0 %v505
    %v1530 = vpop.f32.mrb[0].mxu0
    %v1531 = vadd.f32 %v986, %v1530
    %v1532 = vpop.f32.mrb[0].mxu0
    %v1533 = vpop.f32.mrb[0].mxu0
    %v1534 = vadd.f32 %v989, %v1533
    %v1535 = vpop.f32.mrb[0].mxu0
    %1536 = vmatprep.mubr.bf16.mxu0 0
    %1537 = vmatmul.mubr.bf16.gmra.mrb[0].mxu0 %v506
    %v1538 = vpop.f32.mrb[0].mxu0
    %v1539 = vadd.f32 %v994, %v1538
    %v1540 = vpop.f32.mrb[0].mxu0
    %v1541 = vpop.f32.mrb[0].mxu0
    %v1542 = vadd.f32 %v997, %v1541
    %v1543 = vpop.f32.mrb[0].mxu0
    %1544 = vmatprep.mubr.bf16.mxu0 0
    %1545 = vmatmul.mubr.bf16.gmra.mrb[0].mxu0 %v507
    %v1546 = vpop.f32.mrb[0].mxu0
    %v1547 = vadd.f32 %v1002, %v1546
    %v1548 = vpop.f32.mrb[0].mxu0
    %v1549 = vpop.f32.mrb[0].mxu0
    %v1550 = vadd.f32 %v1005, %v1549
    %v1551 = vpop.f32.mrb[0].mxu0
    %1552 = vmatprep.mubr.bf16.mxu0 0
    %1553 = vmatmul.mubr.bf16.gmra.mrb[0].mxu0 %v508
    %v1554 = vpop.f32.mrb[0].mxu0
    %v1555 = vadd.f32 %v1010, %v1554
    %v1556 = vpop.f32.mrb[0].mxu0
    %v1557 = vpop.f32.mrb[0].mxu0
    %v1558 = vadd.f32 %v1013, %v1557
    %v1559 = vpop.f32.mrb[0].mxu0
    %1560 = vmatprep.mubr.bf16.mxu0 0
    %1561 = vmatmul.mubr.bf16.gmra.mrb[0].mxu0 %v509
    %v1562 = vpop.f32.mrb[0].mxu0
    %v1563 = vadd.f32 %v1018, %v1562
    %v1564 = vpop.f32.mrb[0].mxu0
    %v1565 = vpop.f32.mrb[0].mxu0
    %v1566 = vadd.f32 %v1021, %v1565
    %v1567 = vpop.f32.mrb[0].mxu0
    %1568 = vmatprep.mubr.bf16.mxu0 0
    %1569 = vmatmul.mubr.bf16.gmra.mrb[0].mxu0 %v510
    %v1570 = vpop.f32.mrb[0].mxu0
    %v1571 = vadd.f32 %v1026, %v1570
    %v1572 = vpop.f32.mrb[0].mxu0
    %v1573 = vpop.f32.mrb[0].mxu0
    %v1574 = vadd.f32 %v1029, %v1573
    %v1575 = vpop.f32.mrb[0].mxu0
    %1576 = vmatprep.mubr.bf16.mxu0 0
    %1577 = vmatmul.mubr.bf16.gmra.mrb[0].mxu0 %v511
    %v1578 = vpop.f32.mrb[0].mxu0
    %v1579 = vadd.f32 %v1034, %v1578
    %v1580 = vpop.f32.mrb[0].mxu0
    %v1581 = vpop.f32.mrb[0].mxu0
    %v1582 = vadd.f32 %v1037, %v1581
    %v1583 = vpop.f32.mrb[0].mxu0
    %1584 = vmatprep.mubr.bf16.mxu0 0
    %1585 = vmatmul.mubr.bf16.gmra.mrb[0].mxu0 %v512
    %v1586 = vpop.f32.mrb[0].mxu0
    %v1587 = vadd.f32 %v1042, %v1586
    %v1588 = vpop.f32.mrb[0].mxu0
    %v1589 = vpop.f32.mrb[0].mxu0
    %v1590 = vadd.f32 %v1045, %v1589
    %v1591 = vpop.f32.mrb[0].mxu0
    %1592 = vmatprep.mubr.bf16.mxu0 0
    %1593 = vmatmul.mubr.bf16.gmra.mrb[0].mxu0 %v513
    %v1594 = vpop.f32.mrb[0].mxu0
    %v1595 = vadd.f32 %v1050, %v1594
    %v1596 = vpop.f32.mrb[0].mxu0
    %v1597 = vpop.f32.mrb[0].mxu0
    %v1598 = vadd.f32 %v1053, %v1597
    %v1599 = vpop.f32.mrb[0].mxu0
    %1600 = vmatprep.mubr.bf16.mxu0 0
    %1601 = vmatmul.mubr.bf16.gmra.mrb[0].mxu0 %v514
    %v1602 = vpop.f32.mrb[0].mxu0
    %v1603 = vadd.f32 %v1058, %v1602
    %v1604 = vpop.f32.mrb[0].mxu0
    %v1605 = vpop.f32.mrb[0].mxu0
    %v1606 = vadd.f32 %v1061, %v1605
    %v1607 = vpop.f32.mrb[0].mxu0
    %1608 = vmatprep.mubr.bf16.mxu0 0
    %1609 = vmatmul.mubr.bf16.gmra.mrb[0].mxu0 %v515
    %v1610 = vpop.f32.mrb[0].mxu0
    %v1611 = vadd.f32 %v1066, %v1610
    %v1612 = vpop.f32.mrb[0].mxu0
    %v1613 = vpop.f32.mrb[0].mxu0
    %v1614 = vadd.f32 %v1069, %v1613
    %v1615 = vpop.f32.mrb[0].mxu0
    %1616 = vmatprep.mubr.bf16.mxu0 0
    %1617 = vmatmul.mubr.bf16.gmra.mrb[0].mxu0 %v516
    %v1618 = vpop.f32.mrb[0].mxu0
    %v1619 = vadd.f32 %v1074, %v1618
    %v1620 = vpop.f32.mrb[0].mxu0
    %v1621 = vpop.f32.mrb[0].mxu0
    %v1622 = vadd.f32 %v1077, %v1621
    %v1623 = vpop.f32.mrb[0].mxu0
    %1624 = vmatprep.mubr.bf16.mxu0 0
    %1625 = vmatmul.mubr.bf16.gmra.mrb[0].mxu0 %v517
    %v1626 = vpop.f32.mrb[0].mxu0
    %v1627 = vadd.f32 %v1082, %v1626
    %v1628 = vpop.f32.mrb[0].mxu0
    %v1629 = vpop.f32.mrb[0].mxu0
    %v1630 = vadd.f32 %v1085, %v1629
    %v1631 = vpop.f32.mrb[0].mxu0
    %1632 = vmatprep.mubr.bf16.mxu0 0
    %1633 = vmatmul.mubr.bf16.gmra.mrb[0].mxu0 %v518
    %v1634 = vpop.f32.mrb[0].mxu0
    %v1635 = vadd.f32 %v1090, %v1634
    %v1636 = vpop.f32.mrb[0].mxu0
    %v1637 = vpop.f32.mrb[0].mxu0
    %v1638 = vadd.f32 %v1093, %v1637
    %v1639 = vpop.f32.mrb[0].mxu0
    %1640 = vmatprep.mubr.bf16.mxu0 0
    %1641 = vmatmul.mubr.bf16.gmra.mrb[0].mxu0 %v519
    %v1642 = vpop.f32.mrb[0].mxu0
    %v1643 = vadd.f32 %v1098, %v1642
    %v1644 = vpop.f32.mrb[0].mxu0
    %v1645 = vpop.f32.mrb[0].mxu0
    %v1646 = vadd.f32 %v1101, %v1645
    %v1647 = vpop.f32.mrb[0].mxu0
    %1648 = vmatprep.mubr.bf16.mxu0 0
    %1649 = vmatmul.mubr.bf16.gmra.mrb[0].mxu0 %v520
    %v1650 = vpop.f32.mrb[0].mxu0
    %v1651 = vadd.f32 %v1106, %v1650
    %v1652 = vpop.f32.mrb[0].mxu0
    %v1653 = vpop.f32.mrb[0].mxu0
    %v1654 = vadd.f32 %v1109, %v1653
    %v1655 = vpop.f32.mrb[0].mxu0
    %1656 = vmatprep.mubr.bf16.mxu0 0
    %1657 = vmatmul.mubr.bf16.gmra.mrb[0].mxu0 %v521
    %v1658 = vpop.f32.mrb[0].mxu0
    %v1659 = vadd.f32 %v1114, %v1658
    %v1660 = vpop.f32.mrb[0].mxu0
    %v1661 = vpop.f32.mrb[0].mxu0
    %v1662 = vadd.f32 %v1117, %v1661
    %v1663 = vpop.f32.mrb[0].mxu0
    %1664 = vmatprep.mubr.bf16.mxu0 0
    %1665 = vmatmul.mubr.bf16.gmra.mrb[0].mxu0 %v522
    %v1666 = vpop.f32.mrb[0].mxu0
    %v1667 = vadd.f32 %v1122, %v1666
    %v1668 = vpop.f32.mrb[0].mxu0
    %v1669 = vpop.f32.mrb[0].mxu0
    %v1670 = vadd.f32 %v1125, %v1669
    %v1671 = vpop.f32.mrb[0].mxu0
    %1672 = vmatprep.mubr.bf16.mxu0 0
    %1673 = vmatmul.mubr.bf16.gmra.mrb[0].mxu0 %v523
    %v1674 = vpop.f32.mrb[0].mxu0
    %v1675 = vadd.f32 %v1130, %v1674
    %v1676 = vpop.f32.mrb[0].mxu0
    %v1677 = vpop.f32.mrb[0].mxu0
    %v1678 = vadd.f32 %v1133, %v1677
    %v1679 = vpop.f32.mrb[0].mxu0
    %1680 = vmatprep.mubr.bf16.mxu0 0
    %1681 = vmatmul.mubr.bf16.gmra.mrb[0].mxu0 %v524
    %v1682 = vpop.f32.mrb[0].mxu0
    %v1683 = vadd.f32 %v1138, %v1682
    %v1684 = vpop.f32.mrb[0].mxu0
    %v1685 = vpop.f32.mrb[0].mxu0
    %v1686 = vadd.f32 %v1141, %v1685
    %v1687 = vpop.f32.mrb[0].mxu0
    %1688 = vmatprep.mubr.bf16.mxu0 0
    %1689 = vmatmul.mubr.bf16.gmra.mrb[0].mxu0 %v525
    %v1690 = vpop.f32.mrb[0].mxu0
    %v1691 = vadd.f32 %v1146, %v1690
    %v1692 = vpop.f32.mrb[0].mxu0
    %v1693 = vpop.f32.mrb[0].mxu0
    %v1694 = vadd.f32 %v1149, %v1693
    %v1695 = vpop.f32.mrb[0].mxu0
    %1696 = vmatprep.mubr.bf16.mxu0 0
    %1697 = vmatmul.mubr.bf16.gmra.mrb[0].mxu0 %v526
    %v1698 = vpop.f32.mrb[0].mxu0
    %v1699 = vadd.f32 %v1154, %v1698
    %v1700 = vpop.f32.mrb[0].mxu0
    %v1701 = vpop.f32.mrb[0].mxu0
    %v1702 = vadd.f32 %v1157, %v1701
    %v1703 = vpop.f32.mrb[0].mxu0
    %1704 = vmatprep.mubr.bf16.mxu0 0
    %1705 = vmatmul.mubr.bf16.gmra.mrb[0].mxu0 %v527
    %v1706 = vpop.f32.mrb[0].mxu0
    %v1707 = vadd.f32 %v1162, %v1706
    %v1708 = vpop.f32.mrb[0].mxu0
    %v1709 = vpop.f32.mrb[0].mxu0
    %v1710 = vadd.f32 %v1165, %v1709
    %v1711 = vpop.f32.mrb[0].mxu0
    %1712 = vmatprep.mubr.bf16.mxu0 0
    %1713 = vmatmul.mubr.bf16.gmra.mrb[0].mxu0 %v528
    %v1714 = vpop.f32.mrb[0].mxu0
    %v1715 = vadd.f32 %v1170, %v1714
    %v1716 = vpop.f32.mrb[0].mxu0
    %v1717 = vpop.f32.mrb[0].mxu0
    %v1718 = vadd.f32 %v1173, %v1717
    %v1719 = vpop.f32.mrb[0].mxu0
    %1720 = vmatprep.mubr.bf16.mxu0 0
    %1721 = vmatmul.mubr.bf16.gmra.mrb[0].mxu0 %v529
    %v1722 = vpop.f32.mrb[0].mxu0
    %v1723 = vadd.f32 %v1178, %v1722
    %v1724 = vpop.f32.mrb[0].mxu0
    %v1725 = vpop.f32.mrb[0].mxu0
    %v1726 = vadd.f32 %v1181, %v1725
    %v1727 = vpop.f32.mrb[0].mxu0
    %1728 = vmatprep.mubr.bf16.mxu0 0
    %1729 = vmatmul.mubr.bf16.gmra.mrb[0].mxu0 %v530
    %v1730 = vpop.f32.mrb[0].mxu0
    %v1731 = vadd.f32 %v1186, %v1730
    %v1732 = vpop.f32.mrb[0].mxu0
    %v1733 = vpop.f32.mrb[0].mxu0
    %v1734 = vadd.f32 %v1189, %v1733
    %v1735 = vpop.f32.mrb[0].mxu0
    %1736 = vmatprep.mubr.bf16.mxu0 0
    %1737 = vmatmul.mubr.bf16.gmra.mrb[0].mxu0 %v531
    %v1738 = vpop.f32.mrb[0].mxu0
    %v1739 = vadd.f32 %v1194, %v1738
    %v1740 = vpop.f32.mrb[0].mxu0
    %v1741 = vpop.f32.mrb[0].mxu0
    %v1742 = vadd.f32 %v1197, %v1741
    %v1743 = vpop.f32.mrb[0].mxu0
    %1744 = vmatprep.mubr.bf16.mxu0 0
    %1745 = vmatmul.mubr.bf16.gmra.mrb[0].mxu0 %v532
    %v1746 = vpop.f32.mrb[0].mxu0
    %v1747 = vadd.f32 %v1202, %v1746
    %v1748 = vpop.f32.mrb[0].mxu0
    %v1749 = vpop.f32.mrb[0].mxu0
    %v1750 = vadd.f32 %v1205, %v1749
    %v1751 = vpop.f32.mrb[0].mxu0
    %1752 = vmatprep.mubr.bf16.mxu0 0
    %1753 = vmatmul.mubr.bf16.gmra.mrb[0].mxu0 %v533
    %v1754 = vpop.f32.mrb[0].mxu0
    %v1755 = vadd.f32 %v1210, %v1754
    %v1756 = vpop.f32.mrb[0].mxu0
    %v1757 = vpop.f32.mrb[0].mxu0
    %v1758 = vadd.f32 %v1213, %v1757
    %v1759 = vpop.f32.mrb[0].mxu0
    %1760 = vmatprep.mubr.bf16.mxu0 0
    %1761 = vmatmul.mubr.bf16.gmra.mrb[0].mxu0 %v534
    %v1762 = vpop.f32.mrb[0].mxu0
    %v1763 = vadd.f32 %v1218, %v1762
    %v1764 = vpop.f32.mrb[0].mxu0
    %v1765 = vpop.f32.mrb[0].mxu0
    %v1766 = vadd.f32 %v1221, %v1765
    %v1767 = vpop.f32.mrb[0].mxu0
    %1768 = vmatprep.mubr.bf16.mxu0 0
    %1769 = vmatmul.mubr.bf16.gmra.mrb[0].mxu0 %v535
    %v1770 = vpop.f32.mrb[0].mxu0
    %v1771 = vadd.f32 %v1226, %v1770
    %v1772 = vpop.f32.mrb[0].mxu0
    %v1773 = vpop.f32.mrb[0].mxu0
    %v1774 = vadd.f32 %v1229, %v1773
    %v1775 = vpop.f32.mrb[0].mxu0
    %1776 = vmatprep.mubr.bf16.mxu0 0
    %1777 = vmatmul.mubr.bf16.gmra.mrb[0].mxu0 %v536
    %v1778 = vpop.f32.mrb[0].mxu0
    %v1779 = vadd.f32 %v1234, %v1778
    %v1780 = vpop.f32.mrb[0].mxu0
    %v1781 = vpop.f32.mrb[0].mxu0
    %v1782 = vadd.f32 %v1237, %v1781
    %v1783 = vpop.f32.mrb[0].mxu0
    %1784 = vmatprep.mubr.bf16.mxu0 0
    %1785 = vmatmul.mubr.bf16.gmra.mrb[0].mxu0 %v537
    %v1786 = vpop.f32.mrb[0].mxu0
    %v1787 = vadd.f32 %v1242, %v1786
    %v1788 = vpop.f32.mrb[0].mxu0
    %v1789 = vpop.f32.mrb[0].mxu0
    %v1790 = vadd.f32 %v1245, %v1789
    %v1791 = vpop.f32.mrb[0].mxu0
    %1792 = vmatprep.mubr.bf16.mxu0 0
    %1793 = vmatmul.mubr.bf16.gmra.mrb[0].mxu0 %v538
    %v1794 = vpop.f32.mrb[0].mxu0
    %v1795 = vadd.f32 %v1250, %v1794
    %v1796 = vpop.f32.mrb[0].mxu0
    %v1797 = vpop.f32.mrb[0].mxu0
    %v1798 = vadd.f32 %v1253, %v1797
    %v1799 = vpop.f32.mrb[0].mxu0
    %1800 = vmatprep.mubr.bf16.mxu0 0
    %1801 = vmatmul.mubr.bf16.gmra.mrb[0].mxu0 %v539
    %v1802 = vpop.f32.mrb[0].mxu0
    %v1803 = vadd.f32 %v1258, %v1802
    %v1804 = vpop.f32.mrb[0].mxu0
    %v1805 = vpop.f32.mrb[0].mxu0
    %v1806 = vadd.f32 %v1261, %v1805
    %v1807 = vpop.f32.mrb[0].mxu0
    %1808 = vmatprep.mubr.bf16.mxu0 0
    %1809 = vmatmul.mubr.bf16.gmra.mrb[0].mxu0 %v540
    %v1810 = vpop.f32.mrb[0].mxu0
    %v1811 = vadd.f32 %v1266, %v1810
    %v1812 = vpop.f32.mrb[0].mxu0
    %v1813 = vpop.f32.mrb[0].mxu0
    %v1814 = vadd.f32 %v1269, %v1813
    %v1815 = vpop.f32.mrb[0].mxu0
    %1816 = vmatprep.mubr.bf16.mxu0 0
    %1817 = vmatmul.mubr.bf16.gmra.mrb[0].mxu0 %v541
    %v1818 = vpop.f32.mrb[0].mxu0
    %v1819 = vadd.f32 %v1274, %v1818
    %v1820 = vpop.f32.mrb[0].mxu0
    %v1821 = vpop.f32.mrb[0].mxu0
    %v1822 = vadd.f32 %v1277, %v1821
    %v1823 = vpop.f32.mrb[0].mxu0
    %1824 = vmatprep.mubr.bf16.mxu0 0
    %1825 = vmatmul.mubr.bf16.gmra.mrb[0].mxu0 %v542
    %v1826 = vpop.f32.mrb[0].mxu0
    %v1827 = vadd.f32 %v1282, %v1826
    %v1828 = vpop.f32.mrb[0].mxu0
    %v1829 = vpop.f32.mrb[0].mxu0
    %v1830 = vadd.f32 %v1285, %v1829
    %v1831 = vpop.f32.mrb[0].mxu0
    %1832 = vmatprep.mubr.bf16.mxu0 0
    %1833 = vmatmul.mubr.bf16.gmra.mrb[0].mxu0 %v543
    %v1834 = vpop.f32.mrb[0].mxu0
    %v1835 = vadd.f32 %v1290, %v1834
    %v1836 = vpop.f32.mrb[0].mxu0
    %v1837 = vpop.f32.mrb[0].mxu0
    %v1838 = vadd.f32 %v1293, %v1837
    %v1839 = vpop.f32.mrb[0].mxu0
    %1840 = vmatprep.mubr.bf16.mxu0 0
    %1841 = vmatmul.mubr.bf16.gmra.mrb[0].mxu0 %v544
    %v1842 = vpop.f32.mrb[0].mxu0
    %v1843 = vadd.f32 %v1298, %v1842
    %v1844 = vpop.f32.mrb[0].mxu0
    %v1845 = vpop.f32.mrb[0].mxu0
    %v1846 = vadd.f32 %v1301, %v1845
    %v1847 = vpop.f32.mrb[0].mxu0
    %1848 = vmatprep.mubr.bf16.mxu0 0
    %1849 = vmatmul.mubr.bf16.gmra.mrb[0].mxu0 %v545
    %v1850 = vpop.f32.mrb[0].mxu0
    %v1851 = vadd.f32 %v1306, %v1850
    %v1852 = vpop.f32.mrb[0].mxu0
    %v1853 = vpop.f32.mrb[0].mxu0
    %v1854 = vadd.f32 %v1309, %v1853
    %v1855 = vpop.f32.mrb[0].mxu0
    %1856 = vmatprep.mubr.bf16.mxu0 0
    %1857 = vmatmul.mubr.bf16.gmra.mrb[0].mxu0 %v546
    %v1858 = vpop.f32.mrb[0].mxu0
    %v1859 = vadd.f32 %v1314, %v1858
    %v1860 = vpop.f32.mrb[0].mxu0
    %v1861 = vpop.f32.mrb[0].mxu0
    %v1862 = vadd.f32 %v1317, %v1861
    %v1863 = vpop.f32.mrb[0].mxu0
    %1864 = vmatprep.mubr.bf16.mxu0 0
    %1865 = vmatmul.mubr.bf16.gmra.mrb[0].mxu0 %v547
    %v1866 = vpop.f32.mrb[0].mxu0
    %v1867 = vadd.f32 %v1322, %v1866
    %v1868 = vpop.f32.mrb[0].mxu0
    %v1869 = vpop.f32.mrb[0].mxu0
    %v1870 = vadd.f32 %v1325, %v1869
    %v1871 = vpop.f32.mrb[0].mxu0
    %1872 = vmatprep.mubr.bf16.mxu0 0
    %1873 = vmatmul.mubr.bf16.gmra.mrb[0].mxu0 %v548
    %v1874 = vpop.f32.mrb[0].mxu0
    %v1875 = vadd.f32 %v1330, %v1874
    %v1876 = vpop.f32.mrb[0].mxu0
    %v1877 = vpop.f32.mrb[0].mxu0
    %v1878 = vadd.f32 %v1333, %v1877
    %v1879 = vpop.f32.mrb[0].mxu0
    %1880 = vmatprep.mubr.bf16.mxu0 0
    %1881 = vmatmul.mubr.bf16.gmra.mrb[0].mxu0 %v549
    %v1882 = vpop.f32.mrb[0].mxu0
    %v1883 = vadd.f32 %v1338, %v1882
    %v1884 = vpop.f32.mrb[0].mxu0
    %v1885 = vpop.f32.mrb[0].mxu0
    %v1886 = vadd.f32 %v1341, %v1885
    %v1887 = vpop.f32.mrb[0].mxu0
    %1888 = vmatprep.mubr.bf16.mxu0 0
    %1889 = vmatmul.mubr.bf16.gmra.mrb[0].mxu0 %v622
    %v1890 = vpop.f32.mrb[0].mxu0
    %v1891 = vadd.f32 %v1346, %v1890
    %v1892 = vpop.f32.mrb[0].mxu0
    %v1893 = vpop.f32.mrb[0].mxu0
    %v1894 = vadd.f32 %v1349, %v1893
    %v1895 = vpop.f32.mrb[0].mxu0
    %1896 = vmatprep.mubr.bf16.mxu0 0
    %1897 = vmatmul.mubr.bf16.gmra.mrb[0].mxu0 %v623
    %v1898 = vpop.f32.mrb[0].mxu0
    %v1899 = vadd.f32 %v1354, %v1898
    %v1900 = vpop.f32.mrb[0].mxu0
    %v1901 = vpop.f32.mrb[0].mxu0
    %v1902 = vadd.f32 %v1357, %v1901
    %v1903 = vpop.f32.mrb[0].mxu0
    %1904 = vmatprep.mubr.bf16.mxu0 0
    %1905 = vmatmul.mubr.bf16.gmra.mrb[0].mxu0 %v634
    %v1906 = vpop.f32.mrb[0].mxu0
    %v1907 = vadd.f32 %v1362, %v1906
    %v1908 = vpop.f32.mrb[0].mxu0
    %v1909 = vpop.f32.mrb[0].mxu0
    %v1910 = vadd.f32 %v1365, %v1909
    %v1911 = vpop.f32.mrb[0].mxu0
    %1912 = vmatprep.mubr.bf16.mxu0 0
    %1913 = vmatmul.mubr.bf16.gmra.mrb[0].mxu0 %v635
    %v1914 = vpop.f32.mrb[0].mxu0
    %v1915 = vadd.f32 %v1370, %v1914
    %v1916 = vpop.f32.mrb[0].mxu0
    %v1917 = vpop.f32.mrb[0].mxu0
    %v1918 = vadd.f32 %v1373, %v1917
    %v1919 = vpop.f32.mrb[0].mxu0
    %1920 = vdwg.mxu0
    %v1921 = vld [vmem:[#allocation8] sm:$0xf]
    %v1922 = vld [vmem:[#allocation8 + $0x4] sm:$0xf]
    %v1923 = vld [vmem:[#allocation8 + $0x8] sm:$0xf]
    %v1924 = vld [vmem:[#allocation8 + $0xc] sm:$0xf]
    %v1925 = vld [vmem:[#allocation8 + $0x10] sm:$0xf]
    %v1926 = vld [vmem:[#allocation8 + $0x14] sm:$0xf]
    %v1927 = vld [vmem:[#allocation8 + $0x18] sm:$0xf]
    %v1928 = vld [vmem:[#allocation8 + $0x1c] sm:$0xf]
    %v1929 = vld [vmem:[#allocation8 + $0x20] sm:$0xf]
    %v1930 = vld [vmem:[#allocation8 + $0x24] sm:$0xf]
    %v1931 = vld [vmem:[#allocation8 + $0x28] sm:$0xf]
    %v1932 = vld [vmem:[#allocation8 + $0x2c] sm:$0xf]
    %v1933 = vld [vmem:[#allocation8 + $0x30] sm:$0xf]
    %v1934 = vld [vmem:[#allocation8 + $0x34] sm:$0xf]
    %v1935 = vld [vmem:[#allocation8 + $0x38] sm:$0xf]
    %v1936 = vld [vmem:[#allocation8 + $0x3c] sm:$0xf]
    %v1937 = vld [vmem:[#allocation8 + $0x40] sm:$0xf]
    %v1938 = vld [vmem:[#allocation8 + $0x44] sm:$0xf]
    %v1939 = vld [vmem:[#allocation8 + $0x48] sm:$0xf]
    %v1940 = vld [vmem:[#allocation8 + $0x4c] sm:$0xf]
    %v1941 = vld [vmem:[#allocation8 + $0x50] sm:$0xf]
    %v1942 = vld [vmem:[#allocation8 + $0x54] sm:$0xf]
    %v1943 = vld [vmem:[#allocation8 + $0x58] sm:$0xf]
    %v1944 = vld [vmem:[#allocation8 + $0x5c] sm:$0xf]
    %v1945 = vld [vmem:[#allocation8 + $0x60] sm:$0xf]
    %v1946 = vld [vmem:[#allocation8 + $0x64] sm:$0xf]
    %v1947 = vld [vmem:[#allocation8 + $0x68] sm:$0xf]
    %v1948 = vld [vmem:[#allocation8 + $0x6c] sm:$0xf]
    %v1949 = vld [vmem:[#allocation8 + $0x70] sm:$0xf]
    %v1950 = vld [vmem:[#allocation8 + $0x74] sm:$0xf]
    %v1951 = vld [vmem:[#allocation8 + $0x78] sm:$0xf]
    %v1952 = vld [vmem:[#allocation8 + $0x7c] sm:$0xf]
    %v1953 = vld [vmem:[#allocation8 + $0x80] sm:$0xf]
    %v1954 = vld [vmem:[#allocation8 + $0x84] sm:$0xf]
    %v1955 = vld [vmem:[#allocation8 + $0x88] sm:$0xf]
    %v1956 = vld [vmem:[#allocation8 + $0x8c] sm:$0xf]
    %v1957 = vld [vmem:[#allocation8 + $0x90] sm:$0xf]
    %v1958 = vld [vmem:[#allocation8 + $0x94] sm:$0xf]
    %v1959 = vld [vmem:[#allocation8 + $0x98] sm:$0xf]
    %v1960 = vld [vmem:[#allocation8 + $0x9c] sm:$0xf]
    %v1961 = vld [vmem:[#allocation8 + $0xa0] sm:$0xf]
    %v1962 = vld [vmem:[#allocation8 + $0xa4] sm:$0xf]
    %v1963 = vld [vmem:[#allocation8 + $0xa8] sm:$0xf]
    %v1964 = vld [vmem:[#allocation8 + $0xac] sm:$0xf]
    %v1965 = vld [vmem:[#allocation8 + $0xb0] sm:$0xf]
    %v1966 = vld [vmem:[#allocation8 + $0xb4] sm:$0xf]
    %v1967 = vld [vmem:[#allocation8 + $0xb8] sm:$0xf]
    %v1968 = vld [vmem:[#allocation8 + $0xbc] sm:$0xf]
    %v2017 = vunpack.c.l.b16 %v1921
    %v2018 = vunpack.c.l.b16 %v1922
    %v2019 = vunpack.c.l.b16 %v1923
    %v2020 = vunpack.c.l.b16 %v1924
    %v2021 = vunpack.c.l.b16 %v1925
    %v2022 = vunpack.c.l.b16 %v1926
    %v2023 = vunpack.c.l.b16 %v1927
    %v2024 = vunpack.c.l.b16 %v1928
    %v2025 = vunpack.c.l.b16 %v1929
    %v2026 = vunpack.c.l.b16 %v1930
    %v2027 = vunpack.c.l.b16 %v1931
    %v2028 = vunpack.c.l.b16 %v1932
    %v2029 = vunpack.c.l.b16 %v1933
    %v2030 = vunpack.c.l.b16 %v1934
    %v2031 = vunpack.c.l.b16 %v1935
    %v2032 = vunpack.c.l.b16 %v1936
    %v2033 = vunpack.c.l.b16 %v1937
    %v2034 = vunpack.c.l.b16 %v1938
    %v2035 = vunpack.c.l.b16 %v1939
    %v2036 = vunpack.c.l.b16 %v1940
    %v2037 = vunpack.c.l.b16 %v1941
    %v2038 = vunpack.c.l.b16 %v1942
    %v2039 = vunpack.c.l.b16 %v1943
    %v2040 = vunpack.c.l.b16 %v1944
    %v2041 = vunpack.c.l.b16 %v1945
    %v2042 = vunpack.c.l.b16 %v1946
    %v2043 = vunpack.c.l.b16 %v1947
    %v2044 = vunpack.c.l.b16 %v1948
    %v2045 = vunpack.c.l.b16 %v1949
    %v2046 = vunpack.c.l.b16 %v1950
    %v2047 = vunpack.c.l.b16 %v1951
    %v2048 = vunpack.c.l.b16 %v1952
    %v2049 = vunpack.c.l.b16 %v1953
    %v2050 = vunpack.c.l.b16 %v1954
    %v2051 = vunpack.c.l.b16 %v1955
    %v2052 = vunpack.c.l.b16 %v1956
    %v2053 = vunpack.c.l.b16 %v1957
    %v2054 = vunpack.c.l.b16 %v1958
    %v2055 = vunpack.c.l.b16 %v1959
    %v2056 = vunpack.c.l.b16 %v1960
    %v2057 = vunpack.c.l.b16 %v1961
    %v2058 = vunpack.c.l.b16 %v1962
    %v2059 = vunpack.c.l.b16 %v1963
    %v2060 = vunpack.c.l.b16 %v1964
    %v2061 = vunpack.c.l.b16 %v1965
    %v2062 = vunpack.c.l.b16 %v1966
    %v2063 = vunpack.c.l.b16 %v1967
    %v2064 = vunpack.c.l.b16 %v1968
    %v2065 = vpack.c.b16 %v2018, %v2017
    %v2066 = vpack.c.b16 %v2020, %v2019
    %v2067 = vpack.c.b16 %v2022, %v2021
    %v2068 = vpack.c.b16 %v2024, %v2023
    %v2069 = vpack.c.b16 %v2026, %v2025
    %v2070 = vpack.c.b16 %v2028, %v2027
    %v2071 = vpack.c.b16 %v2030, %v2029
    %v2072 = vpack.c.b16 %v2032, %v2031
    %v2073 = vpack.c.b16 %v2034, %v2033
    %v2074 = vpack.c.b16 %v2036, %v2035
    %v2075 = vpack.c.b16 %v2038, %v2037
    %v2076 = vpack.c.b16 %v2040, %v2039
    %v2077 = vpack.c.b16 %v2042, %v2041
    %v2078 = vpack.c.b16 %v2044, %v2043
    %v2079 = vpack.c.b16 %v2046, %v2045
    %v2080 = vpack.c.b16 %v2048, %v2047
    %v2081 = vpack.c.b16 %v2050, %v2049
    %v2082 = vpack.c.b16 %v2052, %v2051
    %v2083 = vpack.c.b16 %v2054, %v2053
    %v2084 = vpack.c.b16 %v2056, %v2055
    %v2085 = vpack.c.b16 %v2058, %v2057
    %v2086 = vpack.c.b16 %v2060, %v2059
    %v2087 = vpack.c.b16 %v2062, %v2061
    %v2088 = vpack.c.b16 %v2064, %v2063
    %2113 = vmatprep.subr.bf16.mxu0 0
    %2114 = vmatpush1.bf16.msra.mxu0 %v2065
    %2115 = vmatprep.subr.bf16.mxu0 0
    %2116 = vmatpush1.bf16.msra.mxu0 %v2066
    %2117 = vmatprep.subr.bf16.mxu0 0
    %2118 = vmatpush1.bf16.msra.mxu0 %v2067
    %2119 = vmatprep.subr.bf16.mxu0 0
    %2120 = vmatpush1.bf16.msra.mxu0 %v2068
    %2121 = vmatprep.subr.bf16.mxu0 0
    %2122 = vmatpush1.bf16.msra.mxu0 %v2069
    %2123 = vmatprep.subr.bf16.mxu0 0
    %2124 = vmatpush1.bf16.msra.mxu0 %v2070
    %2125 = vmatprep.subr.bf16.mxu0 0
    %2126 = vmatpush1.bf16.msra.mxu0 %v2071
    %2127 = vmatprep.subr.bf16.mxu0 0
    %2128 = vmatpush1.bf16.msra.mxu0 %v2072
    %2129 = vmatprep.subr.bf16.mxu0 0
    %2130 = vmatpush1.bf16.msra.mxu0 %v2073
    %2131 = vmatprep.subr.bf16.mxu0 0
    %2132 = vmatpush1.bf16.msra.mxu0 %v2074
    %2133 = vmatprep.subr.bf16.mxu0 0
    %2134 = vmatpush1.bf16.msra.mxu0 %v2075
    %2135 = vmatprep.subr.bf16.mxu0 0
    %2136 = vmatpush1.bf16.msra.mxu0 %v2076
    %2137 = vmatprep.subr.bf16.mxu0 0
    %2138 = vmatpush1.bf16.msra.mxu0 %v2077
    %2139 = vmatprep.subr.bf16.mxu0 0
    %2140 = vmatpush1.bf16.msra.mxu0 %v2078
    %2141 = vmatprep.subr.bf16.mxu0 0
    %2142 = vmatpush1.bf16.msra.mxu0 %v2079
    %2143 = vmatprep.subr.bf16.mxu0 0
    %2144 = vmatpush1.bf16.msra.mxu0 %v2080
    %2145 = vmatprep.mubr.bf16.mxu0 %v488
    %2146 = vmatmul.mubr.bf16.gmra.mrb[0].mxu0 %v486
    %v2147 = vpop.f32.mrb[0].mxu0
    %v2148 = vadd.f32 0.0, %v2147
    %v2149 = vpop.f32.mrb[0].mxu0
    %v2150 = vpop.f32.mrb[0].mxu0
    %v2151 = vadd.f32 0.0, %v2150
    %v2152 = vpop.f32.mrb[0].mxu0
    %2153 = vmatprep.mubr.bf16.mxu0 %v489
    %2154 = vmatmul.mubr.bf16.gmra.mrb[0].mxu0 %v487
    %v2155 = vpop.f32.mrb[0].mxu0
    %v2156 = vadd.f32 0.0, %v2155
    %v2157 = vpop.f32.mrb[0].mxu0
    %v2158 = vpop.f32.mrb[0].mxu0
    %v2159 = vadd.f32 0.0, %v2158
    %v2160 = vpop.f32.mrb[0].mxu0
    %2161 = vmatprep.mubr.bf16.mxu0 %v490
    %2162 = vmatmul.mubr.bf16.gmra.mrb[0].mxu0 %v488
    %v2163 = vpop.f32.mrb[0].mxu0
    %v2164 = vadd.f32 0.0, %v2163
    %v2165 = vpop.f32.mrb[0].mxu0
    %v2166 = vpop.f32.mrb[0].mxu0
    %v2167 = vadd.f32 0.0, %v2166
    %v2168 = vpop.f32.mrb[0].mxu0
    %2169 = vmatprep.mubr.bf16.mxu0 %v491
    %2170 = vmatmul.mubr.bf16.gmra.mrb[0].mxu0 %v489
    %v2171 = vpop.f32.mrb[0].mxu0
    %v2172 = vadd.f32 0.0, %v2171
    %v2173 = vpop.f32.mrb[0].mxu0
    %v2174 = vpop.f32.mrb[0].mxu0
    %v2175 = vadd.f32 0.0, %v2174
    %v2176 = vpop.f32.mrb[0].mxu0
    %2177 = vmatprep.mubr.bf16.mxu0 %v492
    %2178 = vmatmul.mubr.bf16.gmra.mrb[0].mxu0 %v490
    %v2179 = vpop.f32.mrb[0].mxu0
    %v2180 = vadd.f32 0.0, %v2179
    %v2181 = vpop.f32.mrb[0].mxu0
    %v2182 = vpop.f32.mrb[0].mxu0
    %v2183 = vadd.f32 0.0, %v2182
    %v2184 = vpop.f32.mrb[0].mxu0
    %2185 = vmatprep.mubr.bf16.mxu0 %v493
    %2186 = vmatmul.mubr.bf16.gmra.mrb[0].mxu0 %v491
    %v2187 = vpop.f32.mrb[0].mxu0
    %v2188 = vadd.f32 0.0, %v2187
    %v2189 = vpop.f32.mrb[0].mxu0
    %v2190 = vpop.f32.mrb[0].mxu0
    %v2191 = vadd.f32 0.0, %v2190
    %v2192 = vpop.f32.mrb[0].mxu0
    %2193 = vmatprep.mubr.bf16.mxu0 %v494
    %2194 = vmatmul.mubr.bf16.gmra.mrb[0].mxu0 %v492
    %v2195 = vpop.f32.mrb[0].mxu0
    %v2196 = vadd.f32 0.0, %v2195
    %v2197 = vpop.f32.mrb[0].mxu0
    %v2198 = vpop.f32.mrb[0].mxu0
    %v2199 = vadd.f32 0.0, %v2198
    %v2200 = vpop.f32.mrb[0].mxu0
    %2201 = vmatprep.mubr.bf16.mxu0 %v495
    %2202 = vmatmul.mubr.bf16.gmra.mrb[0].mxu0 %v493
    %v2203 = vpop.f32.mrb[0].mxu0
    %v2204 = vadd.f32 0.0, %v2203
    %v2205 = vpop.f32.mrb[0].mxu0
    %v2206 = vpop.f32.mrb[0].mxu0
    %v2207 = vadd.f32 0.0, %v2206
    %v2208 = vpop.f32.mrb[0].mxu0
    %2209 = vmatprep.mubr.bf16.mxu0 %v496
    %2210 = vmatmul.mubr.bf16.gmra.mrb[0].mxu0 %v494
    %v2211 = vpop.f32.mrb[0].mxu0
    %v2212 = vadd.f32 0.0, %v2211
    %v2213 = vpop.f32.mrb[0].mxu0
    %v2214 = vpop.f32.mrb[0].mxu0
    %v2215 = vadd.f32 0.0, %v2214
    %v2216 = vpop.f32.mrb[0].mxu0
    %2217 = vmatprep.mubr.bf16.mxu0 %v497
    %2218 = vmatmul.mubr.bf16.gmra.mrb[0].mxu0 %v495
    %v2219 = vpop.f32.mrb[0].mxu0
    %v2220 = vadd.f32 0.0, %v2219
    %v2221 = vpop.f32.mrb[0].mxu0
    %v2222 = vpop.f32.mrb[0].mxu0
    %v2223 = vadd.f32 0.0, %v2222
    %v2224 = vpop.f32.mrb[0].mxu0
    %2225 = vmatprep.mubr.bf16.mxu0 %v498
    %2226 = vmatmul.mubr.bf16.gmra.mrb[0].mxu0 %v496
    %v2227 = vpop.f32.mrb[0].mxu0
    %v2228 = vadd.f32 0.0, %v2227
    %v2229 = vpop.f32.mrb[0].mxu0
    %v2230 = vpop.f32.mrb[0].mxu0
    %v2231 = vadd.f32 0.0, %v2230
    %v2232 = vpop.f32.mrb[0].mxu0
    %2233 = vmatprep.mubr.bf16.mxu0 %v499
    %2234 = vmatmul.mubr.bf16.gmra.mrb[0].mxu0 %v497
    %v2235 = vpop.f32.mrb[0].mxu0
    %v2236 = vadd.f32 0.0, %v2235
    %v2237 = vpop.f32.mrb[0].mxu0
    %v2238 = vpop.f32.mrb[0].mxu0
    %v2239 = vadd.f32 0.0, %v2238
    %v2240 = vpop.f32.mrb[0].mxu0
    %2241 = vmatprep.mubr.bf16.mxu0 %v500
    %2242 = vmatmul.mubr.bf16.gmra.mrb[0].mxu0 %v498
    %v2243 = vpop.f32.mrb[0].mxu0
    %v2244 = vadd.f32 0.0, %v2243
    %v2245 = vpop.f32.mrb[0].mxu0
    %v2246 = vpop.f32.mrb[0].mxu0
    %v2247 = vadd.f32 0.0, %v2246
    %v2248 = vpop.f32.mrb[0].mxu0
    %2249 = vmatprep.mubr.bf16.mxu0 %v501
    %2250 = vmatmul.mubr.bf16.gmra.mrb[0].mxu0 %v499
    %v2251 = vpop.f32.mrb[0].mxu0
    %v2252 = vadd.f32 0.0, %v2251
    %v2253 = vpop.f32.mrb[0].mxu0
    %v2254 = vpop.f32.mrb[0].mxu0
    %v2255 = vadd.f32 0.0, %v2254
    %v2256 = vpop.f32.mrb[0].mxu0
    %2257 = vmatprep.mubr.bf16.mxu0 %v502
    %2258 = vmatmul.mubr.bf16.gmra.mrb[0].mxu0 %v500
    %v2259 = vpop.f32.mrb[0].mxu0
    %v2260 = vadd.f32 0.0, %v2259
    %v2261 = vpop.f32.mrb[0].mxu0
    %v2262 = vpop.f32.mrb[0].mxu0
    %v2263 = vadd.f32 0.0, %v2262
    %v2264 = vpop.f32.mrb[0].mxu0
    %2265 = vmatprep.mubr.bf16.mxu0 %v503
    %2266 = vmatmul.mubr.bf16.gmra.mrb[0].mxu0 %v501
    %v2267 = vpop.f32.mrb[0].mxu0
    %v2268 = vadd.f32 0.0, %v2267
    %v2269 = vpop.f32.mrb[0].mxu0
    %v2270 = vpop.f32.mrb[0].mxu0
    %v2271 = vadd.f32 0.0, %v2270
    %v2272 = vpop.f32.mrb[0].mxu0
    %2273 = vmatprep.mubr.bf16.mxu0 %v504
    %2274 = vmatmul.mubr.bf16.gmra.mrb[0].mxu0 %v502
    %v2275 = vpop.f32.mrb[0].mxu0
    %v2276 = vadd.f32 0.0, %v2275
    %v2277 = vpop.f32.mrb[0].mxu0
    %v2278 = vpop.f32.mrb[0].mxu0
    %v2279 = vadd.f32 0.0, %v2278
    %v2280 = vpop.f32.mrb[0].mxu0
    %2281 = vmatprep.mubr.bf16.mxu0 %v505
    %2282 = vmatmul.mubr.bf16.gmra.mrb[0].mxu0 %v503
    %v2283 = vpop.f32.mrb[0].mxu0
    %v2284 = vadd.f32 0.0, %v2283
    %v2285 = vpop.f32.mrb[0].mxu0
    %v2286 = vpop.f32.mrb[0].mxu0
    %v2287 = vadd.f32 0.0, %v2286
    %v2288 = vpop.f32.mrb[0].mxu0
    %2289 = vmatprep.mubr.bf16.mxu0 %v506
    %2290 = vmatmul.mubr.bf16.gmra.mrb[0].mxu0 %v504
    %v2291 = vpop.f32.mrb[0].mxu0
    %v2292 = vadd.f32 0.0, %v2291
    %v2293 = vpop.f32.mrb[0].mxu0
    %v2294 = vpop.f32.mrb[0].mxu0
    %v2295 = vadd.f32 0.0, %v2294
    %v2296 = vpop.f32.mrb[0].mxu0
    %2297 = vmatprep.mubr.bf16.mxu0 %v507
    %2298 = vmatmul.mubr.bf16.gmra.mrb[0].mxu0 %v505
    %v2299 = vpop.f32.mrb[0].mxu0
    %v2300 = vadd.f32 0.0, %v2299
    %v2301 = vpop.f32.mrb[0].mxu0
    %v2302 = vpop.f32.mrb[0].mxu0
    %v2303 = vadd.f32 0.0, %v2302
    %v2304 = vpop.f32.mrb[0].mxu0
    %2305 = vmatprep.mubr.bf16.mxu0 %v508
    %2306 = vmatmul.mubr.bf16.gmra.mrb[0].mxu0 %v506
    %v2307 = vpop.f32.mrb[0].mxu0
    %v2308 = vadd.f32 0.0, %v2307
    %v2309 = vpop.f32.mrb[0].mxu0
    %v2310 = vpop.f32.mrb[0].mxu0
    %v2311 = vadd.f32 0.0, %v2310
    %v2312 = vpop.f32.mrb[0].mxu0
    %2313 = vmatprep.mubr.bf16.mxu0 %v509
    %2314 = vmatmul.mubr.bf16.gmra.mrb[0].mxu0 %v507
    %v2315 = vpop.f32.mrb[0].mxu0
    %v2316 = vadd.f32 0.0, %v2315
    %v2317 = vpop.f32.mrb[0].mxu0
    %v2318 = vpop.f32.mrb[0].mxu0
    %v2319 = vadd.f32 0.0, %v2318
    %v2320 = vpop.f32.mrb[0].mxu0
    %2321 = vmatprep.mubr.bf16.mxu0 %v510
    %2322 = vmatmul.mubr.bf16.gmra.mrb[0].mxu0 %v508
    %v2323 = vpop.f32.mrb[0].mxu0
    %v2324 = vadd.f32 0.0, %v2323
    %v2325 = vpop.f32.mrb[0].mxu0
    %v2326 = vpop.f32.mrb[0].mxu0
    %v2327 = vadd.f32 0.0, %v2326
    %v2328 = vpop.f32.mrb[0].mxu0
    %2329 = vmatprep.mubr.bf16.mxu0 %v511
    %2330 = vmatmul.mubr.bf16.gmra.mrb[0].mxu0 %v509
    %v2331 = vpop.f32.mrb[0].mxu0
    %v2332 = vadd.f32 0.0, %v2331
    %v2333 = vpop.f32.mrb[0].mxu0
    %v2334 = vpop.f32.mrb[0].mxu0
    %v2335 = vadd.f32 0.0, %v2334
    %v2336 = vpop.f32.mrb[0].mxu0
    %2337 = vmatprep.mubr.bf16.mxu0 %v512
    %2338 = vmatmul.mubr.bf16.gmra.mrb[0].mxu0 %v510
    %v2339 = vpop.f32.mrb[0].mxu0
    %v2340 = vadd.f32 0.0, %v2339
    %v2341 = vpop.f32.mrb[0].mxu0
    %v2342 = vpop.f32.mrb[0].mxu0
    %v2343 = vadd.f32 0.0, %v2342
    %v2344 = vpop.f32.mrb[0].mxu0
    %2345 = vmatprep.mubr.bf16.mxu0 %v513
    %2346 = vmatmul.mubr.bf16.gmra.mrb[0].mxu0 %v511
    %v2347 = vpop.f32.mrb[0].mxu0
    %v2348 = vadd.f32 0.0, %v2347
    %v2349 = vpop.f32.mrb[0].mxu0
    %v2350 = vpop.f32.mrb[0].mxu0
    %v2351 = vadd.f32 0.0, %v2350
    %v2352 = vpop.f32.mrb[0].mxu0
    %2353 = vmatprep.mubr.bf16.mxu0 %v514
    %2354 = vmatmul.mubr.bf16.gmra.mrb[0].mxu0 %v512
    %v2355 = vpop.f32.mrb[0].mxu0
    %v2356 = vadd.f32 0.0, %v2355
    %v2357 = vpop.f32.mrb[0].mxu0
    %v2358 = vpop.f32.mrb[0].mxu0
    %v2359 = vadd.f32 0.0, %v2358
    %v2360 = vpop.f32.mrb[0].mxu0
    %2361 = vmatprep.mubr.bf16.mxu0 %v515
    %2362 = vmatmul.mubr.bf16.gmra.mrb[0].mxu0 %v513
    %v2363 = vpop.f32.mrb[0].mxu0
    %v2364 = vadd.f32 0.0, %v2363
    %v2365 = vpop.f32.mrb[0].mxu0
    %v2366 = vpop.f32.mrb[0].mxu0
    %v2367 = vadd.f32 0.0, %v2366
    %v2368 = vpop.f32.mrb[0].mxu0
    %2369 = vmatprep.mubr.bf16.mxu0 %v516
    %2370 = vmatmul.mubr.bf16.gmra.mrb[0].mxu0 %v514
    %v2371 = vpop.f32.mrb[0].mxu0
    %v2372 = vadd.f32 0.0, %v2371
    %v2373 = vpop.f32.mrb[0].mxu0
    %v2374 = vpop.f32.mrb[0].mxu0
    %v2375 = vadd.f32 0.0, %v2374
    %v2376 = vpop.f32.mrb[0].mxu0
    %2377 = vmatprep.mubr.bf16.mxu0 %v517
    %2378 = vmatmul.mubr.bf16.gmra.mrb[0].mxu0 %v515
    %v2379 = vpop.f32.mrb[0].mxu0
    %v2380 = vadd.f32 0.0, %v2379
    %v2381 = vpop.f32.mrb[0].mxu0
    %v2382 = vpop.f32.mrb[0].mxu0
    %v2383 = vadd.f32 0.0, %v2382
    %v2384 = vpop.f32.mrb[0].mxu0
    %2385 = vmatprep.mubr.bf16.mxu0 %v518
    %2386 = vmatmul.mubr.bf16.gmra.mrb[0].mxu0 %v516
    %v2387 = vpop.f32.mrb[0].mxu0
    %v2388 = vadd.f32 0.0, %v2387
    %v2389 = vpop.f32.mrb[0].mxu0
    %v2390 = vpop.f32.mrb[0].mxu0
    %v2391 = vadd.f32 0.0, %v2390
    %v2392 = vpop.f32.mrb[0].mxu0
    %2393 = vmatprep.mubr.bf16.mxu0 %v519
    %2394 = vmatmul.mubr.bf16.gmra.mrb[0].mxu0 %v517
    %v2395 = vpop.f32.mrb[0].mxu0
    %v2396 = vadd.f32 0.0, %v2395
    %v2397 = vpop.f32.mrb[0].mxu0
    %v2398 = vpop.f32.mrb[0].mxu0
    %v2399 = vadd.f32 0.0, %v2398
    %v2400 = vpop.f32.mrb[0].mxu0
    %2401 = vmatprep.mubr.bf16.mxu0 %v520
    %2402 = vmatmul.mubr.bf16.gmra.mrb[0].mxu0 %v518
    %v2403 = vpop.f32.mrb[0].mxu0
    %v2404 = vadd.f32 0.0, %v2403
    %v2405 = vpop.f32.mrb[0].mxu0
    %v2406 = vpop.f32.mrb[0].mxu0
    %v2407 = vadd.f32 0.0, %v2406
    %v2408 = vpop.f32.mrb[0].mxu0
    %2409 = vmatprep.mubr.bf16.mxu0 %v521
    %2410 = vmatmul.mubr.bf16.gmra.mrb[0].mxu0 %v519
    %v2411 = vpop.f32.mrb[0].mxu0
    %v2412 = vadd.f32 0.0, %v2411
    %v2413 = vpop.f32.mrb[0].mxu0
    %v2414 = vpop.f32.mrb[0].mxu0
    %v2415 = vadd.f32 0.0, %v2414
    %v2416 = vpop.f32.mrb[0].mxu0
    %2417 = vmatprep.mubr.bf16.mxu0 %v522
    %2418 = vmatmul.mubr.bf16.gmra.mrb[0].mxu0 %v520
    %v2419 = vpop.f32.mrb[0].mxu0
    %v2420 = vadd.f32 0.0, %v2419
    %v2421 = vpop.f32.mrb[0].mxu0
    %v2422 = vpop.f32.mrb[0].mxu0
    %v2423 = vadd.f32 0.0, %v2422
    %v2424 = vpop.f32.mrb[0].mxu0
    %2425 = vmatprep.mubr.bf16.mxu0 %v523
    %2426 = vmatmul.mubr.bf16.gmra.mrb[0].mxu0 %v521
    %v2427 = vpop.f32.mrb[0].mxu0
    %v2428 = vadd.f32 0.0, %v2427
    %v2429 = vpop.f32.mrb[0].mxu0
    %v2430 = vpop.f32.mrb[0].mxu0
    %v2431 = vadd.f32 0.0, %v2430
    %v2432 = vpop.f32.mrb[0].mxu0
    %2433 = vmatprep.mubr.bf16.mxu0 %v524
    %2434 = vmatmul.mubr.bf16.gmra.mrb[0].mxu0 %v522
    %v2435 = vpop.f32.mrb[0].mxu0
    %v2436 = vadd.f32 0.0, %v2435
    %v2437 = vpop.f32.mrb[0].mxu0
    %v2438 = vpop.f32.mrb[0].mxu0
    %v2439 = vadd.f32 0.0, %v2438
    %v2440 = vpop.f32.mrb[0].mxu0
    %2441 = vmatprep.mubr.bf16.mxu0 %v525
    %2442 = vmatmul.mubr.bf16.gmra.mrb[0].mxu0 %v523
    %v2443 = vpop.f32.mrb[0].mxu0
    %v2444 = vadd.f32 0.0, %v2443
    %v2445 = vpop.f32.mrb[0].mxu0
    %v2446 = vpop.f32.mrb[0].mxu0
    %v2447 = vadd.f32 0.0, %v2446
    %v2448 = vpop.f32.mrb[0].mxu0
    %2449 = vmatprep.mubr.bf16.mxu0 %v526
    %2450 = vmatmul.mubr.bf16.gmra.mrb[0].mxu0 %v524
    %v2451 = vpop.f32.mrb[0].mxu0
    %v2452 = vadd.f32 0.0, %v2451
    %v2453 = vpop.f32.mrb[0].mxu0
    %v2454 = vpop.f32.mrb[0].mxu0
    %v2455 = vadd.f32 0.0, %v2454
    %v2456 = vpop.f32.mrb[0].mxu0
    %2457 = vmatprep.mubr.bf16.mxu0 %v527
    %2458 = vmatmul.mubr.bf16.gmra.mrb[0].mxu0 %v525
    %v2459 = vpop.f32.mrb[0].mxu0
    %v2460 = vadd.f32 0.0, %v2459
    %v2461 = vpop.f32.mrb[0].mxu0
    %v2462 = vpop.f32.mrb[0].mxu0
    %v2463 = vadd.f32 0.0, %v2462
    %v2464 = vpop.f32.mrb[0].mxu0
    %2465 = vmatprep.mubr.bf16.mxu0 %v528
    %2466 = vmatmul.mubr.bf16.gmra.mrb[0].mxu0 %v526
    %v2467 = vpop.f32.mrb[0].mxu0
    %v2468 = vadd.f32 0.0, %v2467
    %v2469 = vpop.f32.mrb[0].mxu0
    %v2470 = vpop.f32.mrb[0].mxu0
    %v2471 = vadd.f32 0.0, %v2470
    %v2472 = vpop.f32.mrb[0].mxu0
    %2473 = vmatprep.mubr.bf16.mxu0 %v529
    %2474 = vmatmul.mubr.bf16.gmra.mrb[0].mxu0 %v527
    %v2475 = vpop.f32.mrb[0].mxu0
    %v2476 = vadd.f32 0.0, %v2475
    %v2477 = vpop.f32.mrb[0].mxu0
    %v2478 = vpop.f32.mrb[0].mxu0
    %v2479 = vadd.f32 0.0, %v2478
    %v2480 = vpop.f32.mrb[0].mxu0
    %2481 = vmatprep.mubr.bf16.mxu0 %v530
    %2482 = vmatmul.mubr.bf16.gmra.mrb[0].mxu0 %v528
    %v2483 = vpop.f32.mrb[0].mxu0
    %v2484 = vadd.f32 0.0, %v2483
    %v2485 = vpop.f32.mrb[0].mxu0
    %v2486 = vpop.f32.mrb[0].mxu0
    %v2487 = vadd.f32 0.0, %v2486
    %v2488 = vpop.f32.mrb[0].mxu0
    %2489 = vmatprep.mubr.bf16.mxu0 %v531
    %2490 = vmatmul.mubr.bf16.gmra.mrb[0].mxu0 %v529
    %v2491 = vpop.f32.mrb[0].mxu0
    %v2492 = vadd.f32 0.0, %v2491
    %v2493 = vpop.f32.mrb[0].mxu0
    %v2494 = vpop.f32.mrb[0].mxu0
    %v2495 = vadd.f32 0.0, %v2494
    %v2496 = vpop.f32.mrb[0].mxu0
    %2497 = vmatprep.mubr.bf16.mxu0 %v532
    %2498 = vmatmul.mubr.bf16.gmra.mrb[0].mxu0 %v530
    %v2499 = vpop.f32.mrb[0].mxu0
    %v2500 = vadd.f32 0.0, %v2499
    %v2501 = vpop.f32.mrb[0].mxu0
    %v2502 = vpop.f32.mrb[0].mxu0
    %v2503 = vadd.f32 0.0, %v2502
    %v2504 = vpop.f32.mrb[0].mxu0
    %2505 = vmatprep.mubr.bf16.mxu0 %v533
    %2506 = vmatmul.mubr.bf16.gmra.mrb[0].mxu0 %v531
    %v2507 = vpop.f32.mrb[0].mxu0
    %v2508 = vadd.f32 0.0, %v2507
    %v2509 = vpop.f32.mrb[0].mxu0
    %v2510 = vpop.f32.mrb[0].mxu0
    %v2511 = vadd.f32 0.0, %v2510
    %v2512 = vpop.f32.mrb[0].mxu0
    %2513 = vmatprep.mubr.bf16.mxu0 %v534
    %2514 = vmatmul.mubr.bf16.gmra.mrb[0].mxu0 %v532
    %v2515 = vpop.f32.mrb[0].mxu0
    %v2516 = vadd.f32 0.0, %v2515
    %v2517 = vpop.f32.mrb[0].mxu0
    %v2518 = vpop.f32.mrb[0].mxu0
    %v2519 = vadd.f32 0.0, %v2518
    %v2520 = vpop.f32.mrb[0].mxu0
    %2521 = vmatprep.mubr.bf16.mxu0 %v535
    %2522 = vmatmul.mubr.bf16.gmra.mrb[0].mxu0 %v533
    %v2523 = vpop.f32.mrb[0].mxu0
    %v2524 = vadd.f32 0.0, %v2523
    %v2525 = vpop.f32.mrb[0].mxu0
    %v2526 = vpop.f32.mrb[0].mxu0
    %v2527 = vadd.f32 0.0, %v2526
    %v2528 = vpop.f32.mrb[0].mxu0
    %2529 = vmatprep.mubr.bf16.mxu0 %v536
    %2530 = vmatmul.mubr.bf16.gmra.mrb[0].mxu0 %v534
    %v2531 = vpop.f32.mrb[0].mxu0
    %v2532 = vadd.f32 0.0, %v2531
    %v2533 = vpop.f32.mrb[0].mxu0
    %v2534 = vpop.f32.mrb[0].mxu0
    %v2535 = vadd.f32 0.0, %v2534
    %v2536 = vpop.f32.mrb[0].mxu0
    %2537 = vmatprep.mubr.bf16.mxu0 %v537
    %2538 = vmatmul.mubr.bf16.gmra.mrb[0].mxu0 %v535
    %v2539 = vpop.f32.mrb[0].mxu0
    %v2540 = vadd.f32 0.0, %v2539
    %v2541 = vpop.f32.mrb[0].mxu0
    %v2542 = vpop.f32.mrb[0].mxu0
    %v2543 = vadd.f32 0.0, %v2542
    %v2544 = vpop.f32.mrb[0].mxu0
    %2545 = vmatprep.mubr.bf16.mxu0 %v538
    %2546 = vmatmul.mubr.bf16.gmra.mrb[0].mxu0 %v536
    %v2547 = vpop.f32.mrb[0].mxu0
    %v2548 = vadd.f32 0.0, %v2547
    %v2549 = vpop.f32.mrb[0].mxu0
    %v2550 = vpop.f32.mrb[0].mxu0
    %v2551 = vadd.f32 0.0, %v2550
    %v2552 = vpop.f32.mrb[0].mxu0
    %2553 = vmatprep.mubr.bf16.mxu0 %v539
    %2554 = vmatmul.mubr.bf16.gmra.mrb[0].mxu0 %v537
    %v2555 = vpop.f32.mrb[0].mxu0
    %v2556 = vadd.f32 0.0, %v2555
    %v2557 = vpop.f32.mrb[0].mxu0
    %v2558 = vpop.f32.mrb[0].mxu0
    %v2559 = vadd.f32 0.0, %v2558
    %v2560 = vpop.f32.mrb[0].mxu0
    %2561 = vmatprep.mubr.bf16.mxu0 %v540
    %2562 = vmatmul.mubr.bf16.gmra.mrb[0].mxu0 %v538
    %v2563 = vpop.f32.mrb[0].mxu0
    %v2564 = vadd.f32 0.0, %v2563
    %v2565 = vpop.f32.mrb[0].mxu0
    %v2566 = vpop.f32.mrb[0].mxu0
    %v2567 = vadd.f32 0.0, %v2566
    %v2568 = vpop.f32.mrb[0].mxu0
    %2569 = vmatprep.mubr.bf16.mxu0 %v541
    %2570 = vmatmul.mubr.bf16.gmra.mrb[0].mxu0 %v539
    %v2571 = vpop.f32.mrb[0].mxu0
    %v2572 = vadd.f32 0.0, %v2571
    %v2573 = vpop.f32.mrb[0].mxu0
    %v2574 = vpop.f32.mrb[0].mxu0
    %v2575 = vadd.f32 0.0, %v2574
    %v2576 = vpop.f32.mrb[0].mxu0
    %2577 = vmatprep.mubr.bf16.mxu0 %v542
    %2578 = vmatmul.mubr.bf16.gmra.mrb[0].mxu0 %v540
    %v2579 = vpop.f32.mrb[0].mxu0
    %v2580 = vadd.f32 0.0, %v2579
    %v2581 = vpop.f32.mrb[0].mxu0
    %v2582 = vpop.f32.mrb[0].mxu0
    %v2583 = vadd.f32 0.0, %v2582
    %v2584 = vpop.f32.mrb[0].mxu0
    %2585 = vmatprep.mubr.bf16.mxu0 %v543
    %2586 = vmatmul.mubr.bf16.gmra.mrb[0].mxu0 %v541
    %v2587 = vpop.f32.mrb[0].mxu0
    %v2588 = vadd.f32 0.0, %v2587
    %v2589 = vpop.f32.mrb[0].mxu0
    %v2590 = vpop.f32.mrb[0].mxu0
    %v2591 = vadd.f32 0.0, %v2590
    %v2592 = vpop.f32.mrb[0].mxu0
    %2593 = vmatprep.mubr.bf16.mxu0 %v544
    %2594 = vmatmul.mubr.bf16.gmra.mrb[0].mxu0 %v542
    %v2595 = vpop.f32.mrb[0].mxu0
    %v2596 = vadd.f32 0.0, %v2595
    %v2597 = vpop.f32.mrb[0].mxu0
    %v2598 = vpop.f32.mrb[0].mxu0
    %v2599 = vadd.f32 0.0, %v2598
    %v2600 = vpop.f32.mrb[0].mxu0
    %2601 = vmatprep.mubr.bf16.mxu0 %v545
    %2602 = vmatmul.mubr.bf16.gmra.mrb[0].mxu0 %v543
    %v2603 = vpop.f32.mrb[0].mxu0
    %v2604 = vadd.f32 0.0, %v2603
    %v2605 = vpop.f32.mrb[0].mxu0
    %v2606 = vpop.f32.mrb[0].mxu0
    %v2607 = vadd.f32 0.0, %v2606
    %v2608 = vpop.f32.mrb[0].mxu0
    %2609 = vmatprep.mubr.bf16.mxu0 %v546
    %2610 = vmatmul.mubr.bf16.gmra.mrb[0].mxu0 %v544
    %v2611 = vpop.f32.mrb[0].mxu0
    %v2612 = vadd.f32 0.0, %v2611
    %v2613 = vpop.f32.mrb[0].mxu0
    %v2614 = vpop.f32.mrb[0].mxu0
    %v2615 = vadd.f32 0.0, %v2614
    %v2616 = vpop.f32.mrb[0].mxu0
    %2617 = vmatprep.mubr.bf16.mxu0 %v547
    %2618 = vmatmul.mubr.bf16.gmra.mrb[0].mxu0 %v545
    %v2619 = vpop.f32.mrb[0].mxu0
    %v2620 = vadd.f32 0.0, %v2619
    %v2621 = vpop.f32.mrb[0].mxu0
    %v2622 = vpop.f32.mrb[0].mxu0
    %v2623 = vadd.f32 0.0, %v2622
    %v2624 = vpop.f32.mrb[0].mxu0
    %2625 = vmatprep.mubr.bf16.mxu0 %v548
    %2626 = vmatmul.mubr.bf16.gmra.mrb[0].mxu0 %v546
    %v2627 = vpop.f32.mrb[0].mxu0
    %v2628 = vadd.f32 0.0, %v2627
    %v2629 = vpop.f32.mrb[0].mxu0
    %v2630 = vpop.f32.mrb[0].mxu0
    %v2631 = vadd.f32 0.0, %v2630
    %v2632 = vpop.f32.mrb[0].mxu0
    %2633 = vmatprep.mubr.bf16.mxu0 %v549
    %2634 = vmatmul.mubr.bf16.gmra.mrb[0].mxu0 %v547
    %v2635 = vpop.f32.mrb[0].mxu0
    %v2636 = vadd.f32 0.0, %v2635
    %v2637 = vpop.f32.mrb[0].mxu0
    %v2638 = vpop.f32.mrb[0].mxu0
    %v2639 = vadd.f32 0.0, %v2638
    %v2640 = vpop.f32.mrb[0].mxu0
    %2641 = vmatprep.mubr.bf16.mxu0 %v622
    %2642 = vmatmul.mubr.bf16.gmra.mrb[0].mxu0 %v548
    %v2643 = vpop.f32.mrb[0].mxu0
    %v2644 = vadd.f32 0.0, %v2643
    %v2645 = vpop.f32.mrb[0].mxu0
    %v2646 = vpop.f32.mrb[0].mxu0
    %v2647 = vadd.f32 0.0, %v2646
    %v2648 = vpop.f32.mrb[0].mxu0
    %2649 = vmatprep.mubr.bf16.mxu0 %v623
    %2650 = vmatmul.mubr.bf16.gmra.mrb[0].mxu0 %v549
    %v2651 = vpop.f32.mrb[0].mxu0
    %v2652 = vadd.f32 0.0, %v2651
    %v2653 = vpop.f32.mrb[0].mxu0
    %v2654 = vpop.f32.mrb[0].mxu0
    %v2655 = vadd.f32 0.0, %v2654
    %v2656 = vpop.f32.mrb[0].mxu0
    %2657 = vdwg.mxu0
    %2658 = vmatprep.subr.bf16.mxu0 0
    %2659 = vmatpush1.bf16.msra.mxu0 %v2081
    %2660 = vmatprep.subr.bf16.mxu0 0
    %2661 = vmatpush1.bf16.msra.mxu0 %v2082
    %2662 = vmatprep.subr.bf16.mxu0 0
    %2663 = vmatpush1.bf16.msra.mxu0 %v2083
    %2664 = vmatprep.subr.bf16.mxu0 0
    %2665 = vmatpush1.bf16.msra.mxu0 %v2084
    %2666 = vmatprep.subr.bf16.mxu0 0
    %2667 = vmatpush1.bf16.msra.mxu0 %v2085
    %2668 = vmatprep.subr.bf16.mxu0 0
    %2669 = vmatpush1.bf16.msra.mxu0 %v2086
    %2670 = vmatprep.subr.bf16.mxu0 0
    %2671 = vmatpush1.bf16.msra.mxu0 %v2087
    %2672 = vmatprep.subr.bf16.mxu0 0
    %2673 = vmatpush1.bf16.msra.mxu0 %v2088
    %2674 = vmatprep.subr.bf16.mxu0 0
    %2675 = vmatpush1.bf16.msra.mxu0 0
    %2676 = vmatprep.subr.bf16.mxu0 0
    %2677 = vmatpush1.bf16.msra.mxu0 0
    %2678 = vmatprep.subr.bf16.mxu0 0
    %2679 = vmatpush1.bf16.msra.mxu0 0
    %2680 = vmatprep.subr.bf16.mxu0 0
    %2681 = vmatpush1.bf16.msra.mxu0 0
    %2682 = vmatprep.subr.bf16.mxu0 0
    %2683 = vmatpush1.bf16.msra.mxu0 0
    %2684 = vmatprep.subr.bf16.mxu0 0
    %2685 = vmatpush1.bf16.msra.mxu0 0
    %2686 = vmatprep.subr.bf16.mxu0 0
    %2687 = vmatpush1.bf16.msra.mxu0 0
    %2688 = vmatprep.subr.bf16.mxu0 0
    %2689 = vmatpush1.bf16.msra.mxu0 0
    %2690 = vmatprep.mubr.bf16.mxu0 0
    %2691 = vmatmul.mubr.bf16.gmra.mrb[0].mxu0 %v490
    %v2692 = vpop.f32.mrb[0].mxu0
    %v2693 = vadd.f32 %v2148, %v2692
    %v2694 = vpop.f32.mrb[0].mxu0
    %v2695 = vpop.f32.mrb[0].mxu0
    %v2696 = vadd.f32 %v2151, %v2695
    %v2697 = vpop.f32.mrb[0].mxu0
    %2698 = vmatprep.mubr.bf16.mxu0 0
    %2699 = vmatmul.mubr.bf16.gmra.mrb[0].mxu0 %v491
    %v2700 = vpop.f32.mrb[0].mxu0
    %v2701 = vadd.f32 %v2156, %v2700
    %v2702 = vpop.f32.mrb[0].mxu0
    %v2703 = vpop.f32.mrb[0].mxu0
    %v2704 = vadd.f32 %v2159, %v2703
    %v2705 = vpop.f32.mrb[0].mxu0
    %2706 = vmatprep.mubr.bf16.mxu0 0
    %2707 = vmatmul.mubr.bf16.gmra.mrb[0].mxu0 %v492
    %v2708 = vpop.f32.mrb[0].mxu0
    %v2709 = vadd.f32 %v2164, %v2708
    %v2710 = vpop.f32.mrb[0].mxu0
    %v2711 = vpop.f32.mrb[0].mxu0
    %v2712 = vadd.f32 %v2167, %v2711
    %v2713 = vpop.f32.mrb[0].mxu0
    %2714 = vmatprep.mubr.bf16.mxu0 0
    %2715 = vmatmul.mubr.bf16.gmra.mrb[0].mxu0 %v493
    %v2716 = vpop.f32.mrb[0].mxu0
    %v2717 = vadd.f32 %v2172, %v2716
    %v2718 = vpop.f32.mrb[0].mxu0
    %v2719 = vpop.f32.mrb[0].mxu0
    %v2720 = vadd.f32 %v2175, %v2719
    %v2721 = vpop.f32.mrb[0].mxu0
    %2722 = vmatprep.mubr.bf16.mxu0 0
    %2723 = vmatmul.mubr.bf16.gmra.mrb[0].mxu0 %v494
    %v2724 = vpop.f32.mrb[0].mxu0
    %v2725 = vadd.f32 %v2180, %v2724
    %v2726 = vpop.f32.mrb[0].mxu0
    %v2727 = vpop.f32.mrb[0].mxu0
    %v2728 = vadd.f32 %v2183, %v2727
    %v2729 = vpop.f32.mrb[0].mxu0
    %2730 = vmatprep.mubr.bf16.mxu0 0
    %2731 = vmatmul.mubr.bf16.gmra.mrb[0].mxu0 %v495
    %v2732 = vpop.f32.mrb[0].mxu0
    %v2733 = vadd.f32 %v2188, %v2732
    %v2734 = vpop.f32.mrb[0].mxu0
    %v2735 = vpop.f32.mrb[0].mxu0
    %v2736 = vadd.f32 %v2191, %v2735
    %v2737 = vpop.f32.mrb[0].mxu0
    %2738 = vmatprep.mubr.bf16.mxu0 0
    %2739 = vmatmul.mubr.bf16.gmra.mrb[0].mxu0 %v496
    %v2740 = vpop.f32.mrb[0].mxu0
    %v2741 = vadd.f32 %v2196, %v2740
    %v2742 = vpop.f32.mrb[0].mxu0
    %v2743 = vpop.f32.mrb[0].mxu0
    %v2744 = vadd.f32 %v2199, %v2743
    %v2745 = vpop.f32.mrb[0].mxu0
    %2746 = vmatprep.mubr.bf16.mxu0 0
    %2747 = vmatmul.mubr.bf16.gmra.mrb[0].mxu0 %v497
    %v2748 = vpop.f32.mrb[0].mxu0
    %v2749 = vadd.f32 %v2204, %v2748
    %v2750 = vpop.f32.mrb[0].mxu0
    %v2751 = vpop.f32.mrb[0].mxu0
    %v2752 = vadd.f32 %v2207, %v2751
    %v2753 = vpop.f32.mrb[0].mxu0
    %2754 = vmatprep.mubr.bf16.mxu0 0
    %2755 = vmatmul.mubr.bf16.gmra.mrb[0].mxu0 %v498
    %v2756 = vpop.f32.mrb[0].mxu0
    %v2757 = vadd.f32 %v2212, %v2756
    %v2758 = vpop.f32.mrb[0].mxu0
    %v2759 = vpop.f32.mrb[0].mxu0
    %v2760 = vadd.f32 %v2215, %v2759
    %v2761 = vpop.f32.mrb[0].mxu0
    %2762 = vmatprep.mubr.bf16.mxu0 0
    %2763 = vmatmul.mubr.bf16.gmra.mrb[0].mxu0 %v499
    %v2764 = vpop.f32.mrb[0].mxu0
    %v2765 = vadd.f32 %v2220, %v2764
    %v2766 = vpop.f32.mrb[0].mxu0
    %v2767 = vpop.f32.mrb[0].mxu0
    %v2768 = vadd.f32 %v2223, %v2767
    %v2769 = vpop.f32.mrb[0].mxu0
    %2770 = vmatprep.mubr.bf16.mxu0 0
    %2771 = vmatmul.mubr.bf16.gmra.mrb[0].mxu0 %v500
    %v2772 = vpop.f32.mrb[0].mxu0
    %v2773 = vadd.f32 %v2228, %v2772
    %v2774 = vpop.f32.mrb[0].mxu0
    %v2775 = vpop.f32.mrb[0].mxu0
    %v2776 = vadd.f32 %v2231, %v2775
    %v2777 = vpop.f32.mrb[0].mxu0
    %2778 = vmatprep.mubr.bf16.mxu0 0
    %2779 = vmatmul.mubr.bf16.gmra.mrb[0].mxu0 %v501
    %v2780 = vpop.f32.mrb[0].mxu0
    %v2781 = vadd.f32 %v2236, %v2780
    %v2782 = vpop.f32.mrb[0].mxu0
    %v2783 = vpop.f32.mrb[0].mxu0
    %v2784 = vadd.f32 %v2239, %v2783
    %v2785 = vpop.f32.mrb[0].mxu0
    %2786 = vmatprep.mubr.bf16.mxu0 0
    %2787 = vmatmul.mubr.bf16.gmra.mrb[0].mxu0 %v502
    %v2788 = vpop.f32.mrb[0].mxu0
    %v2789 = vadd.f32 %v2244, %v2788
    %v2790 = vpop.f32.mrb[0].mxu0
    %v2791 = vpop.f32.mrb[0].mxu0
    %v2792 = vadd.f32 %v2247, %v2791
    %v2793 = vpop.f32.mrb[0].mxu0
    %2794 = vmatprep.mubr.bf16.mxu0 0
    %2795 = vmatmul.mubr.bf16.gmra.mrb[0].mxu0 %v503
    %v2796 = vpop.f32.mrb[0].mxu0
    %v2797 = vadd.f32 %v2252, %v2796
    %v2798 = vpop.f32.mrb[0].mxu0
    %v2799 = vpop.f32.mrb[0].mxu0
    %v2800 = vadd.f32 %v2255, %v2799
    %v2801 = vpop.f32.mrb[0].mxu0
    %2802 = vmatprep.mubr.bf16.mxu0 0
    %2803 = vmatmul.mubr.bf16.gmra.mrb[0].mxu0 %v504
    %v2804 = vpop.f32.mrb[0].mxu0
    %v2805 = vadd.f32 %v2260, %v2804
    %v2806 = vpop.f32.mrb[0].mxu0
    %v2807 = vpop.f32.mrb[0].mxu0
    %v2808 = vadd.f32 %v2263, %v2807
    %v2809 = vpop.f32.mrb[0].mxu0
    %2810 = vmatprep.mubr.bf16.mxu0 0
    %2811 = vmatmul.mubr.bf16.gmra.mrb[0].mxu0 %v505
    %v2812 = vpop.f32.mrb[0].mxu0
    %v2813 = vadd.f32 %v2268, %v2812
    %v2814 = vpop.f32.mrb[0].mxu0
    %v2815 = vpop.f32.mrb[0].mxu0
    %v2816 = vadd.f32 %v2271, %v2815
    %v2817 = vpop.f32.mrb[0].mxu0
    %2818 = vmatprep.mubr.bf16.mxu0 0
    %2819 = vmatmul.mubr.bf16.gmra.mrb[0].mxu0 %v506
    %v2820 = vpop.f32.mrb[0].mxu0
    %v2821 = vadd.f32 %v2276, %v2820
    %v2822 = vpop.f32.mrb[0].mxu0
    %v2823 = vpop.f32.mrb[0].mxu0
    %v2824 = vadd.f32 %v2279, %v2823
    %v2825 = vpop.f32.mrb[0].mxu0
    %2826 = vmatprep.mubr.bf16.mxu0 0
    %2827 = vmatmul.mubr.bf16.gmra.mrb[0].mxu0 %v507
    %v2828 = vpop.f32.mrb[0].mxu0
    %v2829 = vadd.f32 %v2284, %v2828
    %v2830 = vpop.f32.mrb[0].mxu0
    %v2831 = vpop.f32.mrb[0].mxu0
    %v2832 = vadd.f32 %v2287, %v2831
    %v2833 = vpop.f32.mrb[0].mxu0
    %2834 = vmatprep.mubr.bf16.mxu0 0
    %2835 = vmatmul.mubr.bf16.gmra.mrb[0].mxu0 %v508
    %v2836 = vpop.f32.mrb[0].mxu0
    %v2837 = vadd.f32 %v2292, %v2836
    %v2838 = vpop.f32.mrb[0].mxu0
    %v2839 = vpop.f32.mrb[0].mxu0
    %v2840 = vadd.f32 %v2295, %v2839
    %v2841 = vpop.f32.mrb[0].mxu0
    %2842 = vmatprep.mubr.bf16.mxu0 0
    %2843 = vmatmul.mubr.bf16.gmra.mrb[0].mxu0 %v509
    %v2844 = vpop.f32.mrb[0].mxu0
    %v2845 = vadd.f32 %v2300, %v2844
    %v2846 = vpop.f32.mrb[0].mxu0
    %v2847 = vpop.f32.mrb[0].mxu0
    %v2848 = vadd.f32 %v2303, %v2847
    %v2849 = vpop.f32.mrb[0].mxu0
    %2850 = vmatprep.mubr.bf16.mxu0 0
    %2851 = vmatmul.mubr.bf16.gmra.mrb[0].mxu0 %v510
    %v2852 = vpop.f32.mrb[0].mxu0
    %v2853 = vadd.f32 %v2308, %v2852
    %v2854 = vpop.f32.mrb[0].mxu0
    %v2855 = vpop.f32.mrb[0].mxu0
    %v2856 = vadd.f32 %v2311, %v2855
    %v2857 = vpop.f32.mrb[0].mxu0
    %2858 = vmatprep.mubr.bf16.mxu0 0
    %2859 = vmatmul.mubr.bf16.gmra.mrb[0].mxu0 %v511
    %v2860 = vpop.f32.mrb[0].mxu0
    %v2861 = vadd.f32 %v2316, %v2860
    %v2862 = vpop.f32.mrb[0].mxu0
    %v2863 = vpop.f32.mrb[0].mxu0
    %v2864 = vadd.f32 %v2319, %v2863
    %v2865 = vpop.f32.mrb[0].mxu0
    %2866 = vmatprep.mubr.bf16.mxu0 0
    %2867 = vmatmul.mubr.bf16.gmra.mrb[0].mxu0 %v512
    %v2868 = vpop.f32.mrb[0].mxu0
    %v2869 = vadd.f32 %v2324, %v2868
    %v2870 = vpop.f32.mrb[0].mxu0
    %v2871 = vpop.f32.mrb[0].mxu0
    %v2872 = vadd.f32 %v2327, %v2871
    %v2873 = vpop.f32.mrb[0].mxu0
    %2874 = vmatprep.mubr.bf16.mxu0 0
    %2875 = vmatmul.mubr.bf16.gmra.mrb[0].mxu0 %v513
    %v2876 = vpop.f32.mrb[0].mxu0
    %v2877 = vadd.f32 %v2332, %v2876
    %v2878 = vpop.f32.mrb[0].mxu0
    %v2879 = vpop.f32.mrb[0].mxu0
    %v2880 = vadd.f32 %v2335, %v2879
    %v2881 = vpop.f32.mrb[0].mxu0
    %2882 = vmatprep.mubr.bf16.mxu0 0
    %2883 = vmatmul.mubr.bf16.gmra.mrb[0].mxu0 %v514
    %v2884 = vpop.f32.mrb[0].mxu0
    %v2885 = vadd.f32 %v2340, %v2884
    %v2886 = vpop.f32.mrb[0].mxu0
    %v2887 = vpop.f32.mrb[0].mxu0
    %v2888 = vadd.f32 %v2343, %v2887
    %v2889 = vpop.f32.mrb[0].mxu0
    %2890 = vmatprep.mubr.bf16.mxu0 0
    %2891 = vmatmul.mubr.bf16.gmra.mrb[0].mxu0 %v515
    %v2892 = vpop.f32.mrb[0].mxu0
    %v2893 = vadd.f32 %v2348, %v2892
    %v2894 = vpop.f32.mrb[0].mxu0
    %v2895 = vpop.f32.mrb[0].mxu0
    %v2896 = vadd.f32 %v2351, %v2895
    %v2897 = vpop.f32.mrb[0].mxu0
    %2898 = vmatprep.mubr.bf16.mxu0 0
    %2899 = vmatmul.mubr.bf16.gmra.mrb[0].mxu0 %v516
    %v2900 = vpop.f32.mrb[0].mxu0
    %v2901 = vadd.f32 %v2356, %v2900
    %v2902 = vpop.f32.mrb[0].mxu0
    %v2903 = vpop.f32.mrb[0].mxu0
    %v2904 = vadd.f32 %v2359, %v2903
    %v2905 = vpop.f32.mrb[0].mxu0
    %2906 = vmatprep.mubr.bf16.mxu0 0
    %2907 = vmatmul.mubr.bf16.gmra.mrb[0].mxu0 %v517
    %v2908 = vpop.f32.mrb[0].mxu0
    %v2909 = vadd.f32 %v2364, %v2908
    %v2910 = vpop.f32.mrb[0].mxu0
    %v2911 = vpop.f32.mrb[0].mxu0
    %v2912 = vadd.f32 %v2367, %v2911
    %v2913 = vpop.f32.mrb[0].mxu0
    %2914 = vmatprep.mubr.bf16.mxu0 0
    %2915 = vmatmul.mubr.bf16.gmra.mrb[0].mxu0 %v518
    %v2916 = vpop.f32.mrb[0].mxu0
    %v2917 = vadd.f32 %v2372, %v2916
    %v2918 = vpop.f32.mrb[0].mxu0
    %v2919 = vpop.f32.mrb[0].mxu0
    %v2920 = vadd.f32 %v2375, %v2919
    %v2921 = vpop.f32.mrb[0].mxu0
    %2922 = vmatprep.mubr.bf16.mxu0 0
    %2923 = vmatmul.mubr.bf16.gmra.mrb[0].mxu0 %v519
    %v2924 = vpop.f32.mrb[0].mxu0
    %v2925 = vadd.f32 %v2380, %v2924
    %v2926 = vpop.f32.mrb[0].mxu0
    %v2927 = vpop.f32.mrb[0].mxu0
    %v2928 = vadd.f32 %v2383, %v2927
    %v2929 = vpop.f32.mrb[0].mxu0
    %2930 = vmatprep.mubr.bf16.mxu0 0
    %2931 = vmatmul.mubr.bf16.gmra.mrb[0].mxu0 %v520
    %v2932 = vpop.f32.mrb[0].mxu0
    %v2933 = vadd.f32 %v2388, %v2932
    %v2934 = vpop.f32.mrb[0].mxu0
    %v2935 = vpop.f32.mrb[0].mxu0
    %v2936 = vadd.f32 %v2391, %v2935
    %v2937 = vpop.f32.mrb[0].mxu0
    %2938 = vmatprep.mubr.bf16.mxu0 0
    %2939 = vmatmul.mubr.bf16.gmra.mrb[0].mxu0 %v521
    %v2940 = vpop.f32.mrb[0].mxu0
    %v2941 = vadd.f32 %v2396, %v2940
    %v2942 = vpop.f32.mrb[0].mxu0
    %v2943 = vpop.f32.mrb[0].mxu0
    %v2944 = vadd.f32 %v2399, %v2943
    %v2945 = vpop.f32.mrb[0].mxu0
    %2946 = vmatprep.mubr.bf16.mxu0 0
    %2947 = vmatmul.mubr.bf16.gmra.mrb[0].mxu0 %v522
    %v2948 = vpop.f32.mrb[0].mxu0
    %v2949 = vadd.f32 %v2404, %v2948
    %v2950 = vpop.f32.mrb[0].mxu0
    %v2951 = vpop.f32.mrb[0].mxu0
    %v2952 = vadd.f32 %v2407, %v2951
    %v2953 = vpop.f32.mrb[0].mxu0
    %2954 = vmatprep.mubr.bf16.mxu0 0
    %2955 = vmatmul.mubr.bf16.gmra.mrb[0].mxu0 %v523
    %v2956 = vpop.f32.mrb[0].mxu0
    %v2957 = vadd.f32 %v2412, %v2956
    %v2958 = vpop.f32.mrb[0].mxu0
    %v2959 = vpop.f32.mrb[0].mxu0
    %v2960 = vadd.f32 %v2415, %v2959
    %v2961 = vpop.f32.mrb[0].mxu0
    %2962 = vmatprep.mubr.bf16.mxu0 0
    %2963 = vmatmul.mubr.bf16.gmra.mrb[0].mxu0 %v524
    %v2964 = vpop.f32.mrb[0].mxu0
    %v2965 = vadd.f32 %v2420, %v2964
    %v2966 = vpop.f32.mrb[0].mxu0
    %v2967 = vpop.f32.mrb[0].mxu0
    %v2968 = vadd.f32 %v2423, %v2967
    %v2969 = vpop.f32.mrb[0].mxu0
    %2970 = vmatprep.mubr.bf16.mxu0 0
    %2971 = vmatmul.mubr.bf16.gmra.mrb[0].mxu0 %v525
    %v2972 = vpop.f32.mrb[0].mxu0
    %v2973 = vadd.f32 %v2428, %v2972
    %v2974 = vpop.f32.mrb[0].mxu0
    %v2975 = vpop.f32.mrb[0].mxu0
    %v2976 = vadd.f32 %v2431, %v2975
    %v2977 = vpop.f32.mrb[0].mxu0
    %2978 = vmatprep.mubr.bf16.mxu0 0
    %2979 = vmatmul.mubr.bf16.gmra.mrb[0].mxu0 %v526
    %v2980 = vpop.f32.mrb[0].mxu0
    %v2981 = vadd.f32 %v2436, %v2980
    %v2982 = vpop.f32.mrb[0].mxu0
    %v2983 = vpop.f32.mrb[0].mxu0
    %v2984 = vadd.f32 %v2439, %v2983
    %v2985 = vpop.f32.mrb[0].mxu0
    %2986 = vmatprep.mubr.bf16.mxu0 0
    %2987 = vmatmul.mubr.bf16.gmra.mrb[0].mxu0 %v527
    %v2988 = vpop.f32.mrb[0].mxu0
    %v2989 = vadd.f32 %v2444, %v2988
    %v2990 = vpop.f32.mrb[0].mxu0
    %v2991 = vpop.f32.mrb[0].mxu0
    %v2992 = vadd.f32 %v2447, %v2991
    %v2993 = vpop.f32.mrb[0].mxu0
    %2994 = vmatprep.mubr.bf16.mxu0 0
    %2995 = vmatmul.mubr.bf16.gmra.mrb[0].mxu0 %v528
    %v2996 = vpop.f32.mrb[0].mxu0
    %v2997 = vadd.f32 %v2452, %v2996
    %v2998 = vpop.f32.mrb[0].mxu0
    %v2999 = vpop.f32.mrb[0].mxu0
    %v3000 = vadd.f32 %v2455, %v2999
    %v3001 = vpop.f32.mrb[0].mxu0
    %3002 = vmatprep.mubr.bf16.mxu0 0
    %3003 = vmatmul.mubr.bf16.gmra.mrb[0].mxu0 %v529
    %v3004 = vpop.f32.mrb[0].mxu0
    %v3005 = vadd.f32 %v2460, %v3004
    %v3006 = vpop.f32.mrb[0].mxu0
    %v3007 = vpop.f32.mrb[0].mxu0
    %v3008 = vadd.f32 %v2463, %v3007
    %v3009 = vpop.f32.mrb[0].mxu0
    %3010 = vmatprep.mubr.bf16.mxu0 0
    %3011 = vmatmul.mubr.bf16.gmra.mrb[0].mxu0 %v530
    %v3012 = vpop.f32.mrb[0].mxu0
    %v3013 = vadd.f32 %v2468, %v3012
    %v3014 = vpop.f32.mrb[0].mxu0
    %v3015 = vpop.f32.mrb[0].mxu0
    %v3016 = vadd.f32 %v2471, %v3015
    %v3017 = vpop.f32.mrb[0].mxu0
    %3018 = vmatprep.mubr.bf16.mxu0 0
    %3019 = vmatmul.mubr.bf16.gmra.mrb[0].mxu0 %v531
    %v3020 = vpop.f32.mrb[0].mxu0
    %v3021 = vadd.f32 %v2476, %v3020
    %v3022 = vpop.f32.mrb[0].mxu0
    %v3023 = vpop.f32.mrb[0].mxu0
    %v3024 = vadd.f32 %v2479, %v3023
    %v3025 = vpop.f32.mrb[0].mxu0
    %3026 = vmatprep.mubr.bf16.mxu0 0
    %3027 = vmatmul.mubr.bf16.gmra.mrb[0].mxu0 %v532
    %v3028 = vpop.f32.mrb[0].mxu0
    %v3029 = vadd.f32 %v2484, %v3028
    %v3030 = vpop.f32.mrb[0].mxu0
    %v3031 = vpop.f32.mrb[0].mxu0
    %v3032 = vadd.f32 %v2487, %v3031
    %v3033 = vpop.f32.mrb[0].mxu0
    %3034 = vmatprep.mubr.bf16.mxu0 0
    %3035 = vmatmul.mubr.bf16.gmra.mrb[0].mxu0 %v533
    %v3036 = vpop.f32.mrb[0].mxu0
    %v3037 = vadd.f32 %v2492, %v3036
    %v3038 = vpop.f32.mrb[0].mxu0
    %v3039 = vpop.f32.mrb[0].mxu0
    %v3040 = vadd.f32 %v2495, %v3039
    %v3041 = vpop.f32.mrb[0].mxu0
    %3042 = vmatprep.mubr.bf16.mxu0 0
    %3043 = vmatmul.mubr.bf16.gmra.mrb[0].mxu0 %v534
    %v3044 = vpop.f32.mrb[0].mxu0
    %v3045 = vadd.f32 %v2500, %v3044
    %v3046 = vpop.f32.mrb[0].mxu0
    %v3047 = vpop.f32.mrb[0].mxu0
    %v3048 = vadd.f32 %v2503, %v3047
    %v3049 = vpop.f32.mrb[0].mxu0
    %3050 = vmatprep.mubr.bf16.mxu0 0
    %3051 = vmatmul.mubr.bf16.gmra.mrb[0].mxu0 %v535
    %v3052 = vpop.f32.mrb[0].mxu0
    %v3053 = vadd.f32 %v2508, %v3052
    %v3054 = vpop.f32.mrb[0].mxu0
    %v3055 = vpop.f32.mrb[0].mxu0
    %v3056 = vadd.f32 %v2511, %v3055
    %v3057 = vpop.f32.mrb[0].mxu0
    %3058 = vmatprep.mubr.bf16.mxu0 0
    %3059 = vmatmul.mubr.bf16.gmra.mrb[0].mxu0 %v536
    %v3060 = vpop.f32.mrb[0].mxu0
    %v3061 = vadd.f32 %v2516, %v3060
    %v3062 = vpop.f32.mrb[0].mxu0
    %v3063 = vpop.f32.mrb[0].mxu0
    %v3064 = vadd.f32 %v2519, %v3063
    %v3065 = vpop.f32.mrb[0].mxu0
    %3066 = vmatprep.mubr.bf16.mxu0 0
    %3067 = vmatmul.mubr.bf16.gmra.mrb[0].mxu0 %v537
    %v3068 = vpop.f32.mrb[0].mxu0
    %v3069 = vadd.f32 %v2524, %v3068
    %v3070 = vpop.f32.mrb[0].mxu0
    %v3071 = vpop.f32.mrb[0].mxu0
    %v3072 = vadd.f32 %v2527, %v3071
    %v3073 = vpop.f32.mrb[0].mxu0
    %3074 = vmatprep.mubr.bf16.mxu0 0
    %3075 = vmatmul.mubr.bf16.gmra.mrb[0].mxu0 %v538
    %v3076 = vpop.f32.mrb[0].mxu0
    %v3077 = vadd.f32 %v2532, %v3076
    %v3078 = vpop.f32.mrb[0].mxu0
    %v3079 = vpop.f32.mrb[0].mxu0
    %v3080 = vadd.f32 %v2535, %v3079
    %v3081 = vpop.f32.mrb[0].mxu0
    %3082 = vmatprep.mubr.bf16.mxu0 0
    %3083 = vmatmul.mubr.bf16.gmra.mrb[0].mxu0 %v539
    %v3084 = vpop.f32.mrb[0].mxu0
    %v3085 = vadd.f32 %v2540, %v3084
    %v3086 = vpop.f32.mrb[0].mxu0
    %v3087 = vpop.f32.mrb[0].mxu0
    %v3088 = vadd.f32 %v2543, %v3087
    %v3089 = vpop.f32.mrb[0].mxu0
    %3090 = vmatprep.mubr.bf16.mxu0 0
    %3091 = vmatmul.mubr.bf16.gmra.mrb[0].mxu0 %v540
    %v3092 = vpop.f32.mrb[0].mxu0
    %v3093 = vadd.f32 %v2548, %v3092
    %v3094 = vpop.f32.mrb[0].mxu0
    %v3095 = vpop.f32.mrb[0].mxu0
    %v3096 = vadd.f32 %v2551, %v3095
    %v3097 = vpop.f32.mrb[0].mxu0
    %3098 = vmatprep.mubr.bf16.mxu0 0
    %3099 = vmatmul.mubr.bf16.gmra.mrb[0].mxu0 %v541
    %v3100 = vpop.f32.mrb[0].mxu0
    %v3101 = vadd.f32 %v2556, %v3100
    %v3102 = vpop.f32.mrb[0].mxu0
    %v3103 = vpop.f32.mrb[0].mxu0
    %v3104 = vadd.f32 %v2559, %v3103
    %v3105 = vpop.f32.mrb[0].mxu0
    %3106 = vmatprep.mubr.bf16.mxu0 0
    %3107 = vmatmul.mubr.bf16.gmra.mrb[0].mxu0 %v542
    %v3108 = vpop.f32.mrb[0].mxu0
    %v3109 = vadd.f32 %v2564, %v3108
    %v3110 = vpop.f32.mrb[0].mxu0
    %v3111 = vpop.f32.mrb[0].mxu0
    %v3112 = vadd.f32 %v2567, %v3111
    %v3113 = vpop.f32.mrb[0].mxu0
    %3114 = vmatprep.mubr.bf16.mxu0 0
    %3115 = vmatmul.mubr.bf16.gmra.mrb[0].mxu0 %v543
    %v3116 = vpop.f32.mrb[0].mxu0
    %v3117 = vadd.f32 %v2572, %v3116
    %v3118 = vpop.f32.mrb[0].mxu0
    %v3119 = vpop.f32.mrb[0].mxu0
    %v3120 = vadd.f32 %v2575, %v3119
    %v3121 = vpop.f32.mrb[0].mxu0
    %3122 = vmatprep.mubr.bf16.mxu0 0
    %3123 = vmatmul.mubr.bf16.gmra.mrb[0].mxu0 %v544
    %v3124 = vpop.f32.mrb[0].mxu0
    %v3125 = vadd.f32 %v2580, %v3124
    %v3126 = vpop.f32.mrb[0].mxu0
    %v3127 = vpop.f32.mrb[0].mxu0
    %v3128 = vadd.f32 %v2583, %v3127
    %v3129 = vpop.f32.mrb[0].mxu0
    %3130 = vmatprep.mubr.bf16.mxu0 0
    %3131 = vmatmul.mubr.bf16.gmra.mrb[0].mxu0 %v545
    %v3132 = vpop.f32.mrb[0].mxu0
    %v3133 = vadd.f32 %v2588, %v3132
    %v3134 = vpop.f32.mrb[0].mxu0
    %v3135 = vpop.f32.mrb[0].mxu0
    %v3136 = vadd.f32 %v2591, %v3135
    %v3137 = vpop.f32.mrb[0].mxu0
    %3138 = vmatprep.mubr.bf16.mxu0 0
    %3139 = vmatmul.mubr.bf16.gmra.mrb[0].mxu0 %v546
    %v3140 = vpop.f32.mrb[0].mxu0
    %v3141 = vadd.f32 %v2596, %v3140
    %v3142 = vpop.f32.mrb[0].mxu0
    %v3143 = vpop.f32.mrb[0].mxu0
    %v3144 = vadd.f32 %v2599, %v3143
    %v3145 = vpop.f32.mrb[0].mxu0
    %3146 = vmatprep.mubr.bf16.mxu0 0
    %3147 = vmatmul.mubr.bf16.gmra.mrb[0].mxu0 %v547
    %v3148 = vpop.f32.mrb[0].mxu0
    %v3149 = vadd.f32 %v2604, %v3148
    %v3150 = vpop.f32.mrb[0].mxu0
    %v3151 = vpop.f32.mrb[0].mxu0
    %v3152 = vadd.f32 %v2607, %v3151
    %v3153 = vpop.f32.mrb[0].mxu0
    %3154 = vmatprep.mubr.bf16.mxu0 0
    %3155 = vmatmul.mubr.bf16.gmra.mrb[0].mxu0 %v548
    %v3156 = vpop.f32.mrb[0].mxu0
    %v3157 = vadd.f32 %v2612, %v3156
    %v3158 = vpop.f32.mrb[0].mxu0
    %v3159 = vpop.f32.mrb[0].mxu0
    %v3160 = vadd.f32 %v2615, %v3159
    %v3161 = vpop.f32.mrb[0].mxu0
    %3162 = vmatprep.mubr.bf16.mxu0 0
    %3163 = vmatmul.mubr.bf16.gmra.mrb[0].mxu0 %v549
    %v3164 = vpop.f32.mrb[0].mxu0
    %v3165 = vadd.f32 %v2620, %v3164
    %v3166 = vpop.f32.mrb[0].mxu0
    %v3167 = vpop.f32.mrb[0].mxu0
    %v3168 = vadd.f32 %v2623, %v3167
    %v3169 = vpop.f32.mrb[0].mxu0
    %3170 = vmatprep.mubr.bf16.mxu0 0
    %3171 = vmatmul.mubr.bf16.gmra.mrb[0].mxu0 %v622
    %v3172 = vpop.f32.mrb[0].mxu0
    %v3173 = vadd.f32 %v2628, %v3172
    %v3174 = vpop.f32.mrb[0].mxu0
    %v3175 = vpop.f32.mrb[0].mxu0
    %v3176 = vadd.f32 %v2631, %v3175
    %v3177 = vpop.f32.mrb[0].mxu0
    %3178 = vmatprep.mubr.bf16.mxu0 0
    %3179 = vmatmul.mubr.bf16.gmra.mrb[0].mxu0 %v623
    %v3180 = vpop.f32.mrb[0].mxu0
    %v3181 = vadd.f32 %v2636, %v3180
    %v3182 = vpop.f32.mrb[0].mxu0
    %v3183 = vpop.f32.mrb[0].mxu0
    %v3184 = vadd.f32 %v2639, %v3183
    %v3185 = vpop.f32.mrb[0].mxu0
    %3186 = vmatprep.mubr.bf16.mxu0 0
    %3187 = vmatmul.mubr.bf16.gmra.mrb[0].mxu0 %v634
    %v3188 = vpop.f32.mrb[0].mxu0
    %v3189 = vadd.f32 %v2644, %v3188
    %v3190 = vpop.f32.mrb[0].mxu0
    %v3191 = vpop.f32.mrb[0].mxu0
    %v3192 = vadd.f32 %v2647, %v3191
    %v3193 = vpop.f32.mrb[0].mxu0
    %3194 = vmatprep.mubr.bf16.mxu0 0
    %3195 = vmatmul.mubr.bf16.gmra.mrb[0].mxu0 %v635
    %v3196 = vpop.f32.mrb[0].mxu0
    %v3197 = vadd.f32 %v2652, %v3196
    %v3198 = vpop.f32.mrb[0].mxu0
    %v3199 = vpop.f32.mrb[0].mxu0
    %v3200 = vadd.f32 %v2655, %v3199
    %v3201 = vpop.f32.mrb[0].mxu0
    %3202 = vdwg.mxu0
    %s3203 = scalar_lea.vmem [#allocation8], 384
    %v3204 = vld [vmem:[%s3203] sm:$0xf]
    %v3205 = vld [vmem:[%s3203 + $0x4] sm:$0xf]
    %v3206 = vld [vmem:[%s3203 + $0x8] sm:$0xf]
    %v3207 = vld [vmem:[%s3203 + $0xc] sm:$0xf]
    %v3208 = vld [vmem:[%s3203 + $0x10] sm:$0xf]
    %v3209 = vld [vmem:[%s3203 + $0x14] sm:$0xf]
    %v3210 = vld [vmem:[%s3203 + $0x18] sm:$0xf]
    %v3211 = vld [vmem:[%s3203 + $0x1c] sm:$0xf]
    %v3212 = vld [vmem:[%s3203 + $0x20] sm:$0xf]
    %v3213 = vld [vmem:[%s3203 + $0x24] sm:$0xf]
    %v3214 = vld [vmem:[%s3203 + $0x28] sm:$0xf]
    %v3215 = vld [vmem:[%s3203 + $0x2c] sm:$0xf]
    %v3216 = vld [vmem:[%s3203 + $0x30] sm:$0xf]
    %v3217 = vld [vmem:[%s3203 + $0x34] sm:$0xf]
    %v3218 = vld [vmem:[%s3203 + $0x38] sm:$0xf]
    %v3219 = vld [vmem:[%s3203 + $0x3c] sm:$0xf]
    %v3220 = vld [vmem:[%s3203 + $0x40] sm:$0xf]
    %v3221 = vld [vmem:[%s3203 + $0x44] sm:$0xf]
    %v3222 = vld [vmem:[%s3203 + $0x48] sm:$0xf]
    %v3223 = vld [vmem:[%s3203 + $0x4c] sm:$0xf]
    %v3224 = vld [vmem:[%s3203 + $0x50] sm:$0xf]
    %v3225 = vld [vmem:[%s3203 + $0x54] sm:$0xf]
    %v3226 = vld [vmem:[%s3203 + $0x58] sm:$0xf]
    %v3227 = vld [vmem:[%s3203 + $0x5c] sm:$0xf]
    %v3228 = vld [vmem:[%s3203 + $0x60] sm:$0xf]
    %v3229 = vld [vmem:[%s3203 + $0x64] sm:$0xf]
    %v3230 = vld [vmem:[%s3203 + $0x68] sm:$0xf]
    %v3231 = vld [vmem:[%s3203 + $0x6c] sm:$0xf]
    %v3232 = vld [vmem:[%s3203 + $0x70] sm:$0xf]
    %v3233 = vld [vmem:[%s3203 + $0x74] sm:$0xf]
    %v3234 = vld [vmem:[%s3203 + $0x78] sm:$0xf]
    %v3235 = vld [vmem:[%s3203 + $0x7c] sm:$0xf]
    %v3236 = vld [vmem:[%s3203 + $0x80] sm:$0xf]
    %v3237 = vld [vmem:[%s3203 + $0x84] sm:$0xf]
    %v3238 = vld [vmem:[%s3203 + $0x88] sm:$0xf]
    %v3239 = vld [vmem:[%s3203 + $0x8c] sm:$0xf]
    %v3240 = vld [vmem:[%s3203 + $0x90] sm:$0xf]
    %v3241 = vld [vmem:[%s3203 + $0x94] sm:$0xf]
    %v3242 = vld [vmem:[%s3203 + $0x98] sm:$0xf]
    %v3243 = vld [vmem:[%s3203 + $0x9c] sm:$0xf]
    %v3244 = vld [vmem:[%s3203 + $0xa0] sm:$0xf]
    %v3245 = vld [vmem:[%s3203 + $0xa4] sm:$0xf]
    %v3246 = vld [vmem:[%s3203 + $0xa8] sm:$0xf]
    %v3247 = vld [vmem:[%s3203 + $0xac] sm:$0xf]
    %v3248 = vld [vmem:[%s3203 + $0xb0] sm:$0xf]
    %v3249 = vld [vmem:[%s3203 + $0xb4] sm:$0xf]
    %v3250 = vld [vmem:[%s3203 + $0xb8] sm:$0xf]
    %v3251 = vld [vmem:[%s3203 + $0xbc] sm:$0xf]
    %v3300 = vunpack.c.l.b16 %v3204
    %v3301 = vunpack.c.l.b16 %v3205
    %v3302 = vunpack.c.l.b16 %v3206
    %v3303 = vunpack.c.l.b16 %v3207
    %v3304 = vunpack.c.l.b16 %v3208
    %v3305 = vunpack.c.l.b16 %v3209
    %v3306 = vunpack.c.l.b16 %v3210
    %v3307 = vunpack.c.l.b16 %v3211
    %v3308 = vunpack.c.l.b16 %v3212
    %v3309 = vunpack.c.l.b16 %v3213
    %v3310 = vunpack.c.l.b16 %v3214
    %v3311 = vunpack.c.l.b16 %v3215
    %v3312 = vunpack.c.l.b16 %v3216
    %v3313 = vunpack.c.l.b16 %v3217
    %v3314 = vunpack.c.l.b16 %v3218
    %v3315 = vunpack.c.l.b16 %v3219
    %v3316 = vunpack.c.l.b16 %v3220
    %v3317 = vunpack.c.l.b16 %v3221
    %v3318 = vunpack.c.l.b16 %v3222
    %v3319 = vunpack.c.l.b16 %v3223
    %v3320 = vunpack.c.l.b16 %v3224
    %v3321 = vunpack.c.l.b16 %v3225
    %v3322 = vunpack.c.l.b16 %v3226
    %v3323 = vunpack.c.l.b16 %v3227
    %v3324 = vunpack.c.l.b16 %v3228
    %v3325 = vunpack.c.l.b16 %v3229
    %v3326 = vunpack.c.l.b16 %v3230
    %v3327 = vunpack.c.l.b16 %v3231
    %v3328 = vunpack.c.l.b16 %v3232
    %v3329 = vunpack.c.l.b16 %v3233
    %v3330 = vunpack.c.l.b16 %v3234
    %v3331 = vunpack.c.l.b16 %v3235
    %v3332 = vunpack.c.l.b16 %v3236
    %v3333 = vunpack.c.l.b16 %v3237
    %v3334 = vunpack.c.l.b16 %v3238
    %v3335 = vunpack.c.l.b16 %v3239
    %v3336 = vunpack.c.l.b16 %v3240
    %v3337 = vunpack.c.l.b16 %v3241
    %v3338 = vunpack.c.l.b16 %v3242
    %v3339 = vunpack.c.l.b16 %v3243
    %v3340 = vunpack.c.l.b16 %v3244
    %v3341 = vunpack.c.l.b16 %v3245
    %v3342 = vunpack.c.l.b16 %v3246
    %v3343 = vunpack.c.l.b16 %v3247
    %v3344 = vunpack.c.l.b16 %v3248
    %v3345 = vunpack.c.l.b16 %v3249
    %v3346 = vunpack.c.l.b16 %v3250
    %v3347 = vunpack.c.l.b16 %v3251
    %v3348 = vpack.c.b16 %v3301, %v3300
    %v3349 = vpack.c.b16 %v3303, %v3302
    %v3350 = vpack.c.b16 %v3305, %v3304
    %v3351 = vpack.c.b16 %v3307, %v3306
    %v3352 = vpack.c.b16 %v3309, %v3308
    %v3353 = vpack.c.b16 %v3311, %v3310
    %v3354 = vpack.c.b16 %v3313, %v3312
    %v3355 = vpack.c.b16 %v3315, %v3314
    %v3356 = vpack.c.b16 %v3317, %v3316
    %v3357 = vpack.c.b16 %v3319, %v3318
    %v3358 = vpack.c.b16 %v3321, %v3320
    %v3359 = vpack.c.b16 %v3323, %v3322
    %v3360 = vpack.c.b16 %v3325, %v3324
    %v3361 = vpack.c.b16 %v3327, %v3326
    %v3362 = vpack.c.b16 %v3329, %v3328
    %v3363 = vpack.c.b16 %v3331, %v3330
    %v3364 = vpack.c.b16 %v3333, %v3332
    %v3365 = vpack.c.b16 %v3335, %v3334
    %v3366 = vpack.c.b16 %v3337, %v3336
    %v3367 = vpack.c.b16 %v3339, %v3338
    %v3368 = vpack.c.b16 %v3341, %v3340
    %v3369 = vpack.c.b16 %v3343, %v3342
    %v3370 = vpack.c.b16 %v3345, %v3344
    %v3371 = vpack.c.b16 %v3347, %v3346
    %3396 = vmatprep.subr.bf16.mxu0 0
    %3397 = vmatpush1.bf16.msra.mxu0 %v3348
    %3398 = vmatprep.subr.bf16.mxu0 0
    %3399 = vmatpush1.bf16.msra.mxu0 %v3349
    %3400 = vmatprep.subr.bf16.mxu0 0
    %3401 = vmatpush1.bf16.msra.mxu0 %v3350
    %3402 = vmatprep.subr.bf16.mxu0 0
    %3403 = vmatpush1.bf16.msra.mxu0 %v3351
    %3404 = vmatprep.subr.bf16.mxu0 0
    %3405 = vmatpush1.bf16.msra.mxu0 %v3352
    %3406 = vmatprep.subr.bf16.mxu0 0
    %3407 = vmatpush1.bf16.msra.mxu0 %v3353
    %3408 = vmatprep.subr.bf16.mxu0 0
    %3409 = vmatpush1.bf16.msra.mxu0 %v3354
    %3410 = vmatprep.subr.bf16.mxu0 0
    %3411 = vmatpush1.bf16.msra.mxu0 %v3355
    %3412 = vmatprep.subr.bf16.mxu0 0
    %3413 = vmatpush1.bf16.msra.mxu0 %v3356
    %3414 = vmatprep.subr.bf16.mxu0 0
    %3415 = vmatpush1.bf16.msra.mxu0 %v3357
    %3416 = vmatprep.subr.bf16.mxu0 0
    %3417 = vmatpush1.bf16.msra.mxu0 %v3358
    %3418 = vmatprep.subr.bf16.mxu0 0
    %3419 = vmatpush1.bf16.msra.mxu0 %v3359
    %3420 = vmatprep.subr.bf16.mxu0 0
    %3421 = vmatpush1.bf16.msra.mxu0 %v3360
    %3422 = vmatprep.subr.bf16.mxu0 0
    %3423 = vmatpush1.bf16.msra.mxu0 %v3361
    %3424 = vmatprep.subr.bf16.mxu0 0
    %3425 = vmatpush1.bf16.msra.mxu0 %v3362
    %3426 = vmatprep.subr.bf16.mxu0 0
    %3427 = vmatpush1.bf16.msra.mxu0 %v3363
    %3428 = vmatprep.mubr.bf16.mxu0 %v488
    %3429 = vmatmul.mubr.bf16.gmra.mrb[0].mxu0 %v486
    %v3430 = vpop.f32.mrb[0].mxu0
    %v3431 = vadd.f32 0.0, %v3430
    %v3432 = vpop.f32.mrb[0].mxu0
    %v3433 = vpop.f32.mrb[0].mxu0
    %v3434 = vadd.f32 0.0, %v3433
    %v3435 = vpop.f32.mrb[0].mxu0
    %3436 = vmatprep.mubr.bf16.mxu0 %v489
    %3437 = vmatmul.mubr.bf16.gmra.mrb[0].mxu0 %v487
    %v3438 = vpop.f32.mrb[0].mxu0
    %v3439 = vadd.f32 0.0, %v3438
    %v3440 = vpop.f32.mrb[0].mxu0
    %v3441 = vpop.f32.mrb[0].mxu0
    %v3442 = vadd.f32 0.0, %v3441
    %v3443 = vpop.f32.mrb[0].mxu0
    %3444 = vmatprep.mubr.bf16.mxu0 %v490
    %3445 = vmatmul.mubr.bf16.gmra.mrb[0].mxu0 %v488
    %v3446 = vpop.f32.mrb[0].mxu0
    %v3447 = vadd.f32 0.0, %v3446
    %v3448 = vpop.f32.mrb[0].mxu0
    %v3449 = vpop.f32.mrb[0].mxu0
    %v3450 = vadd.f32 0.0, %v3449
    %v3451 = vpop.f32.mrb[0].mxu0
    %3452 = vmatprep.mubr.bf16.mxu0 %v491
    %3453 = vmatmul.mubr.bf16.gmra.mrb[0].mxu0 %v489
    %v3454 = vpop.f32.mrb[0].mxu0
    %v3455 = vadd.f32 0.0, %v3454
    %v3456 = vpop.f32.mrb[0].mxu0
    %v3457 = vpop.f32.mrb[0].mxu0
    %v3458 = vadd.f32 0.0, %v3457
    %v3459 = vpop.f32.mrb[0].mxu0
    %3460 = vmatprep.mubr.bf16.mxu0 %v492
    %3461 = vmatmul.mubr.bf16.gmra.mrb[0].mxu0 %v490
    %v3462 = vpop.f32.mrb[0].mxu0
    %v3463 = vadd.f32 0.0, %v3462
    %v3464 = vpop.f32.mrb[0].mxu0
    %v3465 = vpop.f32.mrb[0].mxu0
    %v3466 = vadd.f32 0.0, %v3465
    %v3467 = vpop.f32.mrb[0].mxu0
    %3468 = vmatprep.mubr.bf16.mxu0 %v493
    %3469 = vmatmul.mubr.bf16.gmra.mrb[0].mxu0 %v491
    %v3470 = vpop.f32.mrb[0].mxu0
    %v3471 = vadd.f32 0.0, %v3470
    %v3472 = vpop.f32.mrb[0].mxu0
    %v3473 = vpop.f32.mrb[0].mxu0
    %v3474 = vadd.f32 0.0, %v3473
    %v3475 = vpop.f32.mrb[0].mxu0
    %3476 = vmatprep.mubr.bf16.mxu0 %v494
    %3477 = vmatmul.mubr.bf16.gmra.mrb[0].mxu0 %v492
    %v3478 = vpop.f32.mrb[0].mxu0
    %v3479 = vadd.f32 0.0, %v3478
    %v3480 = vpop.f32.mrb[0].mxu0
    %v3481 = vpop.f32.mrb[0].mxu0
    %v3482 = vadd.f32 0.0, %v3481
    %v3483 = vpop.f32.mrb[0].mxu0
    %3484 = vmatprep.mubr.bf16.mxu0 %v495
    %3485 = vmatmul.mubr.bf16.gmra.mrb[0].mxu0 %v493
    %v3486 = vpop.f32.mrb[0].mxu0
    %v3487 = vadd.f32 0.0, %v3486
    %v3488 = vpop.f32.mrb[0].mxu0
    %v3489 = vpop.f32.mrb[0].mxu0
    %v3490 = vadd.f32 0.0, %v3489
    %v3491 = vpop.f32.mrb[0].mxu0
    %3492 = vmatprep.mubr.bf16.mxu0 %v496
    %3493 = vmatmul.mubr.bf16.gmra.mrb[0].mxu0 %v494
    %v3494 = vpop.f32.mrb[0].mxu0
    %v3495 = vadd.f32 0.0, %v3494
    %v3496 = vpop.f32.mrb[0].mxu0
    %v3497 = vpop.f32.mrb[0].mxu0
    %v3498 = vadd.f32 0.0, %v3497
    %v3499 = vpop.f32.mrb[0].mxu0
    %3500 = vmatprep.mubr.bf16.mxu0 %v497
    %3501 = vmatmul.mubr.bf16.gmra.mrb[0].mxu0 %v495
    %v3502 = vpop.f32.mrb[0].mxu0
    %v3503 = vadd.f32 0.0, %v3502
    %v3504 = vpop.f32.mrb[0].mxu0
    %v3505 = vpop.f32.mrb[0].mxu0
    %v3506 = vadd.f32 0.0, %v3505
    %v3507 = vpop.f32.mrb[0].mxu0
    %3508 = vmatprep.mubr.bf16.mxu0 %v498
    %3509 = vmatmul.mubr.bf16.gmra.mrb[0].mxu0 %v496
    %v3510 = vpop.f32.mrb[0].mxu0
    %v3511 = vadd.f32 0.0, %v3510
    %v3512 = vpop.f32.mrb[0].mxu0
    %v3513 = vpop.f32.mrb[0].mxu0
    %v3514 = vadd.f32 0.0, %v3513
    %v3515 = vpop.f32.mrb[0].mxu0
    %3516 = vmatprep.mubr.bf16.mxu0 %v499
    %3517 = vmatmul.mubr.bf16.gmra.mrb[0].mxu0 %v497
    %v3518 = vpop.f32.mrb[0].mxu0
    %v3519 = vadd.f32 0.0, %v3518
    %v3520 = vpop.f32.mrb[0].mxu0
    %v3521 = vpop.f32.mrb[0].mxu0
    %v3522 = vadd.f32 0.0, %v3521
    %v3523 = vpop.f32.mrb[0].mxu0
    %3524 = vmatprep.mubr.bf16.mxu0 %v500
    %3525 = vmatmul.mubr.bf16.gmra.mrb[0].mxu0 %v498
    %v3526 = vpop.f32.mrb[0].mxu0
    %v3527 = vadd.f32 0.0, %v3526
    %v3528 = vpop.f32.mrb[0].mxu0
    %v3529 = vpop.f32.mrb[0].mxu0
    %v3530 = vadd.f32 0.0, %v3529
    %v3531 = vpop.f32.mrb[0].mxu0
    %3532 = vmatprep.mubr.bf16.mxu0 %v501
    %3533 = vmatmul.mubr.bf16.gmra.mrb[0].mxu0 %v499
    %v3534 = vpop.f32.mrb[0].mxu0
    %v3535 = vadd.f32 0.0, %v3534
    %v3536 = vpop.f32.mrb[0].mxu0
    %v3537 = vpop.f32.mrb[0].mxu0
    %v3538 = vadd.f32 0.0, %v3537
    %v3539 = vpop.f32.mrb[0].mxu0
    %3540 = vmatprep.mubr.bf16.mxu0 %v502
    %3541 = vmatmul.mubr.bf16.gmra.mrb[0].mxu0 %v500
    %v3542 = vpop.f32.mrb[0].mxu0
    %v3543 = vadd.f32 0.0, %v3542
    %v3544 = vpop.f32.mrb[0].mxu0
    %v3545 = vpop.f32.mrb[0].mxu0
    %v3546 = vadd.f32 0.0, %v3545
    %v3547 = vpop.f32.mrb[0].mxu0
    %3548 = vmatprep.mubr.bf16.mxu0 %v503
    %3549 = vmatmul.mubr.bf16.gmra.mrb[0].mxu0 %v501
    %v3550 = vpop.f32.mrb[0].mxu0
    %v3551 = vadd.f32 0.0, %v3550
    %v3552 = vpop.f32.mrb[0].mxu0
    %v3553 = vpop.f32.mrb[0].mxu0
    %v3554 = vadd.f32 0.0, %v3553
    %v3555 = vpop.f32.mrb[0].mxu0
    %3556 = vmatprep.mubr.bf16.mxu0 %v504
    %3557 = vmatmul.mubr.bf16.gmra.mrb[0].mxu0 %v502
    %v3558 = vpop.f32.mrb[0].mxu0
    %v3559 = vadd.f32 0.0, %v3558
    %v3560 = vpop.f32.mrb[0].mxu0
    %v3561 = vpop.f32.mrb[0].mxu0
    %v3562 = vadd.f32 0.0, %v3561
    %v3563 = vpop.f32.mrb[0].mxu0
    %3564 = vmatprep.mubr.bf16.mxu0 %v505
    %3565 = vmatmul.mubr.bf16.gmra.mrb[0].mxu0 %v503
    %v3566 = vpop.f32.mrb[0].mxu0
    %v3567 = vadd.f32 0.0, %v3566
    %v3568 = vpop.f32.mrb[0].mxu0
    %v3569 = vpop.f32.mrb[0].mxu0
    %v3570 = vadd.f32 0.0, %v3569
    %v3571 = vpop.f32.mrb[0].mxu0
    %3572 = vmatprep.mubr.bf16.mxu0 %v506
    %3573 = vmatmul.mubr.bf16.gmra.mrb[0].mxu0 %v504
    %v3574 = vpop.f32.mrb[0].mxu0
    %v3575 = vadd.f32 0.0, %v3574
    %v3576 = vpop.f32.mrb[0].mxu0
    %v3577 = vpop.f32.mrb[0].mxu0
    %v3578 = vadd.f32 0.0, %v3577
    %v3579 = vpop.f32.mrb[0].mxu0
    %3580 = vmatprep.mubr.bf16.mxu0 %v507
    %3581 = vmatmul.mubr.bf16.gmra.mrb[0].mxu0 %v505
    %v3582 = vpop.f32.mrb[0].mxu0
    %v3583 = vadd.f32 0.0, %v3582
    %v3584 = vpop.f32.mrb[0].mxu0
    %v3585 = vpop.f32.mrb[0].mxu0
    %v3586 = vadd.f32 0.0, %v3585
    %v3587 = vpop.f32.mrb[0].mxu0
    %3588 = vmatprep.mubr.bf16.mxu0 %v508
    %3589 = vmatmul.mubr.bf16.gmra.mrb[0].mxu0 %v506
    %v3590 = vpop.f32.mrb[0].mxu0
    %v3591 = vadd.f32 0.0, %v3590
    %v3592 = vpop.f32.mrb[0].mxu0
    %v3593 = vpop.f32.mrb[0].mxu0
    %v3594 = vadd.f32 0.0, %v3593
    %v3595 = vpop.f32.mrb[0].mxu0
    %3596 = vmatprep.mubr.bf16.mxu0 %v509
    %3597 = vmatmul.mubr.bf16.gmra.mrb[0].mxu0 %v507
    %v3598 = vpop.f32.mrb[0].mxu0
    %v3599 = vadd.f32 0.0, %v3598
    %v3600 = vpop.f32.mrb[0].mxu0
    %v3601 = vpop.f32.mrb[0].mxu0
    %v3602 = vadd.f32 0.0, %v3601
    %v3603 = vpop.f32.mrb[0].mxu0
    %3604 = vmatprep.mubr.bf16.mxu0 %v510
    %3605 = vmatmul.mubr.bf16.gmra.mrb[0].mxu0 %v508
    %v3606 = vpop.f32.mrb[0].mxu0
    %v3607 = vadd.f32 0.0, %v3606
    %v3608 = vpop.f32.mrb[0].mxu0
    %v3609 = vpop.f32.mrb[0].mxu0
    %v3610 = vadd.f32 0.0, %v3609
    %v3611 = vpop.f32.mrb[0].mxu0
    %3612 = vmatprep.mubr.bf16.mxu0 %v511
    %3613 = vmatmul.mubr.bf16.gmra.mrb[0].mxu0 %v509
    %v3614 = vpop.f32.mrb[0].mxu0
    %v3615 = vadd.f32 0.0, %v3614
    %v3616 = vpop.f32.mrb[0].mxu0
    %v3617 = vpop.f32.mrb[0].mxu0
    %v3618 = vadd.f32 0.0, %v3617
    %v3619 = vpop.f32.mrb[0].mxu0
    %3620 = vmatprep.mubr.bf16.mxu0 %v512
    %3621 = vmatmul.mubr.bf16.gmra.mrb[0].mxu0 %v510
    %v3622 = vpop.f32.mrb[0].mxu0
    %v3623 = vadd.f32 0.0, %v3622
    %v3624 = vpop.f32.mrb[0].mxu0
    %v3625 = vpop.f32.mrb[0].mxu0
    %v3626 = vadd.f32 0.0, %v3625
    %v3627 = vpop.f32.mrb[0].mxu0
    %3628 = vmatprep.mubr.bf16.mxu0 %v513
    %3629 = vmatmul.mubr.bf16.gmra.mrb[0].mxu0 %v511
    %v3630 = vpop.f32.mrb[0].mxu0
    %v3631 = vadd.f32 0.0, %v3630
    %v3632 = vpop.f32.mrb[0].mxu0
    %v3633 = vpop.f32.mrb[0].mxu0
    %v3634 = vadd.f32 0.0, %v3633
    %v3635 = vpop.f32.mrb[0].mxu0
    %3636 = vmatprep.mubr.bf16.mxu0 %v514
    %3637 = vmatmul.mubr.bf16.gmra.mrb[0].mxu0 %v512
    %v3638 = vpop.f32.mrb[0].mxu0
    %v3639 = vadd.f32 0.0, %v3638
    %v3640 = vpop.f32.mrb[0].mxu0
    %v3641 = vpop.f32.mrb[0].mxu0
    %v3642 = vadd.f32 0.0, %v3641
    %v3643 = vpop.f32.mrb[0].mxu0
    %3644 = vmatprep.mubr.bf16.mxu0 %v515
    %3645 = vmatmul.mubr.bf16.gmra.mrb[0].mxu0 %v513
    %v3646 = vpop.f32.mrb[0].mxu0
    %v3647 = vadd.f32 0.0, %v3646
    %v3648 = vpop.f32.mrb[0].mxu0
    %v3649 = vpop.f32.mrb[0].mxu0
    %v3650 = vadd.f32 0.0, %v3649
    %v3651 = vpop.f32.mrb[0].mxu0
    %3652 = vmatprep.mubr.bf16.mxu0 %v516
    %3653 = vmatmul.mubr.bf16.gmra.mrb[0].mxu0 %v514
    %v3654 = vpop.f32.mrb[0].mxu0
    %v3655 = vadd.f32 0.0, %v3654
    %v3656 = vpop.f32.mrb[0].mxu0
    %v3657 = vpop.f32.mrb[0].mxu0
    %v3658 = vadd.f32 0.0, %v3657
    %v3659 = vpop.f32.mrb[0].mxu0
    %3660 = vmatprep.mubr.bf16.mxu0 %v517
    %3661 = vmatmul.mubr.bf16.gmra.mrb[0].mxu0 %v515
    %v3662 = vpop.f32.mrb[0].mxu0
    %v3663 = vadd.f32 0.0, %v3662
    %v3664 = vpop.f32.mrb[0].mxu0
    %v3665 = vpop.f32.mrb[0].mxu0
    %v3666 = vadd.f32 0.0, %v3665
    %v3667 = vpop.f32.mrb[0].mxu0
    %3668 = vmatprep.mubr.bf16.mxu0 %v518
    %3669 = vmatmul.mubr.bf16.gmra.mrb[0].mxu0 %v516
    %v3670 = vpop.f32.mrb[0].mxu0
    %v3671 = vadd.f32 0.0, %v3670
    %v3672 = vpop.f32.mrb[0].mxu0
    %v3673 = vpop.f32.mrb[0].mxu0
    %v3674 = vadd.f32 0.0, %v3673
    %v3675 = vpop.f32.mrb[0].mxu0
    %3676 = vmatprep.mubr.bf16.mxu0 %v519
    %3677 = vmatmul.mubr.bf16.gmra.mrb[0].mxu0 %v517
    %v3678 = vpop.f32.mrb[0].mxu0
    %v3679 = vadd.f32 0.0, %v3678
    %v3680 = vpop.f32.mrb[0].mxu0
    %v3681 = vpop.f32.mrb[0].mxu0
    %v3682 = vadd.f32 0.0, %v3681
    %v3683 = vpop.f32.mrb[0].mxu0
    %3684 = vmatprep.mubr.bf16.mxu0 %v520
    %3685 = vmatmul.mubr.bf16.gmra.mrb[0].mxu0 %v518
    %v3686 = vpop.f32.mrb[0].mxu0
    %v3687 = vadd.f32 0.0, %v3686
    %v3688 = vpop.f32.mrb[0].mxu0
    %v3689 = vpop.f32.mrb[0].mxu0
    %v3690 = vadd.f32 0.0, %v3689
    %v3691 = vpop.f32.mrb[0].mxu0
    %3692 = vmatprep.mubr.bf16.mxu0 %v521
    %3693 = vmatmul.mubr.bf16.gmra.mrb[0].mxu0 %v519
    %v3694 = vpop.f32.mrb[0].mxu0
    %v3695 = vadd.f32 0.0, %v3694
    %v3696 = vpop.f32.mrb[0].mxu0
    %v3697 = vpop.f32.mrb[0].mxu0
    %v3698 = vadd.f32 0.0, %v3697
    %v3699 = vpop.f32.mrb[0].mxu0
    %3700 = vmatprep.mubr.bf16.mxu0 %v522
    %3701 = vmatmul.mubr.bf16.gmra.mrb[0].mxu0 %v520
    %v3702 = vpop.f32.mrb[0].mxu0
    %v3703 = vadd.f32 0.0, %v3702
    %v3704 = vpop.f32.mrb[0].mxu0
    %v3705 = vpop.f32.mrb[0].mxu0
    %v3706 = vadd.f32 0.0, %v3705
    %v3707 = vpop.f32.mrb[0].mxu0
    %3708 = vmatprep.mubr.bf16.mxu0 %v523
    %3709 = vmatmul.mubr.bf16.gmra.mrb[0].mxu0 %v521
    %v3710 = vpop.f32.mrb[0].mxu0
    %v3711 = vadd.f32 0.0, %v3710
    %v3712 = vpop.f32.mrb[0].mxu0
    %v3713 = vpop.f32.mrb[0].mxu0
    %v3714 = vadd.f32 0.0, %v3713
    %v3715 = vpop.f32.mrb[0].mxu0
    %3716 = vmatprep.mubr.bf16.mxu0 %v524
    %3717 = vmatmul.mubr.bf16.gmra.mrb[0].mxu0 %v522
    %v3718 = vpop.f32.mrb[0].mxu0
    %v3719 = vadd.f32 0.0, %v3718
    %v3720 = vpop.f32.mrb[0].mxu0
    %v3721 = vpop.f32.mrb[0].mxu0
    %v3722 = vadd.f32 0.0, %v3721
    %v3723 = vpop.f32.mrb[0].mxu0
    %3724 = vmatprep.mubr.bf16.mxu0 %v525
    %3725 = vmatmul.mubr.bf16.gmra.mrb[0].mxu0 %v523
    %v3726 = vpop.f32.mrb[0].mxu0
    %v3727 = vadd.f32 0.0, %v3726
    %v3728 = vpop.f32.mrb[0].mxu0
    %v3729 = vpop.f32.mrb[0].mxu0
    %v3730 = vadd.f32 0.0, %v3729
    %v3731 = vpop.f32.mrb[0].mxu0
    %3732 = vmatprep.mubr.bf16.mxu0 %v526
    %3733 = vmatmul.mubr.bf16.gmra.mrb[0].mxu0 %v524
    %v3734 = vpop.f32.mrb[0].mxu0
    %v3735 = vadd.f32 0.0, %v3734
    %v3736 = vpop.f32.mrb[0].mxu0
    %v3737 = vpop.f32.mrb[0].mxu0
    %v3738 = vadd.f32 0.0, %v3737
    %v3739 = vpop.f32.mrb[0].mxu0
    %3740 = vmatprep.mubr.bf16.mxu0 %v527
    %3741 = vmatmul.mubr.bf16.gmra.mrb[0].mxu0 %v525
    %v3742 = vpop.f32.mrb[0].mxu0
    %v3743 = vadd.f32 0.0, %v3742
    %v3744 = vpop.f32.mrb[0].mxu0
    %v3745 = vpop.f32.mrb[0].mxu0
    %v3746 = vadd.f32 0.0, %v3745
    %v3747 = vpop.f32.mrb[0].mxu0
    %3748 = vmatprep.mubr.bf16.mxu0 %v528
    %3749 = vmatmul.mubr.bf16.gmra.mrb[0].mxu0 %v526
    %v3750 = vpop.f32.mrb[0].mxu0
    %v3751 = vadd.f32 0.0, %v3750
    %v3752 = vpop.f32.mrb[0].mxu0
    %v3753 = vpop.f32.mrb[0].mxu0
    %v3754 = vadd.f32 0.0, %v3753
    %v3755 = vpop.f32.mrb[0].mxu0
    %3756 = vmatprep.mubr.bf16.mxu0 %v529
    %3757 = vmatmul.mubr.bf16.gmra.mrb[0].mxu0 %v527
    %v3758 = vpop.f32.mrb[0].mxu0
    %v3759 = vadd.f32 0.0, %v3758
    %v3760 = vpop.f32.mrb[0].mxu0
    %v3761 = vpop.f32.mrb[0].mxu0
    %v3762 = vadd.f32 0.0, %v3761
    %v3763 = vpop.f32.mrb[0].mxu0
    %3764 = vmatprep.mubr.bf16.mxu0 %v530
    %3765 = vmatmul.mubr.bf16.gmra.mrb[0].mxu0 %v528
    %v3766 = vpop.f32.mrb[0].mxu0
    %v3767 = vadd.f32 0.0, %v3766
    %v3768 = vpop.f32.mrb[0].mxu0
    %v3769 = vpop.f32.mrb[0].mxu0
    %v3770 = vadd.f32 0.0, %v3769
    %v3771 = vpop.f32.mrb[0].mxu0
    %3772 = vmatprep.mubr.bf16.mxu0 %v531
    %3773 = vmatmul.mubr.bf16.gmra.mrb[0].mxu0 %v529
    %v3774 = vpop.f32.mrb[0].mxu0
    %v3775 = vadd.f32 0.0, %v3774
    %v3776 = vpop.f32.mrb[0].mxu0
    %v3777 = vpop.f32.mrb[0].mxu0
    %v3778 = vadd.f32 0.0, %v3777
    %v3779 = vpop.f32.mrb[0].mxu0
    %3780 = vmatprep.mubr.bf16.mxu0 %v532
    %3781 = vmatmul.mubr.bf16.gmra.mrb[0].mxu0 %v530
    %v3782 = vpop.f32.mrb[0].mxu0
    %v3783 = vadd.f32 0.0, %v3782
    %v3784 = vpop.f32.mrb[0].mxu0
    %v3785 = vpop.f32.mrb[0].mxu0
    %v3786 = vadd.f32 0.0, %v3785
    %v3787 = vpop.f32.mrb[0].mxu0
    %3788 = vmatprep.mubr.bf16.mxu0 %v533
    %3789 = vmatmul.mubr.bf16.gmra.mrb[0].mxu0 %v531
    %v3790 = vpop.f32.mrb[0].mxu0
    %v3791 = vadd.f32 0.0, %v3790
    %v3792 = vpop.f32.mrb[0].mxu0
    %v3793 = vpop.f32.mrb[0].mxu0
    %v3794 = vadd.f32 0.0, %v3793
    %v3795 = vpop.f32.mrb[0].mxu0
    %3796 = vmatprep.mubr.bf16.mxu0 %v534
    %3797 = vmatmul.mubr.bf16.gmra.mrb[0].mxu0 %v532
    %v3798 = vpop.f32.mrb[0].mxu0
    %v3799 = vadd.f32 0.0, %v3798
    %v3800 = vpop.f32.mrb[0].mxu0
    %v3801 = vpop.f32.mrb[0].mxu0
    %v3802 = vadd.f32 0.0, %v3801
    %v3803 = vpop.f32.mrb[0].mxu0
    %3804 = vmatprep.mubr.bf16.mxu0 %v535
    %3805 = vmatmul.mubr.bf16.gmra.mrb[0].mxu0 %v533
    %v3806 = vpop.f32.mrb[0].mxu0
    %v3807 = vadd.f32 0.0, %v3806
    %v3808 = vpop.f32.mrb[0].mxu0
    %v3809 = vpop.f32.mrb[0].mxu0
    %v3810 = vadd.f32 0.0, %v3809
    %v3811 = vpop.f32.mrb[0].mxu0
    %3812 = vmatprep.mubr.bf16.mxu0 %v536
    %3813 = vmatmul.mubr.bf16.gmra.mrb[0].mxu0 %v534
    %v3814 = vpop.f32.mrb[0].mxu0
    %v3815 = vadd.f32 0.0, %v3814
    %v3816 = vpop.f32.mrb[0].mxu0
    %v3817 = vpop.f32.mrb[0].mxu0
    %v3818 = vadd.f32 0.0, %v3817
    %v3819 = vpop.f32.mrb[0].mxu0
    %3820 = vmatprep.mubr.bf16.mxu0 %v537
    %3821 = vmatmul.mubr.bf16.gmra.mrb[0].mxu0 %v535
    %v3822 = vpop.f32.mrb[0].mxu0
    %v3823 = vadd.f32 0.0, %v3822
    %v3824 = vpop.f32.mrb[0].mxu0
    %v3825 = vpop.f32.mrb[0].mxu0
    %v3826 = vadd.f32 0.0, %v3825
    %v3827 = vpop.f32.mrb[0].mxu0
    %3828 = vmatprep.mubr.bf16.mxu0 %v538
    %3829 = vmatmul.mubr.bf16.gmra.mrb[0].mxu0 %v536
    %v3830 = vpop.f32.mrb[0].mxu0
    %v3831 = vadd.f32 0.0, %v3830
    %v3832 = vpop.f32.mrb[0].mxu0
    %v3833 = vpop.f32.mrb[0].mxu0
    %v3834 = vadd.f32 0.0, %v3833
    %v3835 = vpop.f32.mrb[0].mxu0
    %3836 = vmatprep.mubr.bf16.mxu0 %v539
    %3837 = vmatmul.mubr.bf16.gmra.mrb[0].mxu0 %v537
    %v3838 = vpop.f32.mrb[0].mxu0
    %v3839 = vadd.f32 0.0, %v3838
    %v3840 = vpop.f32.mrb[0].mxu0
    %v3841 = vpop.f32.mrb[0].mxu0
    %v3842 = vadd.f32 0.0, %v3841
    %v3843 = vpop.f32.mrb[0].mxu0
    %3844 = vmatprep.mubr.bf16.mxu0 %v540
    %3845 = vmatmul.mubr.bf16.gmra.mrb[0].mxu0 %v538
    %v3846 = vpop.f32.mrb[0].mxu0
    %v3847 = vadd.f32 0.0, %v3846
    %v3848 = vpop.f32.mrb[0].mxu0
    %v3849 = vpop.f32.mrb[0].mxu0
    %v3850 = vadd.f32 0.0, %v3849
    %v3851 = vpop.f32.mrb[0].mxu0
    %3852 = vmatprep.mubr.bf16.mxu0 %v541
    %3853 = vmatmul.mubr.bf16.gmra.mrb[0].mxu0 %v539
    %v3854 = vpop.f32.mrb[0].mxu0
    %v3855 = vadd.f32 0.0, %v3854
    %v3856 = vpop.f32.mrb[0].mxu0
    %v3857 = vpop.f32.mrb[0].mxu0
    %v3858 = vadd.f32 0.0, %v3857
    %v3859 = vpop.f32.mrb[0].mxu0
    %3860 = vmatprep.mubr.bf16.mxu0 %v542
    %3861 = vmatmul.mubr.bf16.gmra.mrb[0].mxu0 %v540
    %v3862 = vpop.f32.mrb[0].mxu0
    %v3863 = vadd.f32 0.0, %v3862
    %v3864 = vpop.f32.mrb[0].mxu0
    %v3865 = vpop.f32.mrb[0].mxu0
    %v3866 = vadd.f32 0.0, %v3865
    %v3867 = vpop.f32.mrb[0].mxu0
    %3868 = vmatprep.mubr.bf16.mxu0 %v543
    %3869 = vmatmul.mubr.bf16.gmra.mrb[0].mxu0 %v541
    %v3870 = vpop.f32.mrb[0].mxu0
    %v3871 = vadd.f32 0.0, %v3870
    %v3872 = vpop.f32.mrb[0].mxu0
    %v3873 = vpop.f32.mrb[0].mxu0
    %v3874 = vadd.f32 0.0, %v3873
    %v3875 = vpop.f32.mrb[0].mxu0
    %3876 = vmatprep.mubr.bf16.mxu0 %v544
    %3877 = vmatmul.mubr.bf16.gmra.mrb[0].mxu0 %v542
    %v3878 = vpop.f32.mrb[0].mxu0
    %v3879 = vadd.f32 0.0, %v3878
    %v3880 = vpop.f32.mrb[0].mxu0
    %v3881 = vpop.f32.mrb[0].mxu0
    %v3882 = vadd.f32 0.0, %v3881
    %v3883 = vpop.f32.mrb[0].mxu0
    %3884 = vmatprep.mubr.bf16.mxu0 %v545
    %3885 = vmatmul.mubr.bf16.gmra.mrb[0].mxu0 %v543
    %v3886 = vpop.f32.mrb[0].mxu0
    %v3887 = vadd.f32 0.0, %v3886
    %v3888 = vpop.f32.mrb[0].mxu0
    %v3889 = vpop.f32.mrb[0].mxu0
    %v3890 = vadd.f32 0.0, %v3889
    %v3891 = vpop.f32.mrb[0].mxu0
    %3892 = vmatprep.mubr.bf16.mxu0 %v546
    %3893 = vmatmul.mubr.bf16.gmra.mrb[0].mxu0 %v544
    %v3894 = vpop.f32.mrb[0].mxu0
    %v3895 = vadd.f32 0.0, %v3894
    %v3896 = vpop.f32.mrb[0].mxu0
    %v3897 = vpop.f32.mrb[0].mxu0
    %v3898 = vadd.f32 0.0, %v3897
    %v3899 = vpop.f32.mrb[0].mxu0
    %3900 = vmatprep.mubr.bf16.mxu0 %v547
    %3901 = vmatmul.mubr.bf16.gmra.mrb[0].mxu0 %v545
    %v3902 = vpop.f32.mrb[0].mxu0
    %v3903 = vadd.f32 0.0, %v3902
    %v3904 = vpop.f32.mrb[0].mxu0
    %v3905 = vpop.f32.mrb[0].mxu0
    %v3906 = vadd.f32 0.0, %v3905
    %v3907 = vpop.f32.mrb[0].mxu0
    %3908 = vmatprep.mubr.bf16.mxu0 %v548
    %3909 = vmatmul.mubr.bf16.gmra.mrb[0].mxu0 %v546
    %v3910 = vpop.f32.mrb[0].mxu0
    %v3911 = vadd.f32 0.0, %v3910
    %v3912 = vpop.f32.mrb[0].mxu0
    %v3913 = vpop.f32.mrb[0].mxu0
    %v3914 = vadd.f32 0.0, %v3913
    %v3915 = vpop.f32.mrb[0].mxu0
    %3916 = vmatprep.mubr.bf16.mxu0 %v549
    %3917 = vmatmul.mubr.bf16.gmra.mrb[0].mxu0 %v547
    %v3918 = vpop.f32.mrb[0].mxu0
    %v3919 = vadd.f32 0.0, %v3918
    %v3920 = vpop.f32.mrb[0].mxu0
    %v3921 = vpop.f32.mrb[0].mxu0
    %v3922 = vadd.f32 0.0, %v3921
    %v3923 = vpop.f32.mrb[0].mxu0
    %3924 = vmatprep.mubr.bf16.mxu0 %v622
    %3925 = vmatmul.mubr.bf16.gmra.mrb[0].mxu0 %v548
    %v3926 = vpop.f32.mrb[0].mxu0
    %v3927 = vadd.f32 0.0, %v3926
    %v3928 = vpop.f32.mrb[0].mxu0
    %v3929 = vpop.f32.mrb[0].mxu0
    %v3930 = vadd.f32 0.0, %v3929
    %v3931 = vpop.f32.mrb[0].mxu0
    %3932 = vmatprep.mubr.bf16.mxu0 %v623
    %3933 = vmatmul.mubr.bf16.gmra.mrb[0].mxu0 %v549
    %v3934 = vpop.f32.mrb[0].mxu0
    %v3935 = vadd.f32 0.0, %v3934
    %v3936 = vpop.f32.mrb[0].mxu0
    %v3937 = vpop.f32.mrb[0].mxu0
    %v3938 = vadd.f32 0.0, %v3937
    %v3939 = vpop.f32.mrb[0].mxu0
    %3940 = vdwg.mxu0
    %3941 = vmatprep.subr.bf16.mxu0 0
    %3942 = vmatpush1.bf16.msra.mxu0 %v3364
    %3943 = vmatprep.subr.bf16.mxu0 0
    %3944 = vmatpush1.bf16.msra.mxu0 %v3365
    %3945 = vmatprep.subr.bf16.mxu0 0
    %3946 = vmatpush1.bf16.msra.mxu0 %v3366
    %3947 = vmatprep.subr.bf16.mxu0 0
    %3948 = vmatpush1.bf16.msra.mxu0 %v3367
    %3949 = vmatprep.subr.bf16.mxu0 0
    %3950 = vmatpush1.bf16.msra.mxu0 %v3368
    %3951 = vmatprep.subr.bf16.mxu0 0
    %3952 = vmatpush1.bf16.msra.mxu0 %v3369
    %3953 = vmatprep.subr.bf16.mxu0 0
    %3954 = vmatpush1.bf16.msra.mxu0 %v3370
    %3955 = vmatprep.subr.bf16.mxu0 0
    %3956 = vmatpush1.bf16.msra.mxu0 %v3371
    %3957 = vmatprep.subr.bf16.mxu0 0
    %3958 = vmatpush1.bf16.msra.mxu0 0
    %3959 = vmatprep.subr.bf16.mxu0 0
    %3960 = vmatpush1.bf16.msra.mxu0 0
    %3961 = vmatprep.subr.bf16.mxu0 0
    %3962 = vmatpush1.bf16.msra.mxu0 0
    %3963 = vmatprep.subr.bf16.mxu0 0
    %3964 = vmatpush1.bf16.msra.mxu0 0
    %3965 = vmatprep.subr.bf16.mxu0 0
    %3966 = vmatpush1.bf16.msra.mxu0 0
    %3967 = vmatprep.subr.bf16.mxu0 0
    %3968 = vmatpush1.bf16.msra.mxu0 0
    %3969 = vmatprep.subr.bf16.mxu0 0
    %3970 = vmatpush1.bf16.msra.mxu0 0
    %3971 = vmatprep.subr.bf16.mxu0 0
    %3972 = vmatpush1.bf16.msra.mxu0 0
    %3973 = vmatprep.mubr.bf16.mxu0 0
    %3974 = vmatmul.mubr.bf16.gmra.mrb[0].mxu0 %v490
    %v3975 = vpop.f32.mrb[0].mxu0
    %v3976 = vadd.f32 %v3431, %v3975
    %v3977 = vpop.f32.mrb[0].mxu0
    %v3978 = vpop.f32.mrb[0].mxu0
    %v3979 = vadd.f32 %v3434, %v3978
    %v3980 = vpop.f32.mrb[0].mxu0
    %3981 = vmatprep.mubr.bf16.mxu0 0
    %3982 = vmatmul.mubr.bf16.gmra.mrb[0].mxu0 %v491
    %v3983 = vpop.f32.mrb[0].mxu0
    %v3984 = vadd.f32 %v3439, %v3983
    %v3985 = vpop.f32.mrb[0].mxu0
    %v3986 = vpop.f32.mrb[0].mxu0
    %v3987 = vadd.f32 %v3442, %v3986
    %v3988 = vpop.f32.mrb[0].mxu0
    %3989 = vmatprep.mubr.bf16.mxu0 0
    %3990 = vmatmul.mubr.bf16.gmra.mrb[0].mxu0 %v492
    %v3991 = vpop.f32.mrb[0].mxu0
    %v3992 = vadd.f32 %v3447, %v3991
    %v3993 = vpop.f32.mrb[0].mxu0
    %v3994 = vpop.f32.mrb[0].mxu0
    %v3995 = vadd.f32 %v3450, %v3994
    %v3996 = vpop.f32.mrb[0].mxu0
    %3997 = vmatprep.mubr.bf16.mxu0 0
    %3998 = vmatmul.mubr.bf16.gmra.mrb[0].mxu0 %v493
    %v3999 = vpop.f32.mrb[0].mxu0
    %v4000 = vadd.f32 %v3455, %v3999
    %v4001 = vpop.f32.mrb[0].mxu0
    %v4002 = vpop.f32.mrb[0].mxu0
    %v4003 = vadd.f32 %v3458, %v4002
    %v4004 = vpop.f32.mrb[0].mxu0
    %4005 = vmatprep.mubr.bf16.mxu0 0
    %4006 = vmatmul.mubr.bf16.gmra.mrb[0].mxu0 %v494
    %v4007 = vpop.f32.mrb[0].mxu0
    %v4008 = vadd.f32 %v3463, %v4007
    %v4009 = vpop.f32.mrb[0].mxu0
    %v4010 = vpop.f32.mrb[0].mxu0
    %v4011 = vadd.f32 %v3466, %v4010
    %v4012 = vpop.f32.mrb[0].mxu0
    %4013 = vmatprep.mubr.bf16.mxu0 0
    %4014 = vmatmul.mubr.bf16.gmra.mrb[0].mxu0 %v495
    %v4015 = vpop.f32.mrb[0].mxu0
    %v4016 = vadd.f32 %v3471, %v4015
    %v4017 = vpop.f32.mrb[0].mxu0
    %v4018 = vpop.f32.mrb[0].mxu0
    %v4019 = vadd.f32 %v3474, %v4018
    %v4020 = vpop.f32.mrb[0].mxu0
    %4021 = vmatprep.mubr.bf16.mxu0 0
    %4022 = vmatmul.mubr.bf16.gmra.mrb[0].mxu0 %v496
    %v4023 = vpop.f32.mrb[0].mxu0
    %v4024 = vadd.f32 %v3479, %v4023
    %v4025 = vpop.f32.mrb[0].mxu0
    %v4026 = vpop.f32.mrb[0].mxu0
    %v4027 = vadd.f32 %v3482, %v4026
    %v4028 = vpop.f32.mrb[0].mxu0
    %4029 = vmatprep.mubr.bf16.mxu0 0
    %4030 = vmatmul.mubr.bf16.gmra.mrb[0].mxu0 %v497
    %v4031 = vpop.f32.mrb[0].mxu0
    %v4032 = vadd.f32 %v3487, %v4031
    %v4033 = vpop.f32.mrb[0].mxu0
    %v4034 = vpop.f32.mrb[0].mxu0
    %v4035 = vadd.f32 %v3490, %v4034
    %v4036 = vpop.f32.mrb[0].mxu0
    %4037 = vmatprep.mubr.bf16.mxu0 0
    %4038 = vmatmul.mubr.bf16.gmra.mrb[0].mxu0 %v498
    %v4039 = vpop.f32.mrb[0].mxu0
    %v4040 = vadd.f32 %v3495, %v4039
    %v4041 = vpop.f32.mrb[0].mxu0
    %v4042 = vpop.f32.mrb[0].mxu0
    %v4043 = vadd.f32 %v3498, %v4042
    %v4044 = vpop.f32.mrb[0].mxu0
    %4045 = vmatprep.mubr.bf16.mxu0 0
    %4046 = vmatmul.mubr.bf16.gmra.mrb[0].mxu0 %v499
    %v4047 = vpop.f32.mrb[0].mxu0
    %v4048 = vadd.f32 %v3503, %v4047
    %v4049 = vpop.f32.mrb[0].mxu0
    %v4050 = vpop.f32.mrb[0].mxu0
    %v4051 = vadd.f32 %v3506, %v4050
    %v4052 = vpop.f32.mrb[0].mxu0
    %4053 = vmatprep.mubr.bf16.mxu0 0
    %4054 = vmatmul.mubr.bf16.gmra.mrb[0].mxu0 %v500
    %v4055 = vpop.f32.mrb[0].mxu0
    %v4056 = vadd.f32 %v3511, %v4055
    %v4057 = vpop.f32.mrb[0].mxu0
    %v4058 = vpop.f32.mrb[0].mxu0
    %v4059 = vadd.f32 %v3514, %v4058
    %v4060 = vpop.f32.mrb[0].mxu0
    %4061 = vmatprep.mubr.bf16.mxu0 0
    %4062 = vmatmul.mubr.bf16.gmra.mrb[0].mxu0 %v501
    %v4063 = vpop.f32.mrb[0].mxu0
    %v4064 = vadd.f32 %v3519, %v4063
    %v4065 = vpop.f32.mrb[0].mxu0
    %v4066 = vpop.f32.mrb[0].mxu0
    %v4067 = vadd.f32 %v3522, %v4066
    %v4068 = vpop.f32.mrb[0].mxu0
    %4069 = vmatprep.mubr.bf16.mxu0 0
    %4070 = vmatmul.mubr.bf16.gmra.mrb[0].mxu0 %v502
    %v4071 = vpop.f32.mrb[0].mxu0
    %v4072 = vadd.f32 %v3527, %v4071
    %v4073 = vpop.f32.mrb[0].mxu0
    %v4074 = vpop.f32.mrb[0].mxu0
    %v4075 = vadd.f32 %v3530, %v4074
    %v4076 = vpop.f32.mrb[0].mxu0
    %4077 = vmatprep.mubr.bf16.mxu0 0
    %4078 = vmatmul.mubr.bf16.gmra.mrb[0].mxu0 %v503
    %v4079 = vpop.f32.mrb[0].mxu0
    %v4080 = vadd.f32 %v3535, %v4079
    %v4081 = vpop.f32.mrb[0].mxu0
    %v4082 = vpop.f32.mrb[0].mxu0
    %v4083 = vadd.f32 %v3538, %v4082
    %v4084 = vpop.f32.mrb[0].mxu0
    %4085 = vmatprep.mubr.bf16.mxu0 0
    %4086 = vmatmul.mubr.bf16.gmra.mrb[0].mxu0 %v504
    %v4087 = vpop.f32.mrb[0].mxu0
    %v4088 = vadd.f32 %v3543, %v4087
    %v4089 = vpop.f32.mrb[0].mxu0
    %v4090 = vpop.f32.mrb[0].mxu0
    %v4091 = vadd.f32 %v3546, %v4090
    %v4092 = vpop.f32.mrb[0].mxu0
    %4093 = vmatprep.mubr.bf16.mxu0 0
    %4094 = vmatmul.mubr.bf16.gmra.mrb[0].mxu0 %v505
    %v4095 = vpop.f32.mrb[0].mxu0
    %v4096 = vadd.f32 %v3551, %v4095
    %v4097 = vpop.f32.mrb[0].mxu0
    %v4098 = vpop.f32.mrb[0].mxu0
    %v4099 = vadd.f32 %v3554, %v4098
    %v4100 = vpop.f32.mrb[0].mxu0
    %4101 = vmatprep.mubr.bf16.mxu0 0
    %4102 = vmatmul.mubr.bf16.gmra.mrb[0].mxu0 %v506
    %v4103 = vpop.f32.mrb[0].mxu0
    %v4104 = vadd.f32 %v3559, %v4103
    %v4105 = vpop.f32.mrb[0].mxu0
    %v4106 = vpop.f32.mrb[0].mxu0
    %v4107 = vadd.f32 %v3562, %v4106
    %v4108 = vpop.f32.mrb[0].mxu0
    %4109 = vmatprep.mubr.bf16.mxu0 0
    %4110 = vmatmul.mubr.bf16.gmra.mrb[0].mxu0 %v507
    %v4111 = vpop.f32.mrb[0].mxu0
    %v4112 = vadd.f32 %v3567, %v4111
    %v4113 = vpop.f32.mrb[0].mxu0
    %v4114 = vpop.f32.mrb[0].mxu0
    %v4115 = vadd.f32 %v3570, %v4114
    %v4116 = vpop.f32.mrb[0].mxu0
    %4117 = vmatprep.mubr.bf16.mxu0 0
    %4118 = vmatmul.mubr.bf16.gmra.mrb[0].mxu0 %v508
    %v4119 = vpop.f32.mrb[0].mxu0
    %v4120 = vadd.f32 %v3575, %v4119
    %v4121 = vpop.f32.mrb[0].mxu0
    %v4122 = vpop.f32.mrb[0].mxu0
    %v4123 = vadd.f32 %v3578, %v4122
    %v4124 = vpop.f32.mrb[0].mxu0
    %4125 = vmatprep.mubr.bf16.mxu0 0
    %4126 = vmatmul.mubr.bf16.gmra.mrb[0].mxu0 %v509
    %v4127 = vpop.f32.mrb[0].mxu0
    %v4128 = vadd.f32 %v3583, %v4127
    %v4129 = vpop.f32.mrb[0].mxu0
    %v4130 = vpop.f32.mrb[0].mxu0
    %v4131 = vadd.f32 %v3586, %v4130
    %v4132 = vpop.f32.mrb[0].mxu0
    %4133 = vmatprep.mubr.bf16.mxu0 0
    %4134 = vmatmul.mubr.bf16.gmra.mrb[0].mxu0 %v510
    %v4135 = vpop.f32.mrb[0].mxu0
    %v4136 = vadd.f32 %v3591, %v4135
    %v4137 = vpop.f32.mrb[0].mxu0
    %v4138 = vpop.f32.mrb[0].mxu0
    %v4139 = vadd.f32 %v3594, %v4138
    %v4140 = vpop.f32.mrb[0].mxu0
    %4141 = vmatprep.mubr.bf16.mxu0 0
    %4142 = vmatmul.mubr.bf16.gmra.mrb[0].mxu0 %v511
    %v4143 = vpop.f32.mrb[0].mxu0
    %v4144 = vadd.f32 %v3599, %v4143
    %v4145 = vpop.f32.mrb[0].mxu0
    %v4146 = vpop.f32.mrb[0].mxu0
    %v4147 = vadd.f32 %v3602, %v4146
    %v4148 = vpop.f32.mrb[0].mxu0
    %4149 = vmatprep.mubr.bf16.mxu0 0
    %4150 = vmatmul.mubr.bf16.gmra.mrb[0].mxu0 %v512
    %v4151 = vpop.f32.mrb[0].mxu0
    %v4152 = vadd.f32 %v3607, %v4151
    %v4153 = vpop.f32.mrb[0].mxu0
    %v4154 = vpop.f32.mrb[0].mxu0
    %v4155 = vadd.f32 %v3610, %v4154
    %v4156 = vpop.f32.mrb[0].mxu0
    %4157 = vmatprep.mubr.bf16.mxu0 0
    %4158 = vmatmul.mubr.bf16.gmra.mrb[0].mxu0 %v513
    %v4159 = vpop.f32.mrb[0].mxu0
    %v4160 = vadd.f32 %v3615, %v4159
    %v4161 = vpop.f32.mrb[0].mxu0
    %v4162 = vpop.f32.mrb[0].mxu0
    %v4163 = vadd.f32 %v3618, %v4162
    %v4164 = vpop.f32.mrb[0].mxu0
    %4165 = vmatprep.mubr.bf16.mxu0 0
    %4166 = vmatmul.mubr.bf16.gmra.mrb[0].mxu0 %v514
    %v4167 = vpop.f32.mrb[0].mxu0
    %v4168 = vadd.f32 %v3623, %v4167
    %v4169 = vpop.f32.mrb[0].mxu0
    %v4170 = vpop.f32.mrb[0].mxu0
    %v4171 = vadd.f32 %v3626, %v4170
    %v4172 = vpop.f32.mrb[0].mxu0
    %4173 = vmatprep.mubr.bf16.mxu0 0
    %4174 = vmatmul.mubr.bf16.gmra.mrb[0].mxu0 %v515
    %v4175 = vpop.f32.mrb[0].mxu0
    %v4176 = vadd.f32 %v3631, %v4175
    %v4177 = vpop.f32.mrb[0].mxu0
    %v4178 = vpop.f32.mrb[0].mxu0
    %v4179 = vadd.f32 %v3634, %v4178
    %v4180 = vpop.f32.mrb[0].mxu0
    %4181 = vmatprep.mubr.bf16.mxu0 0
    %4182 = vmatmul.mubr.bf16.gmra.mrb[0].mxu0 %v516
    %v4183 = vpop.f32.mrb[0].mxu0
    %v4184 = vadd.f32 %v3639, %v4183
    %v4185 = vpop.f32.mrb[0].mxu0
    %v4186 = vpop.f32.mrb[0].mxu0
    %v4187 = vadd.f32 %v3642, %v4186
    %v4188 = vpop.f32.mrb[0].mxu0
    %4189 = vmatprep.mubr.bf16.mxu0 0
    %4190 = vmatmul.mubr.bf16.gmra.mrb[0].mxu0 %v517
    %v4191 = vpop.f32.mrb[0].mxu0
    %v4192 = vadd.f32 %v3647, %v4191
    %v4193 = vpop.f32.mrb[0].mxu0
    %v4194 = vpop.f32.mrb[0].mxu0
    %v4195 = vadd.f32 %v3650, %v4194
    %v4196 = vpop.f32.mrb[0].mxu0
    %4197 = vmatprep.mubr.bf16.mxu0 0
    %4198 = vmatmul.mubr.bf16.gmra.mrb[0].mxu0 %v518
    %v4199 = vpop.f32.mrb[0].mxu0
    %v4200 = vadd.f32 %v3655, %v4199
    %v4201 = vpop.f32.mrb[0].mxu0
    %v4202 = vpop.f32.mrb[0].mxu0
    %v4203 = vadd.f32 %v3658, %v4202
    %v4204 = vpop.f32.mrb[0].mxu0
    %4205 = vmatprep.mubr.bf16.mxu0 0
    %4206 = vmatmul.mubr.bf16.gmra.mrb[0].mxu0 %v519
    %v4207 = vpop.f32.mrb[0].mxu0
    %v4208 = vadd.f32 %v3663, %v4207
    %v4209 = vpop.f32.mrb[0].mxu0
    %v4210 = vpop.f32.mrb[0].mxu0
    %v4211 = vadd.f32 %v3666, %v4210
    %v4212 = vpop.f32.mrb[0].mxu0
    %4213 = vmatprep.mubr.bf16.mxu0 0
    %4214 = vmatmul.mubr.bf16.gmra.mrb[0].mxu0 %v520
    %v4215 = vpop.f32.mrb[0].mxu0
    %v4216 = vadd.f32 %v3671, %v4215
    %v4217 = vpop.f32.mrb[0].mxu0
    %v4218 = vpop.f32.mrb[0].mxu0
    %v4219 = vadd.f32 %v3674, %v4218
    %v4220 = vpop.f32.mrb[0].mxu0
    %4221 = vmatprep.mubr.bf16.mxu0 0
    %4222 = vmatmul.mubr.bf16.gmra.mrb[0].mxu0 %v521
    %v4223 = vpop.f32.mrb[0].mxu0
    %v4224 = vadd.f32 %v3679, %v4223
    %v4225 = vpop.f32.mrb[0].mxu0
    %v4226 = vpop.f32.mrb[0].mxu0
    %v4227 = vadd.f32 %v3682, %v4226
    %v4228 = vpop.f32.mrb[0].mxu0
    %4229 = vmatprep.mubr.bf16.mxu0 0
    %4230 = vmatmul.mubr.bf16.gmra.mrb[0].mxu0 %v522
    %v4231 = vpop.f32.mrb[0].mxu0
    %v4232 = vadd.f32 %v3687, %v4231
    %v4233 = vpop.f32.mrb[0].mxu0
    %v4234 = vpop.f32.mrb[0].mxu0
    %v4235 = vadd.f32 %v3690, %v4234
    %v4236 = vpop.f32.mrb[0].mxu0
    %4237 = vmatprep.mubr.bf16.mxu0 0
    %4238 = vmatmul.mubr.bf16.gmra.mrb[0].mxu0 %v523
    %v4239 = vpop.f32.mrb[0].mxu0
    %v4240 = vadd.f32 %v3695, %v4239
    %v4241 = vpop.f32.mrb[0].mxu0
    %v4242 = vpop.f32.mrb[0].mxu0
    %v4243 = vadd.f32 %v3698, %v4242
    %v4244 = vpop.f32.mrb[0].mxu0
    %4245 = vmatprep.mubr.bf16.mxu0 0
    %4246 = vmatmul.mubr.bf16.gmra.mrb[0].mxu0 %v524
    %v4247 = vpop.f32.mrb[0].mxu0
    %v4248 = vadd.f32 %v3703, %v4247
    %v4249 = vpop.f32.mrb[0].mxu0
    %v4250 = vpop.f32.mrb[0].mxu0
    %v4251 = vadd.f32 %v3706, %v4250
    %v4252 = vpop.f32.mrb[0].mxu0
    %4253 = vmatprep.mubr.bf16.mxu0 0
    %4254 = vmatmul.mubr.bf16.gmra.mrb[0].mxu0 %v525
    %v4255 = vpop.f32.mrb[0].mxu0
    %v4256 = vadd.f32 %v3711, %v4255
    %v4257 = vpop.f32.mrb[0].mxu0
    %v4258 = vpop.f32.mrb[0].mxu0
    %v4259 = vadd.f32 %v3714, %v4258
    %v4260 = vpop.f32.mrb[0].mxu0
    %4261 = vmatprep.mubr.bf16.mxu0 0
    %4262 = vmatmul.mubr.bf16.gmra.mrb[0].mxu0 %v526
    %v4263 = vpop.f32.mrb[0].mxu0
    %v4264 = vadd.f32 %v3719, %v4263
    %v4265 = vpop.f32.mrb[0].mxu0
    %v4266 = vpop.f32.mrb[0].mxu0
    %v4267 = vadd.f32 %v3722, %v4266
    %v4268 = vpop.f32.mrb[0].mxu0
    %4269 = vmatprep.mubr.bf16.mxu0 0
    %4270 = vmatmul.mubr.bf16.gmra.mrb[0].mxu0 %v527
    %v4271 = vpop.f32.mrb[0].mxu0
    %v4272 = vadd.f32 %v3727, %v4271
    %v4273 = vpop.f32.mrb[0].mxu0
    %v4274 = vpop.f32.mrb[0].mxu0
    %v4275 = vadd.f32 %v3730, %v4274
    %v4276 = vpop.f32.mrb[0].mxu0
    %4277 = vmatprep.mubr.bf16.mxu0 0
    %4278 = vmatmul.mubr.bf16.gmra.mrb[0].mxu0 %v528
    %v4279 = vpop.f32.mrb[0].mxu0
    %v4280 = vadd.f32 %v3735, %v4279
    %v4281 = vpop.f32.mrb[0].mxu0
    %v4282 = vpop.f32.mrb[0].mxu0
    %v4283 = vadd.f32 %v3738, %v4282
    %v4284 = vpop.f32.mrb[0].mxu0
    %4285 = vmatprep.mubr.bf16.mxu0 0
    %4286 = vmatmul.mubr.bf16.gmra.mrb[0].mxu0 %v529
    %v4287 = vpop.f32.mrb[0].mxu0
    %v4288 = vadd.f32 %v3743, %v4287
    %v4289 = vpop.f32.mrb[0].mxu0
    %v4290 = vpop.f32.mrb[0].mxu0
    %v4291 = vadd.f32 %v3746, %v4290
    %v4292 = vpop.f32.mrb[0].mxu0
    %4293 = vmatprep.mubr.bf16.mxu0 0
    %4294 = vmatmul.mubr.bf16.gmra.mrb[0].mxu0 %v530
    %v4295 = vpop.f32.mrb[0].mxu0
    %v4296 = vadd.f32 %v3751, %v4295
    %v4297 = vpop.f32.mrb[0].mxu0
    %v4298 = vpop.f32.mrb[0].mxu0
    %v4299 = vadd.f32 %v3754, %v4298
    %v4300 = vpop.f32.mrb[0].mxu0
    %4301 = vmatprep.mubr.bf16.mxu0 0
    %4302 = vmatmul.mubr.bf16.gmra.mrb[0].mxu0 %v531
    %v4303 = vpop.f32.mrb[0].mxu0
    %v4304 = vadd.f32 %v3759, %v4303
    %v4305 = vpop.f32.mrb[0].mxu0
    %v4306 = vpop.f32.mrb[0].mxu0
    %v4307 = vadd.f32 %v3762, %v4306
    %v4308 = vpop.f32.mrb[0].mxu0
    %4309 = vmatprep.mubr.bf16.mxu0 0
    %4310 = vmatmul.mubr.bf16.gmra.mrb[0].mxu0 %v532
    %v4311 = vpop.f32.mrb[0].mxu0
    %v4312 = vadd.f32 %v3767, %v4311
    %v4313 = vpop.f32.mrb[0].mxu0
    %v4314 = vpop.f32.mrb[0].mxu0
    %v4315 = vadd.f32 %v3770, %v4314
    %v4316 = vpop.f32.mrb[0].mxu0
    %4317 = vmatprep.mubr.bf16.mxu0 0
    %4318 = vmatmul.mubr.bf16.gmra.mrb[0].mxu0 %v533
    %v4319 = vpop.f32.mrb[0].mxu0
    %v4320 = vadd.f32 %v3775, %v4319
    %v4321 = vpop.f32.mrb[0].mxu0
    %v4322 = vpop.f32.mrb[0].mxu0
    %v4323 = vadd.f32 %v3778, %v4322
    %v4324 = vpop.f32.mrb[0].mxu0
    %4325 = vmatprep.mubr.bf16.mxu0 0
    %4326 = vmatmul.mubr.bf16.gmra.mrb[0].mxu0 %v534
    %v4327 = vpop.f32.mrb[0].mxu0
    %v4328 = vadd.f32 %v3783, %v4327
    %v4329 = vpop.f32.mrb[0].mxu0
    %v4330 = vpop.f32.mrb[0].mxu0
    %v4331 = vadd.f32 %v3786, %v4330
    %v4332 = vpop.f32.mrb[0].mxu0
    %4333 = vmatprep.mubr.bf16.mxu0 0
    %4334 = vmatmul.mubr.bf16.gmra.mrb[0].mxu0 %v535
    %v4335 = vpop.f32.mrb[0].mxu0
    %v4336 = vadd.f32 %v3791, %v4335
    %v4337 = vpop.f32.mrb[0].mxu0
    %v4338 = vpop.f32.mrb[0].mxu0
    %v4339 = vadd.f32 %v3794, %v4338
    %v4340 = vpop.f32.mrb[0].mxu0
    %4341 = vmatprep.mubr.bf16.mxu0 0
    %4342 = vmatmul.mubr.bf16.gmra.mrb[0].mxu0 %v536
    %v4343 = vpop.f32.mrb[0].mxu0
    %v4344 = vadd.f32 %v3799, %v4343
    %v4345 = vpop.f32.mrb[0].mxu0
    %v4346 = vpop.f32.mrb[0].mxu0
    %v4347 = vadd.f32 %v3802, %v4346
    %v4348 = vpop.f32.mrb[0].mxu0
    %4349 = vmatprep.mubr.bf16.mxu0 0
    %4350 = vmatmul.mubr.bf16.gmra.mrb[0].mxu0 %v537
    %v4351 = vpop.f32.mrb[0].mxu0
    %v4352 = vadd.f32 %v3807, %v4351
    %v4353 = vpop.f32.mrb[0].mxu0
    %v4354 = vpop.f32.mrb[0].mxu0
    %v4355 = vadd.f32 %v3810, %v4354
    %v4356 = vpop.f32.mrb[0].mxu0
    %4357 = vmatprep.mubr.bf16.mxu0 0
    %4358 = vmatmul.mubr.bf16.gmra.mrb[0].mxu0 %v538
    %v4359 = vpop.f32.mrb[0].mxu0
    %v4360 = vadd.f32 %v3815, %v4359
    %v4361 = vpop.f32.mrb[0].mxu0
    %v4362 = vpop.f32.mrb[0].mxu0
    %v4363 = vadd.f32 %v3818, %v4362
    %v4364 = vpop.f32.mrb[0].mxu0
    %4365 = vmatprep.mubr.bf16.mxu0 0
    %4366 = vmatmul.mubr.bf16.gmra.mrb[0].mxu0 %v539
    %v4367 = vpop.f32.mrb[0].mxu0
    %v4368 = vadd.f32 %v3823, %v4367
    %v4369 = vpop.f32.mrb[0].mxu0
    %v4370 = vpop.f32.mrb[0].mxu0
    %v4371 = vadd.f32 %v3826, %v4370
    %v4372 = vpop.f32.mrb[0].mxu0
    %4373 = vmatprep.mubr.bf16.mxu0 0
    %4374 = vmatmul.mubr.bf16.gmra.mrb[0].mxu0 %v540
    %v4375 = vpop.f32.mrb[0].mxu0
    %v4376 = vadd.f32 %v3831, %v4375
    %v4377 = vpop.f32.mrb[0].mxu0
    %v4378 = vpop.f32.mrb[0].mxu0
    %v4379 = vadd.f32 %v3834, %v4378
    %v4380 = vpop.f32.mrb[0].mxu0
    %4381 = vmatprep.mubr.bf16.mxu0 0
    %4382 = vmatmul.mubr.bf16.gmra.mrb[0].mxu0 %v541
    %v4383 = vpop.f32.mrb[0].mxu0
    %v4384 = vadd.f32 %v3839, %v4383
    %v4385 = vpop.f32.mrb[0].mxu0
    %v4386 = vpop.f32.mrb[0].mxu0
    %v4387 = vadd.f32 %v3842, %v4386
    %v4388 = vpop.f32.mrb[0].mxu0
    %4389 = vmatprep.mubr.bf16.mxu0 0
    %4390 = vmatmul.mubr.bf16.gmra.mrb[0].mxu0 %v542
    %v4391 = vpop.f32.mrb[0].mxu0
    %v4392 = vadd.f32 %v3847, %v4391
    %v4393 = vpop.f32.mrb[0].mxu0
    %v4394 = vpop.f32.mrb[0].mxu0
    %v4395 = vadd.f32 %v3850, %v4394
    %v4396 = vpop.f32.mrb[0].mxu0
    %4397 = vmatprep.mubr.bf16.mxu0 0
    %4398 = vmatmul.mubr.bf16.gmra.mrb[0].mxu0 %v543
    %v4399 = vpop.f32.mrb[0].mxu0
    %v4400 = vadd.f32 %v3855, %v4399
    %v4401 = vpop.f32.mrb[0].mxu0
    %v4402 = vpop.f32.mrb[0].mxu0
    %v4403 = vadd.f32 %v3858, %v4402
    %v4404 = vpop.f32.mrb[0].mxu0
    %4405 = vmatprep.mubr.bf16.mxu0 0
    %4406 = vmatmul.mubr.bf16.gmra.mrb[0].mxu0 %v544
    %v4407 = vpop.f32.mrb[0].mxu0
    %v4408 = vadd.f32 %v3863, %v4407
    %v4409 = vpop.f32.mrb[0].mxu0
    %v4410 = vpop.f32.mrb[0].mxu0
    %v4411 = vadd.f32 %v3866, %v4410
    %v4412 = vpop.f32.mrb[0].mxu0
    %4413 = vmatprep.mubr.bf16.mxu0 0
    %4414 = vmatmul.mubr.bf16.gmra.mrb[0].mxu0 %v545
    %v4415 = vpop.f32.mrb[0].mxu0
    %v4416 = vadd.f32 %v3871, %v4415
    %v4417 = vpop.f32.mrb[0].mxu0
    %v4418 = vpop.f32.mrb[0].mxu0
    %v4419 = vadd.f32 %v3874, %v4418
    %v4420 = vpop.f32.mrb[0].mxu0
    %4421 = vmatprep.mubr.bf16.mxu0 0
    %4422 = vmatmul.mubr.bf16.gmra.mrb[0].mxu0 %v546
    %v4423 = vpop.f32.mrb[0].mxu0
    %v4424 = vadd.f32 %v3879, %v4423
    %v4425 = vpop.f32.mrb[0].mxu0
    %v4426 = vpop.f32.mrb[0].mxu0
    %v4427 = vadd.f32 %v3882, %v4426
    %v4428 = vpop.f32.mrb[0].mxu0
    %4429 = vmatprep.mubr.bf16.mxu0 0
    %4430 = vmatmul.mubr.bf16.gmra.mrb[0].mxu0 %v547
    %v4431 = vpop.f32.mrb[0].mxu0
    %v4432 = vadd.f32 %v3887, %v4431
    %v4433 = vpop.f32.mrb[0].mxu0
    %v4434 = vpop.f32.mrb[0].mxu0
    %v4435 = vadd.f32 %v3890, %v4434
    %v4436 = vpop.f32.mrb[0].mxu0
    %4437 = vmatprep.mubr.bf16.mxu0 0
    %4438 = vmatmul.mubr.bf16.gmra.mrb[0].mxu0 %v548
    %v4439 = vpop.f32.mrb[0].mxu0
    %v4440 = vadd.f32 %v3895, %v4439
    %v4441 = vpop.f32.mrb[0].mxu0
    %v4442 = vpop.f32.mrb[0].mxu0
    %v4443 = vadd.f32 %v3898, %v4442
    %v4444 = vpop.f32.mrb[0].mxu0
    %4445 = vmatprep.mubr.bf16.mxu0 0
    %4446 = vmatmul.mubr.bf16.gmra.mrb[0].mxu0 %v549
    %v4447 = vpop.f32.mrb[0].mxu0
    %v4448 = vadd.f32 %v3903, %v4447
    %v4449 = vpop.f32.mrb[0].mxu0
    %v4450 = vpop.f32.mrb[0].mxu0
    %v4451 = vadd.f32 %v3906, %v4450
    %v4452 = vpop.f32.mrb[0].mxu0
    %4453 = vmatprep.mubr.bf16.mxu0 0
    %4454 = vmatmul.mubr.bf16.gmra.mrb[0].mxu0 %v622
    %v4455 = vpop.f32.mrb[0].mxu0
    %v4456 = vadd.f32 %v3911, %v4455
    %v4457 = vpop.f32.mrb[0].mxu0
    %v4458 = vpop.f32.mrb[0].mxu0
    %v4459 = vadd.f32 %v3914, %v4458
    %v4460 = vpop.f32.mrb[0].mxu0
    %4461 = vmatprep.mubr.bf16.mxu0 0
    %4462 = vmatmul.mubr.bf16.gmra.mrb[0].mxu0 %v623
    %v4463 = vpop.f32.mrb[0].mxu0
    %v4464 = vadd.f32 %v3919, %v4463
    %v4465 = vpop.f32.mrb[0].mxu0
    %v4466 = vpop.f32.mrb[0].mxu0
    %v4467 = vadd.f32 %v3922, %v4466
    %v4468 = vpop.f32.mrb[0].mxu0
    %4469 = vmatprep.mubr.bf16.mxu0 0
    %4470 = vmatmul.mubr.bf16.gmra.mrb[0].mxu0 %v634
    %v4471 = vpop.f32.mrb[0].mxu0
    %v4472 = vadd.f32 %v3927, %v4471
    %v4473 = vpop.f32.mrb[0].mxu0
    %v4474 = vpop.f32.mrb[0].mxu0
    %v4475 = vadd.f32 %v3930, %v4474
    %v4476 = vpop.f32.mrb[0].mxu0
    %4477 = vmatprep.mubr.bf16.mxu0 0
    %4478 = vmatmul.mubr.bf16.gmra.mrb[0].mxu0 %v635
    %v4479 = vpop.f32.mrb[0].mxu0
    %v4480 = vadd.f32 %v3935, %v4479
    %v4481 = vpop.f32.mrb[0].mxu0
    %v4482 = vpop.f32.mrb[0].mxu0
    %v4483 = vadd.f32 %v3938, %v4482
    %v4484 = vpop.f32.mrb[0].mxu0
    %4485 = vdwg.mxu0
    %v4486 = vlaneseq
    %v4487 = vshrl.u32 %v4486, 7
    %v4488 = vadd.s32 %v4487, 8
    %v4489 = vadd.s32 %v4487, 16
    %v4490 = vadd.s32 %v4487, 24
    %vm4491 = vcmp.gt.s32.totalorder %v4487, 0
    %vm4492 = vcmp.gt.s32.totalorder %v4488, 0
    %vm4493 = vcmp.gt.s32.totalorder %v4489, 0
    %vm4494 = vcmp.gt.s32.totalorder %v4490, 0
    %v4495 = vrot.slane %v2693, 7
    %v4496 = vrot.slane %v2709, 7
    %v4497 = vrot.slane %v2725, 7
    %v4498 = vrot.slane %v2741, 7
    %v4499 = vrot.slane %v2757, 7
    %v4500 = vrot.slane %v2773, 7
    %v4501 = vrot.slane %v2789, 7
    %v4502 = vrot.slane %v2805, 7
    %v4503 = vrot.slane %v2821, 7
    %v4504 = vrot.slane %v2837, 7
    %v4505 = vrot.slane %v2853, 7
    %v4506 = vrot.slane %v2869, 7
    %v4507 = vrot.slane %v2885, 7
    %v4508 = vrot.slane %v2901, 7
    %v4509 = vrot.slane %v2917, 7
    %v4510 = vrot.slane %v2933, 7
    %v4511 = vrot.slane %v2949, 7
    %v4512 = vrot.slane %v2965, 7
    %v4513 = vrot.slane %v2981, 7
    %v4514 = vrot.slane %v2997, 7
    %v4515 = vrot.slane %v3013, 7
    %v4516 = vrot.slane %v3029, 7
    %v4517 = vrot.slane %v3045, 7
    %v4518 = vrot.slane %v3061, 7
    %v4519 = vrot.slane %v3077, 7
    %v4520 = vrot.slane %v3093, 7
    %v4521 = vrot.slane %v3109, 7
    %v4522 = vrot.slane %v3125, 7
    %v4523 = vrot.slane %v3141, 7
    %v4524 = vrot.slane %v3157, 7
    %v4525 = vrot.slane %v3173, 7
    %v4526 = vrot.slane %v3189, 7
    %v4527 = vrot.slane %v2696, 7
    %v4528 = vrot.slane %v2712, 7
    %v4529 = vrot.slane %v2728, 7
    %v4530 = vrot.slane %v2744, 7
    %v4531 = vrot.slane %v2760, 7
    %v4532 = vrot.slane %v2776, 7
    %v4533 = vrot.slane %v2792, 7
    %v4534 = vrot.slane %v2808, 7
    %v4535 = vrot.slane %v2824, 7
    %v4536 = vrot.slane %v2840, 7
    %v4537 = vrot.slane %v2856, 7
    %v4538 = vrot.slane %v2872, 7
    %v4539 = vrot.slane %v2888, 7
    %v4540 = vrot.slane %v2904, 7
    %v4541 = vrot.slane %v2920, 7
    %v4542 = vrot.slane %v2936, 7
    %v4543 = vrot.slane %v2952, 7
    %v4544 = vrot.slane %v2968, 7
    %v4545 = vrot.slane %v2984, 7
    %v4546 = vrot.slane %v3000, 7
    %v4547 = vrot.slane %v3016, 7
    %v4548 = vrot.slane %v3032, 7
    %v4549 = vrot.slane %v3048, 7
    %v4550 = vrot.slane %v3064, 7
    %v4551 = vrot.slane %v3080, 7
    %v4552 = vrot.slane %v3096, 7
    %v4553 = vrot.slane %v3112, 7
    %v4554 = vrot.slane %v3128, 7
    %v4555 = vrot.slane %v3144, 7
    %v4556 = vrot.slane %v3160, 7
    %v4557 = vrot.slane %v3176, 7
    %v4558 = vrot.slane %v3192, 7
    %v4559 = vrot.slane %v2701, 7
    %v4560 = vrot.slane %v2717, 7
    %v4561 = vrot.slane %v2733, 7
    %v4562 = vrot.slane %v2749, 7
    %v4563 = vrot.slane %v2765, 7
    %v4564 = vrot.slane %v2781, 7
    %v4565 = vrot.slane %v2797, 7
    %v4566 = vrot.slane %v2813, 7
    %v4567 = vrot.slane %v2829, 7
    %v4568 = vrot.slane %v2845, 7
    %v4569 = vrot.slane %v2861, 7
    %v4570 = vrot.slane %v2877, 7
    %v4571 = vrot.slane %v2893, 7
    %v4572 = vrot.slane %v2909, 7
    %v4573 = vrot.slane %v2925, 7
    %v4574 = vrot.slane %v2941, 7
    %v4575 = vrot.slane %v2957, 7
    %v4576 = vrot.slane %v2973, 7
    %v4577 = vrot.slane %v2989, 7
    %v4578 = vrot.slane %v3005, 7
    %v4579 = vrot.slane %v3021, 7
    %v4580 = vrot.slane %v3037, 7
    %v4581 = vrot.slane %v3053, 7
    %v4582 = vrot.slane %v3069, 7
    %v4583 = vrot.slane %v3085, 7
    %v4584 = vrot.slane %v3101, 7
    %v4585 = vrot.slane %v3117, 7
    %v4586 = vrot.slane %v3133, 7
    %v4587 = vrot.slane %v3149, 7
    %v4588 = vrot.slane %v3165, 7
    %v4589 = vrot.slane %v3181, 7
    %v4590 = vrot.slane %v3197, 7
    %v4591 = vrot.slane %v2704, 7
    %v4592 = vrot.slane %v2720, 7
    %v4593 = vrot.slane %v2736, 7
    %v4594 = vrot.slane %v2752, 7
    %v4595 = vrot.slane %v2768, 7
    %v4596 = vrot.slane %v2784, 7
    %v4597 = vrot.slane %v2800, 7
    %v4598 = vrot.slane %v2816, 7
    %v4599 = vrot.slane %v2832, 7
    %v4600 = vrot.slane %v2848, 7
    %v4601 = vrot.slane %v2864, 7
    %v4602 = vrot.slane %v2880, 7
    %v4603 = vrot.slane %v2896, 7
    %v4604 = vrot.slane %v2912, 7
    %v4605 = vrot.slane %v2928, 7
    %v4606 = vrot.slane %v2944, 7
    %v4607 = vrot.slane %v2960, 7
    %v4608 = vrot.slane %v2976, 7
    %v4609 = vrot.slane %v2992, 7
    %v4610 = vrot.slane %v3008, 7
    %v4611 = vrot.slane %v3024, 7
    %v4612 = vrot.slane %v3040, 7
    %v4613 = vrot.slane %v3056, 7
    %v4614 = vrot.slane %v3072, 7
    %v4615 = vrot.slane %v3088, 7
    %v4616 = vrot.slane %v3104, 7
    %v4617 = vrot.slane %v3120, 7
    %v4618 = vrot.slane %v3136, 7
    %v4619 = vrot.slane %v3152, 7
    %v4620 = vrot.slane %v3168, 7
    %v4621 = vrot.slane %v3184, 7
    %v4622 = vrot.slane %v3200, 7
    %vm4623 = vcmp.lt.s32.totalorder %v4487, 1
    %v4624 = vsel %vm4623, %v4559, %v4591
    %v4625 = vsel %vm4623, %v4560, %v4592
    %v4626 = vsel %vm4623, %v4561, %v4593
    %v4627 = vsel %vm4623, %v4562, %v4594
    %v4628 = vsel %vm4623, %v4563, %v4595
    %v4629 = vsel %vm4623, %v4564, %v4596
    %v4630 = vsel %vm4623, %v4565, %v4597
    %v4631 = vsel %vm4623, %v4566, %v4598
    %v4632 = vsel %vm4623, %v4567, %v4599
    %v4633 = vsel %vm4623, %v4568, %v4600
    %v4634 = vsel %vm4623, %v4569, %v4601
    %v4635 = vsel %vm4623, %v4570, %v4602
    %v4636 = vsel %vm4623, %v4571, %v4603
    %v4637 = vsel %vm4623, %v4572, %v4604
    %v4638 = vsel %vm4623, %v4573, %v4605
    %v4639 = vsel %vm4623, %v4574, %v4606
    %v4640 = vsel %vm4623, %v4575, %v4607
    %v4641 = vsel %vm4623, %v4576, %v4608
    %v4642 = vsel %vm4623, %v4577, %v4609
    %v4643 = vsel %vm4623, %v4578, %v4610
    %v4644 = vsel %vm4623, %v4579, %v4611
    %v4645 = vsel %vm4623, %v4580, %v4612
    %v4646 = vsel %vm4623, %v4581, %v4613
    %v4647 = vsel %vm4623, %v4582, %v4614
    %v4648 = vsel %vm4623, %v4583, %v4615
    %v4649 = vsel %vm4623, %v4584, %v4616
    %v4650 = vsel %vm4623, %v4585, %v4617
    %v4651 = vsel %vm4623, %v4586, %v4618
    %v4652 = vsel %vm4623, %v4587, %v4619
    %v4653 = vsel %vm4623, %v4588, %v4620
    %v4654 = vsel %vm4623, %v4589, %v4621
    %v4655 = vsel %vm4623, %v4590, %v4622
    %v4656 = vsel %vm4623, %v4527, %v4559
    %v4657 = vsel %vm4623, %v4528, %v4560
    %v4658 = vsel %vm4623, %v4529, %v4561
    %v4659 = vsel %vm4623, %v4530, %v4562
    %v4660 = vsel %vm4623, %v4531, %v4563
    %v4661 = vsel %vm4623, %v4532, %v4564
    %v4662 = vsel %vm4623, %v4533, %v4565
    %v4663 = vsel %vm4623, %v4534, %v4566
    %v4664 = vsel %vm4623, %v4535, %v4567
    %v4665 = vsel %vm4623, %v4536, %v4568
    %v4666 = vsel %vm4623, %v4537, %v4569
    %v4667 = vsel %vm4623, %v4538, %v4570
    %v4668 = vsel %vm4623, %v4539, %v4571
    %v4669 = vsel %vm4623, %v4540, %v4572
    %v4670 = vsel %vm4623, %v4541, %v4573
    %v4671 = vsel %vm4623, %v4542, %v4574
    %v4672 = vsel %vm4623, %v4543, %v4575
    %v4673 = vsel %vm4623, %v4544, %v4576
    %v4674 = vsel %vm4623, %v4545, %v4577
    %v4675 = vsel %vm4623, %v4546, %v4578
    %v4676 = vsel %vm4623, %v4547, %v4579
    %v4677 = vsel %vm4623, %v4548, %v4580
    %v4678 = vsel %vm4623, %v4549, %v4581
    %v4679 = vsel %vm4623, %v4550, %v4582
    %v4680 = vsel %vm4623, %v4551, %v4583
    %v4681 = vsel %vm4623, %v4552, %v4584
    %v4682 = vsel %vm4623, %v4553, %v4585
    %v4683 = vsel %vm4623, %v4554, %v4586
    %v4684 = vsel %vm4623, %v4555, %v4587
    %v4685 = vsel %vm4623, %v4556, %v4588
    %v4686 = vsel %vm4623, %v4557, %v4589
    %v4687 = vsel %vm4623, %v4558, %v4590
    %v4688 = vsel %vm4623, %v4495, %v4527
    %v4689 = vsel %vm4623, %v4496, %v4528
    %v4690 = vsel %vm4623, %v4497, %v4529
    %v4691 = vsel %vm4623, %v4498, %v4530
    %v4692 = vsel %vm4623, %v4499, %v4531
    %v4693 = vsel %vm4623, %v4500, %v4532
    %v4694 = vsel %vm4623, %v4501, %v4533
    %v4695 = vsel %vm4623, %v4502, %v4534
    %v4696 = vsel %vm4623, %v4503, %v4535
    %v4697 = vsel %vm4623, %v4504, %v4536
    %v4698 = vsel %vm4623, %v4505, %v4537
    %v4699 = vsel %vm4623, %v4506, %v4538
    %v4700 = vsel %vm4623, %v4507, %v4539
    %v4701 = vsel %vm4623, %v4508, %v4540
    %v4702 = vsel %vm4623, %v4509, %v4541
    %v4703 = vsel %vm4623, %v4510, %v4542
    %v4704 = vsel %vm4623, %v4511, %v4543
    %v4705 = vsel %vm4623, %v4512, %v4544
    %v4706 = vsel %vm4623, %v4513, %v4545
    %v4707 = vsel %vm4623, %v4514, %v4546
    %v4708 = vsel %vm4623, %v4515, %v4547
    %v4709 = vsel %vm4623, %v4516, %v4548
    %v4710 = vsel %vm4623, %v4517, %v4549
    %v4711 = vsel %vm4623, %v4518, %v4550
    %v4712 = vsel %vm4623, %v4519, %v4551
    %v4713 = vsel %vm4623, %v4520, %v4552
    %v4714 = vsel %vm4623, %v4521, %v4553
    %v4715 = vsel %vm4623, %v4522, %v4554
    %v4716 = vsel %vm4623, %v4523, %v4555
    %v4717 = vsel %vm4623, %v4524, %v4556
    %v4718 = vsel %vm4623, %v4525, %v4557
    %v4719 = vsel %vm4623, %v4526, %v4558
    %v4720 = vsel %vm4623, %v4591, %v4495
    %v4721 = vsel %vm4623, %v4592, %v4496
    %v4722 = vsel %vm4623, %v4593, %v4497
    %v4723 = vsel %vm4623, %v4594, %v4498
    %v4724 = vsel %vm4623, %v4595, %v4499
    %v4725 = vsel %vm4623, %v4596, %v4500
    %v4726 = vsel %vm4623, %v4597, %v4501
    %v4727 = vsel %vm4623, %v4598, %v4502
    %v4728 = vsel %vm4623, %v4599, %v4503
    %v4729 = vsel %vm4623, %v4600, %v4504
    %v4730 = vsel %vm4623, %v4601, %v4505
    %v4731 = vsel %vm4623, %v4602, %v4506
    %v4732 = vsel %vm4623, %v4603, %v4507
    %v4733 = vsel %vm4623, %v4604, %v4508
    %v4734 = vsel %vm4623, %v4605, %v4509
    %v4735 = vsel %vm4623, %v4606, %v4510
    %v4736 = vsel %vm4623, %v4607, %v4511
    %v4737 = vsel %vm4623, %v4608, %v4512
    %v4738 = vsel %vm4623, %v4609, %v4513
    %v4739 = vsel %vm4623, %v4610, %v4514
    %v4740 = vsel %vm4623, %v4611, %v4515
    %v4741 = vsel %vm4623, %v4612, %v4516
    %v4742 = vsel %vm4623, %v4613, %v4517
    %v4743 = vsel %vm4623, %v4614, %v4518
    %v4744 = vsel %vm4623, %v4615, %v4519
    %v4745 = vsel %vm4623, %v4616, %v4520
    %v4746 = vsel %vm4623, %v4617, %v4521
    %v4747 = vsel %vm4623, %v4618, %v4522
    %v4748 = vsel %vm4623, %v4619, %v4523
    %v4749 = vsel %vm4623, %v4620, %v4524
    %v4750 = vsel %vm4623, %v4621, %v4525
    %v4751 = vsel %vm4623, %v4622, %v4526
    %v4752 = vsel %vm4491, 1, 0
    %v4753 = vsel %vm4492, 1, 0
    %v4754 = vsel %vm4493, 1, 0
    %v4755 = vsel %vm4494, 1, 0
    %vm4756 = vcmp.eq.s32.totalorder %v4752, 1
    %vm4757 = vcmp.eq.s32.totalorder %v4753, 1
    %vm4758 = vcmp.eq.s32.totalorder %v4754, 1
    %vm4759 = vcmp.eq.s32.totalorder %v4755, 1
    %v4760 = vsel %vm4756, %v4720, 0.0
    %v4761 = vsel %vm4757, %v4688, 0.0
    %v4762 = vsel %vm4758, %v4656, 0.0
    %v4763 = vsel %vm4759, %v4624, 0.0
    %v4764 = vsel %vm4756, %v4721, 0.0
    %v4765 = vsel %vm4757, %v4689, 0.0
    %v4766 = vsel %vm4758, %v4657, 0.0
    %v4767 = vsel %vm4759, %v4625, 0.0
    %v4768 = vsel %vm4756, %v4722, 0.0
    %v4769 = vsel %vm4757, %v4690, 0.0
    %v4770 = vsel %vm4758, %v4658, 0.0
    %v4771 = vsel %vm4759, %v4626, 0.0
    %v4772 = vsel %vm4756, %v4723, 0.0
    %v4773 = vsel %vm4757, %v4691, 0.0
    %v4774 = vsel %vm4758, %v4659, 0.0
    %v4775 = vsel %vm4759, %v4627, 0.0
    %v4776 = vsel %vm4756, %v4724, 0.0
    %v4777 = vsel %vm4757, %v4692, 0.0
    %v4778 = vsel %vm4758, %v4660, 0.0
    %v4779 = vsel %vm4759, %v4628, 0.0
    %v4780 = vsel %vm4756, %v4725, 0.0
    %v4781 = vsel %vm4757, %v4693, 0.0
    %v4782 = vsel %vm4758, %v4661, 0.0
    %v4783 = vsel %vm4759, %v4629, 0.0
    %v4784 = vsel %vm4756, %v4726, 0.0
    %v4785 = vsel %vm4757, %v4694, 0.0
    %v4786 = vsel %vm4758, %v4662, 0.0
    %v4787 = vsel %vm4759, %v4630, 0.0
    %v4788 = vsel %vm4756, %v4727, 0.0
    %v4789 = vsel %vm4757, %v4695, 0.0
    %v4790 = vsel %vm4758, %v4663, 0.0
    %v4791 = vsel %vm4759, %v4631, 0.0
    %v4792 = vsel %vm4756, %v4728, 0.0
    %v4793 = vsel %vm4757, %v4696, 0.0
    %v4794 = vsel %vm4758, %v4664, 0.0
    %v4795 = vsel %vm4759, %v4632, 0.0
    %v4796 = vsel %vm4756, %v4729, 0.0
    %v4797 = vsel %vm4757, %v4697, 0.0
    %v4798 = vsel %vm4758, %v4665, 0.0
    %v4799 = vsel %vm4759, %v4633, 0.0
    %v4800 = vsel %vm4756, %v4730, 0.0
    %v4801 = vsel %vm4757, %v4698, 0.0
    %v4802 = vsel %vm4758, %v4666, 0.0
    %v4803 = vsel %vm4759, %v4634, 0.0
    %v4804 = vsel %vm4756, %v4731, 0.0
    %v4805 = vsel %vm4757, %v4699, 0.0
    %v4806 = vsel %vm4758, %v4667, 0.0
    %v4807 = vsel %vm4759, %v4635, 0.0
    %v4808 = vsel %vm4756, %v4732, 0.0
    %v4809 = vsel %vm4757, %v4700, 0.0
    %v4810 = vsel %vm4758, %v4668, 0.0
    %v4811 = vsel %vm4759, %v4636, 0.0
    %v4812 = vsel %vm4756, %v4733, 0.0
    %v4813 = vsel %vm4757, %v4701, 0.0
    %v4814 = vsel %vm4758, %v4669, 0.0
    %v4815 = vsel %vm4759, %v4637, 0.0
    %v4816 = vsel %vm4756, %v4734, 0.0
    %v4817 = vsel %vm4757, %v4702, 0.0
    %v4818 = vsel %vm4758, %v4670, 0.0
    %v4819 = vsel %vm4759, %v4638, 0.0
    %v4820 = vsel %vm4756, %v4735, 0.0
    %v4821 = vsel %vm4757, %v4703, 0.0
    %v4822 = vsel %vm4758, %v4671, 0.0
    %v4823 = vsel %vm4759, %v4639, 0.0
    %v4824 = vsel %vm4756, %v4736, 0.0
    %v4825 = vsel %vm4757, %v4704, 0.0
    %v4826 = vsel %vm4758, %v4672, 0.0
    %v4827 = vsel %vm4759, %v4640, 0.0
    %v4828 = vsel %vm4756, %v4737, 0.0
    %v4829 = vsel %vm4757, %v4705, 0.0
    %v4830 = vsel %vm4758, %v4673, 0.0
    %v4831 = vsel %vm4759, %v4641, 0.0
    %v4832 = vsel %vm4756, %v4738, 0.0
    %v4833 = vsel %vm4757, %v4706, 0.0
    %v4834 = vsel %vm4758, %v4674, 0.0
    %v4835 = vsel %vm4759, %v4642, 0.0
    %v4836 = vsel %vm4756, %v4739, 0.0
    %v4837 = vsel %vm4757, %v4707, 0.0
    %v4838 = vsel %vm4758, %v4675, 0.0
    %v4839 = vsel %vm4759, %v4643, 0.0
    %v4840 = vsel %vm4756, %v4740, 0.0
    %v4841 = vsel %vm4757, %v4708, 0.0
    %v4842 = vsel %vm4758, %v4676, 0.0
    %v4843 = vsel %vm4759, %v4644, 0.0
    %v4844 = vsel %vm4756, %v4741, 0.0
    %v4845 = vsel %vm4757, %v4709, 0.0
    %v4846 = vsel %vm4758, %v4677, 0.0
    %v4847 = vsel %vm4759, %v4645, 0.0
    %v4848 = vsel %vm4756, %v4742, 0.0
    %v4849 = vsel %vm4757, %v4710, 0.0
    %v4850 = vsel %vm4758, %v4678, 0.0
    %v4851 = vsel %vm4759, %v4646, 0.0
    %v4852 = vsel %vm4756, %v4743, 0.0
    %v4853 = vsel %vm4757, %v4711, 0.0
    %v4854 = vsel %vm4758, %v4679, 0.0
    %v4855 = vsel %vm4759, %v4647, 0.0
    %v4856 = vsel %vm4756, %v4744, 0.0
    %v4857 = vsel %vm4757, %v4712, 0.0
    %v4858 = vsel %vm4758, %v4680, 0.0
    %v4859 = vsel %vm4759, %v4648, 0.0
    %v4860 = vsel %vm4756, %v4745, 0.0
    %v4861 = vsel %vm4757, %v4713, 0.0
    %v4862 = vsel %vm4758, %v4681, 0.0
    %v4863 = vsel %vm4759, %v4649, 0.0
    %v4864 = vsel %vm4756, %v4746, 0.0
    %v4865 = vsel %vm4757, %v4714, 0.0
    %v4866 = vsel %vm4758, %v4682, 0.0
    %v4867 = vsel %vm4759, %v4650, 0.0
    %v4868 = vsel %vm4756, %v4747, 0.0
    %v4869 = vsel %vm4757, %v4715, 0.0
    %v4870 = vsel %vm4758, %v4683, 0.0
    %v4871 = vsel %vm4759, %v4651, 0.0
    %v4872 = vsel %vm4756, %v4748, 0.0
    %v4873 = vsel %vm4757, %v4716, 0.0
    %v4874 = vsel %vm4758, %v4684, 0.0
    %v4875 = vsel %vm4759, %v4652, 0.0
    %v4876 = vsel %vm4756, %v4749, 0.0
    %v4877 = vsel %vm4757, %v4717, 0.0
    %v4878 = vsel %vm4758, %v4685, 0.0
    %v4879 = vsel %vm4759, %v4653, 0.0
    %v4880 = vsel %vm4756, %v4750, 0.0
    %v4881 = vsel %vm4757, %v4718, 0.0
    %v4882 = vsel %vm4758, %v4686, 0.0
    %v4883 = vsel %vm4759, %v4654, 0.0
    %v4884 = vsel %vm4756, %v4751, 0.0
    %v4885 = vsel %vm4757, %v4719, 0.0
    %v4886 = vsel %vm4758, %v4687, 0.0
    %v4887 = vsel %vm4759, %v4655, 0.0
    %v4888 = vadd.f32 %v1411, %v4760
    %v4889 = vadd.f32 %v1414, %v4761
    %v4890 = vadd.f32 %v1419, %v4762
    %v4891 = vadd.f32 %v1422, %v4763
    %v4892 = vadd.f32 %v1427, %v4764
    %v4893 = vadd.f32 %v1430, %v4765
    %v4894 = vadd.f32 %v1435, %v4766
    %v4895 = vadd.f32 %v1438, %v4767
    %v4896 = vadd.f32 %v1443, %v4768
    %v4897 = vadd.f32 %v1446, %v4769
    %v4898 = vadd.f32 %v1451, %v4770
    %v4899 = vadd.f32 %v1454, %v4771
    %v4900 = vadd.f32 %v1459, %v4772
    %v4901 = vadd.f32 %v1462, %v4773
    %v4902 = vadd.f32 %v1467, %v4774
    %v4903 = vadd.f32 %v1470, %v4775
    %v4904 = vadd.f32 %v1475, %v4776
    %v4905 = vadd.f32 %v1478, %v4777
    %v4906 = vadd.f32 %v1483, %v4778
    %v4907 = vadd.f32 %v1486, %v4779
    %v4908 = vadd.f32 %v1491, %v4780
    %v4909 = vadd.f32 %v1494, %v4781
    %v4910 = vadd.f32 %v1499, %v4782
    %v4911 = vadd.f32 %v1502, %v4783
    %v4912 = vadd.f32 %v1507, %v4784
    %v4913 = vadd.f32 %v1510, %v4785
    %v4914 = vadd.f32 %v1515, %v4786
    %v4915 = vadd.f32 %v1518, %v4787
    %v4916 = vadd.f32 %v1523, %v4788
    %v4917 = vadd.f32 %v1526, %v4789
    %v4918 = vadd.f32 %v1531, %v4790
    %v4919 = vadd.f32 %v1534, %v4791
    %v4920 = vadd.f32 %v1539, %v4792
    %v4921 = vadd.f32 %v1542, %v4793
    %v4922 = vadd.f32 %v1547, %v4794
    %v4923 = vadd.f32 %v1550, %v4795
    %v4924 = vadd.f32 %v1555, %v4796
    %v4925 = vadd.f32 %v1558, %v4797
    %v4926 = vadd.f32 %v1563, %v4798
    %v4927 = vadd.f32 %v1566, %v4799
    %v4928 = vadd.f32 %v1571, %v4800
    %v4929 = vadd.f32 %v1574, %v4801
    %v4930 = vadd.f32 %v1579, %v4802
    %v4931 = vadd.f32 %v1582, %v4803
    %v4932 = vadd.f32 %v1587, %v4804
    %v4933 = vadd.f32 %v1590, %v4805
    %v4934 = vadd.f32 %v1595, %v4806
    %v4935 = vadd.f32 %v1598, %v4807
    %v4936 = vadd.f32 %v1603, %v4808
    %v4937 = vadd.f32 %v1606, %v4809
    %v4938 = vadd.f32 %v1611, %v4810
    %v4939 = vadd.f32 %v1614, %v4811
    %v4940 = vadd.f32 %v1619, %v4812
    %v4941 = vadd.f32 %v1622, %v4813
    %v4942 = vadd.f32 %v1627, %v4814
    %v4943 = vadd.f32 %v1630, %v4815
    %v4944 = vadd.f32 %v1635, %v4816
    %v4945 = vadd.f32 %v1638, %v4817
    %v4946 = vadd.f32 %v1643, %v4818
    %v4947 = vadd.f32 %v1646, %v4819
    %v4948 = vadd.f32 %v1651, %v4820
    %v4949 = vadd.f32 %v1654, %v4821
    %v4950 = vadd.f32 %v1659, %v4822
    %v4951 = vadd.f32 %v1662, %v4823
    %v4952 = vadd.f32 %v1667, %v4824
    %v4953 = vadd.f32 %v1670, %v4825
    %v4954 = vadd.f32 %v1675, %v4826
    %v4955 = vadd.f32 %v1678, %v4827
    %v4956 = vadd.f32 %v1683, %v4828
    %v4957 = vadd.f32 %v1686, %v4829
    %v4958 = vadd.f32 %v1691, %v4830
    %v4959 = vadd.f32 %v1694, %v4831
    %v4960 = vadd.f32 %v1699, %v4832
    %v4961 = vadd.f32 %v1702, %v4833
    %v4962 = vadd.f32 %v1707, %v4834
    %v4963 = vadd.f32 %v1710, %v4835
    %v4964 = vadd.f32 %v1715, %v4836
    %v4965 = vadd.f32 %v1718, %v4837
    %v4966 = vadd.f32 %v1723, %v4838
    %v4967 = vadd.f32 %v1726, %v4839
    %v4968 = vadd.f32 %v1731, %v4840
    %v4969 = vadd.f32 %v1734, %v4841
    %v4970 = vadd.f32 %v1739, %v4842
    %v4971 = vadd.f32 %v1742, %v4843
    %v4972 = vadd.f32 %v1747, %v4844
    %v4973 = vadd.f32 %v1750, %v4845
    %v4974 = vadd.f32 %v1755, %v4846
    %v4975 = vadd.f32 %v1758, %v4847
    %v4976 = vadd.f32 %v1763, %v4848
    %v4977 = vadd.f32 %v1766, %v4849
    %v4978 = vadd.f32 %v1771, %v4850
    %v4979 = vadd.f32 %v1774, %v4851
    %v4980 = vadd.f32 %v1779, %v4852
    %v4981 = vadd.f32 %v1782, %v4853
    %v4982 = vadd.f32 %v1787, %v4854
    %v4983 = vadd.f32 %v1790, %v4855
    %v4984 = vadd.f32 %v1795, %v4856
    %v4985 = vadd.f32 %v1798, %v4857
    %v4986 = vadd.f32 %v1803, %v4858
    %v4987 = vadd.f32 %v1806, %v4859
    %v4988 = vadd.f32 %v1811, %v4860
    %v4989 = vadd.f32 %v1814, %v4861
    %v4990 = vadd.f32 %v1819, %v4862
    %v4991 = vadd.f32 %v1822, %v4863
    %v4992 = vadd.f32 %v1827, %v4864
    %v4993 = vadd.f32 %v1830, %v4865
    %v4994 = vadd.f32 %v1835, %v4866
    %v4995 = vadd.f32 %v1838, %v4867
    %v4996 = vadd.f32 %v1843, %v4868
    %v4997 = vadd.f32 %v1846, %v4869
    %v4998 = vadd.f32 %v1851, %v4870
    %v4999 = vadd.f32 %v1854, %v4871
    %v5000 = vadd.f32 %v1859, %v4872
    %v5001 = vadd.f32 %v1862, %v4873
    %v5002 = vadd.f32 %v1867, %v4874
    %v5003 = vadd.f32 %v1870, %v4875
    %v5004 = vadd.f32 %v1875, %v4876
    %v5005 = vadd.f32 %v1878, %v4877
    %v5006 = vadd.f32 %v1883, %v4878
    %v5007 = vadd.f32 %v1886, %v4879
    %v5008 = vadd.f32 %v1891, %v4880
    %v5009 = vadd.f32 %v1894, %v4881
    %v5010 = vadd.f32 %v1899, %v4882
    %v5011 = vadd.f32 %v1902, %v4883
    %v5012 = vadd.f32 %v1907, %v4884
    %v5013 = vadd.f32 %v1910, %v4885
    %v5014 = vadd.f32 %v1915, %v4886
    %v5015 = vadd.f32 %v1918, %v4887
    %vm5016 = vcmp.lt.s32.totalorder %v4487, 31
    %vm5017 = vcmp.lt.s32.totalorder %v4488, 31
    %vm5018 = vcmp.lt.s32.totalorder %v4489, 31
    %vm5019 = vcmp.lt.s32.totalorder %v4490, 31
    %v5020 = vrot.slane %v3976, 1
    %v5021 = vrot.slane %v3992, 1
    %v5022 = vrot.slane %v4008, 1
    %v5023 = vrot.slane %v4024, 1
    %v5024 = vrot.slane %v4040, 1
    %v5025 = vrot.slane %v4056, 1
    %v5026 = vrot.slane %v4072, 1
    %v5027 = vrot.slane %v4088, 1
    %v5028 = vrot.slane %v4104, 1
    %v5029 = vrot.slane %v4120, 1
    %v5030 = vrot.slane %v4136, 1
    %v5031 = vrot.slane %v4152, 1
    %v5032 = vrot.slane %v4168, 1
    %v5033 = vrot.slane %v4184, 1
    %v5034 = vrot.slane %v4200, 1
    %v5035 = vrot.slane %v4216, 1
    %v5036 = vrot.slane %v4232, 1
    %v5037 = vrot.slane %v4248, 1
    %v5038 = vrot.slane %v4264, 1
    %v5039 = vrot.slane %v4280, 1
    %v5040 = vrot.slane %v4296, 1
    %v5041 = vrot.slane %v4312, 1
    %v5042 = vrot.slane %v4328, 1
    %v5043 = vrot.slane %v4344, 1
    %v5044 = vrot.slane %v4360, 1
    %v5045 = vrot.slane %v4376, 1
    %v5046 = vrot.slane %v4392, 1
    %v5047 = vrot.slane %v4408, 1
    %v5048 = vrot.slane %v4424, 1
    %v5049 = vrot.slane %v4440, 1
    %v5050 = vrot.slane %v4456, 1
    %v5051 = vrot.slane %v4472, 1
    %v5052 = vrot.slane %v3979, 1
    %v5053 = vrot.slane %v3995, 1
    %v5054 = vrot.slane %v4011, 1
    %v5055 = vrot.slane %v4027, 1
    %v5056 = vrot.slane %v4043, 1
    %v5057 = vrot.slane %v4059, 1
    %v5058 = vrot.slane %v4075, 1
    %v5059 = vrot.slane %v4091, 1
    %v5060 = vrot.slane %v4107, 1
    %v5061 = vrot.slane %v4123, 1
    %v5062 = vrot.slane %v4139, 1
    %v5063 = vrot.slane %v4155, 1
    %v5064 = vrot.slane %v4171, 1
    %v5065 = vrot.slane %v4187, 1
    %v5066 = vrot.slane %v4203, 1
    %v5067 = vrot.slane %v4219, 1
    %v5068 = vrot.slane %v4235, 1
    %v5069 = vrot.slane %v4251, 1
    %v5070 = vrot.slane %v4267, 1
    %v5071 = vrot.slane %v4283, 1
    %v5072 = vrot.slane %v4299, 1
    %v5073 = vrot.slane %v4315, 1
    %v5074 = vrot.slane %v4331, 1
    %v5075 = vrot.slane %v4347, 1
    %v5076 = vrot.slane %v4363, 1
    %v5077 = vrot.slane %v4379, 1
    %v5078 = vrot.slane %v4395, 1
    %v5079 = vrot.slane %v4411, 1
    %v5080 = vrot.slane %v4427, 1
    %v5081 = vrot.slane %v4443, 1
    %v5082 = vrot.slane %v4459, 1
    %v5083 = vrot.slane %v4475, 1
    %v5084 = vrot.slane %v3984, 1
    %v5085 = vrot.slane %v4000, 1
    %v5086 = vrot.slane %v4016, 1
    %v5087 = vrot.slane %v4032, 1
    %v5088 = vrot.slane %v4048, 1
    %v5089 = vrot.slane %v4064, 1
    %v5090 = vrot.slane %v4080, 1
    %v5091 = vrot.slane %v4096, 1
    %v5092 = vrot.slane %v4112, 1
    %v5093 = vrot.slane %v4128, 1
    %v5094 = vrot.slane %v4144, 1
    %v5095 = vrot.slane %v4160, 1
    %v5096 = vrot.slane %v4176, 1
    %v5097 = vrot.slane %v4192, 1
    %v5098 = vrot.slane %v4208, 1
    %v5099 = vrot.slane %v4224, 1
    %v5100 = vrot.slane %v4240, 1
    %v5101 = vrot.slane %v4256, 1
    %v5102 = vrot.slane %v4272, 1
    %v5103 = vrot.slane %v4288, 1
    %v5104 = vrot.slane %v4304, 1
    %v5105 = vrot.slane %v4320, 1
    %v5106 = vrot.slane %v4336, 1
    %v5107 = vrot.slane %v4352, 1
    %v5108 = vrot.slane %v4368, 1
    %v5109 = vrot.slane %v4384, 1
    %v5110 = vrot.slane %v4400, 1
    %v5111 = vrot.slane %v4416, 1
    %v5112 = vrot.slane %v4432, 1
    %v5113 = vrot.slane %v4448, 1
    %v5114 = vrot.slane %v4464, 1
    %v5115 = vrot.slane %v4480, 1
    %v5116 = vrot.slane %v3987, 1
    %v5117 = vrot.slane %v4003, 1
    %v5118 = vrot.slane %v4019, 1
    %v5119 = vrot.slane %v4035, 1
    %v5120 = vrot.slane %v4051, 1
    %v5121 = vrot.slane %v4067, 1
    %v5122 = vrot.slane %v4083, 1
    %v5123 = vrot.slane %v4099, 1
    %v5124 = vrot.slane %v4115, 1
    %v5125 = vrot.slane %v4131, 1
    %v5126 = vrot.slane %v4147, 1
    %v5127 = vrot.slane %v4163, 1
    %v5128 = vrot.slane %v4179, 1
    %v5129 = vrot.slane %v4195, 1
    %v5130 = vrot.slane %v4211, 1
    %v5131 = vrot.slane %v4227, 1
    %v5132 = vrot.slane %v4243, 1
    %v5133 = vrot.slane %v4259, 1
    %v5134 = vrot.slane %v4275, 1
    %v5135 = vrot.slane %v4291, 1
    %v5136 = vrot.slane %v4307, 1
    %v5137 = vrot.slane %v4323, 1
    %v5138 = vrot.slane %v4339, 1
    %v5139 = vrot.slane %v4355, 1
    %v5140 = vrot.slane %v4371, 1
    %v5141 = vrot.slane %v4387, 1
    %v5142 = vrot.slane %v4403, 1
    %v5143 = vrot.slane %v4419, 1
    %v5144 = vrot.slane %v4435, 1
    %v5145 = vrot.slane %v4451, 1
    %v5146 = vrot.slane %v4467, 1
    %v5147 = vrot.slane %v4483, 1
    %vm5148 = vcmp.lt.s32.totalorder %v4487, 7
    %v5149 = vsel %vm5148, %v5084, %v5116
    %v5150 = vsel %vm5148, %v5085, %v5117
    %v5151 = vsel %vm5148, %v5086, %v5118
    %v5152 = vsel %vm5148, %v5087, %v5119
    %v5153 = vsel %vm5148, %v5088, %v5120
    %v5154 = vsel %vm5148, %v5089, %v5121
    %v5155 = vsel %vm5148, %v5090, %v5122
    %v5156 = vsel %vm5148, %v5091, %v5123
    %v5157 = vsel %vm5148, %v5092, %v5124
    %v5158 = vsel %vm5148, %v5093, %v5125
    %v5159 = vsel %vm5148, %v5094, %v5126
    %v5160 = vsel %vm5148, %v5095, %v5127
    %v5161 = vsel %vm5148, %v5096, %v5128
    %v5162 = vsel %vm5148, %v5097, %v5129
    %v5163 = vsel %vm5148, %v5098, %v5130
    %v5164 = vsel %vm5148, %v5099, %v5131
    %v5165 = vsel %vm5148, %v5100, %v5132
    %v5166 = vsel %vm5148, %v5101, %v5133
    %v5167 = vsel %vm5148, %v5102, %v5134
    %v5168 = vsel %vm5148, %v5103, %v5135
    %v5169 = vsel %vm5148, %v5104, %v5136
    %v5170 = vsel %vm5148, %v5105, %v5137
    %v5171 = vsel %vm5148, %v5106, %v5138
    %v5172 = vsel %vm5148, %v5107, %v5139
    %v5173 = vsel %vm5148, %v5108, %v5140
    %v5174 = vsel %vm5148, %v5109, %v5141
    %v5175 = vsel %vm5148, %v5110, %v5142
    %v5176 = vsel %vm5148, %v5111, %v5143
    %v5177 = vsel %vm5148, %v5112, %v5144
    %v5178 = vsel %vm5148, %v5113, %v5145
    %v5179 = vsel %vm5148, %v5114, %v5146
    %v5180 = vsel %vm5148, %v5115, %v5147
    %v5181 = vsel %vm5148, %v5052, %v5084
    %v5182 = vsel %vm5148, %v5053, %v5085
    %v5183 = vsel %vm5148, %v5054, %v5086
    %v5184 = vsel %vm5148, %v5055, %v5087
    %v5185 = vsel %vm5148, %v5056, %v5088
    %v5186 = vsel %vm5148, %v5057, %v5089
    %v5187 = vsel %vm5148, %v5058, %v5090
    %v5188 = vsel %vm5148, %v5059, %v5091
    %v5189 = vsel %vm5148, %v5060, %v5092
    %v5190 = vsel %vm5148, %v5061, %v5093
    %v5191 = vsel %vm5148, %v5062, %v5094
    %v5192 = vsel %vm5148, %v5063, %v5095
    %v5193 = vsel %vm5148, %v5064, %v5096
    %v5194 = vsel %vm5148, %v5065, %v5097
    %v5195 = vsel %vm5148, %v5066, %v5098
    %v5196 = vsel %vm5148, %v5067, %v5099
    %v5197 = vsel %vm5148, %v5068, %v5100
    %v5198 = vsel %vm5148, %v5069, %v5101
    %v5199 = vsel %vm5148, %v5070, %v5102
    %v5200 = vsel %vm5148, %v5071, %v5103
    %v5201 = vsel %vm5148, %v5072, %v5104
    %v5202 = vsel %vm5148, %v5073, %v5105
    %v5203 = vsel %vm5148, %v5074, %v5106
    %v5204 = vsel %vm5148, %v5075, %v5107
    %v5205 = vsel %vm5148, %v5076, %v5108
    %v5206 = vsel %vm5148, %v5077, %v5109
    %v5207 = vsel %vm5148, %v5078, %v5110
    %v5208 = vsel %vm5148, %v5079, %v5111
    %v5209 = vsel %vm5148, %v5080, %v5112
    %v5210 = vsel %vm5148, %v5081, %v5113
    %v5211 = vsel %vm5148, %v5082, %v5114
    %v5212 = vsel %vm5148, %v5083, %v5115
    %v5213 = vsel %vm5148, %v5020, %v5052
    %v5214 = vsel %vm5148, %v5021, %v5053
    %v5215 = vsel %vm5148, %v5022, %v5054
    %v5216 = vsel %vm5148, %v5023, %v5055
    %v5217 = vsel %vm5148, %v5024, %v5056
    %v5218 = vsel %vm5148, %v5025, %v5057
    %v5219 = vsel %vm5148, %v5026, %v5058
    %v5220 = vsel %vm5148, %v5027, %v5059
    %v5221 = vsel %vm5148, %v5028, %v5060
    %v5222 = vsel %vm5148, %v5029, %v5061
    %v5223 = vsel %vm5148, %v5030, %v5062
    %v5224 = vsel %vm5148, %v5031, %v5063
    %v5225 = vsel %vm5148, %v5032, %v5064
    %v5226 = vsel %vm5148, %v5033, %v5065
    %v5227 = vsel %vm5148, %v5034, %v5066
    %v5228 = vsel %vm5148, %v5035, %v5067
    %v5229 = vsel %vm5148, %v5036, %v5068
    %v5230 = vsel %vm5148, %v5037, %v5069
    %v5231 = vsel %vm5148, %v5038, %v5070
    %v5232 = vsel %vm5148, %v5039, %v5071
    %v5233 = vsel %vm5148, %v5040, %v5072
    %v5234 = vsel %vm5148, %v5041, %v5073
    %v5235 = vsel %vm5148, %v5042, %v5074
    %v5236 = vsel %vm5148, %v5043, %v5075
    %v5237 = vsel %vm5148, %v5044, %v5076
    %v5238 = vsel %vm5148, %v5045, %v5077
    %v5239 = vsel %vm5148, %v5046, %v5078
    %v5240 = vsel %vm5148, %v5047, %v5079
    %v5241 = vsel %vm5148, %v5048, %v5080
    %v5242 = vsel %vm5148, %v5049, %v5081
    %v5243 = vsel %vm5148, %v5050, %v5082
    %v5244 = vsel %vm5148, %v5051, %v5083
    %v5245 = vsel %vm5148, %v5116, %v5020
    %v5246 = vsel %vm5148, %v5117, %v5021
    %v5247 = vsel %vm5148, %v5118, %v5022
    %v5248 = vsel %vm5148, %v5119, %v5023
    %v5249 = vsel %vm5148, %v5120, %v5024
    %v5250 = vsel %vm5148, %v5121, %v5025
    %v5251 = vsel %vm5148, %v5122, %v5026
    %v5252 = vsel %vm5148, %v5123, %v5027
    %v5253 = vsel %vm5148, %v5124, %v5028
    %v5254 = vsel %vm5148, %v5125, %v5029
    %v5255 = vsel %vm5148, %v5126, %v5030
    %v5256 = vsel %vm5148, %v5127, %v5031
    %v5257 = vsel %vm5148, %v5128, %v5032
    %v5258 = vsel %vm5148, %v5129, %v5033
    %v5259 = vsel %vm5148, %v5130, %v5034
    %v5260 = vsel %vm5148, %v5131, %v5035
    %v5261 = vsel %vm5148, %v5132, %v5036
    %v5262 = vsel %vm5148, %v5133, %v5037
    %v5263 = vsel %vm5148, %v5134, %v5038
    %v5264 = vsel %vm5148, %v5135, %v5039
    %v5265 = vsel %vm5148, %v5136, %v5040
    %v5266 = vsel %vm5148, %v5137, %v5041
    %v5267 = vsel %vm5148, %v5138, %v5042
    %v5268 = vsel %vm5148, %v5139, %v5043
    %v5269 = vsel %vm5148, %v5140, %v5044
    %v5270 = vsel %vm5148, %v5141, %v5045
    %v5271 = vsel %vm5148, %v5142, %v5046
    %v5272 = vsel %vm5148, %v5143, %v5047
    %v5273 = vsel %vm5148, %v5144, %v5048
    %v5274 = vsel %vm5148, %v5145, %v5049
    %v5275 = vsel %vm5148, %v5146, %v5050
    %v5276 = vsel %vm5148, %v5147, %v5051
    %v5277 = vsel %vm5016, 1, 0
    %v5278 = vsel %vm5017, 1, 0
    %v5279 = vsel %vm5018, 1, 0
    %v5280 = vsel %vm5019, 1, 0
    %vm5281 = vcmp.eq.s32.totalorder %v5277, 1
    %vm5282 = vcmp.eq.s32.totalorder %v5278, 1
    %vm5283 = vcmp.eq.s32.totalorder %v5279, 1
    %vm5284 = vcmp.eq.s32.totalorder %v5280, 1
    %v5285 = vsel %vm5281, %v5213, 0.0
    %v5286 = vsel %vm5282, %v5181, 0.0
    %v5287 = vsel %vm5283, %v5149, 0.0
    %v5288 = vsel %vm5284, %v5245, 0.0
    %v5289 = vsel %vm5281, %v5214, 0.0
    %v5290 = vsel %vm5282, %v5182, 0.0
    %v5291 = vsel %vm5283, %v5150, 0.0
    %v5292 = vsel %vm5284, %v5246, 0.0
    %v5293 = vsel %vm5281, %v5215, 0.0
    %v5294 = vsel %vm5282, %v5183, 0.0
    %v5295 = vsel %vm5283, %v5151, 0.0
    %v5296 = vsel %vm5284, %v5247, 0.0
    %v5297 = vsel %vm5281, %v5216, 0.0
    %v5298 = vsel %vm5282, %v5184, 0.0
    %v5299 = vsel %vm5283, %v5152, 0.0
    %v5300 = vsel %vm5284, %v5248, 0.0
    %v5301 = vsel %vm5281, %v5217, 0.0
    %v5302 = vsel %vm5282, %v5185, 0.0
    %v5303 = vsel %vm5283, %v5153, 0.0
    %v5304 = vsel %vm5284, %v5249, 0.0
    %v5305 = vsel %vm5281, %v5218, 0.0
    %v5306 = vsel %vm5282, %v5186, 0.0
    %v5307 = vsel %vm5283, %v5154, 0.0
    %v5308 = vsel %vm5284, %v5250, 0.0
    %v5309 = vsel %vm5281, %v5219, 0.0
    %v5310 = vsel %vm5282, %v5187, 0.0
    %v5311 = vsel %vm5283, %v5155, 0.0
    %v5312 = vsel %vm5284, %v5251, 0.0
    %v5313 = vsel %vm5281, %v5220, 0.0
    %v5314 = vsel %vm5282, %v5188, 0.0
    %v5315 = vsel %vm5283, %v5156, 0.0
    %v5316 = vsel %vm5284, %v5252, 0.0
    %v5317 = vsel %vm5281, %v5221, 0.0
    %v5318 = vsel %vm5282, %v5189, 0.0
    %v5319 = vsel %vm5283, %v5157, 0.0
    %v5320 = vsel %vm5284, %v5253, 0.0
    %v5321 = vsel %vm5281, %v5222, 0.0
    %v5322 = vsel %vm5282, %v5190, 0.0
    %v5323 = vsel %vm5283, %v5158, 0.0
    %v5324 = vsel %vm5284, %v5254, 0.0
    %v5325 = vsel %vm5281, %v5223, 0.0
    %v5326 = vsel %vm5282, %v5191, 0.0
    %v5327 = vsel %vm5283, %v5159, 0.0
    %v5328 = vsel %vm5284, %v5255, 0.0
    %v5329 = vsel %vm5281, %v5224, 0.0
    %v5330 = vsel %vm5282, %v5192, 0.0
    %v5331 = vsel %vm5283, %v5160, 0.0
    %v5332 = vsel %vm5284, %v5256, 0.0
    %v5333 = vsel %vm5281, %v5225, 0.0
    %v5334 = vsel %vm5282, %v5193, 0.0
    %v5335 = vsel %vm5283, %v5161, 0.0
    %v5336 = vsel %vm5284, %v5257, 0.0
    %v5337 = vsel %vm5281, %v5226, 0.0
    %v5338 = vsel %vm5282, %v5194, 0.0
    %v5339 = vsel %vm5283, %v5162, 0.0
    %v5340 = vsel %vm5284, %v5258, 0.0
    %v5341 = vsel %vm5281, %v5227, 0.0
    %v5342 = vsel %vm5282, %v5195, 0.0
    %v5343 = vsel %vm5283, %v5163, 0.0
    %v5344 = vsel %vm5284, %v5259, 0.0
    %v5345 = vsel %vm5281, %v5228, 0.0
    %v5346 = vsel %vm5282, %v5196, 0.0
    %v5347 = vsel %vm5283, %v5164, 0.0
    %v5348 = vsel %vm5284, %v5260, 0.0
    %v5349 = vsel %vm5281, %v5229, 0.0
    %v5350 = vsel %vm5282, %v5197, 0.0
    %v5351 = vsel %vm5283, %v5165, 0.0
    %v5352 = vsel %vm5284, %v5261, 0.0
    %v5353 = vsel %vm5281, %v5230, 0.0
    %v5354 = vsel %vm5282, %v5198, 0.0
    %v5355 = vsel %vm5283, %v5166, 0.0
    %v5356 = vsel %vm5284, %v5262, 0.0
    %v5357 = vsel %vm5281, %v5231, 0.0
    %v5358 = vsel %vm5282, %v5199, 0.0
    %v5359 = vsel %vm5283, %v5167, 0.0
    %v5360 = vsel %vm5284, %v5263, 0.0
    %v5361 = vsel %vm5281, %v5232, 0.0
    %v5362 = vsel %vm5282, %v5200, 0.0
    %v5363 = vsel %vm5283, %v5168, 0.0
    %v5364 = vsel %vm5284, %v5264, 0.0
    %v5365 = vsel %vm5281, %v5233, 0.0
    %v5366 = vsel %vm5282, %v5201, 0.0
    %v5367 = vsel %vm5283, %v5169, 0.0
    %v5368 = vsel %vm5284, %v5265, 0.0
    %v5369 = vsel %vm5281, %v5234, 0.0
    %v5370 = vsel %vm5282, %v5202, 0.0
    %v5371 = vsel %vm5283, %v5170, 0.0
    %v5372 = vsel %vm5284, %v5266, 0.0
    %v5373 = vsel %vm5281, %v5235, 0.0
    %v5374 = vsel %vm5282, %v5203, 0.0
    %v5375 = vsel %vm5283, %v5171, 0.0
    %v5376 = vsel %vm5284, %v5267, 0.0
    %v5377 = vsel %vm5281, %v5236, 0.0
    %v5378 = vsel %vm5282, %v5204, 0.0
    %v5379 = vsel %vm5283, %v5172, 0.0
    %v5380 = vsel %vm5284, %v5268, 0.0
    %v5381 = vsel %vm5281, %v5237, 0.0
    %v5382 = vsel %vm5282, %v5205, 0.0
    %v5383 = vsel %vm5283, %v5173, 0.0
    %v5384 = vsel %vm5284, %v5269, 0.0
    %v5385 = vsel %vm5281, %v5238, 0.0
    %v5386 = vsel %vm5282, %v5206, 0.0
    %v5387 = vsel %vm5283, %v5174, 0.0
    %v5388 = vsel %vm5284, %v5270, 0.0
    %v5389 = vsel %vm5281, %v5239, 0.0
    %v5390 = vsel %vm5282, %v5207, 0.0
    %v5391 = vsel %vm5283, %v5175, 0.0
    %v5392 = vsel %vm5284, %v5271, 0.0
    %v5393 = vsel %vm5281, %v5240, 0.0
    %v5394 = vsel %vm5282, %v5208, 0.0
    %v5395 = vsel %vm5283, %v5176, 0.0
    %v5396 = vsel %vm5284, %v5272, 0.0
    %v5397 = vsel %vm5281, %v5241, 0.0
    %v5398 = vsel %vm5282, %v5209, 0.0
    %v5399 = vsel %vm5283, %v5177, 0.0
    %v5400 = vsel %vm5284, %v5273, 0.0
    %v5401 = vsel %vm5281, %v5242, 0.0
    %v5402 = vsel %vm5282, %v5210, 0.0
    %v5403 = vsel %vm5283, %v5178, 0.0
    %v5404 = vsel %vm5284, %v5274, 0.0
    %v5405 = vsel %vm5281, %v5243, 0.0
    %v5406 = vsel %vm5282, %v5211, 0.0
    %v5407 = vsel %vm5283, %v5179, 0.0
    %v5408 = vsel %vm5284, %v5275, 0.0
    %v5409 = vsel %vm5281, %v5244, 0.0
    %v5410 = vsel %vm5282, %v5212, 0.0
    %v5411 = vsel %vm5283, %v5180, 0.0
    %v5412 = vsel %vm5284, %v5276, 0.0
    %v5413 = vadd.f32 %v4888, %v5285
    %v5414 = vadd.f32 %v4889, %v5286
    %v5415 = vadd.f32 %v4890, %v5287
    %v5416 = vadd.f32 %v4891, %v5288
    %v5417 = vadd.f32 %v4892, %v5289
    %v5418 = vadd.f32 %v4893, %v5290
    %v5419 = vadd.f32 %v4894, %v5291
    %v5420 = vadd.f32 %v4895, %v5292
    %v5421 = vadd.f32 %v4896, %v5293
    %v5422 = vadd.f32 %v4897, %v5294
    %v5423 = vadd.f32 %v4898, %v5295
    %v5424 = vadd.f32 %v4899, %v5296
    %v5425 = vadd.f32 %v4900, %v5297
    %v5426 = vadd.f32 %v4901, %v5298
    %v5427 = vadd.f32 %v4902, %v5299
    %v5428 = vadd.f32 %v4903, %v5300
    %v5429 = vadd.f32 %v4904, %v5301
    %v5430 = vadd.f32 %v4905, %v5302
    %v5431 = vadd.f32 %v4906, %v5303
    %v5432 = vadd.f32 %v4907, %v5304
    %v5433 = vadd.f32 %v4908, %v5305
    %v5434 = vadd.f32 %v4909, %v5306
    %v5435 = vadd.f32 %v4910, %v5307
    %v5436 = vadd.f32 %v4911, %v5308
    %v5437 = vadd.f32 %v4912, %v5309
    %v5438 = vadd.f32 %v4913, %v5310
    %v5439 = vadd.f32 %v4914, %v5311
    %v5440 = vadd.f32 %v4915, %v5312
    %v5441 = vadd.f32 %v4916, %v5313
    %v5442 = vadd.f32 %v4917, %v5314
    %v5443 = vadd.f32 %v4918, %v5315
    %v5444 = vadd.f32 %v4919, %v5316
    %v5445 = vadd.f32 %v4920, %v5317
    %v5446 = vadd.f32 %v4921, %v5318
    %v5447 = vadd.f32 %v4922, %v5319
    %v5448 = vadd.f32 %v4923, %v5320
    %v5449 = vadd.f32 %v4924, %v5321
    %v5450 = vadd.f32 %v4925, %v5322
    %v5451 = vadd.f32 %v4926, %v5323
    %v5452 = vadd.f32 %v4927, %v5324
    %v5453 = vadd.f32 %v4928, %v5325
    %v5454 = vadd.f32 %v4929, %v5326
    %v5455 = vadd.f32 %v4930, %v5327
    %v5456 = vadd.f32 %v4931, %v5328
    %v5457 = vadd.f32 %v4932, %v5329
    %v5458 = vadd.f32 %v4933, %v5330
    %v5459 = vadd.f32 %v4934, %v5331
    %v5460 = vadd.f32 %v4935, %v5332
    %v5461 = vadd.f32 %v4936, %v5333
    %v5462 = vadd.f32 %v4937, %v5334
    %v5463 = vadd.f32 %v4938, %v5335
    %v5464 = vadd.f32 %v4939, %v5336
    %v5465 = vadd.f32 %v4940, %v5337
    %v5466 = vadd.f32 %v4941, %v5338
    %v5467 = vadd.f32 %v4942, %v5339
    %v5468 = vadd.f32 %v4943, %v5340
    %v5469 = vadd.f32 %v4944, %v5341
    %v5470 = vadd.f32 %v4945, %v5342
    %v5471 = vadd.f32 %v4946, %v5343
    %v5472 = vadd.f32 %v4947, %v5344
    %v5473 = vadd.f32 %v4948, %v5345
    %v5474 = vadd.f32 %v4949, %v5346
    %v5475 = vadd.f32 %v4950, %v5347
    %v5476 = vadd.f32 %v4951, %v5348
    %v5477 = vadd.f32 %v4952, %v5349
    %v5478 = vadd.f32 %v4953, %v5350
    %v5479 = vadd.f32 %v4954, %v5351
    %v5480 = vadd.f32 %v4955, %v5352
    %v5481 = vadd.f32 %v4956, %v5353
    %v5482 = vadd.f32 %v4957, %v5354
    %v5483 = vadd.f32 %v4958, %v5355
    %v5484 = vadd.f32 %v4959, %v5356
    %v5485 = vadd.f32 %v4960, %v5357
    %v5486 = vadd.f32 %v4961, %v5358
    %v5487 = vadd.f32 %v4962, %v5359
    %v5488 = vadd.f32 %v4963, %v5360
    %v5489 = vadd.f32 %v4964, %v5361
    %v5490 = vadd.f32 %v4965, %v5362
    %v5491 = vadd.f32 %v4966, %v5363
    %v5492 = vadd.f32 %v4967, %v5364
    %v5493 = vadd.f32 %v4968, %v5365
    %v5494 = vadd.f32 %v4969, %v5366
    %v5495 = vadd.f32 %v4970, %v5367
    %v5496 = vadd.f32 %v4971, %v5368
    %v5497 = vadd.f32 %v4972, %v5369
    %v5498 = vadd.f32 %v4973, %v5370
    %v5499 = vadd.f32 %v4974, %v5371
    %v5500 = vadd.f32 %v4975, %v5372
    %v5501 = vadd.f32 %v4976, %v5373
    %v5502 = vadd.f32 %v4977, %v5374
    %v5503 = vadd.f32 %v4978, %v5375
    %v5504 = vadd.f32 %v4979, %v5376
    %v5505 = vadd.f32 %v4980, %v5377
    %v5506 = vadd.f32 %v4981, %v5378
    %v5507 = vadd.f32 %v4982, %v5379
    %v5508 = vadd.f32 %v4983, %v5380
    %v5509 = vadd.f32 %v4984, %v5381
    %v5510 = vadd.f32 %v4985, %v5382
    %v5511 = vadd.f32 %v4986, %v5383
    %v5512 = vadd.f32 %v4987, %v5384
    %v5513 = vadd.f32 %v4988, %v5385
    %v5514 = vadd.f32 %v4989, %v5386
    %v5515 = vadd.f32 %v4990, %v5387
    %v5516 = vadd.f32 %v4991, %v5388
    %v5517 = vadd.f32 %v4992, %v5389
    %v5518 = vadd.f32 %v4993, %v5390
    %v5519 = vadd.f32 %v4994, %v5391
    %v5520 = vadd.f32 %v4995, %v5392
    %v5521 = vadd.f32 %v4996, %v5393
    %v5522 = vadd.f32 %v4997, %v5394
    %v5523 = vadd.f32 %v4998, %v5395
    %v5524 = vadd.f32 %v4999, %v5396
    %v5525 = vadd.f32 %v5000, %v5397
    %v5526 = vadd.f32 %v5001, %v5398
    %v5527 = vadd.f32 %v5002, %v5399
    %v5528 = vadd.f32 %v5003, %v5400
    %v5529 = vadd.f32 %v5004, %v5401
    %v5530 = vadd.f32 %v5005, %v5402
    %v5531 = vadd.f32 %v5006, %v5403
    %v5532 = vadd.f32 %v5007, %v5404
    %v5533 = vadd.f32 %v5008, %v5405
    %v5534 = vadd.f32 %v5009, %v5406
    %v5535 = vadd.f32 %v5010, %v5407
    %v5536 = vadd.f32 %v5011, %v5408
    %v5537 = vadd.f32 %v5012, %v5409
    %v5538 = vadd.f32 %v5013, %v5410
    %v5539 = vadd.f32 %v5014, %v5411
    %v5540 = vadd.f32 %v5015, %v5412
    %v5541 = vld [vmem:[%s4] sm:$0x1]
    %v5543 = vlaneseq
    %v5544 = vshrl.u32 %v5543, 7
    %v5545 = vsub.s32 0, %v5544
    %v5546 = vrot.slane %v5541, %v5545
    %v5548 = vadd.f32 %v5413, %v5546
    %v5549 = vadd.f32 %v5414, %v5546
    %v5550 = vadd.f32 %v5415, %v5546
    %v5551 = vadd.f32 %v5416, %v5546
    %v5552 = vadd.f32 %v5417, %v5546
    %v5553 = vadd.f32 %v5418, %v5546
    %v5554 = vadd.f32 %v5419, %v5546
    %v5555 = vadd.f32 %v5420, %v5546
    %v5556 = vadd.f32 %v5421, %v5546
    %v5557 = vadd.f32 %v5422, %v5546
    %v5558 = vadd.f32 %v5423, %v5546
    %v5559 = vadd.f32 %v5424, %v5546
    %v5560 = vadd.f32 %v5425, %v5546
    %v5561 = vadd.f32 %v5426, %v5546
    %v5562 = vadd.f32 %v5427, %v5546
    %v5563 = vadd.f32 %v5428, %v5546
    %v5564 = vadd.f32 %v5429, %v5546
    %v5565 = vadd.f32 %v5430, %v5546
    %v5566 = vadd.f32 %v5431, %v5546
    %v5567 = vadd.f32 %v5432, %v5546
    %v5568 = vadd.f32 %v5433, %v5546
    %v5569 = vadd.f32 %v5434, %v5546
    %v5570 = vadd.f32 %v5435, %v5546
    %v5571 = vadd.f32 %v5436, %v5546
    %v5572 = vadd.f32 %v5437, %v5546
    %v5573 = vadd.f32 %v5438, %v5546
    %v5574 = vadd.f32 %v5439, %v5546
    %v5575 = vadd.f32 %v5440, %v5546
    %v5576 = vadd.f32 %v5441, %v5546
    %v5577 = vadd.f32 %v5442, %v5546
    %v5578 = vadd.f32 %v5443, %v5546
    %v5579 = vadd.f32 %v5444, %v5546
    %v5580 = vadd.f32 %v5445, %v5546
    %v5581 = vadd.f32 %v5446, %v5546
    %v5582 = vadd.f32 %v5447, %v5546
    %v5583 = vadd.f32 %v5448, %v5546
    %v5584 = vadd.f32 %v5449, %v5546
    %v5585 = vadd.f32 %v5450, %v5546
    %v5586 = vadd.f32 %v5451, %v5546
    %v5587 = vadd.f32 %v5452, %v5546
    %v5588 = vadd.f32 %v5453, %v5546
    %v5589 = vadd.f32 %v5454, %v5546
    %v5590 = vadd.f32 %v5455, %v5546
    %v5591 = vadd.f32 %v5456, %v5546
    %v5592 = vadd.f32 %v5457, %v5546
    %v5593 = vadd.f32 %v5458, %v5546
    %v5594 = vadd.f32 %v5459, %v5546
    %v5595 = vadd.f32 %v5460, %v5546
    %v5596 = vadd.f32 %v5461, %v5546
    %v5597 = vadd.f32 %v5462, %v5546
    %v5598 = vadd.f32 %v5463, %v5546
    %v5599 = vadd.f32 %v5464, %v5546
    %v5600 = vadd.f32 %v5465, %v5546
    %v5601 = vadd.f32 %v5466, %v5546
    %v5602 = vadd.f32 %v5467, %v5546
    %v5603 = vadd.f32 %v5468, %v5546
    %v5604 = vadd.f32 %v5469, %v5546
    %v5605 = vadd.f32 %v5470, %v5546
    %v5606 = vadd.f32 %v5471, %v5546
    %v5607 = vadd.f32 %v5472, %v5546
    %v5608 = vadd.f32 %v5473, %v5546
    %v5609 = vadd.f32 %v5474, %v5546
    %v5610 = vadd.f32 %v5475, %v5546
    %v5611 = vadd.f32 %v5476, %v5546
    %v5612 = vadd.f32 %v5477, %v5546
    %v5613 = vadd.f32 %v5478, %v5546
    %v5614 = vadd.f32 %v5479, %v5546
    %v5615 = vadd.f32 %v5480, %v5546
    %v5616 = vadd.f32 %v5481, %v5546
    %v5617 = vadd.f32 %v5482, %v5546
    %v5618 = vadd.f32 %v5483, %v5546
    %v5619 = vadd.f32 %v5484, %v5546
    %v5620 = vadd.f32 %v5485, %v5546
    %v5621 = vadd.f32 %v5486, %v5546
    %v5622 = vadd.f32 %v5487, %v5546
    %v5623 = vadd.f32 %v5488, %v5546
    %v5624 = vadd.f32 %v5489, %v5546
    %v5625 = vadd.f32 %v5490, %v5546
    %v5626 = vadd.f32 %v5491, %v5546
    %v5627 = vadd.f32 %v5492, %v5546
    %v5628 = vadd.f32 %v5493, %v5546
    %v5629 = vadd.f32 %v5494, %v5546
    %v5630 = vadd.f32 %v5495, %v5546
    %v5631 = vadd.f32 %v5496, %v5546
    %v5632 = vadd.f32 %v5497, %v5546
    %v5633 = vadd.f32 %v5498, %v5546
    %v5634 = vadd.f32 %v5499, %v5546
    %v5635 = vadd.f32 %v5500, %v5546
    %v5636 = vadd.f32 %v5501, %v5546
    %v5637 = vadd.f32 %v5502, %v5546
    %v5638 = vadd.f32 %v5503, %v5546
    %v5639 = vadd.f32 %v5504, %v5546
    %v5640 = vadd.f32 %v5505, %v5546
    %v5641 = vadd.f32 %v5506, %v5546
    %v5642 = vadd.f32 %v5507, %v5546
    %v5643 = vadd.f32 %v5508, %v5546
    %v5644 = vadd.f32 %v5509, %v5546
    %v5645 = vadd.f32 %v5510, %v5546
    %v5646 = vadd.f32 %v5511, %v5546
    %v5647 = vadd.f32 %v5512, %v5546
    %v5648 = vadd.f32 %v5513, %v5546
    %v5649 = vadd.f32 %v5514, %v5546
    %v5650 = vadd.f32 %v5515, %v5546
    %v5651 = vadd.f32 %v5516, %v5546
    %v5652 = vadd.f32 %v5517, %v5546
    %v5653 = vadd.f32 %v5518, %v5546
    %v5654 = vadd.f32 %v5519, %v5546
    %v5655 = vadd.f32 %v5520, %v5546
    %v5656 = vadd.f32 %v5521, %v5546
    %v5657 = vadd.f32 %v5522, %v5546
    %v5658 = vadd.f32 %v5523, %v5546
    %v5659 = vadd.f32 %v5524, %v5546
    %v5660 = vadd.f32 %v5525, %v5546
    %v5661 = vadd.f32 %v5526, %v5546
    %v5662 = vadd.f32 %v5527, %v5546
    %v5663 = vadd.f32 %v5528, %v5546
    %v5664 = vadd.f32 %v5529, %v5546
    %v5665 = vadd.f32 %v5530, %v5546
    %v5666 = vadd.f32 %v5531, %v5546
    %v5667 = vadd.f32 %v5532, %v5546
    %v5668 = vadd.f32 %v5533, %v5546
    %v5669 = vadd.f32 %v5534, %v5546
    %v5670 = vadd.f32 %v5535, %v5546
    %v5671 = vadd.f32 %v5536, %v5546
    %v5672 = vadd.f32 %v5537, %v5546
    %v5673 = vadd.f32 %v5538, %v5546
    %v5674 = vadd.f32 %v5539, %v5546
    %v5675 = vadd.f32 %v5540, %v5546
    %v5676 = vmax.f32 %v5548, 0.0
    %v5677 = vmax.f32 %v5549, 0.0
    %v5678 = vmax.f32 %v5550, 0.0
    %v5679 = vmax.f32 %v5551, 0.0
    %v5680 = vmax.f32 %v5552, 0.0
    %v5681 = vmax.f32 %v5553, 0.0
    %v5682 = vmax.f32 %v5554, 0.0
    %v5683 = vmax.f32 %v5555, 0.0
    %v5684 = vmax.f32 %v5556, 0.0
    %v5685 = vmax.f32 %v5557, 0.0
    %v5686 = vmax.f32 %v5558, 0.0
    %v5687 = vmax.f32 %v5559, 0.0
    %v5688 = vmax.f32 %v5560, 0.0
    %v5689 = vmax.f32 %v5561, 0.0
    %v5690 = vmax.f32 %v5562, 0.0
    %v5691 = vmax.f32 %v5563, 0.0
    %v5692 = vmax.f32 %v5564, 0.0
    %v5693 = vmax.f32 %v5565, 0.0
    %v5694 = vmax.f32 %v5566, 0.0
    %v5695 = vmax.f32 %v5567, 0.0
    %v5696 = vmax.f32 %v5568, 0.0
    %v5697 = vmax.f32 %v5569, 0.0
    %v5698 = vmax.f32 %v5570, 0.0
    %v5699 = vmax.f32 %v5571, 0.0
    %v5700 = vmax.f32 %v5572, 0.0
    %v5701 = vmax.f32 %v5573, 0.0
    %v5702 = vmax.f32 %v5574, 0.0
    %v5703 = vmax.f32 %v5575, 0.0
    %v5704 = vmax.f32 %v5576, 0.0
    %v5705 = vmax.f32 %v5577, 0.0
    %v5706 = vmax.f32 %v5578, 0.0
    %v5707 = vmax.f32 %v5579, 0.0
    %v5708 = vmax.f32 %v5580, 0.0
    %v5709 = vmax.f32 %v5581, 0.0
    %v5710 = vmax.f32 %v5582, 0.0
    %v5711 = vmax.f32 %v5583, 0.0
    %v5712 = vmax.f32 %v5584, 0.0
    %v5713 = vmax.f32 %v5585, 0.0
    %v5714 = vmax.f32 %v5586, 0.0
    %v5715 = vmax.f32 %v5587, 0.0
    %v5716 = vmax.f32 %v5588, 0.0
    %v5717 = vmax.f32 %v5589, 0.0
    %v5718 = vmax.f32 %v5590, 0.0
    %v5719 = vmax.f32 %v5591, 0.0
    %v5720 = vmax.f32 %v5592, 0.0
    %v5721 = vmax.f32 %v5593, 0.0
    %v5722 = vmax.f32 %v5594, 0.0
    %v5723 = vmax.f32 %v5595, 0.0
    %v5724 = vmax.f32 %v5596, 0.0
    %v5725 = vmax.f32 %v5597, 0.0
    %v5726 = vmax.f32 %v5598, 0.0
    %v5727 = vmax.f32 %v5599, 0.0
    %v5728 = vmax.f32 %v5600, 0.0
    %v5729 = vmax.f32 %v5601, 0.0
    %v5730 = vmax.f32 %v5602, 0.0
    %v5731 = vmax.f32 %v5603, 0.0
    %v5732 = vmax.f32 %v5604, 0.0
    %v5733 = vmax.f32 %v5605, 0.0
    %v5734 = vmax.f32 %v5606, 0.0
    %v5735 = vmax.f32 %v5607, 0.0
    %v5736 = vmax.f32 %v5608, 0.0
    %v5737 = vmax.f32 %v5609, 0.0
    %v5738 = vmax.f32 %v5610, 0.0
    %v5739 = vmax.f32 %v5611, 0.0
    %v5740 = vmax.f32 %v5612, 0.0
    %v5741 = vmax.f32 %v5613, 0.0
    %v5742 = vmax.f32 %v5614, 0.0
    %v5743 = vmax.f32 %v5615, 0.0
    %v5744 = vmax.f32 %v5616, 0.0
    %v5745 = vmax.f32 %v5617, 0.0
    %v5746 = vmax.f32 %v5618, 0.0
    %v5747 = vmax.f32 %v5619, 0.0
    %v5748 = vmax.f32 %v5620, 0.0
    %v5749 = vmax.f32 %v5621, 0.0
    %v5750 = vmax.f32 %v5622, 0.0
    %v5751 = vmax.f32 %v5623, 0.0
    %v5752 = vmax.f32 %v5624, 0.0
    %v5753 = vmax.f32 %v5625, 0.0
    %v5754 = vmax.f32 %v5626, 0.0
    %v5755 = vmax.f32 %v5627, 0.0
    %v5756 = vmax.f32 %v5628, 0.0
    %v5757 = vmax.f32 %v5629, 0.0
    %v5758 = vmax.f32 %v5630, 0.0
    %v5759 = vmax.f32 %v5631, 0.0
    %v5760 = vmax.f32 %v5632, 0.0
    %v5761 = vmax.f32 %v5633, 0.0
    %v5762 = vmax.f32 %v5634, 0.0
    %v5763 = vmax.f32 %v5635, 0.0
    %v5764 = vmax.f32 %v5636, 0.0
    %v5765 = vmax.f32 %v5637, 0.0
    %v5766 = vmax.f32 %v5638, 0.0
    %v5767 = vmax.f32 %v5639, 0.0
    %v5768 = vmax.f32 %v5640, 0.0
    %v5769 = vmax.f32 %v5641, 0.0
    %v5770 = vmax.f32 %v5642, 0.0
    %v5771 = vmax.f32 %v5643, 0.0
    %v5772 = vmax.f32 %v5644, 0.0
    %v5773 = vmax.f32 %v5645, 0.0
    %v5774 = vmax.f32 %v5646, 0.0
    %v5775 = vmax.f32 %v5647, 0.0
    %v5776 = vmax.f32 %v5648, 0.0
    %v5777 = vmax.f32 %v5649, 0.0
    %v5778 = vmax.f32 %v5650, 0.0
    %v5779 = vmax.f32 %v5651, 0.0
    %v5780 = vmax.f32 %v5652, 0.0
    %v5781 = vmax.f32 %v5653, 0.0
    %v5782 = vmax.f32 %v5654, 0.0
    %v5783 = vmax.f32 %v5655, 0.0
    %v5784 = vmax.f32 %v5656, 0.0
    %v5785 = vmax.f32 %v5657, 0.0
    %v5786 = vmax.f32 %v5658, 0.0
    %v5787 = vmax.f32 %v5659, 0.0
    %v5788 = vmax.f32 %v5660, 0.0
    %v5789 = vmax.f32 %v5661, 0.0
    %v5790 = vmax.f32 %v5662, 0.0
    %v5791 = vmax.f32 %v5663, 0.0
    %v5792 = vmax.f32 %v5664, 0.0
    %v5793 = vmax.f32 %v5665, 0.0
    %v5794 = vmax.f32 %v5666, 0.0
    %v5795 = vmax.f32 %v5667, 0.0
    %v5796 = vmax.f32 %v5668, 0.0
    %v5797 = vmax.f32 %v5669, 0.0
    %v5798 = vmax.f32 %v5670, 0.0
    %v5799 = vmax.f32 %v5671, 0.0
    %v5800 = vmax.f32 %v5672, 0.0
    %v5801 = vmax.f32 %v5673, 0.0
    %v5802 = vmax.f32 %v5674, 0.0
    %v5803 = vmax.f32 %v5675, 0.0
    %v5804 = vpack.c.bf16 %v5677, %v5676
    %v5805 = vpack.c.bf16 %v5679, %v5678
    %v5806 = vpack.c.bf16 %v5681, %v5680
    %v5807 = vpack.c.bf16 %v5683, %v5682
    %v5808 = vpack.c.bf16 %v5685, %v5684
    %v5809 = vpack.c.bf16 %v5687, %v5686
    %v5810 = vpack.c.bf16 %v5689, %v5688
    %v5811 = vpack.c.bf16 %v5691, %v5690
    %v5812 = vpack.c.bf16 %v5693, %v5692
    %v5813 = vpack.c.bf16 %v5695, %v5694
    %v5814 = vpack.c.bf16 %v5697, %v5696
    %v5815 = vpack.c.bf16 %v5699, %v5698
    %v5816 = vpack.c.bf16 %v5701, %v5700
    %v5817 = vpack.c.bf16 %v5703, %v5702
    %v5818 = vpack.c.bf16 %v5705, %v5704
    %v5819 = vpack.c.bf16 %v5707, %v5706
    %v5820 = vpack.c.bf16 %v5709, %v5708
    %v5821 = vpack.c.bf16 %v5711, %v5710
    %v5822 = vpack.c.bf16 %v5713, %v5712
    %v5823 = vpack.c.bf16 %v5715, %v5714
    %v5824 = vpack.c.bf16 %v5717, %v5716
    %v5825 = vpack.c.bf16 %v5719, %v5718
    %v5826 = vpack.c.bf16 %v5721, %v5720
    %v5827 = vpack.c.bf16 %v5723, %v5722
    %v5828 = vpack.c.bf16 %v5725, %v5724
    %v5829 = vpack.c.bf16 %v5727, %v5726
    %v5830 = vpack.c.bf16 %v5729, %v5728
    %v5831 = vpack.c.bf16 %v5731, %v5730
    %v5832 = vpack.c.bf16 %v5733, %v5732
    %v5833 = vpack.c.bf16 %v5735, %v5734
    %v5834 = vpack.c.bf16 %v5737, %v5736
    %v5835 = vpack.c.bf16 %v5739, %v5738
    %v5836 = vpack.c.bf16 %v5741, %v5740
    %v5837 = vpack.c.bf16 %v5743, %v5742
    %v5838 = vpack.c.bf16 %v5745, %v5744
    %v5839 = vpack.c.bf16 %v5747, %v5746
    %v5840 = vpack.c.bf16 %v5749, %v5748
    %v5841 = vpack.c.bf16 %v5751, %v5750
    %v5842 = vpack.c.bf16 %v5753, %v5752
    %v5843 = vpack.c.bf16 %v5755, %v5754
    %v5844 = vpack.c.bf16 %v5757, %v5756
    %v5845 = vpack.c.bf16 %v5759, %v5758
    %v5846 = vpack.c.bf16 %v5761, %v5760
    %v5847 = vpack.c.bf16 %v5763, %v5762
    %v5848 = vpack.c.bf16 %v5765, %v5764
    %v5849 = vpack.c.bf16 %v5767, %v5766
    %v5850 = vpack.c.bf16 %v5769, %v5768
    %v5851 = vpack.c.bf16 %v5771, %v5770
    %v5852 = vpack.c.bf16 %v5773, %v5772
    %v5853 = vpack.c.bf16 %v5775, %v5774
    %v5854 = vpack.c.bf16 %v5777, %v5776
    %v5855 = vpack.c.bf16 %v5779, %v5778
    %v5856 = vpack.c.bf16 %v5781, %v5780
    %v5857 = vpack.c.bf16 %v5783, %v5782
    %v5858 = vpack.c.bf16 %v5785, %v5784
    %v5859 = vpack.c.bf16 %v5787, %v5786
    %v5860 = vpack.c.bf16 %v5789, %v5788
    %v5861 = vpack.c.bf16 %v5791, %v5790
    %v5862 = vpack.c.bf16 %v5793, %v5792
    %v5863 = vpack.c.bf16 %v5795, %v5794
    %v5864 = vpack.c.bf16 %v5797, %v5796
    %v5865 = vpack.c.bf16 %v5799, %v5798
    %v5866 = vpack.c.bf16 %v5801, %v5800
    %v5867 = vpack.c.bf16 %v5803, %v5802
    %v5932 = vunpack.c.l.b16 %v5804
    %v5933 = vunpack.c.h.b16 %v5804
    %v5934 = vunpack.c.l.b16 %v5805
    %v5935 = vunpack.c.h.b16 %v5805
    %v5936 = vunpack.c.l.b16 %v5806
    %v5937 = vunpack.c.h.b16 %v5806
    %v5938 = vunpack.c.l.b16 %v5807
    %v5939 = vunpack.c.h.b16 %v5807
    %v5940 = vunpack.c.l.b16 %v5808
    %v5941 = vunpack.c.h.b16 %v5808
    %v5942 = vunpack.c.l.b16 %v5809
    %v5943 = vunpack.c.h.b16 %v5809
    %v5944 = vunpack.c.l.b16 %v5810
    %v5945 = vunpack.c.h.b16 %v5810
    %v5946 = vunpack.c.l.b16 %v5811
    %v5947 = vunpack.c.h.b16 %v5811
    %v5948 = vunpack.c.l.b16 %v5812
    %v5949 = vunpack.c.h.b16 %v5812
    %v5950 = vunpack.c.l.b16 %v5813
    %v5951 = vunpack.c.h.b16 %v5813
    %v5952 = vunpack.c.l.b16 %v5814
    %v5953 = vunpack.c.h.b16 %v5814
    %v5954 = vunpack.c.l.b16 %v5815
    %v5955 = vunpack.c.h.b16 %v5815
    %v5956 = vunpack.c.l.b16 %v5816
    %v5957 = vunpack.c.h.b16 %v5816
    %v5958 = vunpack.c.l.b16 %v5817
    %v5959 = vunpack.c.h.b16 %v5817
    %v5960 = vunpack.c.l.b16 %v5818
    %v5961 = vunpack.c.h.b16 %v5818
    %v5962 = vunpack.c.l.b16 %v5819
    %v5963 = vunpack.c.h.b16 %v5819
    %v5964 = vunpack.c.l.b16 %v5820
    %v5965 = vunpack.c.h.b16 %v5820
    %v5966 = vunpack.c.l.b16 %v5821
    %v5967 = vunpack.c.h.b16 %v5821
    %v5968 = vunpack.c.l.b16 %v5822
    %v5969 = vunpack.c.h.b16 %v5822
    %v5970 = vunpack.c.l.b16 %v5823
    %v5971 = vunpack.c.h.b16 %v5823
    %v5972 = vunpack.c.l.b16 %v5824
    %v5973 = vunpack.c.h.b16 %v5824
    %v5974 = vunpack.c.l.b16 %v5825
    %v5975 = vunpack.c.h.b16 %v5825
    %v5976 = vunpack.c.l.b16 %v5826
    %v5977 = vunpack.c.h.b16 %v5826
    %v5978 = vunpack.c.l.b16 %v5827
    %v5979 = vunpack.c.h.b16 %v5827
    %v5980 = vunpack.c.l.b16 %v5828
    %v5981 = vunpack.c.h.b16 %v5828
    %v5982 = vunpack.c.l.b16 %v5829
    %v5983 = vunpack.c.h.b16 %v5829
    %v5984 = vunpack.c.l.b16 %v5830
    %v5985 = vunpack.c.h.b16 %v5830
    %v5986 = vunpack.c.l.b16 %v5831
    %v5987 = vunpack.c.h.b16 %v5831
    %v5988 = vunpack.c.l.b16 %v5832
    %v5989 = vunpack.c.h.b16 %v5832
    %v5990 = vunpack.c.l.b16 %v5833
    %v5991 = vunpack.c.h.b16 %v5833
    %v5992 = vunpack.c.l.b16 %v5834
    %v5993 = vunpack.c.h.b16 %v5834
    %v5994 = vunpack.c.l.b16 %v5835
    %v5995 = vunpack.c.h.b16 %v5835
    %v5996 = vunpack.c.l.b16 %v5836
    %v5997 = vunpack.c.h.b16 %v5836
    %v5998 = vunpack.c.l.b16 %v5837
    %v5999 = vunpack.c.h.b16 %v5837
    %v6000 = vunpack.c.l.b16 %v5838
    %v6001 = vunpack.c.h.b16 %v5838
    %v6002 = vunpack.c.l.b16 %v5839
    %v6003 = vunpack.c.h.b16 %v5839
    %v6004 = vunpack.c.l.b16 %v5840
    %v6005 = vunpack.c.h.b16 %v5840
    %v6006 = vunpack.c.l.b16 %v5841
    %v6007 = vunpack.c.h.b16 %v5841
    %v6008 = vunpack.c.l.b16 %v5842
    %v6009 = vunpack.c.h.b16 %v5842
    %v6010 = vunpack.c.l.b16 %v5843
    %v6011 = vunpack.c.h.b16 %v5843
    %v6012 = vunpack.c.l.b16 %v5844
    %v6013 = vunpack.c.h.b16 %v5844
    %v6014 = vunpack.c.l.b16 %v5845
    %v6015 = vunpack.c.h.b16 %v5845
    %v6016 = vunpack.c.l.b16 %v5846
    %v6017 = vunpack.c.h.b16 %v5846
    %v6018 = vunpack.c.l.b16 %v5847
    %v6019 = vunpack.c.h.b16 %v5847
    %v6020 = vunpack.c.l.b16 %v5848
    %v6021 = vunpack.c.h.b16 %v5848
    %v6022 = vunpack.c.l.b16 %v5849
    %v6023 = vunpack.c.h.b16 %v5849
    %v6024 = vunpack.c.l.b16 %v5850
    %v6025 = vunpack.c.h.b16 %v5850
    %v6026 = vunpack.c.l.b16 %v5851
    %v6027 = vunpack.c.h.b16 %v5851
    %v6028 = vunpack.c.l.b16 %v5852
    %v6029 = vunpack.c.h.b16 %v5852
    %v6030 = vunpack.c.l.b16 %v5853
    %v6031 = vunpack.c.h.b16 %v5853
    %v6032 = vunpack.c.l.b16 %v5854
    %v6033 = vunpack.c.h.b16 %v5854
    %v6034 = vunpack.c.l.b16 %v5855
    %v6035 = vunpack.c.h.b16 %v5855
    %v6036 = vunpack.c.l.b16 %v5856
    %v6037 = vunpack.c.h.b16 %v5856
    %v6038 = vunpack.c.l.b16 %v5857
    %v6039 = vunpack.c.h.b16 %v5857
    %v6040 = vunpack.c.l.b16 %v5858
    %v6041 = vunpack.c.h.b16 %v5858
    %v6042 = vunpack.c.l.b16 %v5859
    %v6043 = vunpack.c.h.b16 %v5859
    %v6044 = vunpack.c.l.b16 %v5860
    %v6045 = vunpack.c.h.b16 %v5860
    %v6046 = vunpack.c.l.b16 %v5861
    %v6047 = vunpack.c.h.b16 %v5861
    %v6048 = vunpack.c.l.b16 %v5862
    %v6049 = vunpack.c.h.b16 %v5862
    %v6050 = vunpack.c.l.b16 %v5863
    %v6051 = vunpack.c.h.b16 %v5863
    %v6052 = vunpack.c.l.b16 %v5864
    %v6053 = vunpack.c.h.b16 %v5864
    %v6054 = vunpack.c.l.b16 %v5865
    %v6055 = vunpack.c.h.b16 %v5865
    %v6056 = vunpack.c.l.b16 %v5866
    %v6057 = vunpack.c.h.b16 %v5866
    %v6058 = vunpack.c.l.b16 %v5867
    %v6059 = vunpack.c.h.b16 %v5867
    %v6060 = vpack.c.b16 %v5932, %v5932
    %v6061 = vpack.c.b16 %v5933, %v5933
    %v6062 = vpack.c.b16 %v5934, %v5934
    %v6063 = vpack.c.b16 %v5935, %v5935
    %v6064 = vpack.c.b16 %v5936, %v5936
    %v6065 = vpack.c.b16 %v5937, %v5937
    %v6066 = vpack.c.b16 %v5938, %v5938
    %v6067 = vpack.c.b16 %v5939, %v5939
    %v6068 = vpack.c.b16 %v5940, %v5940
    %v6069 = vpack.c.b16 %v5941, %v5941
    %v6070 = vpack.c.b16 %v5942, %v5942
    %v6071 = vpack.c.b16 %v5943, %v5943
    %v6072 = vpack.c.b16 %v5944, %v5944
    %v6073 = vpack.c.b16 %v5945, %v5945
    %v6074 = vpack.c.b16 %v5946, %v5946
    %v6075 = vpack.c.b16 %v5947, %v5947
    %v6076 = vpack.c.b16 %v5948, %v5948
    %v6077 = vpack.c.b16 %v5949, %v5949
    %v6078 = vpack.c.b16 %v5950, %v5950
    %v6079 = vpack.c.b16 %v5951, %v5951
    %v6080 = vpack.c.b16 %v5952, %v5952
    %v6081 = vpack.c.b16 %v5953, %v5953
    %v6082 = vpack.c.b16 %v5954, %v5954
    %v6083 = vpack.c.b16 %v5955, %v5955
    %v6084 = vpack.c.b16 %v5956, %v5956
    %v6085 = vpack.c.b16 %v5957, %v5957
    %v6086 = vpack.c.b16 %v5958, %v5958
    %v6087 = vpack.c.b16 %v5959, %v5959
    %v6088 = vpack.c.b16 %v5960, %v5960
    %v6089 = vpack.c.b16 %v5961, %v5961
    %v6090 = vpack.c.b16 %v5962, %v5962
    %v6091 = vpack.c.b16 %v5963, %v5963
    %v6092 = vpack.c.b16 %v5964, %v5964
    %v6093 = vpack.c.b16 %v5965, %v5965
    %v6094 = vpack.c.b16 %v5966, %v5966
    %v6095 = vpack.c.b16 %v5967, %v5967
    %v6096 = vpack.c.b16 %v5968, %v5968
    %v6097 = vpack.c.b16 %v5969, %v5969
    %v6098 = vpack.c.b16 %v5970, %v5970
    %v6099 = vpack.c.b16 %v5971, %v5971
    %v6100 = vpack.c.b16 %v5972, %v5972
    %v6101 = vpack.c.b16 %v5973, %v5973
    %v6102 = vpack.c.b16 %v5974, %v5974
    %v6103 = vpack.c.b16 %v5975, %v5975
    %v6104 = vpack.c.b16 %v5976, %v5976
    %v6105 = vpack.c.b16 %v5977, %v5977
    %v6106 = vpack.c.b16 %v5978, %v5978
    %v6107 = vpack.c.b16 %v5979, %v5979
    %v6108 = vpack.c.b16 %v5980, %v5980
    %v6109 = vpack.c.b16 %v5981, %v5981
    %v6110 = vpack.c.b16 %v5982, %v5982
    %v6111 = vpack.c.b16 %v5983, %v5983
    %v6112 = vpack.c.b16 %v5984, %v5984
    %v6113 = vpack.c.b16 %v5985, %v5985
    %v6114 = vpack.c.b16 %v5986, %v5986
    %v6115 = vpack.c.b16 %v5987, %v5987
    %v6116 = vpack.c.b16 %v5988, %v5988
    %v6117 = vpack.c.b16 %v5989, %v5989
    %v6118 = vpack.c.b16 %v5990, %v5990
    %v6119 = vpack.c.b16 %v5991, %v5991
    %v6120 = vpack.c.b16 %v5992, %v5992
    %v6121 = vpack.c.b16 %v5993, %v5993
    %v6122 = vpack.c.b16 %v5994, %v5994
    %v6123 = vpack.c.b16 %v5995, %v5995
    %v6124 = vpack.c.b16 %v5996, %v5996
    %v6125 = vpack.c.b16 %v5997, %v5997
    %v6126 = vpack.c.b16 %v5998, %v5998
    %v6127 = vpack.c.b16 %v5999, %v5999
    %v6128 = vpack.c.b16 %v6000, %v6000
    %v6129 = vpack.c.b16 %v6001, %v6001
    %v6130 = vpack.c.b16 %v6002, %v6002
    %v6131 = vpack.c.b16 %v6003, %v6003
    %v6132 = vpack.c.b16 %v6004, %v6004
    %v6133 = vpack.c.b16 %v6005, %v6005
    %v6134 = vpack.c.b16 %v6006, %v6006
    %v6135 = vpack.c.b16 %v6007, %v6007
    %v6136 = vpack.c.b16 %v6008, %v6008
    %v6137 = vpack.c.b16 %v6009, %v6009
    %v6138 = vpack.c.b16 %v6010, %v6010
    %v6139 = vpack.c.b16 %v6011, %v6011
    %v6140 = vpack.c.b16 %v6012, %v6012
    %v6141 = vpack.c.b16 %v6013, %v6013
    %v6142 = vpack.c.b16 %v6014, %v6014
    %v6143 = vpack.c.b16 %v6015, %v6015
    %v6144 = vpack.c.b16 %v6016, %v6016
    %v6145 = vpack.c.b16 %v6017, %v6017
    %v6146 = vpack.c.b16 %v6018, %v6018
    %v6147 = vpack.c.b16 %v6019, %v6019
    %v6148 = vpack.c.b16 %v6020, %v6020
    %v6149 = vpack.c.b16 %v6021, %v6021
    %v6150 = vpack.c.b16 %v6022, %v6022
    %v6151 = vpack.c.b16 %v6023, %v6023
    %v6152 = vpack.c.b16 %v6024, %v6024
    %v6153 = vpack.c.b16 %v6025, %v6025
    %v6154 = vpack.c.b16 %v6026, %v6026
    %v6155 = vpack.c.b16 %v6027, %v6027
    %v6156 = vpack.c.b16 %v6028, %v6028
    %v6157 = vpack.c.b16 %v6029, %v6029
    %v6158 = vpack.c.b16 %v6030, %v6030
    %v6159 = vpack.c.b16 %v6031, %v6031
    %v6160 = vpack.c.b16 %v6032, %v6032
    %v6161 = vpack.c.b16 %v6033, %v6033
    %v6162 = vpack.c.b16 %v6034, %v6034
    %v6163 = vpack.c.b16 %v6035, %v6035
    %v6164 = vpack.c.b16 %v6036, %v6036
    %v6165 = vpack.c.b16 %v6037, %v6037
    %v6166 = vpack.c.b16 %v6038, %v6038
    %v6167 = vpack.c.b16 %v6039, %v6039
    %v6168 = vpack.c.b16 %v6040, %v6040
    %v6169 = vpack.c.b16 %v6041, %v6041
    %v6170 = vpack.c.b16 %v6042, %v6042
    %v6171 = vpack.c.b16 %v6043, %v6043
    %v6172 = vpack.c.b16 %v6044, %v6044
    %v6173 = vpack.c.b16 %v6045, %v6045
    %v6174 = vpack.c.b16 %v6046, %v6046
    %v6175 = vpack.c.b16 %v6047, %v6047
    %v6176 = vpack.c.b16 %v6048, %v6048
    %v6177 = vpack.c.b16 %v6049, %v6049
    %v6178 = vpack.c.b16 %v6050, %v6050
    %v6179 = vpack.c.b16 %v6051, %v6051
    %v6180 = vpack.c.b16 %v6052, %v6052
    %v6181 = vpack.c.b16 %v6053, %v6053
    %v6182 = vpack.c.b16 %v6054, %v6054
    %v6183 = vpack.c.b16 %v6055, %v6055
    %v6184 = vpack.c.b16 %v6056, %v6056
    %v6185 = vpack.c.b16 %v6057, %v6057
    %v6186 = vpack.c.b16 %v6058, %v6058
    %v6187 = vpack.c.b16 %v6059, %v6059
    %6316 = vst [vmem:[#allocation10] sm:$0xf] %v6060
    %6317 = vst [vmem:[#allocation10 + $0x4] sm:$0xf] %v6061
    %6318 = vst [vmem:[#allocation10 + $0x8] sm:$0xf] %v6062
    %6319 = vst [vmem:[#allocation10 + $0xc] sm:$0xf] %v6063
    %6320 = vst [vmem:[#allocation10 + $0x10] sm:$0xf] %v6064
    %6321 = vst [vmem:[#allocation10 + $0x14] sm:$0xf] %v6065
    %6322 = vst [vmem:[#allocation10 + $0x18] sm:$0xf] %v6066
    %6323 = vst [vmem:[#allocation10 + $0x1c] sm:$0xf] %v6067
    %6324 = vst [vmem:[#allocation10 + $0x20] sm:$0xf] %v6068
    %6325 = vst [vmem:[#allocation10 + $0x24] sm:$0xf] %v6069
    %6326 = vst [vmem:[#allocation10 + $0x28] sm:$0xf] %v6070
    %6327 = vst [vmem:[#allocation10 + $0x2c] sm:$0xf] %v6071
    %6328 = vst [vmem:[#allocation10 + $0x30] sm:$0xf] %v6072
    %6329 = vst [vmem:[#allocation10 + $0x34] sm:$0xf] %v6073
    %6330 = vst [vmem:[#allocation10 + $0x38] sm:$0xf] %v6074
    %6331 = vst [vmem:[#allocation10 + $0x3c] sm:$0xf] %v6075
    %6332 = vst [vmem:[#allocation10 + $0x40] sm:$0xf] %v6076
    %6333 = vst [vmem:[#allocation10 + $0x44] sm:$0xf] %v6077
    %6334 = vst [vmem:[#allocation10 + $0x48] sm:$0xf] %v6078
    %6335 = vst [vmem:[#allocation10 + $0x4c] sm:$0xf] %v6079
    %6336 = vst [vmem:[#allocation10 + $0x50] sm:$0xf] %v6080
    %6337 = vst [vmem:[#allocation10 + $0x54] sm:$0xf] %v6081
    %6338 = vst [vmem:[#allocation10 + $0x58] sm:$0xf] %v6082
    %6339 = vst [vmem:[#allocation10 + $0x5c] sm:$0xf] %v6083
    %6340 = vst [vmem:[#allocation10 + $0x60] sm:$0xf] %v6084
    %6341 = vst [vmem:[#allocation10 + $0x64] sm:$0xf] %v6085
    %6342 = vst [vmem:[#allocation10 + $0x68] sm:$0xf] %v6086
    %6343 = vst [vmem:[#allocation10 + $0x6c] sm:$0xf] %v6087
    %6344 = vst [vmem:[#allocation10 + $0x70] sm:$0xf] %v6088
    %6345 = vst [vmem:[#allocation10 + $0x74] sm:$0xf] %v6089
    %6346 = vst [vmem:[#allocation10 + $0x78] sm:$0xf] %v6090
    %6347 = vst [vmem:[#allocation10 + $0x7c] sm:$0xf] %v6091
    %6348 = vst [vmem:[#allocation10 + $0x80] sm:$0xf] %v6092
    %6349 = vst [vmem:[#allocation10 + $0x84] sm:$0xf] %v6093
    %6350 = vst [vmem:[#allocation10 + $0x88] sm:$0xf] %v6094
    %6351 = vst [vmem:[#allocation10 + $0x8c] sm:$0xf] %v6095
    %6352 = vst [vmem:[#allocation10 + $0x90] sm:$0xf] %v6096
    %6353 = vst [vmem:[#allocation10 + $0x94] sm:$0xf] %v6097
    %6354 = vst [vmem:[#allocation10 + $0x98] sm:$0xf] %v6098
    %6355 = vst [vmem:[#allocation10 + $0x9c] sm:$0xf] %v6099
    %6356 = vst [vmem:[#allocation10 + $0xa0] sm:$0xf] %v6100
    %6357 = vst [vmem:[#allocation10 + $0xa4] sm:$0xf] %v6101
    %6358 = vst [vmem:[#allocation10 + $0xa8] sm:$0xf] %v6102
    %6359 = vst [vmem:[#allocation10 + $0xac] sm:$0xf] %v6103
    %6360 = vst [vmem:[#allocation10 + $0xb0] sm:$0xf] %v6104
    %6361 = vst [vmem:[#allocation10 + $0xb4] sm:$0xf] %v6105
    %6362 = vst [vmem:[#allocation10 + $0xb8] sm:$0xf] %v6106
    %6363 = vst [vmem:[#allocation10 + $0xbc] sm:$0xf] %v6107
    %6364 = vst [vmem:[#allocation10 + $0xc0] sm:$0xf] %v6108
    %6365 = vst [vmem:[#allocation10 + $0xc4] sm:$0xf] %v6109
    %6366 = vst [vmem:[#allocation10 + $0xc8] sm:$0xf] %v6110
    %6367 = vst [vmem:[#allocation10 + $0xcc] sm:$0xf] %v6111
    %6368 = vst [vmem:[#allocation10 + $0xd0] sm:$0xf] %v6112
    %6369 = vst [vmem:[#allocation10 + $0xd4] sm:$0xf] %v6113
    %6370 = vst [vmem:[#allocation10 + $0xd8] sm:$0xf] %v6114
    %6371 = vst [vmem:[#allocation10 + $0xdc] sm:$0xf] %v6115
    %6372 = vst [vmem:[#allocation10 + $0xe0] sm:$0xf] %v6116
    %6373 = vst [vmem:[#allocation10 + $0xe4] sm:$0xf] %v6117
    %6374 = vst [vmem:[#allocation10 + $0xe8] sm:$0xf] %v6118
    %6375 = vst [vmem:[#allocation10 + $0xec] sm:$0xf] %v6119
    %6376 = vst [vmem:[#allocation10 + $0xf0] sm:$0xf] %v6120
    %6377 = vst [vmem:[#allocation10 + $0xf4] sm:$0xf] %v6121
    %6378 = vst [vmem:[#allocation10 + $0xf8] sm:$0xf] %v6122
    %6379 = vst [vmem:[#allocation10 + $0xfc] sm:$0xf] %v6123
    %6380 = vst [vmem:[#allocation10 + $0x100] sm:$0xf] %v6124
    %6381 = vst [vmem:[#allocation10 + $0x104] sm:$0xf] %v6125
    %6382 = vst [vmem:[#allocation10 + $0x108] sm:$0xf] %v6126
    %6383 = vst [vmem:[#allocation10 + $0x10c] sm:$0xf] %v6127
    %6384 = vst [vmem:[#allocation10 + $0x110] sm:$0xf] %v6128
    %6385 = vst [vmem:[#allocation10 + $0x114] sm:$0xf] %v6129
    %6386 = vst [vmem:[#allocation10 + $0x118] sm:$0xf] %v6130
    %6387 = vst [vmem:[#allocation10 + $0x11c] sm:$0xf] %v6131
    %6388 = vst [vmem:[#allocation10 + $0x120] sm:$0xf] %v6132
    %6389 = vst [vmem:[#allocation10 + $0x124] sm:$0xf] %v6133
    %6390 = vst [vmem:[#allocation10 + $0x128] sm:$0xf] %v6134
    %6391 = vst [vmem:[#allocation10 + $0x12c] sm:$0xf] %v6135
    %6392 = vst [vmem:[#allocation10 + $0x130] sm:$0xf] %v6136
    %6393 = vst [vmem:[#allocation10 + $0x134] sm:$0xf] %v6137
    %6394 = vst [vmem:[#allocation10 + $0x138] sm:$0xf] %v6138
    %6395 = vst [vmem:[#allocation10 + $0x13c] sm:$0xf] %v6139
    %6396 = vst [vmem:[#allocation10 + $0x140] sm:$0xf] %v6140
    %6397 = vst [vmem:[#allocation10 + $0x144] sm:$0xf] %v6141
    %6398 = vst [vmem:[#allocation10 + $0x148] sm:$0xf] %v6142
    %6399 = vst [vmem:[#allocation10 + $0x14c] sm:$0xf] %v6143
    %6400 = vst [vmem:[#allocation10 + $0x150] sm:$0xf] %v6144
    %6401 = vst [vmem:[#allocation10 + $0x154] sm:$0xf] %v6145
    %6402 = vst [vmem:[#allocation10 + $0x158] sm:$0xf] %v6146
    %6403 = vst [vmem:[#allocation10 + $0x15c] sm:$0xf] %v6147
    %6404 = vst [vmem:[#allocation10 + $0x160] sm:$0xf] %v6148
    %6405 = vst [vmem:[#allocation10 + $0x164] sm:$0xf] %v6149
    %6406 = vst [vmem:[#allocation10 + $0x168] sm:$0xf] %v6150
    %6407 = vst [vmem:[#allocation10 + $0x16c] sm:$0xf] %v6151
    %6408 = vst [vmem:[#allocation10 + $0x170] sm:$0xf] %v6152
    %6409 = vst [vmem:[#allocation10 + $0x174] sm:$0xf] %v6153
    %6410 = vst [vmem:[#allocation10 + $0x178] sm:$0xf] %v6154
    %6411 = vst [vmem:[#allocation10 + $0x17c] sm:$0xf] %v6155
    %6412 = vst [vmem:[#allocation10 + $0x180] sm:$0xf] %v6156
    %6413 = vst [vmem:[#allocation10 + $0x184] sm:$0xf] %v6157
    %6414 = vst [vmem:[#allocation10 + $0x188] sm:$0xf] %v6158
    %6415 = vst [vmem:[#allocation10 + $0x18c] sm:$0xf] %v6159
    %6416 = vst [vmem:[#allocation10 + $0x190] sm:$0xf] %v6160
    %6417 = vst [vmem:[#allocation10 + $0x194] sm:$0xf] %v6161
    %6418 = vst [vmem:[#allocation10 + $0x198] sm:$0xf] %v6162
    %6419 = vst [vmem:[#allocation10 + $0x19c] sm:$0xf] %v6163
    %6420 = vst [vmem:[#allocation10 + $0x1a0] sm:$0xf] %v6164
    %6421 = vst [vmem:[#allocation10 + $0x1a4] sm:$0xf] %v6165
    %6422 = vst [vmem:[#allocation10 + $0x1a8] sm:$0xf] %v6166
    %6423 = vst [vmem:[#allocation10 + $0x1ac] sm:$0xf] %v6167
    %6424 = vst [vmem:[#allocation10 + $0x1b0] sm:$0xf] %v6168
    %6425 = vst [vmem:[#allocation10 + $0x1b4] sm:$0xf] %v6169
    %6426 = vst [vmem:[#allocation10 + $0x1b8] sm:$0xf] %v6170
    %6427 = vst [vmem:[#allocation10 + $0x1bc] sm:$0xf] %v6171
    %6428 = vst [vmem:[#allocation10 + $0x1c0] sm:$0xf] %v6172
    %6429 = vst [vmem:[#allocation10 + $0x1c4] sm:$0xf] %v6173
    %6430 = vst [vmem:[#allocation10 + $0x1c8] sm:$0xf] %v6174
    %6431 = vst [vmem:[#allocation10 + $0x1cc] sm:$0xf] %v6175
    %6432 = vst [vmem:[#allocation10 + $0x1d0] sm:$0xf] %v6176
    %6433 = vst [vmem:[#allocation10 + $0x1d4] sm:$0xf] %v6177
    %6434 = vst [vmem:[#allocation10 + $0x1d8] sm:$0xf] %v6178
    %6435 = vst [vmem:[#allocation10 + $0x1dc] sm:$0xf] %v6179
    %6436 = vst [vmem:[#allocation10 + $0x1e0] sm:$0xf] %v6180
    %6437 = vst [vmem:[#allocation10 + $0x1e4] sm:$0xf] %v6181
    %6438 = vst [vmem:[#allocation10 + $0x1e8] sm:$0xf] %v6182
    %6439 = vst [vmem:[#allocation10 + $0x1ec] sm:$0xf] %v6183
    %6440 = vst [vmem:[#allocation10 + $0x1f0] sm:$0xf] %v6184
    %6441 = vst [vmem:[#allocation10 + $0x1f4] sm:$0xf] %v6185
    %6442 = vst [vmem:[#allocation10 + $0x1f8] sm:$0xf] %v6186
    %6443 = vst [vmem:[#allocation10 + $0x1fc] sm:$0xf] %v6187
    %v6444 = vmax.f32 %v5676, %v5680
    %v6445 = vmax.f32 %v5677, %v5681
    %v6446 = vmax.f32 %v5678, %v5682
    %v6447 = vmax.f32 %v5679, %v5683
    %v6448 = vmax.f32 %v5684, %v5688
    %v6449 = vmax.f32 %v5685, %v5689
    %v6450 = vmax.f32 %v5686, %v5690
    %v6451 = vmax.f32 %v5687, %v5691
    %v6452 = vmax.f32 %v5692, %v5696
    %v6453 = vmax.f32 %v5693, %v5697
    %v6454 = vmax.f32 %v5694, %v5698
    %v6455 = vmax.f32 %v5695, %v5699
    %v6456 = vmax.f32 %v5700, %v5704
    %v6457 = vmax.f32 %v5701, %v5705
    %v6458 = vmax.f32 %v5702, %v5706
    %v6459 = vmax.f32 %v5703, %v5707
    %v6460 = vmax.f32 %v5708, %v5712
    %v6461 = vmax.f32 %v5709, %v5713
    %v6462 = vmax.f32 %v5710, %v5714
    %v6463 = vmax.f32 %v5711, %v5715
    %v6464 = vmax.f32 %v5716, %v5720
    %v6465 = vmax.f32 %v5717, %v5721
    %v6466 = vmax.f32 %v5718, %v5722
    %v6467 = vmax.f32 %v5719, %v5723
    %v6468 = vmax.f32 %v5724, %v5728
    %v6469 = vmax.f32 %v5725, %v5729
    %v6470 = vmax.f32 %v5726, %v5730
    %v6471 = vmax.f32 %v5727, %v5731
    %v6472 = vmax.f32 %v5732, %v5736
    %v6473 = vmax.f32 %v5733, %v5737
    %v6474 = vmax.f32 %v5734, %v5738
    %v6475 = vmax.f32 %v5735, %v5739
    %v6476 = vmax.f32 %v5740, %v5744
    %v6477 = vmax.f32 %v5741, %v5745
    %v6478 = vmax.f32 %v5742, %v5746
    %v6479 = vmax.f32 %v5743, %v5747
    %v6480 = vmax.f32 %v5748, %v5752
    %v6481 = vmax.f32 %v5749, %v5753
    %v6482 = vmax.f32 %v5750, %v5754
    %v6483 = vmax.f32 %v5751, %v5755
    %v6484 = vmax.f32 %v5756, %v5760
    %v6485 = vmax.f32 %v5757, %v5761
    %v6486 = vmax.f32 %v5758, %v5762
    %v6487 = vmax.f32 %v5759, %v5763
    %v6488 = vmax.f32 %v5764, %v5768
    %v6489 = vmax.f32 %v5765, %v5769
    %v6490 = vmax.f32 %v5766, %v5770
    %v6491 = vmax.f32 %v5767, %v5771
    %v6492 = vmax.f32 %v5772, %v5776
    %v6493 = vmax.f32 %v5773, %v5777
    %v6494 = vmax.f32 %v5774, %v5778
    %v6495 = vmax.f32 %v5775, %v5779
    %v6496 = vmax.f32 %v5780, %v5784
    %v6497 = vmax.f32 %v5781, %v5785
    %v6498 = vmax.f32 %v5782, %v5786
    %v6499 = vmax.f32 %v5783, %v5787
    %v6500 = vmax.f32 %v5788, %v5792
    %v6501 = vmax.f32 %v5789, %v5793
    %v6502 = vmax.f32 %v5790, %v5794
    %v6503 = vmax.f32 %v5791, %v5795
    %v6504 = vmax.f32 %v5796, %v5800
    %v6505 = vmax.f32 %v5797, %v5801
    %v6506 = vmax.f32 %v5798, %v5802
    %v6507 = vmax.f32 %v5799, %v5803
    %v6572 = vcombine.high %v6444, %v6444
    %v6574 = vunpack.c.l.s4 1983009808
    %v6575 = vunpack.c.0.s8 %v6574
    %v6576 = vlaneseq
    %v6577 = vshrl.u32 %v6576, 7
    %v6578 = vsub.s32 %v6575, %v6577
    %v6579 = vrot.slane %v6444, %v6578
    %v6581 = vunpack.c.l.s4 1983009808
    %v6582 = vunpack.c.0.s8 %v6581
    %v6583 = vlaneseq
    %v6584 = vshrl.u32 %v6583, 7
    %v6585 = vsub.s32 %v6582, %v6584
    %v6586 = vrot.slane %v6572, %v6585
    %v6587 = vcombine.high %v6579, %v6579
    %v6588 = vcombine.high %v6586, %v6586
    %v6589 = vcombine.high %v6445, %v6445
    %v6591 = vunpack.c.l.s4 1983009808
    %v6592 = vunpack.c.0.s8 %v6591
    %v6593 = vlaneseq
    %v6594 = vshrl.u32 %v6593, 7
    %v6595 = vsub.s32 %v6592, %v6594
    %v6596 = vrot.slane %v6445, %v6595
    %v6598 = vunpack.c.l.s4 1983009808
    %v6599 = vunpack.c.0.s8 %v6598
    %v6600 = vlaneseq
    %v6601 = vshrl.u32 %v6600, 7
    %v6602 = vsub.s32 %v6599, %v6601
    %v6603 = vrot.slane %v6589, %v6602
    %v6604 = vcombine.high %v6596, %v6596
    %v6605 = vcombine.high %v6603, %v6603
    %v6606 = vcombine.high %v6446, %v6446
    %v6608 = vunpack.c.l.s4 1983009808
    %v6609 = vunpack.c.0.s8 %v6608
    %v6610 = vlaneseq
    %v6611 = vshrl.u32 %v6610, 7
    %v6612 = vsub.s32 %v6609, %v6611
    %v6613 = vrot.slane %v6446, %v6612
    %v6615 = vunpack.c.l.s4 1983009808
    %v6616 = vunpack.c.0.s8 %v6615
    %v6617 = vlaneseq
    %v6618 = vshrl.u32 %v6617, 7
    %v6619 = vsub.s32 %v6616, %v6618
    %v6620 = vrot.slane %v6606, %v6619
    %v6621 = vcombine.high %v6613, %v6613
    %v6622 = vcombine.high %v6620, %v6620
    %v6623 = vcombine.high %v6447, %v6447
    %v6625 = vunpack.c.l.s4 1983009808
    %v6626 = vunpack.c.0.s8 %v6625
    %v6627 = vlaneseq
    %v6628 = vshrl.u32 %v6627, 7
    %v6629 = vsub.s32 %v6626, %v6628
    %v6630 = vrot.slane %v6447, %v6629
    %v6632 = vunpack.c.l.s4 1983009808
    %v6633 = vunpack.c.0.s8 %v6632
    %v6634 = vlaneseq
    %v6635 = vshrl.u32 %v6634, 7
    %v6636 = vsub.s32 %v6633, %v6635
    %v6637 = vrot.slane %v6623, %v6636
    %v6638 = vcombine.high %v6630, %v6630
    %v6639 = vcombine.high %v6637, %v6637
    %v6640 = vcombine.high %v6448, %v6448
    %v6642 = vunpack.c.l.s4 1983009808
    %v6643 = vunpack.c.0.s8 %v6642
    %v6644 = vlaneseq
    %v6645 = vshrl.u32 %v6644, 7
    %v6646 = vsub.s32 %v6643, %v6645
    %v6647 = vrot.slane %v6448, %v6646
    %v6649 = vunpack.c.l.s4 1983009808
    %v6650 = vunpack.c.0.s8 %v6649
    %v6651 = vlaneseq
    %v6652 = vshrl.u32 %v6651, 7
    %v6653 = vsub.s32 %v6650, %v6652
    %v6654 = vrot.slane %v6640, %v6653
    %v6655 = vcombine.high %v6647, %v6647
    %v6656 = vcombine.high %v6654, %v6654
    %v6657 = vcombine.high %v6449, %v6449
    %v6659 = vunpack.c.l.s4 1983009808
    %v6660 = vunpack.c.0.s8 %v6659
    %v6661 = vlaneseq
    %v6662 = vshrl.u32 %v6661, 7
    %v6663 = vsub.s32 %v6660, %v6662
    %v6664 = vrot.slane %v6449, %v6663
    %v6666 = vunpack.c.l.s4 1983009808
    %v6667 = vunpack.c.0.s8 %v6666
    %v6668 = vlaneseq
    %v6669 = vshrl.u32 %v6668, 7
    %v6670 = vsub.s32 %v6667, %v6669
    %v6671 = vrot.slane %v6657, %v6670
    %v6672 = vcombine.high %v6664, %v6664
    %v6673 = vcombine.high %v6671, %v6671
    %v6674 = vcombine.high %v6450, %v6450
    %v6676 = vunpack.c.l.s4 1983009808
    %v6677 = vunpack.c.0.s8 %v6676
    %v6678 = vlaneseq
    %v6679 = vshrl.u32 %v6678, 7
    %v6680 = vsub.s32 %v6677, %v6679
    %v6681 = vrot.slane %v6450, %v6680
    %v6683 = vunpack.c.l.s4 1983009808
    %v6684 = vunpack.c.0.s8 %v6683
    %v6685 = vlaneseq
    %v6686 = vshrl.u32 %v6685, 7
    %v6687 = vsub.s32 %v6684, %v6686
    %v6688 = vrot.slane %v6674, %v6687
    %v6689 = vcombine.high %v6681, %v6681
    %v6690 = vcombine.high %v6688, %v6688
    %v6691 = vcombine.high %v6451, %v6451
    %v6693 = vunpack.c.l.s4 1983009808
    %v6694 = vunpack.c.0.s8 %v6693
    %v6695 = vlaneseq
    %v6696 = vshrl.u32 %v6695, 7
    %v6697 = vsub.s32 %v6694, %v6696
    %v6698 = vrot.slane %v6451, %v6697
    %v6700 = vunpack.c.l.s4 1983009808
    %v6701 = vunpack.c.0.s8 %v6700
    %v6702 = vlaneseq
    %v6703 = vshrl.u32 %v6702, 7
    %v6704 = vsub.s32 %v6701, %v6703
    %v6705 = vrot.slane %v6691, %v6704
    %v6706 = vcombine.high %v6698, %v6698
    %v6707 = vcombine.high %v6705, %v6705
    %v6708 = vcombine.high %v6452, %v6452
    %v6710 = vunpack.c.l.s4 1983009808
    %v6711 = vunpack.c.0.s8 %v6710
    %v6712 = vlaneseq
    %v6713 = vshrl.u32 %v6712, 7
    %v6714 = vsub.s32 %v6711, %v6713
    %v6715 = vrot.slane %v6452, %v6714
    %v6717 = vunpack.c.l.s4 1983009808
    %v6718 = vunpack.c.0.s8 %v6717
    %v6719 = vlaneseq
    %v6720 = vshrl.u32 %v6719, 7
    %v6721 = vsub.s32 %v6718, %v6720
    %v6722 = vrot.slane %v6708, %v6721
    %v6723 = vcombine.high %v6715, %v6715
    %v6724 = vcombine.high %v6722, %v6722
    %v6725 = vcombine.high %v6453, %v6453
    %v6727 = vunpack.c.l.s4 1983009808
    %v6728 = vunpack.c.0.s8 %v6727
    %v6729 = vlaneseq
    %v6730 = vshrl.u32 %v6729, 7
    %v6731 = vsub.s32 %v6728, %v6730
    %v6732 = vrot.slane %v6453, %v6731
    %v6734 = vunpack.c.l.s4 1983009808
    %v6735 = vunpack.c.0.s8 %v6734
    %v6736 = vlaneseq
    %v6737 = vshrl.u32 %v6736, 7
    %v6738 = vsub.s32 %v6735, %v6737
    %v6739 = vrot.slane %v6725, %v6738
    %v6740 = vcombine.high %v6732, %v6732
    %v6741 = vcombine.high %v6739, %v6739
    %v6742 = vcombine.high %v6454, %v6454
    %v6744 = vunpack.c.l.s4 1983009808
    %v6745 = vunpack.c.0.s8 %v6744
    %v6746 = vlaneseq
    %v6747 = vshrl.u32 %v6746, 7
    %v6748 = vsub.s32 %v6745, %v6747
    %v6749 = vrot.slane %v6454, %v6748
    %v6751 = vunpack.c.l.s4 1983009808
    %v6752 = vunpack.c.0.s8 %v6751
    %v6753 = vlaneseq
    %v6754 = vshrl.u32 %v6753, 7
    %v6755 = vsub.s32 %v6752, %v6754
    %v6756 = vrot.slane %v6742, %v6755
    %v6757 = vcombine.high %v6749, %v6749
    %v6758 = vcombine.high %v6756, %v6756
    %v6759 = vcombine.high %v6455, %v6455
    %v6761 = vunpack.c.l.s4 1983009808
    %v6762 = vunpack.c.0.s8 %v6761
    %v6763 = vlaneseq
    %v6764 = vshrl.u32 %v6763, 7
    %v6765 = vsub.s32 %v6762, %v6764
    %v6766 = vrot.slane %v6455, %v6765
    %v6768 = vunpack.c.l.s4 1983009808
    %v6769 = vunpack.c.0.s8 %v6768
    %v6770 = vlaneseq
    %v6771 = vshrl.u32 %v6770, 7
    %v6772 = vsub.s32 %v6769, %v6771
    %v6773 = vrot.slane %v6759, %v6772
    %v6774 = vcombine.high %v6766, %v6766
    %v6775 = vcombine.high %v6773, %v6773
    %v6776 = vcombine.high %v6456, %v6456
    %v6778 = vunpack.c.l.s4 1983009808
    %v6779 = vunpack.c.0.s8 %v6778
    %v6780 = vlaneseq
    %v6781 = vshrl.u32 %v6780, 7
    %v6782 = vsub.s32 %v6779, %v6781
    %v6783 = vrot.slane %v6456, %v6782
    %v6785 = vunpack.c.l.s4 1983009808
    %v6786 = vunpack.c.0.s8 %v6785
    %v6787 = vlaneseq
    %v6788 = vshrl.u32 %v6787, 7
    %v6789 = vsub.s32 %v6786, %v6788
    %v6790 = vrot.slane %v6776, %v6789
    %v6791 = vcombine.high %v6783, %v6783
    %v6792 = vcombine.high %v6790, %v6790
    %v6793 = vcombine.high %v6457, %v6457
    %v6795 = vunpack.c.l.s4 1983009808
    %v6796 = vunpack.c.0.s8 %v6795
    %v6797 = vlaneseq
    %v6798 = vshrl.u32 %v6797, 7
    %v6799 = vsub.s32 %v6796, %v6798
    %v6800 = vrot.slane %v6457, %v6799
    %v6802 = vunpack.c.l.s4 1983009808
    %v6803 = vunpack.c.0.s8 %v6802
    %v6804 = vlaneseq
    %v6805 = vshrl.u32 %v6804, 7
    %v6806 = vsub.s32 %v6803, %v6805
    %v6807 = vrot.slane %v6793, %v6806
    %v6808 = vcombine.high %v6800, %v6800
    %v6809 = vcombine.high %v6807, %v6807
    %v6810 = vcombine.high %v6458, %v6458
    %v6812 = vunpack.c.l.s4 1983009808
    %v6813 = vunpack.c.0.s8 %v6812
    %v6814 = vlaneseq
    %v6815 = vshrl.u32 %v6814, 7
    %v6816 = vsub.s32 %v6813, %v6815
    %v6817 = vrot.slane %v6458, %v6816
    %v6819 = vunpack.c.l.s4 1983009808
    %v6820 = vunpack.c.0.s8 %v6819
    %v6821 = vlaneseq
    %v6822 = vshrl.u32 %v6821, 7
    %v6823 = vsub.s32 %v6820, %v6822
    %v6824 = vrot.slane %v6810, %v6823
    %v6825 = vcombine.high %v6817, %v6817
    %v6826 = vcombine.high %v6824, %v6824
    %v6827 = vcombine.high %v6459, %v6459
    %v6829 = vunpack.c.l.s4 1983009808
    %v6830 = vunpack.c.0.s8 %v6829
    %v6831 = vlaneseq
    %v6832 = vshrl.u32 %v6831, 7
    %v6833 = vsub.s32 %v6830, %v6832
    %v6834 = vrot.slane %v6459, %v6833
    %v6836 = vunpack.c.l.s4 1983009808
    %v6837 = vunpack.c.0.s8 %v6836
    %v6838 = vlaneseq
    %v6839 = vshrl.u32 %v6838, 7
    %v6840 = vsub.s32 %v6837, %v6839
    %v6841 = vrot.slane %v6827, %v6840
    %v6842 = vcombine.high %v6834, %v6834
    %v6843 = vcombine.high %v6841, %v6841
    %v6844 = vcombine.high %v6460, %v6460
    %v6846 = vunpack.c.l.s4 1983009808
    %v6847 = vunpack.c.0.s8 %v6846
    %v6848 = vlaneseq
    %v6849 = vshrl.u32 %v6848, 7
    %v6850 = vsub.s32 %v6847, %v6849
    %v6851 = vrot.slane %v6460, %v6850
    %v6853 = vunpack.c.l.s4 1983009808
    %v6854 = vunpack.c.0.s8 %v6853
    %v6855 = vlaneseq
    %v6856 = vshrl.u32 %v6855, 7
    %v6857 = vsub.s32 %v6854, %v6856
    %v6858 = vrot.slane %v6844, %v6857
    %v6859 = vcombine.high %v6851, %v6851
    %v6860 = vcombine.high %v6858, %v6858
    %v6861 = vcombine.high %v6461, %v6461
    %v6863 = vunpack.c.l.s4 1983009808
    %v6864 = vunpack.c.0.s8 %v6863
    %v6865 = vlaneseq
    %v6866 = vshrl.u32 %v6865, 7
    %v6867 = vsub.s32 %v6864, %v6866
    %v6868 = vrot.slane %v6461, %v6867
    %v6870 = vunpack.c.l.s4 1983009808
    %v6871 = vunpack.c.0.s8 %v6870
    %v6872 = vlaneseq
    %v6873 = vshrl.u32 %v6872, 7
    %v6874 = vsub.s32 %v6871, %v6873
    %v6875 = vrot.slane %v6861, %v6874
    %v6876 = vcombine.high %v6868, %v6868
    %v6877 = vcombine.high %v6875, %v6875
    %v6878 = vcombine.high %v6462, %v6462
    %v6880 = vunpack.c.l.s4 1983009808
    %v6881 = vunpack.c.0.s8 %v6880
    %v6882 = vlaneseq
    %v6883 = vshrl.u32 %v6882, 7
    %v6884 = vsub.s32 %v6881, %v6883
    %v6885 = vrot.slane %v6462, %v6884
    %v6887 = vunpack.c.l.s4 1983009808
    %v6888 = vunpack.c.0.s8 %v6887
    %v6889 = vlaneseq
    %v6890 = vshrl.u32 %v6889, 7
    %v6891 = vsub.s32 %v6888, %v6890
    %v6892 = vrot.slane %v6878, %v6891
    %v6893 = vcombine.high %v6885, %v6885
    %v6894 = vcombine.high %v6892, %v6892
    %v6895 = vcombine.high %v6463, %v6463
    %v6897 = vunpack.c.l.s4 1983009808
    %v6898 = vunpack.c.0.s8 %v6897
    %v6899 = vlaneseq
    %v6900 = vshrl.u32 %v6899, 7
    %v6901 = vsub.s32 %v6898, %v6900
    %v6902 = vrot.slane %v6463, %v6901
    %v6904 = vunpack.c.l.s4 1983009808
    %v6905 = vunpack.c.0.s8 %v6904
    %v6906 = vlaneseq
    %v6907 = vshrl.u32 %v6906, 7
    %v6908 = vsub.s32 %v6905, %v6907
    %v6909 = vrot.slane %v6895, %v6908
    %v6910 = vcombine.high %v6902, %v6902
    %v6911 = vcombine.high %v6909, %v6909
    %v6912 = vcombine.high %v6464, %v6464
    %v6914 = vunpack.c.l.s4 1983009808
    %v6915 = vunpack.c.0.s8 %v6914
    %v6916 = vlaneseq
    %v6917 = vshrl.u32 %v6916, 7
    %v6918 = vsub.s32 %v6915, %v6917
    %v6919 = vrot.slane %v6464, %v6918
    %v6921 = vunpack.c.l.s4 1983009808
    %v6922 = vunpack.c.0.s8 %v6921
    %v6923 = vlaneseq
    %v6924 = vshrl.u32 %v6923, 7
    %v6925 = vsub.s32 %v6922, %v6924
    %v6926 = vrot.slane %v6912, %v6925
    %v6927 = vcombine.high %v6919, %v6919
    %v6928 = vcombine.high %v6926, %v6926
    %v6929 = vcombine.high %v6465, %v6465
    %v6931 = vunpack.c.l.s4 1983009808
    %v6932 = vunpack.c.0.s8 %v6931
    %v6933 = vlaneseq
    %v6934 = vshrl.u32 %v6933, 7
    %v6935 = vsub.s32 %v6932, %v6934
    %v6936 = vrot.slane %v6465, %v6935
    %v6938 = vunpack.c.l.s4 1983009808
    %v6939 = vunpack.c.0.s8 %v6938
    %v6940 = vlaneseq
    %v6941 = vshrl.u32 %v6940, 7
    %v6942 = vsub.s32 %v6939, %v6941
    %v6943 = vrot.slane %v6929, %v6942
    %v6944 = vcombine.high %v6936, %v6936
    %v6945 = vcombine.high %v6943, %v6943
    %v6946 = vcombine.high %v6466, %v6466
    %v6948 = vunpack.c.l.s4 1983009808
    %v6949 = vunpack.c.0.s8 %v6948
    %v6950 = vlaneseq
    %v6951 = vshrl.u32 %v6950, 7
    %v6952 = vsub.s32 %v6949, %v6951
    %v6953 = vrot.slane %v6466, %v6952
    %v6955 = vunpack.c.l.s4 1983009808
    %v6956 = vunpack.c.0.s8 %v6955
    %v6957 = vlaneseq
    %v6958 = vshrl.u32 %v6957, 7
    %v6959 = vsub.s32 %v6956, %v6958
    %v6960 = vrot.slane %v6946, %v6959
    %v6961 = vcombine.high %v6953, %v6953
    %v6962 = vcombine.high %v6960, %v6960
    %v6963 = vcombine.high %v6467, %v6467
    %v6965 = vunpack.c.l.s4 1983009808
    %v6966 = vunpack.c.0.s8 %v6965
    %v6967 = vlaneseq
    %v6968 = vshrl.u32 %v6967, 7
    %v6969 = vsub.s32 %v6966, %v6968
    %v6970 = vrot.slane %v6467, %v6969
    %v6972 = vunpack.c.l.s4 1983009808
    %v6973 = vunpack.c.0.s8 %v6972
    %v6974 = vlaneseq
    %v6975 = vshrl.u32 %v6974, 7
    %v6976 = vsub.s32 %v6973, %v6975
    %v6977 = vrot.slane %v6963, %v6976
    %v6978 = vcombine.high %v6970, %v6970
    %v6979 = vcombine.high %v6977, %v6977
    %v6980 = vcombine.high %v6468, %v6468
    %v6982 = vunpack.c.l.s4 1983009808
    %v6983 = vunpack.c.0.s8 %v6982
    %v6984 = vlaneseq
    %v6985 = vshrl.u32 %v6984, 7
    %v6986 = vsub.s32 %v6983, %v6985
    %v6987 = vrot.slane %v6468, %v6986
    %v6989 = vunpack.c.l.s4 1983009808
    %v6990 = vunpack.c.0.s8 %v6989
    %v6991 = vlaneseq
    %v6992 = vshrl.u32 %v6991, 7
    %v6993 = vsub.s32 %v6990, %v6992
    %v6994 = vrot.slane %v6980, %v6993
    %v6995 = vcombine.high %v6987, %v6987
    %v6996 = vcombine.high %v6994, %v6994
    %v6997 = vcombine.high %v6469, %v6469
    %v6999 = vunpack.c.l.s4 1983009808
    %v7000 = vunpack.c.0.s8 %v6999
    %v7001 = vlaneseq
    %v7002 = vshrl.u32 %v7001, 7
    %v7003 = vsub.s32 %v7000, %v7002
    %v7004 = vrot.slane %v6469, %v7003
    %v7006 = vunpack.c.l.s4 1983009808
    %v7007 = vunpack.c.0.s8 %v7006
    %v7008 = vlaneseq
    %v7009 = vshrl.u32 %v7008, 7
    %v7010 = vsub.s32 %v7007, %v7009
    %v7011 = vrot.slane %v6997, %v7010
    %v7012 = vcombine.high %v7004, %v7004
    %v7013 = vcombine.high %v7011, %v7011
    %v7014 = vcombine.high %v6470, %v6470
    %v7016 = vunpack.c.l.s4 1983009808
    %v7017 = vunpack.c.0.s8 %v7016
    %v7018 = vlaneseq
    %v7019 = vshrl.u32 %v7018, 7
    %v7020 = vsub.s32 %v7017, %v7019
    %v7021 = vrot.slane %v6470, %v7020
    %v7023 = vunpack.c.l.s4 1983009808
    %v7024 = vunpack.c.0.s8 %v7023
    %v7025 = vlaneseq
    %v7026 = vshrl.u32 %v7025, 7
    %v7027 = vsub.s32 %v7024, %v7026
    %v7028 = vrot.slane %v7014, %v7027
    %v7029 = vcombine.high %v7021, %v7021
    %v7030 = vcombine.high %v7028, %v7028
    %v7031 = vcombine.high %v6471, %v6471
    %v7033 = vunpack.c.l.s4 1983009808
    %v7034 = vunpack.c.0.s8 %v7033
    %v7035 = vlaneseq
    %v7036 = vshrl.u32 %v7035, 7
    %v7037 = vsub.s32 %v7034, %v7036
    %v7038 = vrot.slane %v6471, %v7037
    %v7040 = vunpack.c.l.s4 1983009808
    %v7041 = vunpack.c.0.s8 %v7040
    %v7042 = vlaneseq
    %v7043 = vshrl.u32 %v7042, 7
    %v7044 = vsub.s32 %v7041, %v7043
    %v7045 = vrot.slane %v7031, %v7044
    %v7046 = vcombine.high %v7038, %v7038
    %v7047 = vcombine.high %v7045, %v7045
    %v7048 = vcombine.high %v6472, %v6472
    %v7050 = vunpack.c.l.s4 1983009808
    %v7051 = vunpack.c.0.s8 %v7050
    %v7052 = vlaneseq
    %v7053 = vshrl.u32 %v7052, 7
    %v7054 = vsub.s32 %v7051, %v7053
    %v7055 = vrot.slane %v6472, %v7054
    %v7057 = vunpack.c.l.s4 1983009808
    %v7058 = vunpack.c.0.s8 %v7057
    %v7059 = vlaneseq
    %v7060 = vshrl.u32 %v7059, 7
    %v7061 = vsub.s32 %v7058, %v7060
    %v7062 = vrot.slane %v7048, %v7061
    %v7063 = vcombine.high %v7055, %v7055
    %v7064 = vcombine.high %v7062, %v7062
    %v7065 = vcombine.high %v6473, %v6473
    %v7067 = vunpack.c.l.s4 1983009808
    %v7068 = vunpack.c.0.s8 %v7067
    %v7069 = vlaneseq
    %v7070 = vshrl.u32 %v7069, 7
    %v7071 = vsub.s32 %v7068, %v7070
    %v7072 = vrot.slane %v6473, %v7071
    %v7074 = vunpack.c.l.s4 1983009808
    %v7075 = vunpack.c.0.s8 %v7074
    %v7076 = vlaneseq
    %v7077 = vshrl.u32 %v7076, 7
    %v7078 = vsub.s32 %v7075, %v7077
    %v7079 = vrot.slane %v7065, %v7078
    %v7080 = vcombine.high %v7072, %v7072
    %v7081 = vcombine.high %v7079, %v7079
    %v7082 = vcombine.high %v6474, %v6474
    %v7084 = vunpack.c.l.s4 1983009808
    %v7085 = vunpack.c.0.s8 %v7084
    %v7086 = vlaneseq
    %v7087 = vshrl.u32 %v7086, 7
    %v7088 = vsub.s32 %v7085, %v7087
    %v7089 = vrot.slane %v6474, %v7088
    %v7091 = vunpack.c.l.s4 1983009808
    %v7092 = vunpack.c.0.s8 %v7091
    %v7093 = vlaneseq
    %v7094 = vshrl.u32 %v7093, 7
    %v7095 = vsub.s32 %v7092, %v7094
    %v7096 = vrot.slane %v7082, %v7095
    %v7097 = vcombine.high %v7089, %v7089
    %v7098 = vcombine.high %v7096, %v7096
    %v7099 = vcombine.high %v6475, %v6475
    %v7101 = vunpack.c.l.s4 1983009808
    %v7102 = vunpack.c.0.s8 %v7101
    %v7103 = vlaneseq
    %v7104 = vshrl.u32 %v7103, 7
    %v7105 = vsub.s32 %v7102, %v7104
    %v7106 = vrot.slane %v6475, %v7105
    %v7108 = vunpack.c.l.s4 1983009808
    %v7109 = vunpack.c.0.s8 %v7108
    %v7110 = vlaneseq
    %v7111 = vshrl.u32 %v7110, 7
    %v7112 = vsub.s32 %v7109, %v7111
    %v7113 = vrot.slane %v7099, %v7112
    %v7114 = vcombine.high %v7106, %v7106
    %v7115 = vcombine.high %v7113, %v7113
    %v7116 = vcombine.high %v6476, %v6476
    %v7118 = vunpack.c.l.s4 1983009808
    %v7119 = vunpack.c.0.s8 %v7118
    %v7120 = vlaneseq
    %v7121 = vshrl.u32 %v7120, 7
    %v7122 = vsub.s32 %v7119, %v7121
    %v7123 = vrot.slane %v6476, %v7122
    %v7125 = vunpack.c.l.s4 1983009808
    %v7126 = vunpack.c.0.s8 %v7125
    %v7127 = vlaneseq
    %v7128 = vshrl.u32 %v7127, 7
    %v7129 = vsub.s32 %v7126, %v7128
    %v7130 = vrot.slane %v7116, %v7129
    %v7131 = vcombine.high %v7123, %v7123
    %v7132 = vcombine.high %v7130, %v7130
    %v7133 = vcombine.high %v6477, %v6477
    %v7135 = vunpack.c.l.s4 1983009808
    %v7136 = vunpack.c.0.s8 %v7135
    %v7137 = vlaneseq
    %v7138 = vshrl.u32 %v7137, 7
    %v7139 = vsub.s32 %v7136, %v7138
    %v7140 = vrot.slane %v6477, %v7139
    %v7142 = vunpack.c.l.s4 1983009808
    %v7143 = vunpack.c.0.s8 %v7142
    %v7144 = vlaneseq
    %v7145 = vshrl.u32 %v7144, 7
    %v7146 = vsub.s32 %v7143, %v7145
    %v7147 = vrot.slane %v7133, %v7146
    %v7148 = vcombine.high %v7140, %v7140
    %v7149 = vcombine.high %v7147, %v7147
    %v7150 = vcombine.high %v6478, %v6478
    %v7152 = vunpack.c.l.s4 1983009808
    %v7153 = vunpack.c.0.s8 %v7152
    %v7154 = vlaneseq
    %v7155 = vshrl.u32 %v7154, 7
    %v7156 = vsub.s32 %v7153, %v7155
    %v7157 = vrot.slane %v6478, %v7156
    %v7159 = vunpack.c.l.s4 1983009808
    %v7160 = vunpack.c.0.s8 %v7159
    %v7161 = vlaneseq
    %v7162 = vshrl.u32 %v7161, 7
    %v7163 = vsub.s32 %v7160, %v7162
    %v7164 = vrot.slane %v7150, %v7163
    %v7165 = vcombine.high %v7157, %v7157
    %v7166 = vcombine.high %v7164, %v7164
    %v7167 = vcombine.high %v6479, %v6479
    %v7169 = vunpack.c.l.s4 1983009808
    %v7170 = vunpack.c.0.s8 %v7169
    %v7171 = vlaneseq
    %v7172 = vshrl.u32 %v7171, 7
    %v7173 = vsub.s32 %v7170, %v7172
    %v7174 = vrot.slane %v6479, %v7173
    %v7176 = vunpack.c.l.s4 1983009808
    %v7177 = vunpack.c.0.s8 %v7176
    %v7178 = vlaneseq
    %v7179 = vshrl.u32 %v7178, 7
    %v7180 = vsub.s32 %v7177, %v7179
    %v7181 = vrot.slane %v7167, %v7180
    %v7182 = vcombine.high %v7174, %v7174
    %v7183 = vcombine.high %v7181, %v7181
    %v7184 = vcombine.high %v6480, %v6480
    %v7186 = vunpack.c.l.s4 1983009808
    %v7187 = vunpack.c.0.s8 %v7186
    %v7188 = vlaneseq
    %v7189 = vshrl.u32 %v7188, 7
    %v7190 = vsub.s32 %v7187, %v7189
    %v7191 = vrot.slane %v6480, %v7190
    %v7193 = vunpack.c.l.s4 1983009808
    %v7194 = vunpack.c.0.s8 %v7193
    %v7195 = vlaneseq
    %v7196 = vshrl.u32 %v7195, 7
    %v7197 = vsub.s32 %v7194, %v7196
    %v7198 = vrot.slane %v7184, %v7197
    %v7199 = vcombine.high %v7191, %v7191
    %v7200 = vcombine.high %v7198, %v7198
    %v7201 = vcombine.high %v6481, %v6481
    %v7203 = vunpack.c.l.s4 1983009808
    %v7204 = vunpack.c.0.s8 %v7203
    %v7205 = vlaneseq
    %v7206 = vshrl.u32 %v7205, 7
    %v7207 = vsub.s32 %v7204, %v7206
    %v7208 = vrot.slane %v6481, %v7207
    %v7210 = vunpack.c.l.s4 1983009808
    %v7211 = vunpack.c.0.s8 %v7210
    %v7212 = vlaneseq
    %v7213 = vshrl.u32 %v7212, 7
    %v7214 = vsub.s32 %v7211, %v7213
    %v7215 = vrot.slane %v7201, %v7214
    %v7216 = vcombine.high %v7208, %v7208
    %v7217 = vcombine.high %v7215, %v7215
    %v7218 = vcombine.high %v6482, %v6482
    %v7220 = vunpack.c.l.s4 1983009808
    %v7221 = vunpack.c.0.s8 %v7220
    %v7222 = vlaneseq
    %v7223 = vshrl.u32 %v7222, 7
    %v7224 = vsub.s32 %v7221, %v7223
    %v7225 = vrot.slane %v6482, %v7224
    %v7227 = vunpack.c.l.s4 1983009808
    %v7228 = vunpack.c.0.s8 %v7227
    %v7229 = vlaneseq
    %v7230 = vshrl.u32 %v7229, 7
    %v7231 = vsub.s32 %v7228, %v7230
    %v7232 = vrot.slane %v7218, %v7231
    %v7233 = vcombine.high %v7225, %v7225
    %v7234 = vcombine.high %v7232, %v7232
    %v7235 = vcombine.high %v6483, %v6483
    %v7237 = vunpack.c.l.s4 1983009808
    %v7238 = vunpack.c.0.s8 %v7237
    %v7239 = vlaneseq
    %v7240 = vshrl.u32 %v7239, 7
    %v7241 = vsub.s32 %v7238, %v7240
    %v7242 = vrot.slane %v6483, %v7241
    %v7244 = vunpack.c.l.s4 1983009808
    %v7245 = vunpack.c.0.s8 %v7244
    %v7246 = vlaneseq
    %v7247 = vshrl.u32 %v7246, 7
    %v7248 = vsub.s32 %v7245, %v7247
    %v7249 = vrot.slane %v7235, %v7248
    %v7250 = vcombine.high %v7242, %v7242
    %v7251 = vcombine.high %v7249, %v7249
    %v7252 = vcombine.high %v6484, %v6484
    %v7254 = vunpack.c.l.s4 1983009808
    %v7255 = vunpack.c.0.s8 %v7254
    %v7256 = vlaneseq
    %v7257 = vshrl.u32 %v7256, 7
    %v7258 = vsub.s32 %v7255, %v7257
    %v7259 = vrot.slane %v6484, %v7258
    %v7261 = vunpack.c.l.s4 1983009808
    %v7262 = vunpack.c.0.s8 %v7261
    %v7263 = vlaneseq
    %v7264 = vshrl.u32 %v7263, 7
    %v7265 = vsub.s32 %v7262, %v7264
    %v7266 = vrot.slane %v7252, %v7265
    %v7267 = vcombine.high %v7259, %v7259
    %v7268 = vcombine.high %v7266, %v7266
    %v7269 = vcombine.high %v6485, %v6485
    %v7271 = vunpack.c.l.s4 1983009808
    %v7272 = vunpack.c.0.s8 %v7271
    %v7273 = vlaneseq
    %v7274 = vshrl.u32 %v7273, 7
    %v7275 = vsub.s32 %v7272, %v7274
    %v7276 = vrot.slane %v6485, %v7275
    %v7278 = vunpack.c.l.s4 1983009808
    %v7279 = vunpack.c.0.s8 %v7278
    %v7280 = vlaneseq
    %v7281 = vshrl.u32 %v7280, 7
    %v7282 = vsub.s32 %v7279, %v7281
    %v7283 = vrot.slane %v7269, %v7282
    %v7284 = vcombine.high %v7276, %v7276
    %v7285 = vcombine.high %v7283, %v7283
    %v7286 = vcombine.high %v6486, %v6486
    %v7288 = vunpack.c.l.s4 1983009808
    %v7289 = vunpack.c.0.s8 %v7288
    %v7290 = vlaneseq
    %v7291 = vshrl.u32 %v7290, 7
    %v7292 = vsub.s32 %v7289, %v7291
    %v7293 = vrot.slane %v6486, %v7292
    %v7295 = vunpack.c.l.s4 1983009808
    %v7296 = vunpack.c.0.s8 %v7295
    %v7297 = vlaneseq
    %v7298 = vshrl.u32 %v7297, 7
    %v7299 = vsub.s32 %v7296, %v7298
    %v7300 = vrot.slane %v7286, %v7299
    %v7301 = vcombine.high %v7293, %v7293
    %v7302 = vcombine.high %v7300, %v7300
    %v7303 = vcombine.high %v6487, %v6487
    %v7305 = vunpack.c.l.s4 1983009808
    %v7306 = vunpack.c.0.s8 %v7305
    %v7307 = vlaneseq
    %v7308 = vshrl.u32 %v7307, 7
    %v7309 = vsub.s32 %v7306, %v7308
    %v7310 = vrot.slane %v6487, %v7309
    %v7312 = vunpack.c.l.s4 1983009808
    %v7313 = vunpack.c.0.s8 %v7312
    %v7314 = vlaneseq
    %v7315 = vshrl.u32 %v7314, 7
    %v7316 = vsub.s32 %v7313, %v7315
    %v7317 = vrot.slane %v7303, %v7316
    %v7318 = vcombine.high %v7310, %v7310
    %v7319 = vcombine.high %v7317, %v7317
    %v7320 = vcombine.high %v6488, %v6488
    %v7322 = vunpack.c.l.s4 1983009808
    %v7323 = vunpack.c.0.s8 %v7322
    %v7324 = vlaneseq
    %v7325 = vshrl.u32 %v7324, 7
    %v7326 = vsub.s32 %v7323, %v7325
    %v7327 = vrot.slane %v6488, %v7326
    %v7329 = vunpack.c.l.s4 1983009808
    %v7330 = vunpack.c.0.s8 %v7329
    %v7331 = vlaneseq
    %v7332 = vshrl.u32 %v7331, 7
    %v7333 = vsub.s32 %v7330, %v7332
    %v7334 = vrot.slane %v7320, %v7333
    %v7335 = vcombine.high %v7327, %v7327
    %v7336 = vcombine.high %v7334, %v7334
    %v7337 = vcombine.high %v6489, %v6489
    %v7339 = vunpack.c.l.s4 1983009808
    %v7340 = vunpack.c.0.s8 %v7339
    %v7341 = vlaneseq
    %v7342 = vshrl.u32 %v7341, 7
    %v7343 = vsub.s32 %v7340, %v7342
    %v7344 = vrot.slane %v6489, %v7343
    %v7346 = vunpack.c.l.s4 1983009808
    %v7347 = vunpack.c.0.s8 %v7346
    %v7348 = vlaneseq
    %v7349 = vshrl.u32 %v7348, 7
    %v7350 = vsub.s32 %v7347, %v7349
    %v7351 = vrot.slane %v7337, %v7350
    %v7352 = vcombine.high %v7344, %v7344
    %v7353 = vcombine.high %v7351, %v7351
    %v7354 = vcombine.high %v6490, %v6490
    %v7356 = vunpack.c.l.s4 1983009808
    %v7357 = vunpack.c.0.s8 %v7356
    %v7358 = vlaneseq
    %v7359 = vshrl.u32 %v7358, 7
    %v7360 = vsub.s32 %v7357, %v7359
    %v7361 = vrot.slane %v6490, %v7360
    %v7363 = vunpack.c.l.s4 1983009808
    %v7364 = vunpack.c.0.s8 %v7363
    %v7365 = vlaneseq
    %v7366 = vshrl.u32 %v7365, 7
    %v7367 = vsub.s32 %v7364, %v7366
    %v7368 = vrot.slane %v7354, %v7367
    %v7369 = vcombine.high %v7361, %v7361
    %v7370 = vcombine.high %v7368, %v7368
    %v7371 = vcombine.high %v6491, %v6491
    %v7373 = vunpack.c.l.s4 1983009808
    %v7374 = vunpack.c.0.s8 %v7373
    %v7375 = vlaneseq
    %v7376 = vshrl.u32 %v7375, 7
    %v7377 = vsub.s32 %v7374, %v7376
    %v7378 = vrot.slane %v6491, %v7377
    %v7380 = vunpack.c.l.s4 1983009808
    %v7381 = vunpack.c.0.s8 %v7380
    %v7382 = vlaneseq
    %v7383 = vshrl.u32 %v7382, 7
    %v7384 = vsub.s32 %v7381, %v7383
    %v7385 = vrot.slane %v7371, %v7384
    %v7386 = vcombine.high %v7378, %v7378
    %v7387 = vcombine.high %v7385, %v7385
    %v7388 = vcombine.high %v6492, %v6492
    %v7390 = vunpack.c.l.s4 1983009808
    %v7391 = vunpack.c.0.s8 %v7390
    %v7392 = vlaneseq
    %v7393 = vshrl.u32 %v7392, 7
    %v7394 = vsub.s32 %v7391, %v7393
    %v7395 = vrot.slane %v6492, %v7394
    %v7397 = vunpack.c.l.s4 1983009808
    %v7398 = vunpack.c.0.s8 %v7397
    %v7399 = vlaneseq
    %v7400 = vshrl.u32 %v7399, 7
    %v7401 = vsub.s32 %v7398, %v7400
    %v7402 = vrot.slane %v7388, %v7401
    %v7403 = vcombine.high %v7395, %v7395
    %v7404 = vcombine.high %v7402, %v7402
    %v7405 = vcombine.high %v6493, %v6493
    %v7407 = vunpack.c.l.s4 1983009808
    %v7408 = vunpack.c.0.s8 %v7407
    %v7409 = vlaneseq
    %v7410 = vshrl.u32 %v7409, 7
    %v7411 = vsub.s32 %v7408, %v7410
    %v7412 = vrot.slane %v6493, %v7411
    %v7414 = vunpack.c.l.s4 1983009808
    %v7415 = vunpack.c.0.s8 %v7414
    %v7416 = vlaneseq
    %v7417 = vshrl.u32 %v7416, 7
    %v7418 = vsub.s32 %v7415, %v7417
    %v7419 = vrot.slane %v7405, %v7418
    %v7420 = vcombine.high %v7412, %v7412
    %v7421 = vcombine.high %v7419, %v7419
    %v7422 = vcombine.high %v6494, %v6494
    %v7424 = vunpack.c.l.s4 1983009808
    %v7425 = vunpack.c.0.s8 %v7424
    %v7426 = vlaneseq
    %v7427 = vshrl.u32 %v7426, 7
    %v7428 = vsub.s32 %v7425, %v7427
    %v7429 = vrot.slane %v6494, %v7428
    %v7431 = vunpack.c.l.s4 1983009808
    %v7432 = vunpack.c.0.s8 %v7431
    %v7433 = vlaneseq
    %v7434 = vshrl.u32 %v7433, 7
    %v7435 = vsub.s32 %v7432, %v7434
    %v7436 = vrot.slane %v7422, %v7435
    %v7437 = vcombine.high %v7429, %v7429
    %v7438 = vcombine.high %v7436, %v7436
    %v7439 = vcombine.high %v6495, %v6495
    %v7441 = vunpack.c.l.s4 1983009808
    %v7442 = vunpack.c.0.s8 %v7441
    %v7443 = vlaneseq
    %v7444 = vshrl.u32 %v7443, 7
    %v7445 = vsub.s32 %v7442, %v7444
    %v7446 = vrot.slane %v6495, %v7445
    %v7448 = vunpack.c.l.s4 1983009808
    %v7449 = vunpack.c.0.s8 %v7448
    %v7450 = vlaneseq
    %v7451 = vshrl.u32 %v7450, 7
    %v7452 = vsub.s32 %v7449, %v7451
    %v7453 = vrot.slane %v7439, %v7452
    %v7454 = vcombine.high %v7446, %v7446
    %v7455 = vcombine.high %v7453, %v7453
    %v7456 = vcombine.high %v6496, %v6496
    %v7458 = vunpack.c.l.s4 1983009808
    %v7459 = vunpack.c.0.s8 %v7458
    %v7460 = vlaneseq
    %v7461 = vshrl.u32 %v7460, 7
    %v7462 = vsub.s32 %v7459, %v7461
    %v7463 = vrot.slane %v6496, %v7462
    %v7465 = vunpack.c.l.s4 1983009808
    %v7466 = vunpack.c.0.s8 %v7465
    %v7467 = vlaneseq
    %v7468 = vshrl.u32 %v7467, 7
    %v7469 = vsub.s32 %v7466, %v7468
    %v7470 = vrot.slane %v7456, %v7469
    %v7471 = vcombine.high %v7463, %v7463
    %v7472 = vcombine.high %v7470, %v7470
    %v7473 = vcombine.high %v6497, %v6497
    %v7475 = vunpack.c.l.s4 1983009808
    %v7476 = vunpack.c.0.s8 %v7475
    %v7477 = vlaneseq
    %v7478 = vshrl.u32 %v7477, 7
    %v7479 = vsub.s32 %v7476, %v7478
    %v7480 = vrot.slane %v6497, %v7479
    %v7482 = vunpack.c.l.s4 1983009808
    %v7483 = vunpack.c.0.s8 %v7482
    %v7484 = vlaneseq
    %v7485 = vshrl.u32 %v7484, 7
    %v7486 = vsub.s32 %v7483, %v7485
    %v7487 = vrot.slane %v7473, %v7486
    %v7488 = vcombine.high %v7480, %v7480
    %v7489 = vcombine.high %v7487, %v7487
    %v7490 = vcombine.high %v6498, %v6498
    %v7492 = vunpack.c.l.s4 1983009808
    %v7493 = vunpack.c.0.s8 %v7492
    %v7494 = vlaneseq
    %v7495 = vshrl.u32 %v7494, 7
    %v7496 = vsub.s32 %v7493, %v7495
    %v7497 = vrot.slane %v6498, %v7496
    %v7499 = vunpack.c.l.s4 1983009808
    %v7500 = vunpack.c.0.s8 %v7499
    %v7501 = vlaneseq
    %v7502 = vshrl.u32 %v7501, 7
    %v7503 = vsub.s32 %v7500, %v7502
    %v7504 = vrot.slane %v7490, %v7503
    %v7505 = vcombine.high %v7497, %v7497
    %v7506 = vcombine.high %v7504, %v7504
    %v7507 = vcombine.high %v6499, %v6499
    %v7509 = vunpack.c.l.s4 1983009808
    %v7510 = vunpack.c.0.s8 %v7509
    %v7511 = vlaneseq
    %v7512 = vshrl.u32 %v7511, 7
    %v7513 = vsub.s32 %v7510, %v7512
    %v7514 = vrot.slane %v6499, %v7513
    %v7516 = vunpack.c.l.s4 1983009808
    %v7517 = vunpack.c.0.s8 %v7516
    %v7518 = vlaneseq
    %v7519 = vshrl.u32 %v7518, 7
    %v7520 = vsub.s32 %v7517, %v7519
    %v7521 = vrot.slane %v7507, %v7520
    %v7522 = vcombine.high %v7514, %v7514
    %v7523 = vcombine.high %v7521, %v7521
    %v7524 = vcombine.high %v6500, %v6500
    %v7526 = vunpack.c.l.s4 1983009808
    %v7527 = vunpack.c.0.s8 %v7526
    %v7528 = vlaneseq
    %v7529 = vshrl.u32 %v7528, 7
    %v7530 = vsub.s32 %v7527, %v7529
    %v7531 = vrot.slane %v6500, %v7530
    %v7533 = vunpack.c.l.s4 1983009808
    %v7534 = vunpack.c.0.s8 %v7533
    %v7535 = vlaneseq
    %v7536 = vshrl.u32 %v7535, 7
    %v7537 = vsub.s32 %v7534, %v7536
    %v7538 = vrot.slane %v7524, %v7537
    %v7539 = vcombine.high %v7531, %v7531
    %v7540 = vcombine.high %v7538, %v7538
    %v7541 = vcombine.high %v6501, %v6501
    %v7543 = vunpack.c.l.s4 1983009808
    %v7544 = vunpack.c.0.s8 %v7543
    %v7545 = vlaneseq
    %v7546 = vshrl.u32 %v7545, 7
    %v7547 = vsub.s32 %v7544, %v7546
    %v7548 = vrot.slane %v6501, %v7547
    %v7550 = vunpack.c.l.s4 1983009808
    %v7551 = vunpack.c.0.s8 %v7550
    %v7552 = vlaneseq
    %v7553 = vshrl.u32 %v7552, 7
    %v7554 = vsub.s32 %v7551, %v7553
    %v7555 = vrot.slane %v7541, %v7554
    %v7556 = vcombine.high %v7548, %v7548
    %v7557 = vcombine.high %v7555, %v7555
    %v7558 = vcombine.high %v6502, %v6502
    %v7560 = vunpack.c.l.s4 1983009808
    %v7561 = vunpack.c.0.s8 %v7560
    %v7562 = vlaneseq
    %v7563 = vshrl.u32 %v7562, 7
    %v7564 = vsub.s32 %v7561, %v7563
    %v7565 = vrot.slane %v6502, %v7564
    %v7567 = vunpack.c.l.s4 1983009808
    %v7568 = vunpack.c.0.s8 %v7567
    %v7569 = vlaneseq
    %v7570 = vshrl.u32 %v7569, 7
    %v7571 = vsub.s32 %v7568, %v7570
    %v7572 = vrot.slane %v7558, %v7571
    %v7573 = vcombine.high %v7565, %v7565
    %v7574 = vcombine.high %v7572, %v7572
    %v7575 = vcombine.high %v6503, %v6503
    %v7577 = vunpack.c.l.s4 1983009808
    %v7578 = vunpack.c.0.s8 %v7577
    %v7579 = vlaneseq
    %v7580 = vshrl.u32 %v7579, 7
    %v7581 = vsub.s32 %v7578, %v7580
    %v7582 = vrot.slane %v6503, %v7581
    %v7584 = vunpack.c.l.s4 1983009808
    %v7585 = vunpack.c.0.s8 %v7584
    %v7586 = vlaneseq
    %v7587 = vshrl.u32 %v7586, 7
    %v7588 = vsub.s32 %v7585, %v7587
    %v7589 = vrot.slane %v7575, %v7588
    %v7590 = vcombine.high %v7582, %v7582
    %v7591 = vcombine.high %v7589, %v7589
    %v7592 = vcombine.high %v6504, %v6504
    %v7594 = vunpack.c.l.s4 1983009808
    %v7595 = vunpack.c.0.s8 %v7594
    %v7596 = vlaneseq
    %v7597 = vshrl.u32 %v7596, 7
    %v7598 = vsub.s32 %v7595, %v7597
    %v7599 = vrot.slane %v6504, %v7598
    %v7601 = vunpack.c.l.s4 1983009808
    %v7602 = vunpack.c.0.s8 %v7601
    %v7603 = vlaneseq
    %v7604 = vshrl.u32 %v7603, 7
    %v7605 = vsub.s32 %v7602, %v7604
    %v7606 = vrot.slane %v7592, %v7605
    %v7607 = vcombine.high %v7599, %v7599
    %v7608 = vcombine.high %v7606, %v7606
    %v7609 = vcombine.high %v6505, %v6505
    %v7611 = vunpack.c.l.s4 1983009808
    %v7612 = vunpack.c.0.s8 %v7611
    %v7613 = vlaneseq
    %v7614 = vshrl.u32 %v7613, 7
    %v7615 = vsub.s32 %v7612, %v7614
    %v7616 = vrot.slane %v6505, %v7615
    %v7618 = vunpack.c.l.s4 1983009808
    %v7619 = vunpack.c.0.s8 %v7618
    %v7620 = vlaneseq
    %v7621 = vshrl.u32 %v7620, 7
    %v7622 = vsub.s32 %v7619, %v7621
    %v7623 = vrot.slane %v7609, %v7622
    %v7624 = vcombine.high %v7616, %v7616
    %v7625 = vcombine.high %v7623, %v7623
    %v7626 = vcombine.high %v6506, %v6506
    %v7628 = vunpack.c.l.s4 1983009808
    %v7629 = vunpack.c.0.s8 %v7628
    %v7630 = vlaneseq
    %v7631 = vshrl.u32 %v7630, 7
    %v7632 = vsub.s32 %v7629, %v7631
    %v7633 = vrot.slane %v6506, %v7632
    %v7635 = vunpack.c.l.s4 1983009808
    %v7636 = vunpack.c.0.s8 %v7635
    %v7637 = vlaneseq
    %v7638 = vshrl.u32 %v7637, 7
    %v7639 = vsub.s32 %v7636, %v7638
    %v7640 = vrot.slane %v7626, %v7639
    %v7641 = vcombine.high %v7633, %v7633
    %v7642 = vcombine.high %v7640, %v7640
    %v7643 = vcombine.high %v6507, %v6507
    %v7645 = vunpack.c.l.s4 1983009808
    %v7646 = vunpack.c.0.s8 %v7645
    %v7647 = vlaneseq
    %v7648 = vshrl.u32 %v7647, 7
    %v7649 = vsub.s32 %v7646, %v7648
    %v7650 = vrot.slane %v6507, %v7649
    %v7652 = vunpack.c.l.s4 1983009808
    %v7653 = vunpack.c.0.s8 %v7652
    %v7654 = vlaneseq
    %v7655 = vshrl.u32 %v7654, 7
    %v7656 = vsub.s32 %v7653, %v7655
    %v7657 = vrot.slane %v7643, %v7656
    %v7658 = vcombine.high %v7650, %v7650
    %v7659 = vcombine.high %v7657, %v7657
    %vm7916 = vcmask 1041408
    %v7917 = vsel %vm7916, %v6579, -inf
    %v7918 = vrot.slane %v7917, 4
    %v7919 = vmax.f32 %v7917, %v7918
    %v7920 = vrot.slane %v7919, 2
    %v7921 = vmax.f32 %v7919, %v7920
    %v7922 = vrot.slane %v7921, 1
    %v7923 = vmax.f32 %v7921, %v7922
    %v7924 = vsel %vm7916, %v6587, -inf
    %v7925 = vrot.slane %v7924, 4
    %v7926 = vmax.f32 %v7924, %v7925
    %v7927 = vrot.slane %v7926, 2
    %v7928 = vmax.f32 %v7926, %v7927
    %v7929 = vrot.slane %v7928, 1
    %v7930 = vmax.f32 %v7928, %v7929
    %v7931 = vsel %vm7916, %v6586, -inf
    %v7932 = vrot.slane %v7931, 4
    %v7933 = vmax.f32 %v7931, %v7932
    %v7934 = vrot.slane %v7933, 2
    %v7935 = vmax.f32 %v7933, %v7934
    %v7936 = vrot.slane %v7935, 1
    %v7937 = vmax.f32 %v7935, %v7936
    %v7938 = vsel %vm7916, %v6588, -inf
    %v7939 = vrot.slane %v7938, 4
    %v7940 = vmax.f32 %v7938, %v7939
    %v7941 = vrot.slane %v7940, 2
    %v7942 = vmax.f32 %v7940, %v7941
    %v7943 = vrot.slane %v7942, 1
    %v7944 = vmax.f32 %v7942, %v7943
    %v7945 = vsel %vm7916, %v6596, -inf
    %v7946 = vrot.slane %v7945, 4
    %v7947 = vmax.f32 %v7945, %v7946
    %v7948 = vrot.slane %v7947, 2
    %v7949 = vmax.f32 %v7947, %v7948
    %v7950 = vrot.slane %v7949, 1
    %v7951 = vmax.f32 %v7949, %v7950
    %v7952 = vsel %vm7916, %v6604, -inf
    %v7953 = vrot.slane %v7952, 4
    %v7954 = vmax.f32 %v7952, %v7953
    %v7955 = vrot.slane %v7954, 2
    %v7956 = vmax.f32 %v7954, %v7955
    %v7957 = vrot.slane %v7956, 1
    %v7958 = vmax.f32 %v7956, %v7957
    %v7959 = vsel %vm7916, %v6603, -inf
    %v7960 = vrot.slane %v7959, 4
    %v7961 = vmax.f32 %v7959, %v7960
    %v7962 = vrot.slane %v7961, 2
    %v7963 = vmax.f32 %v7961, %v7962
    %v7964 = vrot.slane %v7963, 1
    %v7965 = vmax.f32 %v7963, %v7964
    %v7966 = vsel %vm7916, %v6605, -inf
    %v7967 = vrot.slane %v7966, 4
    %v7968 = vmax.f32 %v7966, %v7967
    %v7969 = vrot.slane %v7968, 2
    %v7970 = vmax.f32 %v7968, %v7969
    %v7971 = vrot.slane %v7970, 1
    %v7972 = vmax.f32 %v7970, %v7971
    %v7973 = vsel %vm7916, %v6613, -inf
    %v7974 = vrot.slane %v7973, 4
    %v7975 = vmax.f32 %v7973, %v7974
    %v7976 = vrot.slane %v7975, 2
    %v7977 = vmax.f32 %v7975, %v7976
    %v7978 = vrot.slane %v7977, 1
    %v7979 = vmax.f32 %v7977, %v7978
    %v7980 = vsel %vm7916, %v6621, -inf
    %v7981 = vrot.slane %v7980, 4
    %v7982 = vmax.f32 %v7980, %v7981
    %v7983 = vrot.slane %v7982, 2
    %v7984 = vmax.f32 %v7982, %v7983
    %v7985 = vrot.slane %v7984, 1
    %v7986 = vmax.f32 %v7984, %v7985
    %v7987 = vsel %vm7916, %v6620, -inf
    %v7988 = vrot.slane %v7987, 4
    %v7989 = vmax.f32 %v7987, %v7988
    %v7990 = vrot.slane %v7989, 2
    %v7991 = vmax.f32 %v7989, %v7990
    %v7992 = vrot.slane %v7991, 1
    %v7993 = vmax.f32 %v7991, %v7992
    %v7994 = vsel %vm7916, %v6622, -inf
    %v7995 = vrot.slane %v7994, 4
    %v7996 = vmax.f32 %v7994, %v7995
    %v7997 = vrot.slane %v7996, 2
    %v7998 = vmax.f32 %v7996, %v7997
    %v7999 = vrot.slane %v7998, 1
    %v8000 = vmax.f32 %v7998, %v7999
    %v8001 = vsel %vm7916, %v6630, -inf
    %v8002 = vrot.slane %v8001, 4
    %v8003 = vmax.f32 %v8001, %v8002
    %v8004 = vrot.slane %v8003, 2
    %v8005 = vmax.f32 %v8003, %v8004
    %v8006 = vrot.slane %v8005, 1
    %v8007 = vmax.f32 %v8005, %v8006
    %v8008 = vsel %vm7916, %v6638, -inf
    %v8009 = vrot.slane %v8008, 4
    %v8010 = vmax.f32 %v8008, %v8009
    %v8011 = vrot.slane %v8010, 2
    %v8012 = vmax.f32 %v8010, %v8011
    %v8013 = vrot.slane %v8012, 1
    %v8014 = vmax.f32 %v8012, %v8013
    %v8015 = vsel %vm7916, %v6637, -inf
    %v8016 = vrot.slane %v8015, 4
    %v8017 = vmax.f32 %v8015, %v8016
    %v8018 = vrot.slane %v8017, 2
    %v8019 = vmax.f32 %v8017, %v8018
    %v8020 = vrot.slane %v8019, 1
    %v8021 = vmax.f32 %v8019, %v8020
    %v8022 = vsel %vm7916, %v6639, -inf
    %v8023 = vrot.slane %v8022, 4
    %v8024 = vmax.f32 %v8022, %v8023
    %v8025 = vrot.slane %v8024, 2
    %v8026 = vmax.f32 %v8024, %v8025
    %v8027 = vrot.slane %v8026, 1
    %v8028 = vmax.f32 %v8026, %v8027
    %v8029 = vsel %vm7916, %v6647, -inf
    %v8030 = vrot.slane %v8029, 4
    %v8031 = vmax.f32 %v8029, %v8030
    %v8032 = vrot.slane %v8031, 2
    %v8033 = vmax.f32 %v8031, %v8032
    %v8034 = vrot.slane %v8033, 1
    %v8035 = vmax.f32 %v8033, %v8034
    %v8036 = vsel %vm7916, %v6655, -inf
    %v8037 = vrot.slane %v8036, 4
    %v8038 = vmax.f32 %v8036, %v8037
    %v8039 = vrot.slane %v8038, 2
    %v8040 = vmax.f32 %v8038, %v8039
    %v8041 = vrot.slane %v8040, 1
    %v8042 = vmax.f32 %v8040, %v8041
    %v8043 = vsel %vm7916, %v6654, -inf
    %v8044 = vrot.slane %v8043, 4
    %v8045 = vmax.f32 %v8043, %v8044
    %v8046 = vrot.slane %v8045, 2
    %v8047 = vmax.f32 %v8045, %v8046
    %v8048 = vrot.slane %v8047, 1
    %v8049 = vmax.f32 %v8047, %v8048
    %v8050 = vsel %vm7916, %v6656, -inf
    %v8051 = vrot.slane %v8050, 4
    %v8052 = vmax.f32 %v8050, %v8051
    %v8053 = vrot.slane %v8052, 2
    %v8054 = vmax.f32 %v8052, %v8053
    %v8055 = vrot.slane %v8054, 1
    %v8056 = vmax.f32 %v8054, %v8055
    %v8057 = vsel %vm7916, %v6664, -inf
    %v8058 = vrot.slane %v8057, 4
    %v8059 = vmax.f32 %v8057, %v8058
    %v8060 = vrot.slane %v8059, 2
    %v8061 = vmax.f32 %v8059, %v8060
    %v8062 = vrot.slane %v8061, 1
    %v8063 = vmax.f32 %v8061, %v8062
    %v8064 = vsel %vm7916, %v6672, -inf
    %v8065 = vrot.slane %v8064, 4
    %v8066 = vmax.f32 %v8064, %v8065
    %v8067 = vrot.slane %v8066, 2
    %v8068 = vmax.f32 %v8066, %v8067
    %v8069 = vrot.slane %v8068, 1
    %v8070 = vmax.f32 %v8068, %v8069
    %v8071 = vsel %vm7916, %v6671, -inf
    %v8072 = vrot.slane %v8071, 4
    %v8073 = vmax.f32 %v8071, %v8072
    %v8074 = vrot.slane %v8073, 2
    %v8075 = vmax.f32 %v8073, %v8074
    %v8076 = vrot.slane %v8075, 1
    %v8077 = vmax.f32 %v8075, %v8076
    %v8078 = vsel %vm7916, %v6673, -inf
    %v8079 = vrot.slane %v8078, 4
    %v8080 = vmax.f32 %v8078, %v8079
    %v8081 = vrot.slane %v8080, 2
    %v8082 = vmax.f32 %v8080, %v8081
    %v8083 = vrot.slane %v8082, 1
    %v8084 = vmax.f32 %v8082, %v8083
    %v8085 = vsel %vm7916, %v6681, -inf
    %v8086 = vrot.slane %v8085, 4
    %v8087 = vmax.f32 %v8085, %v8086
    %v8088 = vrot.slane %v8087, 2
    %v8089 = vmax.f32 %v8087, %v8088
    %v8090 = vrot.slane %v8089, 1
    %v8091 = vmax.f32 %v8089, %v8090
    %v8092 = vsel %vm7916, %v6689, -inf
    %v8093 = vrot.slane %v8092, 4
    %v8094 = vmax.f32 %v8092, %v8093
    %v8095 = vrot.slane %v8094, 2
    %v8096 = vmax.f32 %v8094, %v8095
    %v8097 = vrot.slane %v8096, 1
    %v8098 = vmax.f32 %v8096, %v8097
    %v8099 = vsel %vm7916, %v6688, -inf
    %v8100 = vrot.slane %v8099, 4
    %v8101 = vmax.f32 %v8099, %v8100
    %v8102 = vrot.slane %v8101, 2
    %v8103 = vmax.f32 %v8101, %v8102
    %v8104 = vrot.slane %v8103, 1
    %v8105 = vmax.f32 %v8103, %v8104
    %v8106 = vsel %vm7916, %v6690, -inf
    %v8107 = vrot.slane %v8106, 4
    %v8108 = vmax.f32 %v8106, %v8107
    %v8109 = vrot.slane %v8108, 2
    %v8110 = vmax.f32 %v8108, %v8109
    %v8111 = vrot.slane %v8110, 1
    %v8112 = vmax.f32 %v8110, %v8111
    %v8113 = vsel %vm7916, %v6698, -inf
    %v8114 = vrot.slane %v8113, 4
    %v8115 = vmax.f32 %v8113, %v8114
    %v8116 = vrot.slane %v8115, 2
    %v8117 = vmax.f32 %v8115, %v8116
    %v8118 = vrot.slane %v8117, 1
    %v8119 = vmax.f32 %v8117, %v8118
    %v8120 = vsel %vm7916, %v6706, -inf
    %v8121 = vrot.slane %v8120, 4
    %v8122 = vmax.f32 %v8120, %v8121
    %v8123 = vrot.slane %v8122, 2
    %v8124 = vmax.f32 %v8122, %v8123
    %v8125 = vrot.slane %v8124, 1
    %v8126 = vmax.f32 %v8124, %v8125
    %v8127 = vsel %vm7916, %v6705, -inf
    %v8128 = vrot.slane %v8127, 4
    %v8129 = vmax.f32 %v8127, %v8128
    %v8130 = vrot.slane %v8129, 2
    %v8131 = vmax.f32 %v8129, %v8130
    %v8132 = vrot.slane %v8131, 1
    %v8133 = vmax.f32 %v8131, %v8132
    %v8134 = vsel %vm7916, %v6707, -inf
    %v8135 = vrot.slane %v8134, 4
    %v8136 = vmax.f32 %v8134, %v8135
    %v8137 = vrot.slane %v8136, 2
    %v8138 = vmax.f32 %v8136, %v8137
    %v8139 = vrot.slane %v8138, 1
    %v8140 = vmax.f32 %v8138, %v8139
    %v8141 = vsel %vm7916, %v6715, -inf
    %v8142 = vrot.slane %v8141, 4
    %v8143 = vmax.f32 %v8141, %v8142
    %v8144 = vrot.slane %v8143, 2
    %v8145 = vmax.f32 %v8143, %v8144
    %v8146 = vrot.slane %v8145, 1
    %v8147 = vmax.f32 %v8145, %v8146
    %v8148 = vsel %vm7916, %v6723, -inf
    %v8149 = vrot.slane %v8148, 4
    %v8150 = vmax.f32 %v8148, %v8149
    %v8151 = vrot.slane %v8150, 2
    %v8152 = vmax.f32 %v8150, %v8151
    %v8153 = vrot.slane %v8152, 1
    %v8154 = vmax.f32 %v8152, %v8153
    %v8155 = vsel %vm7916, %v6722, -inf
    %v8156 = vrot.slane %v8155, 4
    %v8157 = vmax.f32 %v8155, %v8156
    %v8158 = vrot.slane %v8157, 2
    %v8159 = vmax.f32 %v8157, %v8158
    %v8160 = vrot.slane %v8159, 1
    %v8161 = vmax.f32 %v8159, %v8160
    %v8162 = vsel %vm7916, %v6724, -inf
    %v8163 = vrot.slane %v8162, 4
    %v8164 = vmax.f32 %v8162, %v8163
    %v8165 = vrot.slane %v8164, 2
    %v8166 = vmax.f32 %v8164, %v8165
    %v8167 = vrot.slane %v8166, 1
    %v8168 = vmax.f32 %v8166, %v8167
    %v8169 = vsel %vm7916, %v6732, -inf
    %v8170 = vrot.slane %v8169, 4
    %v8171 = vmax.f32 %v8169, %v8170
    %v8172 = vrot.slane %v8171, 2
    %v8173 = vmax.f32 %v8171, %v8172
    %v8174 = vrot.slane %v8173, 1
    %v8175 = vmax.f32 %v8173, %v8174
    %v8176 = vsel %vm7916, %v6740, -inf
    %v8177 = vrot.slane %v8176, 4
    %v8178 = vmax.f32 %v8176, %v8177
    %v8179 = vrot.slane %v8178, 2
    %v8180 = vmax.f32 %v8178, %v8179
    %v8181 = vrot.slane %v8180, 1
    %v8182 = vmax.f32 %v8180, %v8181
    %v8183 = vsel %vm7916, %v6739, -inf
    %v8184 = vrot.slane %v8183, 4
    %v8185 = vmax.f32 %v8183, %v8184
    %v8186 = vrot.slane %v8185, 2
    %v8187 = vmax.f32 %v8185, %v8186
    %v8188 = vrot.slane %v8187, 1
    %v8189 = vmax.f32 %v8187, %v8188
    %v8190 = vsel %vm7916, %v6741, -inf
    %v8191 = vrot.slane %v8190, 4
    %v8192 = vmax.f32 %v8190, %v8191
    %v8193 = vrot.slane %v8192, 2
    %v8194 = vmax.f32 %v8192, %v8193
    %v8195 = vrot.slane %v8194, 1
    %v8196 = vmax.f32 %v8194, %v8195
    %v8197 = vsel %vm7916, %v6749, -inf
    %v8198 = vrot.slane %v8197, 4
    %v8199 = vmax.f32 %v8197, %v8198
    %v8200 = vrot.slane %v8199, 2
    %v8201 = vmax.f32 %v8199, %v8200
    %v8202 = vrot.slane %v8201, 1
    %v8203 = vmax.f32 %v8201, %v8202
    %v8204 = vsel %vm7916, %v6757, -inf
    %v8205 = vrot.slane %v8204, 4
    %v8206 = vmax.f32 %v8204, %v8205
    %v8207 = vrot.slane %v8206, 2
    %v8208 = vmax.f32 %v8206, %v8207
    %v8209 = vrot.slane %v8208, 1
    %v8210 = vmax.f32 %v8208, %v8209
    %v8211 = vsel %vm7916, %v6756, -inf
    %v8212 = vrot.slane %v8211, 4
    %v8213 = vmax.f32 %v8211, %v8212
    %v8214 = vrot.slane %v8213, 2
    %v8215 = vmax.f32 %v8213, %v8214
    %v8216 = vrot.slane %v8215, 1
    %v8217 = vmax.f32 %v8215, %v8216
    %v8218 = vsel %vm7916, %v6758, -inf
    %v8219 = vrot.slane %v8218, 4
    %v8220 = vmax.f32 %v8218, %v8219
    %v8221 = vrot.slane %v8220, 2
    %v8222 = vmax.f32 %v8220, %v8221
    %v8223 = vrot.slane %v8222, 1
    %v8224 = vmax.f32 %v8222, %v8223
    %v8225 = vsel %vm7916, %v6766, -inf
    %v8226 = vrot.slane %v8225, 4
    %v8227 = vmax.f32 %v8225, %v8226
    %v8228 = vrot.slane %v8227, 2
    %v8229 = vmax.f32 %v8227, %v8228
    %v8230 = vrot.slane %v8229, 1
    %v8231 = vmax.f32 %v8229, %v8230
    %v8232 = vsel %vm7916, %v6774, -inf
    %v8233 = vrot.slane %v8232, 4
    %v8234 = vmax.f32 %v8232, %v8233
    %v8235 = vrot.slane %v8234, 2
    %v8236 = vmax.f32 %v8234, %v8235
    %v8237 = vrot.slane %v8236, 1
    %v8238 = vmax.f32 %v8236, %v8237
    %v8239 = vsel %vm7916, %v6773, -inf
    %v8240 = vrot.slane %v8239, 4
    %v8241 = vmax.f32 %v8239, %v8240
    %v8242 = vrot.slane %v8241, 2
    %v8243 = vmax.f32 %v8241, %v8242
    %v8244 = vrot.slane %v8243, 1
    %v8245 = vmax.f32 %v8243, %v8244
    %v8246 = vsel %vm7916, %v6775, -inf
    %v8247 = vrot.slane %v8246, 4
    %v8248 = vmax.f32 %v8246, %v8247
    %v8249 = vrot.slane %v8248, 2
    %v8250 = vmax.f32 %v8248, %v8249
    %v8251 = vrot.slane %v8250, 1
    %v8252 = vmax.f32 %v8250, %v8251
    %v8253 = vsel %vm7916, %v6783, -inf
    %v8254 = vrot.slane %v8253, 4
    %v8255 = vmax.f32 %v8253, %v8254
    %v8256 = vrot.slane %v8255, 2
    %v8257 = vmax.f32 %v8255, %v8256
    %v8258 = vrot.slane %v8257, 1
    %v8259 = vmax.f32 %v8257, %v8258
    %v8260 = vsel %vm7916, %v6791, -inf
    %v8261 = vrot.slane %v8260, 4
    %v8262 = vmax.f32 %v8260, %v8261
    %v8263 = vrot.slane %v8262, 2
    %v8264 = vmax.f32 %v8262, %v8263
    %v8265 = vrot.slane %v8264, 1
    %v8266 = vmax.f32 %v8264, %v8265
    %v8267 = vsel %vm7916, %v6790, -inf
    %v8268 = vrot.slane %v8267, 4
    %v8269 = vmax.f32 %v8267, %v8268
    %v8270 = vrot.slane %v8269, 2
    %v8271 = vmax.f32 %v8269, %v8270
    %v8272 = vrot.slane %v8271, 1
    %v8273 = vmax.f32 %v8271, %v8272
    %v8274 = vsel %vm7916, %v6792, -inf
    %v8275 = vrot.slane %v8274, 4
    %v8276 = vmax.f32 %v8274, %v8275
    %v8277 = vrot.slane %v8276, 2
    %v8278 = vmax.f32 %v8276, %v8277
    %v8279 = vrot.slane %v8278, 1
    %v8280 = vmax.f32 %v8278, %v8279
    %v8281 = vsel %vm7916, %v6800, -inf
    %v8282 = vrot.slane %v8281, 4
    %v8283 = vmax.f32 %v8281, %v8282
    %v8284 = vrot.slane %v8283, 2
    %v8285 = vmax.f32 %v8283, %v8284
    %v8286 = vrot.slane %v8285, 1
    %v8287 = vmax.f32 %v8285, %v8286
    %v8288 = vsel %vm7916, %v6808, -inf
    %v8289 = vrot.slane %v8288, 4
    %v8290 = vmax.f32 %v8288, %v8289
    %v8291 = vrot.slane %v8290, 2
    %v8292 = vmax.f32 %v8290, %v8291
    %v8293 = vrot.slane %v8292, 1
    %v8294 = vmax.f32 %v8292, %v8293
    %v8295 = vsel %vm7916, %v6807, -inf
    %v8296 = vrot.slane %v8295, 4
    %v8297 = vmax.f32 %v8295, %v8296
    %v8298 = vrot.slane %v8297, 2
    %v8299 = vmax.f32 %v8297, %v8298
    %v8300 = vrot.slane %v8299, 1
    %v8301 = vmax.f32 %v8299, %v8300
    %v8302 = vsel %vm7916, %v6809, -inf
    %v8303 = vrot.slane %v8302, 4
    %v8304 = vmax.f32 %v8302, %v8303
    %v8305 = vrot.slane %v8304, 2
    %v8306 = vmax.f32 %v8304, %v8305
    %v8307 = vrot.slane %v8306, 1
    %v8308 = vmax.f32 %v8306, %v8307
    %v8309 = vsel %vm7916, %v6817, -inf
    %v8310 = vrot.slane %v8309, 4
    %v8311 = vmax.f32 %v8309, %v8310
    %v8312 = vrot.slane %v8311, 2
    %v8313 = vmax.f32 %v8311, %v8312
    %v8314 = vrot.slane %v8313, 1
    %v8315 = vmax.f32 %v8313, %v8314
    %v8316 = vsel %vm7916, %v6825, -inf
    %v8317 = vrot.slane %v8316, 4
    %v8318 = vmax.f32 %v8316, %v8317
    %v8319 = vrot.slane %v8318, 2
    %v8320 = vmax.f32 %v8318, %v8319
    %v8321 = vrot.slane %v8320, 1
    %v8322 = vmax.f32 %v8320, %v8321
    %v8323 = vsel %vm7916, %v6824, -inf
    %v8324 = vrot.slane %v8323, 4
    %v8325 = vmax.f32 %v8323, %v8324
    %v8326 = vrot.slane %v8325, 2
    %v8327 = vmax.f32 %v8325, %v8326
    %v8328 = vrot.slane %v8327, 1
    %v8329 = vmax.f32 %v8327, %v8328
    %v8330 = vsel %vm7916, %v6826, -inf
    %v8331 = vrot.slane %v8330, 4
    %v8332 = vmax.f32 %v8330, %v8331
    %v8333 = vrot.slane %v8332, 2
    %v8334 = vmax.f32 %v8332, %v8333
    %v8335 = vrot.slane %v8334, 1
    %v8336 = vmax.f32 %v8334, %v8335
    %v8337 = vsel %vm7916, %v6834, -inf
    %v8338 = vrot.slane %v8337, 4
    %v8339 = vmax.f32 %v8337, %v8338
    %v8340 = vrot.slane %v8339, 2
    %v8341 = vmax.f32 %v8339, %v8340
    %v8342 = vrot.slane %v8341, 1
    %v8343 = vmax.f32 %v8341, %v8342
    %v8344 = vsel %vm7916, %v6842, -inf
    %v8345 = vrot.slane %v8344, 4
    %v8346 = vmax.f32 %v8344, %v8345
    %v8347 = vrot.slane %v8346, 2
    %v8348 = vmax.f32 %v8346, %v8347
    %v8349 = vrot.slane %v8348, 1
    %v8350 = vmax.f32 %v8348, %v8349
    %v8351 = vsel %vm7916, %v6841, -inf
    %v8352 = vrot.slane %v8351, 4
    %v8353 = vmax.f32 %v8351, %v8352
    %v8354 = vrot.slane %v8353, 2
    %v8355 = vmax.f32 %v8353, %v8354
    %v8356 = vrot.slane %v8355, 1
    %v8357 = vmax.f32 %v8355, %v8356
    %v8358 = vsel %vm7916, %v6843, -inf
    %v8359 = vrot.slane %v8358, 4
    %v8360 = vmax.f32 %v8358, %v8359
    %v8361 = vrot.slane %v8360, 2
    %v8362 = vmax.f32 %v8360, %v8361
    %v8363 = vrot.slane %v8362, 1
    %v8364 = vmax.f32 %v8362, %v8363
    %v8365 = vsel %vm7916, %v6851, -inf
    %v8366 = vrot.slane %v8365, 4
    %v8367 = vmax.f32 %v8365, %v8366
    %v8368 = vrot.slane %v8367, 2
    %v8369 = vmax.f32 %v8367, %v8368
    %v8370 = vrot.slane %v8369, 1
    %v8371 = vmax.f32 %v8369, %v8370
    %v8372 = vsel %vm7916, %v6859, -inf
    %v8373 = vrot.slane %v8372, 4
    %v8374 = vmax.f32 %v8372, %v8373
    %v8375 = vrot.slane %v8374, 2
    %v8376 = vmax.f32 %v8374, %v8375
    %v8377 = vrot.slane %v8376, 1
    %v8378 = vmax.f32 %v8376, %v8377
    %v8379 = vsel %vm7916, %v6858, -inf
    %v8380 = vrot.slane %v8379, 4
    %v8381 = vmax.f32 %v8379, %v8380
    %v8382 = vrot.slane %v8381, 2
    %v8383 = vmax.f32 %v8381, %v8382
    %v8384 = vrot.slane %v8383, 1
    %v8385 = vmax.f32 %v8383, %v8384
    %v8386 = vsel %vm7916, %v6860, -inf
    %v8387 = vrot.slane %v8386, 4
    %v8388 = vmax.f32 %v8386, %v8387
    %v8389 = vrot.slane %v8388, 2
    %v8390 = vmax.f32 %v8388, %v8389
    %v8391 = vrot.slane %v8390, 1
    %v8392 = vmax.f32 %v8390, %v8391
    %v8393 = vsel %vm7916, %v6868, -inf
    %v8394 = vrot.slane %v8393, 4
    %v8395 = vmax.f32 %v8393, %v8394
    %v8396 = vrot.slane %v8395, 2
    %v8397 = vmax.f32 %v8395, %v8396
    %v8398 = vrot.slane %v8397, 1
    %v8399 = vmax.f32 %v8397, %v8398
    %v8400 = vsel %vm7916, %v6876, -inf
    %v8401 = vrot.slane %v8400, 4
    %v8402 = vmax.f32 %v8400, %v8401
    %v8403 = vrot.slane %v8402, 2
    %v8404 = vmax.f32 %v8402, %v8403
    %v8405 = vrot.slane %v8404, 1
    %v8406 = vmax.f32 %v8404, %v8405
    %v8407 = vsel %vm7916, %v6875, -inf
    %v8408 = vrot.slane %v8407, 4
    %v8409 = vmax.f32 %v8407, %v8408
    %v8410 = vrot.slane %v8409, 2
    %v8411 = vmax.f32 %v8409, %v8410
    %v8412 = vrot.slane %v8411, 1
    %v8413 = vmax.f32 %v8411, %v8412
    %v8414 = vsel %vm7916, %v6877, -inf
    %v8415 = vrot.slane %v8414, 4
    %v8416 = vmax.f32 %v8414, %v8415
    %v8417 = vrot.slane %v8416, 2
    %v8418 = vmax.f32 %v8416, %v8417
    %v8419 = vrot.slane %v8418, 1
    %v8420 = vmax.f32 %v8418, %v8419
    %v8421 = vsel %vm7916, %v6885, -inf
    %v8422 = vrot.slane %v8421, 4
    %v8423 = vmax.f32 %v8421, %v8422
    %v8424 = vrot.slane %v8423, 2
    %v8425 = vmax.f32 %v8423, %v8424
    %v8426 = vrot.slane %v8425, 1
    %v8427 = vmax.f32 %v8425, %v8426
    %v8428 = vsel %vm7916, %v6893, -inf
    %v8429 = vrot.slane %v8428, 4
    %v8430 = vmax.f32 %v8428, %v8429
    %v8431 = vrot.slane %v8430, 2
    %v8432 = vmax.f32 %v8430, %v8431
    %v8433 = vrot.slane %v8432, 1
    %v8434 = vmax.f32 %v8432, %v8433
    %v8435 = vsel %vm7916, %v6892, -inf
    %v8436 = vrot.slane %v8435, 4
    %v8437 = vmax.f32 %v8435, %v8436
    %v8438 = vrot.slane %v8437, 2
    %v8439 = vmax.f32 %v8437, %v8438
    %v8440 = vrot.slane %v8439, 1
    %v8441 = vmax.f32 %v8439, %v8440
    %v8442 = vsel %vm7916, %v6894, -inf
    %v8443 = vrot.slane %v8442, 4
    %v8444 = vmax.f32 %v8442, %v8443
    %v8445 = vrot.slane %v8444, 2
    %v8446 = vmax.f32 %v8444, %v8445
    %v8447 = vrot.slane %v8446, 1
    %v8448 = vmax.f32 %v8446, %v8447
    %v8449 = vsel %vm7916, %v6902, -inf
    %v8450 = vrot.slane %v8449, 4
    %v8451 = vmax.f32 %v8449, %v8450
    %v8452 = vrot.slane %v8451, 2
    %v8453 = vmax.f32 %v8451, %v8452
    %v8454 = vrot.slane %v8453, 1
    %v8455 = vmax.f32 %v8453, %v8454
    %v8456 = vsel %vm7916, %v6910, -inf
    %v8457 = vrot.slane %v8456, 4
    %v8458 = vmax.f32 %v8456, %v8457
    %v8459 = vrot.slane %v8458, 2
    %v8460 = vmax.f32 %v8458, %v8459
    %v8461 = vrot.slane %v8460, 1
    %v8462 = vmax.f32 %v8460, %v8461
    %v8463 = vsel %vm7916, %v6909, -inf
    %v8464 = vrot.slane %v8463, 4
    %v8465 = vmax.f32 %v8463, %v8464
    %v8466 = vrot.slane %v8465, 2
    %v8467 = vmax.f32 %v8465, %v8466
    %v8468 = vrot.slane %v8467, 1
    %v8469 = vmax.f32 %v8467, %v8468
    %v8470 = vsel %vm7916, %v6911, -inf
    %v8471 = vrot.slane %v8470, 4
    %v8472 = vmax.f32 %v8470, %v8471
    %v8473 = vrot.slane %v8472, 2
    %v8474 = vmax.f32 %v8472, %v8473
    %v8475 = vrot.slane %v8474, 1
    %v8476 = vmax.f32 %v8474, %v8475
    %v8477 = vsel %vm7916, %v6919, -inf
    %v8478 = vrot.slane %v8477, 4
    %v8479 = vmax.f32 %v8477, %v8478
    %v8480 = vrot.slane %v8479, 2
    %v8481 = vmax.f32 %v8479, %v8480
    %v8482 = vrot.slane %v8481, 1
    %v8483 = vmax.f32 %v8481, %v8482
    %v8484 = vsel %vm7916, %v6927, -inf
    %v8485 = vrot.slane %v8484, 4
    %v8486 = vmax.f32 %v8484, %v8485
    %v8487 = vrot.slane %v8486, 2
    %v8488 = vmax.f32 %v8486, %v8487
    %v8489 = vrot.slane %v8488, 1
    %v8490 = vmax.f32 %v8488, %v8489
    %v8491 = vsel %vm7916, %v6926, -inf
    %v8492 = vrot.slane %v8491, 4
    %v8493 = vmax.f32 %v8491, %v8492
    %v8494 = vrot.slane %v8493, 2
    %v8495 = vmax.f32 %v8493, %v8494
    %v8496 = vrot.slane %v8495, 1
    %v8497 = vmax.f32 %v8495, %v8496
    %v8498 = vsel %vm7916, %v6928, -inf
    %v8499 = vrot.slane %v8498, 4
    %v8500 = vmax.f32 %v8498, %v8499
    %v8501 = vrot.slane %v8500, 2
    %v8502 = vmax.f32 %v8500, %v8501
    %v8503 = vrot.slane %v8502, 1
    %v8504 = vmax.f32 %v8502, %v8503
    %v8505 = vsel %vm7916, %v6936, -inf
    %v8506 = vrot.slane %v8505, 4
    %v8507 = vmax.f32 %v8505, %v8506
    %v8508 = vrot.slane %v8507, 2
    %v8509 = vmax.f32 %v8507, %v8508
    %v8510 = vrot.slane %v8509, 1
    %v8511 = vmax.f32 %v8509, %v8510
    %v8512 = vsel %vm7916, %v6944, -inf
    %v8513 = vrot.slane %v8512, 4
    %v8514 = vmax.f32 %v8512, %v8513
    %v8515 = vrot.slane %v8514, 2
    %v8516 = vmax.f32 %v8514, %v8515
    %v8517 = vrot.slane %v8516, 1
    %v8518 = vmax.f32 %v8516, %v8517
    %v8519 = vsel %vm7916, %v6943, -inf
    %v8520 = vrot.slane %v8519, 4
    %v8521 = vmax.f32 %v8519, %v8520
    %v8522 = vrot.slane %v8521, 2
    %v8523 = vmax.f32 %v8521, %v8522
    %v8524 = vrot.slane %v8523, 1
    %v8525 = vmax.f32 %v8523, %v8524
    %v8526 = vsel %vm7916, %v6945, -inf
    %v8527 = vrot.slane %v8526, 4
    %v8528 = vmax.f32 %v8526, %v8527
    %v8529 = vrot.slane %v8528, 2
    %v8530 = vmax.f32 %v8528, %v8529
    %v8531 = vrot.slane %v8530, 1
    %v8532 = vmax.f32 %v8530, %v8531
    %v8533 = vsel %vm7916, %v6953, -inf
    %v8534 = vrot.slane %v8533, 4
    %v8535 = vmax.f32 %v8533, %v8534
    %v8536 = vrot.slane %v8535, 2
    %v8537 = vmax.f32 %v8535, %v8536
    %v8538 = vrot.slane %v8537, 1
    %v8539 = vmax.f32 %v8537, %v8538
    %v8540 = vsel %vm7916, %v6961, -inf
    %v8541 = vrot.slane %v8540, 4
    %v8542 = vmax.f32 %v8540, %v8541
    %v8543 = vrot.slane %v8542, 2
    %v8544 = vmax.f32 %v8542, %v8543
    %v8545 = vrot.slane %v8544, 1
    %v8546 = vmax.f32 %v8544, %v8545
    %v8547 = vsel %vm7916, %v6960, -inf
    %v8548 = vrot.slane %v8547, 4
    %v8549 = vmax.f32 %v8547, %v8548
    %v8550 = vrot.slane %v8549, 2
    %v8551 = vmax.f32 %v8549, %v8550
    %v8552 = vrot.slane %v8551, 1
    %v8553 = vmax.f32 %v8551, %v8552
    %v8554 = vsel %vm7916, %v6962, -inf
    %v8555 = vrot.slane %v8554, 4
    %v8556 = vmax.f32 %v8554, %v8555
    %v8557 = vrot.slane %v8556, 2
    %v8558 = vmax.f32 %v8556, %v8557
    %v8559 = vrot.slane %v8558, 1
    %v8560 = vmax.f32 %v8558, %v8559
    %v8561 = vsel %vm7916, %v6970, -inf
    %v8562 = vrot.slane %v8561, 4
    %v8563 = vmax.f32 %v8561, %v8562
    %v8564 = vrot.slane %v8563, 2
    %v8565 = vmax.f32 %v8563, %v8564
    %v8566 = vrot.slane %v8565, 1
    %v8567 = vmax.f32 %v8565, %v8566
    %v8568 = vsel %vm7916, %v6978, -inf
    %v8569 = vrot.slane %v8568, 4
    %v8570 = vmax.f32 %v8568, %v8569
    %v8571 = vrot.slane %v8570, 2
    %v8572 = vmax.f32 %v8570, %v8571
    %v8573 = vrot.slane %v8572, 1
    %v8574 = vmax.f32 %v8572, %v8573
    %v8575 = vsel %vm7916, %v6977, -inf
    %v8576 = vrot.slane %v8575, 4
    %v8577 = vmax.f32 %v8575, %v8576
    %v8578 = vrot.slane %v8577, 2
    %v8579 = vmax.f32 %v8577, %v8578
    %v8580 = vrot.slane %v8579, 1
    %v8581 = vmax.f32 %v8579, %v8580
    %v8582 = vsel %vm7916, %v6979, -inf
    %v8583 = vrot.slane %v8582, 4
    %v8584 = vmax.f32 %v8582, %v8583
    %v8585 = vrot.slane %v8584, 2
    %v8586 = vmax.f32 %v8584, %v8585
    %v8587 = vrot.slane %v8586, 1
    %v8588 = vmax.f32 %v8586, %v8587
    %v8589 = vsel %vm7916, %v6987, -inf
    %v8590 = vrot.slane %v8589, 4
    %v8591 = vmax.f32 %v8589, %v8590
    %v8592 = vrot.slane %v8591, 2
    %v8593 = vmax.f32 %v8591, %v8592
    %v8594 = vrot.slane %v8593, 1
    %v8595 = vmax.f32 %v8593, %v8594
    %v8596 = vsel %vm7916, %v6995, -inf
    %v8597 = vrot.slane %v8596, 4
    %v8598 = vmax.f32 %v8596, %v8597
    %v8599 = vrot.slane %v8598, 2
    %v8600 = vmax.f32 %v8598, %v8599
    %v8601 = vrot.slane %v8600, 1
    %v8602 = vmax.f32 %v8600, %v8601
    %v8603 = vsel %vm7916, %v6994, -inf
    %v8604 = vrot.slane %v8603, 4
    %v8605 = vmax.f32 %v8603, %v8604
    %v8606 = vrot.slane %v8605, 2
    %v8607 = vmax.f32 %v8605, %v8606
    %v8608 = vrot.slane %v8607, 1
    %v8609 = vmax.f32 %v8607, %v8608
    %v8610 = vsel %vm7916, %v6996, -inf
    %v8611 = vrot.slane %v8610, 4
    %v8612 = vmax.f32 %v8610, %v8611
    %v8613 = vrot.slane %v8612, 2
    %v8614 = vmax.f32 %v8612, %v8613
    %v8615 = vrot.slane %v8614, 1
    %v8616 = vmax.f32 %v8614, %v8615
    %v8617 = vsel %vm7916, %v7004, -inf
    %v8618 = vrot.slane %v8617, 4
    %v8619 = vmax.f32 %v8617, %v8618
    %v8620 = vrot.slane %v8619, 2
    %v8621 = vmax.f32 %v8619, %v8620
    %v8622 = vrot.slane %v8621, 1
    %v8623 = vmax.f32 %v8621, %v8622
    %v8624 = vsel %vm7916, %v7012, -inf
    %v8625 = vrot.slane %v8624, 4
    %v8626 = vmax.f32 %v8624, %v8625
    %v8627 = vrot.slane %v8626, 2
    %v8628 = vmax.f32 %v8626, %v8627
    %v8629 = vrot.slane %v8628, 1
    %v8630 = vmax.f32 %v8628, %v8629
    %v8631 = vsel %vm7916, %v7011, -inf
    %v8632 = vrot.slane %v8631, 4
    %v8633 = vmax.f32 %v8631, %v8632
    %v8634 = vrot.slane %v8633, 2
    %v8635 = vmax.f32 %v8633, %v8634
    %v8636 = vrot.slane %v8635, 1
    %v8637 = vmax.f32 %v8635, %v8636
    %v8638 = vsel %vm7916, %v7013, -inf
    %v8639 = vrot.slane %v8638, 4
    %v8640 = vmax.f32 %v8638, %v8639
    %v8641 = vrot.slane %v8640, 2
    %v8642 = vmax.f32 %v8640, %v8641
    %v8643 = vrot.slane %v8642, 1
    %v8644 = vmax.f32 %v8642, %v8643
    %v8645 = vsel %vm7916, %v7021, -inf
    %v8646 = vrot.slane %v8645, 4
    %v8647 = vmax.f32 %v8645, %v8646
    %v8648 = vrot.slane %v8647, 2
    %v8649 = vmax.f32 %v8647, %v8648
    %v8650 = vrot.slane %v8649, 1
    %v8651 = vmax.f32 %v8649, %v8650
    %v8652 = vsel %vm7916, %v7029, -inf
    %v8653 = vrot.slane %v8652, 4
    %v8654 = vmax.f32 %v8652, %v8653
    %v8655 = vrot.slane %v8654, 2
    %v8656 = vmax.f32 %v8654, %v8655
    %v8657 = vrot.slane %v8656, 1
    %v8658 = vmax.f32 %v8656, %v8657
    %v8659 = vsel %vm7916, %v7028, -inf
    %v8660 = vrot.slane %v8659, 4
    %v8661 = vmax.f32 %v8659, %v8660
    %v8662 = vrot.slane %v8661, 2
    %v8663 = vmax.f32 %v8661, %v8662
    %v8664 = vrot.slane %v8663, 1
    %v8665 = vmax.f32 %v8663, %v8664
    %v8666 = vsel %vm7916, %v7030, -inf
    %v8667 = vrot.slane %v8666, 4
    %v8668 = vmax.f32 %v8666, %v8667
    %v8669 = vrot.slane %v8668, 2
    %v8670 = vmax.f32 %v8668, %v8669
    %v8671 = vrot.slane %v8670, 1
    %v8672 = vmax.f32 %v8670, %v8671
    %v8673 = vsel %vm7916, %v7038, -inf
    %v8674 = vrot.slane %v8673, 4
    %v8675 = vmax.f32 %v8673, %v8674
    %v8676 = vrot.slane %v8675, 2
    %v8677 = vmax.f32 %v8675, %v8676
    %v8678 = vrot.slane %v8677, 1
    %v8679 = vmax.f32 %v8677, %v8678
    %v8680 = vsel %vm7916, %v7046, -inf
    %v8681 = vrot.slane %v8680, 4
    %v8682 = vmax.f32 %v8680, %v8681
    %v8683 = vrot.slane %v8682, 2
    %v8684 = vmax.f32 %v8682, %v8683
    %v8685 = vrot.slane %v8684, 1
    %v8686 = vmax.f32 %v8684, %v8685
    %v8687 = vsel %vm7916, %v7045, -inf
    %v8688 = vrot.slane %v8687, 4
    %v8689 = vmax.f32 %v8687, %v8688
    %v8690 = vrot.slane %v8689, 2
    %v8691 = vmax.f32 %v8689, %v8690
    %v8692 = vrot.slane %v8691, 1
    %v8693 = vmax.f32 %v8691, %v8692
    %v8694 = vsel %vm7916, %v7047, -inf
    %v8695 = vrot.slane %v8694, 4
    %v8696 = vmax.f32 %v8694, %v8695
    %v8697 = vrot.slane %v8696, 2
    %v8698 = vmax.f32 %v8696, %v8697
    %v8699 = vrot.slane %v8698, 1
    %v8700 = vmax.f32 %v8698, %v8699
    %v8701 = vsel %vm7916, %v7055, -inf
    %v8702 = vrot.slane %v8701, 4
    %v8703 = vmax.f32 %v8701, %v8702
    %v8704 = vrot.slane %v8703, 2
    %v8705 = vmax.f32 %v8703, %v8704
    %v8706 = vrot.slane %v8705, 1
    %v8707 = vmax.f32 %v8705, %v8706
    %v8708 = vsel %vm7916, %v7063, -inf
    %v8709 = vrot.slane %v8708, 4
    %v8710 = vmax.f32 %v8708, %v8709
    %v8711 = vrot.slane %v8710, 2
    %v8712 = vmax.f32 %v8710, %v8711
    %v8713 = vrot.slane %v8712, 1
    %v8714 = vmax.f32 %v8712, %v8713
    %v8715 = vsel %vm7916, %v7062, -inf
    %v8716 = vrot.slane %v8715, 4
    %v8717 = vmax.f32 %v8715, %v8716
    %v8718 = vrot.slane %v8717, 2
    %v8719 = vmax.f32 %v8717, %v8718
    %v8720 = vrot.slane %v8719, 1
    %v8721 = vmax.f32 %v8719, %v8720
    %v8722 = vsel %vm7916, %v7064, -inf
    %v8723 = vrot.slane %v8722, 4
    %v8724 = vmax.f32 %v8722, %v8723
    %v8725 = vrot.slane %v8724, 2
    %v8726 = vmax.f32 %v8724, %v8725
    %v8727 = vrot.slane %v8726, 1
    %v8728 = vmax.f32 %v8726, %v8727
    %v8729 = vsel %vm7916, %v7072, -inf
    %v8730 = vrot.slane %v8729, 4
    %v8731 = vmax.f32 %v8729, %v8730
    %v8732 = vrot.slane %v8731, 2
    %v8733 = vmax.f32 %v8731, %v8732
    %v8734 = vrot.slane %v8733, 1
    %v8735 = vmax.f32 %v8733, %v8734
    %v8736 = vsel %vm7916, %v7080, -inf
    %v8737 = vrot.slane %v8736, 4
    %v8738 = vmax.f32 %v8736, %v8737
    %v8739 = vrot.slane %v8738, 2
    %v8740 = vmax.f32 %v8738, %v8739
    %v8741 = vrot.slane %v8740, 1
    %v8742 = vmax.f32 %v8740, %v8741
    %v8743 = vsel %vm7916, %v7079, -inf
    %v8744 = vrot.slane %v8743, 4
    %v8745 = vmax.f32 %v8743, %v8744
    %v8746 = vrot.slane %v8745, 2
    %v8747 = vmax.f32 %v8745, %v8746
    %v8748 = vrot.slane %v8747, 1
    %v8749 = vmax.f32 %v8747, %v8748
    %v8750 = vsel %vm7916, %v7081, -inf
    %v8751 = vrot.slane %v8750, 4
    %v8752 = vmax.f32 %v8750, %v8751
    %v8753 = vrot.slane %v8752, 2
    %v8754 = vmax.f32 %v8752, %v8753
    %v8755 = vrot.slane %v8754, 1
    %v8756 = vmax.f32 %v8754, %v8755
    %v8757 = vsel %vm7916, %v7089, -inf
    %v8758 = vrot.slane %v8757, 4
    %v8759 = vmax.f32 %v8757, %v8758
    %v8760 = vrot.slane %v8759, 2
    %v8761 = vmax.f32 %v8759, %v8760
    %v8762 = vrot.slane %v8761, 1
    %v8763 = vmax.f32 %v8761, %v8762
    %v8764 = vsel %vm7916, %v7097, -inf
    %v8765 = vrot.slane %v8764, 4
    %v8766 = vmax.f32 %v8764, %v8765
    %v8767 = vrot.slane %v8766, 2
    %v8768 = vmax.f32 %v8766, %v8767
    %v8769 = vrot.slane %v8768, 1
    %v8770 = vmax.f32 %v8768, %v8769
    %v8771 = vsel %vm7916, %v7096, -inf
    %v8772 = vrot.slane %v8771, 4
    %v8773 = vmax.f32 %v8771, %v8772
    %v8774 = vrot.slane %v8773, 2
    %v8775 = vmax.f32 %v8773, %v8774
    %v8776 = vrot.slane %v8775, 1
    %v8777 = vmax.f32 %v8775, %v8776
    %v8778 = vsel %vm7916, %v7098, -inf
    %v8779 = vrot.slane %v8778, 4
    %v8780 = vmax.f32 %v8778, %v8779
    %v8781 = vrot.slane %v8780, 2
    %v8782 = vmax.f32 %v8780, %v8781
    %v8783 = vrot.slane %v8782, 1
    %v8784 = vmax.f32 %v8782, %v8783
    %v8785 = vsel %vm7916, %v7106, -inf
    %v8786 = vrot.slane %v8785, 4
    %v8787 = vmax.f32 %v8785, %v8786
    %v8788 = vrot.slane %v8787, 2
    %v8789 = vmax.f32 %v8787, %v8788
    %v8790 = vrot.slane %v8789, 1
    %v8791 = vmax.f32 %v8789, %v8790
    %v8792 = vsel %vm7916, %v7114, -inf
    %v8793 = vrot.slane %v8792, 4
    %v8794 = vmax.f32 %v8792, %v8793
    %v8795 = vrot.slane %v8794, 2
    %v8796 = vmax.f32 %v8794, %v8795
    %v8797 = vrot.slane %v8796, 1
    %v8798 = vmax.f32 %v8796, %v8797
    %v8799 = vsel %vm7916, %v7113, -inf
    %v8800 = vrot.slane %v8799, 4
    %v8801 = vmax.f32 %v8799, %v8800
    %v8802 = vrot.slane %v8801, 2
    %v8803 = vmax.f32 %v8801, %v8802
    %v8804 = vrot.slane %v8803, 1
    %v8805 = vmax.f32 %v8803, %v8804
    %v8806 = vsel %vm7916, %v7115, -inf
    %v8807 = vrot.slane %v8806, 4
    %v8808 = vmax.f32 %v8806, %v8807
    %v8809 = vrot.slane %v8808, 2
    %v8810 = vmax.f32 %v8808, %v8809
    %v8811 = vrot.slane %v8810, 1
    %v8812 = vmax.f32 %v8810, %v8811
    %v8813 = vsel %vm7916, %v7123, -inf
    %v8814 = vrot.slane %v8813, 4
    %v8815 = vmax.f32 %v8813, %v8814
    %v8816 = vrot.slane %v8815, 2
    %v8817 = vmax.f32 %v8815, %v8816
    %v8818 = vrot.slane %v8817, 1
    %v8819 = vmax.f32 %v8817, %v8818
    %v8820 = vsel %vm7916, %v7131, -inf
    %v8821 = vrot.slane %v8820, 4
    %v8822 = vmax.f32 %v8820, %v8821
    %v8823 = vrot.slane %v8822, 2
    %v8824 = vmax.f32 %v8822, %v8823
    %v8825 = vrot.slane %v8824, 1
    %v8826 = vmax.f32 %v8824, %v8825
    %v8827 = vsel %vm7916, %v7130, -inf
    %v8828 = vrot.slane %v8827, 4
    %v8829 = vmax.f32 %v8827, %v8828
    %v8830 = vrot.slane %v8829, 2
    %v8831 = vmax.f32 %v8829, %v8830
    %v8832 = vrot.slane %v8831, 1
    %v8833 = vmax.f32 %v8831, %v8832
    %v8834 = vsel %vm7916, %v7132, -inf
    %v8835 = vrot.slane %v8834, 4
    %v8836 = vmax.f32 %v8834, %v8835
    %v8837 = vrot.slane %v8836, 2
    %v8838 = vmax.f32 %v8836, %v8837
    %v8839 = vrot.slane %v8838, 1
    %v8840 = vmax.f32 %v8838, %v8839
    %v8841 = vsel %vm7916, %v7140, -inf
    %v8842 = vrot.slane %v8841, 4
    %v8843 = vmax.f32 %v8841, %v8842
    %v8844 = vrot.slane %v8843, 2
    %v8845 = vmax.f32 %v8843, %v8844
    %v8846 = vrot.slane %v8845, 1
    %v8847 = vmax.f32 %v8845, %v8846
    %v8848 = vsel %vm7916, %v7148, -inf
    %v8849 = vrot.slane %v8848, 4
    %v8850 = vmax.f32 %v8848, %v8849
    %v8851 = vrot.slane %v8850, 2
    %v8852 = vmax.f32 %v8850, %v8851
    %v8853 = vrot.slane %v8852, 1
    %v8854 = vmax.f32 %v8852, %v8853
    %v8855 = vsel %vm7916, %v7147, -inf
    %v8856 = vrot.slane %v8855, 4
    %v8857 = vmax.f32 %v8855, %v8856
    %v8858 = vrot.slane %v8857, 2
    %v8859 = vmax.f32 %v8857, %v8858
    %v8860 = vrot.slane %v8859, 1
    %v8861 = vmax.f32 %v8859, %v8860
    %v8862 = vsel %vm7916, %v7149, -inf
    %v8863 = vrot.slane %v8862, 4
    %v8864 = vmax.f32 %v8862, %v8863
    %v8865 = vrot.slane %v8864, 2
    %v8866 = vmax.f32 %v8864, %v8865
    %v8867 = vrot.slane %v8866, 1
    %v8868 = vmax.f32 %v8866, %v8867
    %v8869 = vsel %vm7916, %v7157, -inf
    %v8870 = vrot.slane %v8869, 4
    %v8871 = vmax.f32 %v8869, %v8870
    %v8872 = vrot.slane %v8871, 2
    %v8873 = vmax.f32 %v8871, %v8872
    %v8874 = vrot.slane %v8873, 1
    %v8875 = vmax.f32 %v8873, %v8874
    %v8876 = vsel %vm7916, %v7165, -inf
    %v8877 = vrot.slane %v8876, 4
    %v8878 = vmax.f32 %v8876, %v8877
    %v8879 = vrot.slane %v8878, 2
    %v8880 = vmax.f32 %v8878, %v8879
    %v8881 = vrot.slane %v8880, 1
    %v8882 = vmax.f32 %v8880, %v8881
    %v8883 = vsel %vm7916, %v7164, -inf
    %v8884 = vrot.slane %v8883, 4
    %v8885 = vmax.f32 %v8883, %v8884
    %v8886 = vrot.slane %v8885, 2
    %v8887 = vmax.f32 %v8885, %v8886
    %v8888 = vrot.slane %v8887, 1
    %v8889 = vmax.f32 %v8887, %v8888
    %v8890 = vsel %vm7916, %v7166, -inf
    %v8891 = vrot.slane %v8890, 4
    %v8892 = vmax.f32 %v8890, %v8891
    %v8893 = vrot.slane %v8892, 2
    %v8894 = vmax.f32 %v8892, %v8893
    %v8895 = vrot.slane %v8894, 1
    %v8896 = vmax.f32 %v8894, %v8895
    %v8897 = vsel %vm7916, %v7174, -inf
    %v8898 = vrot.slane %v8897, 4
    %v8899 = vmax.f32 %v8897, %v8898
    %v8900 = vrot.slane %v8899, 2
    %v8901 = vmax.f32 %v8899, %v8900
    %v8902 = vrot.slane %v8901, 1
    %v8903 = vmax.f32 %v8901, %v8902
    %v8904 = vsel %vm7916, %v7182, -inf
    %v8905 = vrot.slane %v8904, 4
    %v8906 = vmax.f32 %v8904, %v8905
    %v8907 = vrot.slane %v8906, 2
    %v8908 = vmax.f32 %v8906, %v8907
    %v8909 = vrot.slane %v8908, 1
    %v8910 = vmax.f32 %v8908, %v8909
    %v8911 = vsel %vm7916, %v7181, -inf
    %v8912 = vrot.slane %v8911, 4
    %v8913 = vmax.f32 %v8911, %v8912
    %v8914 = vrot.slane %v8913, 2
    %v8915 = vmax.f32 %v8913, %v8914
    %v8916 = vrot.slane %v8915, 1
    %v8917 = vmax.f32 %v8915, %v8916
    %v8918 = vsel %vm7916, %v7183, -inf
    %v8919 = vrot.slane %v8918, 4
    %v8920 = vmax.f32 %v8918, %v8919
    %v8921 = vrot.slane %v8920, 2
    %v8922 = vmax.f32 %v8920, %v8921
    %v8923 = vrot.slane %v8922, 1
    %v8924 = vmax.f32 %v8922, %v8923
    %v8925 = vsel %vm7916, %v7191, -inf
    %v8926 = vrot.slane %v8925, 4
    %v8927 = vmax.f32 %v8925, %v8926
    %v8928 = vrot.slane %v8927, 2
    %v8929 = vmax.f32 %v8927, %v8928
    %v8930 = vrot.slane %v8929, 1
    %v8931 = vmax.f32 %v8929, %v8930
    %v8932 = vsel %vm7916, %v7199, -inf
    %v8933 = vrot.slane %v8932, 4
    %v8934 = vmax.f32 %v8932, %v8933
    %v8935 = vrot.slane %v8934, 2
    %v8936 = vmax.f32 %v8934, %v8935
    %v8937 = vrot.slane %v8936, 1
    %v8938 = vmax.f32 %v8936, %v8937
    %v8939 = vsel %vm7916, %v7198, -inf
    %v8940 = vrot.slane %v8939, 4
    %v8941 = vmax.f32 %v8939, %v8940
    %v8942 = vrot.slane %v8941, 2
    %v8943 = vmax.f32 %v8941, %v8942
    %v8944 = vrot.slane %v8943, 1
    %v8945 = vmax.f32 %v8943, %v8944
    %v8946 = vsel %vm7916, %v7200, -inf
    %v8947 = vrot.slane %v8946, 4
    %v8948 = vmax.f32 %v8946, %v8947
    %v8949 = vrot.slane %v8948, 2
    %v8950 = vmax.f32 %v8948, %v8949
    %v8951 = vrot.slane %v8950, 1
    %v8952 = vmax.f32 %v8950, %v8951
    %v8953 = vsel %vm7916, %v7208, -inf
    %v8954 = vrot.slane %v8953, 4
    %v8955 = vmax.f32 %v8953, %v8954
    %v8956 = vrot.slane %v8955, 2
    %v8957 = vmax.f32 %v8955, %v8956
    %v8958 = vrot.slane %v8957, 1
    %v8959 = vmax.f32 %v8957, %v8958
    %v8960 = vsel %vm7916, %v7216, -inf
    %v8961 = vrot.slane %v8960, 4
    %v8962 = vmax.f32 %v8960, %v8961
    %v8963 = vrot.slane %v8962, 2
    %v8964 = vmax.f32 %v8962, %v8963
    %v8965 = vrot.slane %v8964, 1
    %v8966 = vmax.f32 %v8964, %v8965
    %v8967 = vsel %vm7916, %v7215, -inf
    %v8968 = vrot.slane %v8967, 4
    %v8969 = vmax.f32 %v8967, %v8968
    %v8970 = vrot.slane %v8969, 2
    %v8971 = vmax.f32 %v8969, %v8970
    %v8972 = vrot.slane %v8971, 1
    %v8973 = vmax.f32 %v8971, %v8972
    %v8974 = vsel %vm7916, %v7217, -inf
    %v8975 = vrot.slane %v8974, 4
    %v8976 = vmax.f32 %v8974, %v8975
    %v8977 = vrot.slane %v8976, 2
    %v8978 = vmax.f32 %v8976, %v8977
    %v8979 = vrot.slane %v8978, 1
    %v8980 = vmax.f32 %v8978, %v8979
    %v8981 = vsel %vm7916, %v7225, -inf
    %v8982 = vrot.slane %v8981, 4
    %v8983 = vmax.f32 %v8981, %v8982
    %v8984 = vrot.slane %v8983, 2
    %v8985 = vmax.f32 %v8983, %v8984
    %v8986 = vrot.slane %v8985, 1
    %v8987 = vmax.f32 %v8985, %v8986
    %v8988 = vsel %vm7916, %v7233, -inf
    %v8989 = vrot.slane %v8988, 4
    %v8990 = vmax.f32 %v8988, %v8989
    %v8991 = vrot.slane %v8990, 2
    %v8992 = vmax.f32 %v8990, %v8991
    %v8993 = vrot.slane %v8992, 1
    %v8994 = vmax.f32 %v8992, %v8993
    %v8995 = vsel %vm7916, %v7232, -inf
    %v8996 = vrot.slane %v8995, 4
    %v8997 = vmax.f32 %v8995, %v8996
    %v8998 = vrot.slane %v8997, 2
    %v8999 = vmax.f32 %v8997, %v8998
    %v9000 = vrot.slane %v8999, 1
    %v9001 = vmax.f32 %v8999, %v9000
    %v9002 = vsel %vm7916, %v7234, -inf
    %v9003 = vrot.slane %v9002, 4
    %v9004 = vmax.f32 %v9002, %v9003
    %v9005 = vrot.slane %v9004, 2
    %v9006 = vmax.f32 %v9004, %v9005
    %v9007 = vrot.slane %v9006, 1
    %v9008 = vmax.f32 %v9006, %v9007
    %v9009 = vsel %vm7916, %v7242, -inf
    %v9010 = vrot.slane %v9009, 4
    %v9011 = vmax.f32 %v9009, %v9010
    %v9012 = vrot.slane %v9011, 2
    %v9013 = vmax.f32 %v9011, %v9012
    %v9014 = vrot.slane %v9013, 1
    %v9015 = vmax.f32 %v9013, %v9014
    %v9016 = vsel %vm7916, %v7250, -inf
    %v9017 = vrot.slane %v9016, 4
    %v9018 = vmax.f32 %v9016, %v9017
    %v9019 = vrot.slane %v9018, 2
    %v9020 = vmax.f32 %v9018, %v9019
    %v9021 = vrot.slane %v9020, 1
    %v9022 = vmax.f32 %v9020, %v9021
    %v9023 = vsel %vm7916, %v7249, -inf
    %v9024 = vrot.slane %v9023, 4
    %v9025 = vmax.f32 %v9023, %v9024
    %v9026 = vrot.slane %v9025, 2
    %v9027 = vmax.f32 %v9025, %v9026
    %v9028 = vrot.slane %v9027, 1
    %v9029 = vmax.f32 %v9027, %v9028
    %v9030 = vsel %vm7916, %v7251, -inf
    %v9031 = vrot.slane %v9030, 4
    %v9032 = vmax.f32 %v9030, %v9031
    %v9033 = vrot.slane %v9032, 2
    %v9034 = vmax.f32 %v9032, %v9033
    %v9035 = vrot.slane %v9034, 1
    %v9036 = vmax.f32 %v9034, %v9035
    %v9037 = vsel %vm7916, %v7259, -inf
    %v9038 = vrot.slane %v9037, 4
    %v9039 = vmax.f32 %v9037, %v9038
    %v9040 = vrot.slane %v9039, 2
    %v9041 = vmax.f32 %v9039, %v9040
    %v9042 = vrot.slane %v9041, 1
    %v9043 = vmax.f32 %v9041, %v9042
    %v9044 = vsel %vm7916, %v7267, -inf
    %v9045 = vrot.slane %v9044, 4
    %v9046 = vmax.f32 %v9044, %v9045
    %v9047 = vrot.slane %v9046, 2
    %v9048 = vmax.f32 %v9046, %v9047
    %v9049 = vrot.slane %v9048, 1
    %v9050 = vmax.f32 %v9048, %v9049
    %v9051 = vsel %vm7916, %v7266, -inf
    %v9052 = vrot.slane %v9051, 4
    %v9053 = vmax.f32 %v9051, %v9052
    %v9054 = vrot.slane %v9053, 2
    %v9055 = vmax.f32 %v9053, %v9054
    %v9056 = vrot.slane %v9055, 1
    %v9057 = vmax.f32 %v9055, %v9056
    %v9058 = vsel %vm7916, %v7268, -inf
    %v9059 = vrot.slane %v9058, 4
    %v9060 = vmax.f32 %v9058, %v9059
    %v9061 = vrot.slane %v9060, 2
    %v9062 = vmax.f32 %v9060, %v9061
    %v9063 = vrot.slane %v9062, 1
    %v9064 = vmax.f32 %v9062, %v9063
    %v9065 = vsel %vm7916, %v7276, -inf
    %v9066 = vrot.slane %v9065, 4
    %v9067 = vmax.f32 %v9065, %v9066
    %v9068 = vrot.slane %v9067, 2
    %v9069 = vmax.f32 %v9067, %v9068
    %v9070 = vrot.slane %v9069, 1
    %v9071 = vmax.f32 %v9069, %v9070
    %v9072 = vsel %vm7916, %v7284, -inf
    %v9073 = vrot.slane %v9072, 4
    %v9074 = vmax.f32 %v9072, %v9073
    %v9075 = vrot.slane %v9074, 2
    %v9076 = vmax.f32 %v9074, %v9075
    %v9077 = vrot.slane %v9076, 1
    %v9078 = vmax.f32 %v9076, %v9077
    %v9079 = vsel %vm7916, %v7283, -inf
    %v9080 = vrot.slane %v9079, 4
    %v9081 = vmax.f32 %v9079, %v9080
    %v9082 = vrot.slane %v9081, 2
    %v9083 = vmax.f32 %v9081, %v9082
    %v9084 = vrot.slane %v9083, 1
    %v9085 = vmax.f32 %v9083, %v9084
    %v9086 = vsel %vm7916, %v7285, -inf
    %v9087 = vrot.slane %v9086, 4
    %v9088 = vmax.f32 %v9086, %v9087
    %v9089 = vrot.slane %v9088, 2
    %v9090 = vmax.f32 %v9088, %v9089
    %v9091 = vrot.slane %v9090, 1
    %v9092 = vmax.f32 %v9090, %v9091
    %v9093 = vsel %vm7916, %v7293, -inf
    %v9094 = vrot.slane %v9093, 4
    %v9095 = vmax.f32 %v9093, %v9094
    %v9096 = vrot.slane %v9095, 2
    %v9097 = vmax.f32 %v9095, %v9096
    %v9098 = vrot.slane %v9097, 1
    %v9099 = vmax.f32 %v9097, %v9098
    %v9100 = vsel %vm7916, %v7301, -inf
    %v9101 = vrot.slane %v9100, 4
    %v9102 = vmax.f32 %v9100, %v9101
    %v9103 = vrot.slane %v9102, 2
    %v9104 = vmax.f32 %v9102, %v9103
    %v9105 = vrot.slane %v9104, 1
    %v9106 = vmax.f32 %v9104, %v9105
    %v9107 = vsel %vm7916, %v7300, -inf
    %v9108 = vrot.slane %v9107, 4
    %v9109 = vmax.f32 %v9107, %v9108
    %v9110 = vrot.slane %v9109, 2
    %v9111 = vmax.f32 %v9109, %v9110
    %v9112 = vrot.slane %v9111, 1
    %v9113 = vmax.f32 %v9111, %v9112
    %v9114 = vsel %vm7916, %v7302, -inf
    %v9115 = vrot.slane %v9114, 4
    %v9116 = vmax.f32 %v9114, %v9115
    %v9117 = vrot.slane %v9116, 2
    %v9118 = vmax.f32 %v9116, %v9117
    %v9119 = vrot.slane %v9118, 1
    %v9120 = vmax.f32 %v9118, %v9119
    %v9121 = vsel %vm7916, %v7310, -inf
    %v9122 = vrot.slane %v9121, 4
    %v9123 = vmax.f32 %v9121, %v9122
    %v9124 = vrot.slane %v9123, 2
    %v9125 = vmax.f32 %v9123, %v9124
    %v9126 = vrot.slane %v9125, 1
    %v9127 = vmax.f32 %v9125, %v9126
    %v9128 = vsel %vm7916, %v7318, -inf
    %v9129 = vrot.slane %v9128, 4
    %v9130 = vmax.f32 %v9128, %v9129
    %v9131 = vrot.slane %v9130, 2
    %v9132 = vmax.f32 %v9130, %v9131
    %v9133 = vrot.slane %v9132, 1
    %v9134 = vmax.f32 %v9132, %v9133
    %v9135 = vsel %vm7916, %v7317, -inf
    %v9136 = vrot.slane %v9135, 4
    %v9137 = vmax.f32 %v9135, %v9136
    %v9138 = vrot.slane %v9137, 2
    %v9139 = vmax.f32 %v9137, %v9138
    %v9140 = vrot.slane %v9139, 1
    %v9141 = vmax.f32 %v9139, %v9140
    %v9142 = vsel %vm7916, %v7319, -inf
    %v9143 = vrot.slane %v9142, 4
    %v9144 = vmax.f32 %v9142, %v9143
    %v9145 = vrot.slane %v9144, 2
    %v9146 = vmax.f32 %v9144, %v9145
    %v9147 = vrot.slane %v9146, 1
    %v9148 = vmax.f32 %v9146, %v9147
    %v9149 = vsel %vm7916, %v7327, -inf
    %v9150 = vrot.slane %v9149, 4
    %v9151 = vmax.f32 %v9149, %v9150
    %v9152 = vrot.slane %v9151, 2
    %v9153 = vmax.f32 %v9151, %v9152
    %v9154 = vrot.slane %v9153, 1
    %v9155 = vmax.f32 %v9153, %v9154
    %v9156 = vsel %vm7916, %v7335, -inf
    %v9157 = vrot.slane %v9156, 4
    %v9158 = vmax.f32 %v9156, %v9157
    %v9159 = vrot.slane %v9158, 2
    %v9160 = vmax.f32 %v9158, %v9159
    %v9161 = vrot.slane %v9160, 1
    %v9162 = vmax.f32 %v9160, %v9161
    %v9163 = vsel %vm7916, %v7334, -inf
    %v9164 = vrot.slane %v9163, 4
    %v9165 = vmax.f32 %v9163, %v9164
    %v9166 = vrot.slane %v9165, 2
    %v9167 = vmax.f32 %v9165, %v9166
    %v9168 = vrot.slane %v9167, 1
    %v9169 = vmax.f32 %v9167, %v9168
    %v9170 = vsel %vm7916, %v7336, -inf
    %v9171 = vrot.slane %v9170, 4
    %v9172 = vmax.f32 %v9170, %v9171
    %v9173 = vrot.slane %v9172, 2
    %v9174 = vmax.f32 %v9172, %v9173
    %v9175 = vrot.slane %v9174, 1
    %v9176 = vmax.f32 %v9174, %v9175
    %v9177 = vsel %vm7916, %v7344, -inf
    %v9178 = vrot.slane %v9177, 4
    %v9179 = vmax.f32 %v9177, %v9178
    %v9180 = vrot.slane %v9179, 2
    %v9181 = vmax.f32 %v9179, %v9180
    %v9182 = vrot.slane %v9181, 1
    %v9183 = vmax.f32 %v9181, %v9182
    %v9184 = vsel %vm7916, %v7352, -inf
    %v9185 = vrot.slane %v9184, 4
    %v9186 = vmax.f32 %v9184, %v9185
    %v9187 = vrot.slane %v9186, 2
    %v9188 = vmax.f32 %v9186, %v9187
    %v9189 = vrot.slane %v9188, 1
    %v9190 = vmax.f32 %v9188, %v9189
    %v9191 = vsel %vm7916, %v7351, -inf
    %v9192 = vrot.slane %v9191, 4
    %v9193 = vmax.f32 %v9191, %v9192
    %v9194 = vrot.slane %v9193, 2
    %v9195 = vmax.f32 %v9193, %v9194
    %v9196 = vrot.slane %v9195, 1
    %v9197 = vmax.f32 %v9195, %v9196
    %v9198 = vsel %vm7916, %v7353, -inf
    %v9199 = vrot.slane %v9198, 4
    %v9200 = vmax.f32 %v9198, %v9199
    %v9201 = vrot.slane %v9200, 2
    %v9202 = vmax.f32 %v9200, %v9201
    %v9203 = vrot.slane %v9202, 1
    %v9204 = vmax.f32 %v9202, %v9203
    %v9205 = vsel %vm7916, %v7361, -inf
    %v9206 = vrot.slane %v9205, 4
    %v9207 = vmax.f32 %v9205, %v9206
    %v9208 = vrot.slane %v9207, 2
    %v9209 = vmax.f32 %v9207, %v9208
    %v9210 = vrot.slane %v9209, 1
    %v9211 = vmax.f32 %v9209, %v9210
    %v9212 = vsel %vm7916, %v7369, -inf
    %v9213 = vrot.slane %v9212, 4
    %v9214 = vmax.f32 %v9212, %v9213
    %v9215 = vrot.slane %v9214, 2
    %v9216 = vmax.f32 %v9214, %v9215
    %v9217 = vrot.slane %v9216, 1
    %v9218 = vmax.f32 %v9216, %v9217
    %v9219 = vsel %vm7916, %v7368, -inf
    %v9220 = vrot.slane %v9219, 4
    %v9221 = vmax.f32 %v9219, %v9220
    %v9222 = vrot.slane %v9221, 2
    %v9223 = vmax.f32 %v9221, %v9222
    %v9224 = vrot.slane %v9223, 1
    %v9225 = vmax.f32 %v9223, %v9224
    %v9226 = vsel %vm7916, %v7370, -inf
    %v9227 = vrot.slane %v9226, 4
    %v9228 = vmax.f32 %v9226, %v9227
    %v9229 = vrot.slane %v9228, 2
    %v9230 = vmax.f32 %v9228, %v9229
    %v9231 = vrot.slane %v9230, 1
    %v9232 = vmax.f32 %v9230, %v9231
    %v9233 = vsel %vm7916, %v7378, -inf
    %v9234 = vrot.slane %v9233, 4
    %v9235 = vmax.f32 %v9233, %v9234
    %v9236 = vrot.slane %v9235, 2
    %v9237 = vmax.f32 %v9235, %v9236
    %v9238 = vrot.slane %v9237, 1
    %v9239 = vmax.f32 %v9237, %v9238
    %v9240 = vsel %vm7916, %v7386, -inf
    %v9241 = vrot.slane %v9240, 4
    %v9242 = vmax.f32 %v9240, %v9241
    %v9243 = vrot.slane %v9242, 2
    %v9244 = vmax.f32 %v9242, %v9243
    %v9245 = vrot.slane %v9244, 1
    %v9246 = vmax.f32 %v9244, %v9245
    %v9247 = vsel %vm7916, %v7385, -inf
    %v9248 = vrot.slane %v9247, 4
    %v9249 = vmax.f32 %v9247, %v9248
    %v9250 = vrot.slane %v9249, 2
    %v9251 = vmax.f32 %v9249, %v9250
    %v9252 = vrot.slane %v9251, 1
    %v9253 = vmax.f32 %v9251, %v9252
    %v9254 = vsel %vm7916, %v7387, -inf
    %v9255 = vrot.slane %v9254, 4
    %v9256 = vmax.f32 %v9254, %v9255
    %v9257 = vrot.slane %v9256, 2
    %v9258 = vmax.f32 %v9256, %v9257
    %v9259 = vrot.slane %v9258, 1
    %v9260 = vmax.f32 %v9258, %v9259
    %v9261 = vsel %vm7916, %v7395, -inf
    %v9262 = vrot.slane %v9261, 4
    %v9263 = vmax.f32 %v9261, %v9262
    %v9264 = vrot.slane %v9263, 2
    %v9265 = vmax.f32 %v9263, %v9264
    %v9266 = vrot.slane %v9265, 1
    %v9267 = vmax.f32 %v9265, %v9266
    %v9268 = vsel %vm7916, %v7403, -inf
    %v9269 = vrot.slane %v9268, 4
    %v9270 = vmax.f32 %v9268, %v9269
    %v9271 = vrot.slane %v9270, 2
    %v9272 = vmax.f32 %v9270, %v9271
    %v9273 = vrot.slane %v9272, 1
    %v9274 = vmax.f32 %v9272, %v9273
    %v9275 = vsel %vm7916, %v7402, -inf
    %v9276 = vrot.slane %v9275, 4
    %v9277 = vmax.f32 %v9275, %v9276
    %v9278 = vrot.slane %v9277, 2
    %v9279 = vmax.f32 %v9277, %v9278
    %v9280 = vrot.slane %v9279, 1
    %v9281 = vmax.f32 %v9279, %v9280
    %v9282 = vsel %vm7916, %v7404, -inf
    %v9283 = vrot.slane %v9282, 4
    %v9284 = vmax.f32 %v9282, %v9283
    %v9285 = vrot.slane %v9284, 2
    %v9286 = vmax.f32 %v9284, %v9285
    %v9287 = vrot.slane %v9286, 1
    %v9288 = vmax.f32 %v9286, %v9287
    %v9289 = vsel %vm7916, %v7412, -inf
    %v9290 = vrot.slane %v9289, 4
    %v9291 = vmax.f32 %v9289, %v9290
    %v9292 = vrot.slane %v9291, 2
    %v9293 = vmax.f32 %v9291, %v9292
    %v9294 = vrot.slane %v9293, 1
    %v9295 = vmax.f32 %v9293, %v9294
    %v9296 = vsel %vm7916, %v7420, -inf
    %v9297 = vrot.slane %v9296, 4
    %v9298 = vmax.f32 %v9296, %v9297
    %v9299 = vrot.slane %v9298, 2
    %v9300 = vmax.f32 %v9298, %v9299
    %v9301 = vrot.slane %v9300, 1
    %v9302 = vmax.f32 %v9300, %v9301
    %v9303 = vsel %vm7916, %v7419, -inf
    %v9304 = vrot.slane %v9303, 4
    %v9305 = vmax.f32 %v9303, %v9304
    %v9306 = vrot.slane %v9305, 2
    %v9307 = vmax.f32 %v9305, %v9306
    %v9308 = vrot.slane %v9307, 1
    %v9309 = vmax.f32 %v9307, %v9308
    %v9310 = vsel %vm7916, %v7421, -inf
    %v9311 = vrot.slane %v9310, 4
    %v9312 = vmax.f32 %v9310, %v9311
    %v9313 = vrot.slane %v9312, 2
    %v9314 = vmax.f32 %v9312, %v9313
    %v9315 = vrot.slane %v9314, 1
    %v9316 = vmax.f32 %v9314, %v9315
    %v9317 = vsel %vm7916, %v7429, -inf
    %v9318 = vrot.slane %v9317, 4
    %v9319 = vmax.f32 %v9317, %v9318
    %v9320 = vrot.slane %v9319, 2
    %v9321 = vmax.f32 %v9319, %v9320
    %v9322 = vrot.slane %v9321, 1
    %v9323 = vmax.f32 %v9321, %v9322
    %v9324 = vsel %vm7916, %v7437, -inf
    %v9325 = vrot.slane %v9324, 4
    %v9326 = vmax.f32 %v9324, %v9325
    %v9327 = vrot.slane %v9326, 2
    %v9328 = vmax.f32 %v9326, %v9327
    %v9329 = vrot.slane %v9328, 1
    %v9330 = vmax.f32 %v9328, %v9329
    %v9331 = vsel %vm7916, %v7436, -inf
    %v9332 = vrot.slane %v9331, 4
    %v9333 = vmax.f32 %v9331, %v9332
    %v9334 = vrot.slane %v9333, 2
    %v9335 = vmax.f32 %v9333, %v9334
    %v9336 = vrot.slane %v9335, 1
    %v9337 = vmax.f32 %v9335, %v9336
    %v9338 = vsel %vm7916, %v7438, -inf
    %v9339 = vrot.slane %v9338, 4
    %v9340 = vmax.f32 %v9338, %v9339
    %v9341 = vrot.slane %v9340, 2
    %v9342 = vmax.f32 %v9340, %v9341
    %v9343 = vrot.slane %v9342, 1
    %v9344 = vmax.f32 %v9342, %v9343
    %v9345 = vsel %vm7916, %v7446, -inf
    %v9346 = vrot.slane %v9345, 4
    %v9347 = vmax.f32 %v9345, %v9346
    %v9348 = vrot.slane %v9347, 2
    %v9349 = vmax.f32 %v9347, %v9348
    %v9350 = vrot.slane %v9349, 1
    %v9351 = vmax.f32 %v9349, %v9350
    %v9352 = vsel %vm7916, %v7454, -inf
    %v9353 = vrot.slane %v9352, 4
    %v9354 = vmax.f32 %v9352, %v9353
    %v9355 = vrot.slane %v9354, 2
    %v9356 = vmax.f32 %v9354, %v9355
    %v9357 = vrot.slane %v9356, 1
    %v9358 = vmax.f32 %v9356, %v9357
    %v9359 = vsel %vm7916, %v7453, -inf
    %v9360 = vrot.slane %v9359, 4
    %v9361 = vmax.f32 %v9359, %v9360
    %v9362 = vrot.slane %v9361, 2
    %v9363 = vmax.f32 %v9361, %v9362
    %v9364 = vrot.slane %v9363, 1
    %v9365 = vmax.f32 %v9363, %v9364
    %v9366 = vsel %vm7916, %v7455, -inf
    %v9367 = vrot.slane %v9366, 4
    %v9368 = vmax.f32 %v9366, %v9367
    %v9369 = vrot.slane %v9368, 2
    %v9370 = vmax.f32 %v9368, %v9369
    %v9371 = vrot.slane %v9370, 1
    %v9372 = vmax.f32 %v9370, %v9371
    %v9373 = vsel %vm7916, %v7463, -inf
    %v9374 = vrot.slane %v9373, 4
    %v9375 = vmax.f32 %v9373, %v9374
    %v9376 = vrot.slane %v9375, 2
    %v9377 = vmax.f32 %v9375, %v9376
    %v9378 = vrot.slane %v9377, 1
    %v9379 = vmax.f32 %v9377, %v9378
    %v9380 = vsel %vm7916, %v7471, -inf
    %v9381 = vrot.slane %v9380, 4
    %v9382 = vmax.f32 %v9380, %v9381
    %v9383 = vrot.slane %v9382, 2
    %v9384 = vmax.f32 %v9382, %v9383
    %v9385 = vrot.slane %v9384, 1
    %v9386 = vmax.f32 %v9384, %v9385
    %v9387 = vsel %vm7916, %v7470, -inf
    %v9388 = vrot.slane %v9387, 4
    %v9389 = vmax.f32 %v9387, %v9388
    %v9390 = vrot.slane %v9389, 2
    %v9391 = vmax.f32 %v9389, %v9390
    %v9392 = vrot.slane %v9391, 1
    %v9393 = vmax.f32 %v9391, %v9392
    %v9394 = vsel %vm7916, %v7472, -inf
    %v9395 = vrot.slane %v9394, 4
    %v9396 = vmax.f32 %v9394, %v9395
    %v9397 = vrot.slane %v9396, 2
    %v9398 = vmax.f32 %v9396, %v9397
    %v9399 = vrot.slane %v9398, 1
    %v9400 = vmax.f32 %v9398, %v9399
    %v9401 = vsel %vm7916, %v7480, -inf
    %v9402 = vrot.slane %v9401, 4
    %v9403 = vmax.f32 %v9401, %v9402
    %v9404 = vrot.slane %v9403, 2
    %v9405 = vmax.f32 %v9403, %v9404
    %v9406 = vrot.slane %v9405, 1
    %v9407 = vmax.f32 %v9405, %v9406
    %v9408 = vsel %vm7916, %v7488, -inf
    %v9409 = vrot.slane %v9408, 4
    %v9410 = vmax.f32 %v9408, %v9409
    %v9411 = vrot.slane %v9410, 2
    %v9412 = vmax.f32 %v9410, %v9411
    %v9413 = vrot.slane %v9412, 1
    %v9414 = vmax.f32 %v9412, %v9413
    %v9415 = vsel %vm7916, %v7487, -inf
    %v9416 = vrot.slane %v9415, 4
    %v9417 = vmax.f32 %v9415, %v9416
    %v9418 = vrot.slane %v9417, 2
    %v9419 = vmax.f32 %v9417, %v9418
    %v9420 = vrot.slane %v9419, 1
    %v9421 = vmax.f32 %v9419, %v9420
    %v9422 = vsel %vm7916, %v7489, -inf
    %v9423 = vrot.slane %v9422, 4
    %v9424 = vmax.f32 %v9422, %v9423
    %v9425 = vrot.slane %v9424, 2
    %v9426 = vmax.f32 %v9424, %v9425
    %v9427 = vrot.slane %v9426, 1
    %v9428 = vmax.f32 %v9426, %v9427
    %v9429 = vsel %vm7916, %v7497, -inf
    %v9430 = vrot.slane %v9429, 4
    %v9431 = vmax.f32 %v9429, %v9430
    %v9432 = vrot.slane %v9431, 2
    %v9433 = vmax.f32 %v9431, %v9432
    %v9434 = vrot.slane %v9433, 1
    %v9435 = vmax.f32 %v9433, %v9434
    %v9436 = vsel %vm7916, %v7505, -inf
    %v9437 = vrot.slane %v9436, 4
    %v9438 = vmax.f32 %v9436, %v9437
    %v9439 = vrot.slane %v9438, 2
    %v9440 = vmax.f32 %v9438, %v9439
    %v9441 = vrot.slane %v9440, 1
    %v9442 = vmax.f32 %v9440, %v9441
    %v9443 = vsel %vm7916, %v7504, -inf
    %v9444 = vrot.slane %v9443, 4
    %v9445 = vmax.f32 %v9443, %v9444
    %v9446 = vrot.slane %v9445, 2
    %v9447 = vmax.f32 %v9445, %v9446
    %v9448 = vrot.slane %v9447, 1
    %v9449 = vmax.f32 %v9447, %v9448
    %v9450 = vsel %vm7916, %v7506, -inf
    %v9451 = vrot.slane %v9450, 4
    %v9452 = vmax.f32 %v9450, %v9451
    %v9453 = vrot.slane %v9452, 2
    %v9454 = vmax.f32 %v9452, %v9453
    %v9455 = vrot.slane %v9454, 1
    %v9456 = vmax.f32 %v9454, %v9455
    %v9457 = vsel %vm7916, %v7514, -inf
    %v9458 = vrot.slane %v9457, 4
    %v9459 = vmax.f32 %v9457, %v9458
    %v9460 = vrot.slane %v9459, 2
    %v9461 = vmax.f32 %v9459, %v9460
    %v9462 = vrot.slane %v9461, 1
    %v9463 = vmax.f32 %v9461, %v9462
    %v9464 = vsel %vm7916, %v7522, -inf
    %v9465 = vrot.slane %v9464, 4
    %v9466 = vmax.f32 %v9464, %v9465
    %v9467 = vrot.slane %v9466, 2
    %v9468 = vmax.f32 %v9466, %v9467
    %v9469 = vrot.slane %v9468, 1
    %v9470 = vmax.f32 %v9468, %v9469
    %v9471 = vsel %vm7916, %v7521, -inf
    %v9472 = vrot.slane %v9471, 4
    %v9473 = vmax.f32 %v9471, %v9472
    %v9474 = vrot.slane %v9473, 2
    %v9475 = vmax.f32 %v9473, %v9474
    %v9476 = vrot.slane %v9475, 1
    %v9477 = vmax.f32 %v9475, %v9476
    %v9478 = vsel %vm7916, %v7523, -inf
    %v9479 = vrot.slane %v9478, 4
    %v9480 = vmax.f32 %v9478, %v9479
    %v9481 = vrot.slane %v9480, 2
    %v9482 = vmax.f32 %v9480, %v9481
    %v9483 = vrot.slane %v9482, 1
    %v9484 = vmax.f32 %v9482, %v9483
    %v9485 = vsel %vm7916, %v7531, -inf
    %v9486 = vrot.slane %v9485, 4
    %v9487 = vmax.f32 %v9485, %v9486
    %v9488 = vrot.slane %v9487, 2
    %v9489 = vmax.f32 %v9487, %v9488
    %v9490 = vrot.slane %v9489, 1
    %v9491 = vmax.f32 %v9489, %v9490
    %v9492 = vsel %vm7916, %v7539, -inf
    %v9493 = vrot.slane %v9492, 4
    %v9494 = vmax.f32 %v9492, %v9493
    %v9495 = vrot.slane %v9494, 2
    %v9496 = vmax.f32 %v9494, %v9495
    %v9497 = vrot.slane %v9496, 1
    %v9498 = vmax.f32 %v9496, %v9497
    %v9499 = vsel %vm7916, %v7538, -inf
    %v9500 = vrot.slane %v9499, 4
    %v9501 = vmax.f32 %v9499, %v9500
    %v9502 = vrot.slane %v9501, 2
    %v9503 = vmax.f32 %v9501, %v9502
    %v9504 = vrot.slane %v9503, 1
    %v9505 = vmax.f32 %v9503, %v9504
    %v9506 = vsel %vm7916, %v7540, -inf
    %v9507 = vrot.slane %v9506, 4
    %v9508 = vmax.f32 %v9506, %v9507
    %v9509 = vrot.slane %v9508, 2
    %v9510 = vmax.f32 %v9508, %v9509
    %v9511 = vrot.slane %v9510, 1
    %v9512 = vmax.f32 %v9510, %v9511
    %v9513 = vsel %vm7916, %v7548, -inf
    %v9514 = vrot.slane %v9513, 4
    %v9515 = vmax.f32 %v9513, %v9514
    %v9516 = vrot.slane %v9515, 2
    %v9517 = vmax.f32 %v9515, %v9516
    %v9518 = vrot.slane %v9517, 1
    %v9519 = vmax.f32 %v9517, %v9518
    %v9520 = vsel %vm7916, %v7556, -inf
    %v9521 = vrot.slane %v9520, 4
    %v9522 = vmax.f32 %v9520, %v9521
    %v9523 = vrot.slane %v9522, 2
    %v9524 = vmax.f32 %v9522, %v9523
    %v9525 = vrot.slane %v9524, 1
    %v9526 = vmax.f32 %v9524, %v9525
    %v9527 = vsel %vm7916, %v7555, -inf
    %v9528 = vrot.slane %v9527, 4
    %v9529 = vmax.f32 %v9527, %v9528
    %v9530 = vrot.slane %v9529, 2
    %v9531 = vmax.f32 %v9529, %v9530
    %v9532 = vrot.slane %v9531, 1
    %v9533 = vmax.f32 %v9531, %v9532
    %v9534 = vsel %vm7916, %v7557, -inf
    %v9535 = vrot.slane %v9534, 4
    %v9536 = vmax.f32 %v9534, %v9535
    %v9537 = vrot.slane %v9536, 2
    %v9538 = vmax.f32 %v9536, %v9537
    %v9539 = vrot.slane %v9538, 1
    %v9540 = vmax.f32 %v9538, %v9539
    %v9541 = vsel %vm7916, %v7565, -inf
    %v9542 = vrot.slane %v9541, 4
    %v9543 = vmax.f32 %v9541, %v9542
    %v9544 = vrot.slane %v9543, 2
    %v9545 = vmax.f32 %v9543, %v9544
    %v9546 = vrot.slane %v9545, 1
    %v9547 = vmax.f32 %v9545, %v9546
    %v9548 = vsel %vm7916, %v7573, -inf
    %v9549 = vrot.slane %v9548, 4
    %v9550 = vmax.f32 %v9548, %v9549
    %v9551 = vrot.slane %v9550, 2
    %v9552 = vmax.f32 %v9550, %v9551
    %v9553 = vrot.slane %v9552, 1
    %v9554 = vmax.f32 %v9552, %v9553
    %v9555 = vsel %vm7916, %v7572, -inf
    %v9556 = vrot.slane %v9555, 4
    %v9557 = vmax.f32 %v9555, %v9556
    %v9558 = vrot.slane %v9557, 2
    %v9559 = vmax.f32 %v9557, %v9558
    %v9560 = vrot.slane %v9559, 1
    %v9561 = vmax.f32 %v9559, %v9560
    %v9562 = vsel %vm7916, %v7574, -inf
    %v9563 = vrot.slane %v9562, 4
    %v9564 = vmax.f32 %v9562, %v9563
    %v9565 = vrot.slane %v9564, 2
    %v9566 = vmax.f32 %v9564, %v9565
    %v9567 = vrot.slane %v9566, 1
    %v9568 = vmax.f32 %v9566, %v9567
    %v9569 = vsel %vm7916, %v7582, -inf
    %v9570 = vrot.slane %v9569, 4
    %v9571 = vmax.f32 %v9569, %v9570
    %v9572 = vrot.slane %v9571, 2
    %v9573 = vmax.f32 %v9571, %v9572
    %v9574 = vrot.slane %v9573, 1
    %v9575 = vmax.f32 %v9573, %v9574
    %v9576 = vsel %vm7916, %v7590, -inf
    %v9577 = vrot.slane %v9576, 4
    %v9578 = vmax.f32 %v9576, %v9577
    %v9579 = vrot.slane %v9578, 2
    %v9580 = vmax.f32 %v9578, %v9579
    %v9581 = vrot.slane %v9580, 1
    %v9582 = vmax.f32 %v9580, %v9581
    %v9583 = vsel %vm7916, %v7589, -inf
    %v9584 = vrot.slane %v9583, 4
    %v9585 = vmax.f32 %v9583, %v9584
    %v9586 = vrot.slane %v9585, 2
    %v9587 = vmax.f32 %v9585, %v9586
    %v9588 = vrot.slane %v9587, 1
    %v9589 = vmax.f32 %v9587, %v9588
    %v9590 = vsel %vm7916, %v7591, -inf
    %v9591 = vrot.slane %v9590, 4
    %v9592 = vmax.f32 %v9590, %v9591
    %v9593 = vrot.slane %v9592, 2
    %v9594 = vmax.f32 %v9592, %v9593
    %v9595 = vrot.slane %v9594, 1
    %v9596 = vmax.f32 %v9594, %v9595
    %v9597 = vsel %vm7916, %v7599, -inf
    %v9598 = vrot.slane %v9597, 4
    %v9599 = vmax.f32 %v9597, %v9598
    %v9600 = vrot.slane %v9599, 2
    %v9601 = vmax.f32 %v9599, %v9600
    %v9602 = vrot.slane %v9601, 1
    %v9603 = vmax.f32 %v9601, %v9602
    %v9604 = vsel %vm7916, %v7607, -inf
    %v9605 = vrot.slane %v9604, 4
    %v9606 = vmax.f32 %v9604, %v9605
    %v9607 = vrot.slane %v9606, 2
    %v9608 = vmax.f32 %v9606, %v9607
    %v9609 = vrot.slane %v9608, 1
    %v9610 = vmax.f32 %v9608, %v9609
    %v9611 = vsel %vm7916, %v7606, -inf
    %v9612 = vrot.slane %v9611, 4
    %v9613 = vmax.f32 %v9611, %v9612
    %v9614 = vrot.slane %v9613, 2
    %v9615 = vmax.f32 %v9613, %v9614
    %v9616 = vrot.slane %v9615, 1
    %v9617 = vmax.f32 %v9615, %v9616
    %v9618 = vsel %vm7916, %v7608, -inf
    %v9619 = vrot.slane %v9618, 4
    %v9620 = vmax.f32 %v9618, %v9619
    %v9621 = vrot.slane %v9620, 2
    %v9622 = vmax.f32 %v9620, %v9621
    %v9623 = vrot.slane %v9622, 1
    %v9624 = vmax.f32 %v9622, %v9623
    %v9625 = vsel %vm7916, %v7616, -inf
    %v9626 = vrot.slane %v9625, 4
    %v9627 = vmax.f32 %v9625, %v9626
    %v9628 = vrot.slane %v9627, 2
    %v9629 = vmax.f32 %v9627, %v9628
    %v9630 = vrot.slane %v9629, 1
    %v9631 = vmax.f32 %v9629, %v9630
    %v9632 = vsel %vm7916, %v7624, -inf
    %v9633 = vrot.slane %v9632, 4
    %v9634 = vmax.f32 %v9632, %v9633
    %v9635 = vrot.slane %v9634, 2
    %v9636 = vmax.f32 %v9634, %v9635
    %v9637 = vrot.slane %v9636, 1
    %v9638 = vmax.f32 %v9636, %v9637
    %v9639 = vsel %vm7916, %v7623, -inf
    %v9640 = vrot.slane %v9639, 4
    %v9641 = vmax.f32 %v9639, %v9640
    %v9642 = vrot.slane %v9641, 2
    %v9643 = vmax.f32 %v9641, %v9642
    %v9644 = vrot.slane %v9643, 1
    %v9645 = vmax.f32 %v9643, %v9644
    %v9646 = vsel %vm7916, %v7625, -inf
    %v9647 = vrot.slane %v9646, 4
    %v9648 = vmax.f32 %v9646, %v9647
    %v9649 = vrot.slane %v9648, 2
    %v9650 = vmax.f32 %v9648, %v9649
    %v9651 = vrot.slane %v9650, 1
    %v9652 = vmax.f32 %v9650, %v9651
    %v9653 = vsel %vm7916, %v7633, -inf
    %v9654 = vrot.slane %v9653, 4
    %v9655 = vmax.f32 %v9653, %v9654
    %v9656 = vrot.slane %v9655, 2
    %v9657 = vmax.f32 %v9655, %v9656
    %v9658 = vrot.slane %v9657, 1
    %v9659 = vmax.f32 %v9657, %v9658
    %v9660 = vsel %vm7916, %v7641, -inf
    %v9661 = vrot.slane %v9660, 4
    %v9662 = vmax.f32 %v9660, %v9661
    %v9663 = vrot.slane %v9662, 2
    %v9664 = vmax.f32 %v9662, %v9663
    %v9665 = vrot.slane %v9664, 1
    %v9666 = vmax.f32 %v9664, %v9665
    %v9667 = vsel %vm7916, %v7640, -inf
    %v9668 = vrot.slane %v9667, 4
    %v9669 = vmax.f32 %v9667, %v9668
    %v9670 = vrot.slane %v9669, 2
    %v9671 = vmax.f32 %v9669, %v9670
    %v9672 = vrot.slane %v9671, 1
    %v9673 = vmax.f32 %v9671, %v9672
    %v9674 = vsel %vm7916, %v7642, -inf
    %v9675 = vrot.slane %v9674, 4
    %v9676 = vmax.f32 %v9674, %v9675
    %v9677 = vrot.slane %v9676, 2
    %v9678 = vmax.f32 %v9676, %v9677
    %v9679 = vrot.slane %v9678, 1
    %v9680 = vmax.f32 %v9678, %v9679
    %v9681 = vsel %vm7916, %v7650, -inf
    %v9682 = vrot.slane %v9681, 4
    %v9683 = vmax.f32 %v9681, %v9682
    %v9684 = vrot.slane %v9683, 2
    %v9685 = vmax.f32 %v9683, %v9684
    %v9686 = vrot.slane %v9685, 1
    %v9687 = vmax.f32 %v9685, %v9686
    %v9688 = vsel %vm7916, %v7658, -inf
    %v9689 = vrot.slane %v9688, 4
    %v9690 = vmax.f32 %v9688, %v9689
    %v9691 = vrot.slane %v9690, 2
    %v9692 = vmax.f32 %v9690, %v9691
    %v9693 = vrot.slane %v9692, 1
    %v9694 = vmax.f32 %v9692, %v9693
    %v9695 = vsel %vm7916, %v7657, -inf
    %v9696 = vrot.slane %v9695, 4
    %v9697 = vmax.f32 %v9695, %v9696
    %v9698 = vrot.slane %v9697, 2
    %v9699 = vmax.f32 %v9697, %v9698
    %v9700 = vrot.slane %v9699, 1
    %v9701 = vmax.f32 %v9699, %v9700
    %v9702 = vsel %vm7916, %v7659, -inf
    %v9703 = vrot.slane %v9702, 4
    %v9704 = vmax.f32 %v9702, %v9703
    %v9705 = vrot.slane %v9704, 2
    %v9706 = vmax.f32 %v9704, %v9705
    %v9707 = vrot.slane %v9706, 1
    %v9708 = vmax.f32 %v9706, %v9707
    %v9709 = vpack.c.bf16 %v7923, %v7923
    %v9710 = vpack.c.bf16 %v7930, %v7930
    %v9711 = vpack.c.bf16 %v7937, %v7937
    %v9712 = vpack.c.bf16 %v7944, %v7944
    %v9713 = vpack.c.bf16 %v7951, %v7951
    %v9714 = vpack.c.bf16 %v7958, %v7958
    %v9715 = vpack.c.bf16 %v7965, %v7965
    %v9716 = vpack.c.bf16 %v7972, %v7972
    %v9717 = vpack.c.bf16 %v7979, %v7979
    %v9718 = vpack.c.bf16 %v7986, %v7986
    %v9719 = vpack.c.bf16 %v7993, %v7993
    %v9720 = vpack.c.bf16 %v8000, %v8000
    %v9721 = vpack.c.bf16 %v8007, %v8007
    %v9722 = vpack.c.bf16 %v8014, %v8014
    %v9723 = vpack.c.bf16 %v8021, %v8021
    %v9724 = vpack.c.bf16 %v8028, %v8028
    %v9725 = vpack.c.bf16 %v8035, %v8035
    %v9726 = vpack.c.bf16 %v8042, %v8042
    %v9727 = vpack.c.bf16 %v8049, %v8049
    %v9728 = vpack.c.bf16 %v8056, %v8056
    %v9729 = vpack.c.bf16 %v8063, %v8063
    %v9730 = vpack.c.bf16 %v8070, %v8070
    %v9731 = vpack.c.bf16 %v8077, %v8077
    %v9732 = vpack.c.bf16 %v8084, %v8084
    %v9733 = vpack.c.bf16 %v8091, %v8091
    %v9734 = vpack.c.bf16 %v8098, %v8098
    %v9735 = vpack.c.bf16 %v8105, %v8105
    %v9736 = vpack.c.bf16 %v8112, %v8112
    %v9737 = vpack.c.bf16 %v8119, %v8119
    %v9738 = vpack.c.bf16 %v8126, %v8126
    %v9739 = vpack.c.bf16 %v8133, %v8133
    %v9740 = vpack.c.bf16 %v8140, %v8140
    %v9741 = vpack.c.bf16 %v8147, %v8147
    %v9742 = vpack.c.bf16 %v8154, %v8154
    %v9743 = vpack.c.bf16 %v8161, %v8161
    %v9744 = vpack.c.bf16 %v8168, %v8168
    %v9745 = vpack.c.bf16 %v8175, %v8175
    %v9746 = vpack.c.bf16 %v8182, %v8182
    %v9747 = vpack.c.bf16 %v8189, %v8189
    %v9748 = vpack.c.bf16 %v8196, %v8196
    %v9749 = vpack.c.bf16 %v8203, %v8203
    %v9750 = vpack.c.bf16 %v8210, %v8210
    %v9751 = vpack.c.bf16 %v8217, %v8217
    %v9752 = vpack.c.bf16 %v8224, %v8224
    %v9753 = vpack.c.bf16 %v8231, %v8231
    %v9754 = vpack.c.bf16 %v8238, %v8238
    %v9755 = vpack.c.bf16 %v8245, %v8245
    %v9756 = vpack.c.bf16 %v8252, %v8252
    %v9757 = vpack.c.bf16 %v8259, %v8259
    %v9758 = vpack.c.bf16 %v8266, %v8266
    %v9759 = vpack.c.bf16 %v8273, %v8273
    %v9760 = vpack.c.bf16 %v8280, %v8280
    %v9761 = vpack.c.bf16 %v8287, %v8287
    %v9762 = vpack.c.bf16 %v8294, %v8294
    %v9763 = vpack.c.bf16 %v8301, %v8301
    %v9764 = vpack.c.bf16 %v8308, %v8308
    %v9765 = vpack.c.bf16 %v8315, %v8315
    %v9766 = vpack.c.bf16 %v8322, %v8322
    %v9767 = vpack.c.bf16 %v8329, %v8329
    %v9768 = vpack.c.bf16 %v8336, %v8336
    %v9769 = vpack.c.bf16 %v8343, %v8343
    %v9770 = vpack.c.bf16 %v8350, %v8350
    %v9771 = vpack.c.bf16 %v8357, %v8357
    %v9772 = vpack.c.bf16 %v8364, %v8364
    %v9773 = vpack.c.bf16 %v8371, %v8371
    %v9774 = vpack.c.bf16 %v8378, %v8378
    %v9775 = vpack.c.bf16 %v8385, %v8385
    %v9776 = vpack.c.bf16 %v8392, %v8392
    %v9777 = vpack.c.bf16 %v8399, %v8399
    %v9778 = vpack.c.bf16 %v8406, %v8406
    %v9779 = vpack.c.bf16 %v8413, %v8413
    %v9780 = vpack.c.bf16 %v8420, %v8420
    %v9781 = vpack.c.bf16 %v8427, %v8427
    %v9782 = vpack.c.bf16 %v8434, %v8434
    %v9783 = vpack.c.bf16 %v8441, %v8441
    %v9784 = vpack.c.bf16 %v8448, %v8448
    %v9785 = vpack.c.bf16 %v8455, %v8455
    %v9786 = vpack.c.bf16 %v8462, %v8462
    %v9787 = vpack.c.bf16 %v8469, %v8469
    %v9788 = vpack.c.bf16 %v8476, %v8476
    %v9789 = vpack.c.bf16 %v8483, %v8483
    %v9790 = vpack.c.bf16 %v8490, %v8490
    %v9791 = vpack.c.bf16 %v8497, %v8497
    %v9792 = vpack.c.bf16 %v8504, %v8504
    %v9793 = vpack.c.bf16 %v8511, %v8511
    %v9794 = vpack.c.bf16 %v8518, %v8518
    %v9795 = vpack.c.bf16 %v8525, %v8525
    %v9796 = vpack.c.bf16 %v8532, %v8532
    %v9797 = vpack.c.bf16 %v8539, %v8539
    %v9798 = vpack.c.bf16 %v8546, %v8546
    %v9799 = vpack.c.bf16 %v8553, %v8553
    %v9800 = vpack.c.bf16 %v8560, %v8560
    %v9801 = vpack.c.bf16 %v8567, %v8567
    %v9802 = vpack.c.bf16 %v8574, %v8574
    %v9803 = vpack.c.bf16 %v8581, %v8581
    %v9804 = vpack.c.bf16 %v8588, %v8588
    %v9805 = vpack.c.bf16 %v8595, %v8595
    %v9806 = vpack.c.bf16 %v8602, %v8602
    %v9807 = vpack.c.bf16 %v8609, %v8609
    %v9808 = vpack.c.bf16 %v8616, %v8616
    %v9809 = vpack.c.bf16 %v8623, %v8623
    %v9810 = vpack.c.bf16 %v8630, %v8630
    %v9811 = vpack.c.bf16 %v8637, %v8637
    %v9812 = vpack.c.bf16 %v8644, %v8644
    %v9813 = vpack.c.bf16 %v8651, %v8651
    %v9814 = vpack.c.bf16 %v8658, %v8658
    %v9815 = vpack.c.bf16 %v8665, %v8665
    %v9816 = vpack.c.bf16 %v8672, %v8672
    %v9817 = vpack.c.bf16 %v8679, %v8679
    %v9818 = vpack.c.bf16 %v8686, %v8686
    %v9819 = vpack.c.bf16 %v8693, %v8693
    %v9820 = vpack.c.bf16 %v8700, %v8700
    %v9821 = vpack.c.bf16 %v8707, %v8707
    %v9822 = vpack.c.bf16 %v8714, %v8714
    %v9823 = vpack.c.bf16 %v8721, %v8721
    %v9824 = vpack.c.bf16 %v8728, %v8728
    %v9825 = vpack.c.bf16 %v8735, %v8735
    %v9826 = vpack.c.bf16 %v8742, %v8742
    %v9827 = vpack.c.bf16 %v8749, %v8749
    %v9828 = vpack.c.bf16 %v8756, %v8756
    %v9829 = vpack.c.bf16 %v8763, %v8763
    %v9830 = vpack.c.bf16 %v8770, %v8770
    %v9831 = vpack.c.bf16 %v8777, %v8777
    %v9832 = vpack.c.bf16 %v8784, %v8784
    %v9833 = vpack.c.bf16 %v8791, %v8791
    %v9834 = vpack.c.bf16 %v8798, %v8798
    %v9835 = vpack.c.bf16 %v8805, %v8805
    %v9836 = vpack.c.bf16 %v8812, %v8812
    %v9837 = vpack.c.bf16 %v8819, %v8819
    %v9838 = vpack.c.bf16 %v8826, %v8826
    %v9839 = vpack.c.bf16 %v8833, %v8833
    %v9840 = vpack.c.bf16 %v8840, %v8840
    %v9841 = vpack.c.bf16 %v8847, %v8847
    %v9842 = vpack.c.bf16 %v8854, %v8854
    %v9843 = vpack.c.bf16 %v8861, %v8861
    %v9844 = vpack.c.bf16 %v8868, %v8868
    %v9845 = vpack.c.bf16 %v8875, %v8875
    %v9846 = vpack.c.bf16 %v8882, %v8882
    %v9847 = vpack.c.bf16 %v8889, %v8889
    %v9848 = vpack.c.bf16 %v8896, %v8896
    %v9849 = vpack.c.bf16 %v8903, %v8903
    %v9850 = vpack.c.bf16 %v8910, %v8910
    %v9851 = vpack.c.bf16 %v8917, %v8917
    %v9852 = vpack.c.bf16 %v8924, %v8924
    %v9853 = vpack.c.bf16 %v8931, %v8931
    %v9854 = vpack.c.bf16 %v8938, %v8938
    %v9855 = vpack.c.bf16 %v8945, %v8945
    %v9856 = vpack.c.bf16 %v8952, %v8952
    %v9857 = vpack.c.bf16 %v8959, %v8959
    %v9858 = vpack.c.bf16 %v8966, %v8966
    %v9859 = vpack.c.bf16 %v8973, %v8973
    %v9860 = vpack.c.bf16 %v8980, %v8980
    %v9861 = vpack.c.bf16 %v8987, %v8987
    %v9862 = vpack.c.bf16 %v8994, %v8994
    %v9863 = vpack.c.bf16 %v9001, %v9001
    %v9864 = vpack.c.bf16 %v9008, %v9008
    %v9865 = vpack.c.bf16 %v9015, %v9015
    %v9866 = vpack.c.bf16 %v9022, %v9022
    %v9867 = vpack.c.bf16 %v9029, %v9029
    %v9868 = vpack.c.bf16 %v9036, %v9036
    %v9869 = vpack.c.bf16 %v9043, %v9043
    %v9870 = vpack.c.bf16 %v9050, %v9050
    %v9871 = vpack.c.bf16 %v9057, %v9057
    %v9872 = vpack.c.bf16 %v9064, %v9064
    %v9873 = vpack.c.bf16 %v9071, %v9071
    %v9874 = vpack.c.bf16 %v9078, %v9078
    %v9875 = vpack.c.bf16 %v9085, %v9085
    %v9876 = vpack.c.bf16 %v9092, %v9092
    %v9877 = vpack.c.bf16 %v9099, %v9099
    %v9878 = vpack.c.bf16 %v9106, %v9106
    %v9879 = vpack.c.bf16 %v9113, %v9113
    %v9880 = vpack.c.bf16 %v9120, %v9120
    %v9881 = vpack.c.bf16 %v9127, %v9127
    %v9882 = vpack.c.bf16 %v9134, %v9134
    %v9883 = vpack.c.bf16 %v9141, %v9141
    %v9884 = vpack.c.bf16 %v9148, %v9148
    %v9885 = vpack.c.bf16 %v9155, %v9155
    %v9886 = vpack.c.bf16 %v9162, %v9162
    %v9887 = vpack.c.bf16 %v9169, %v9169
    %v9888 = vpack.c.bf16 %v9176, %v9176
    %v9889 = vpack.c.bf16 %v9183, %v9183
    %v9890 = vpack.c.bf16 %v9190, %v9190
    %v9891 = vpack.c.bf16 %v9197, %v9197
    %v9892 = vpack.c.bf16 %v9204, %v9204
    %v9893 = vpack.c.bf16 %v9211, %v9211
    %v9894 = vpack.c.bf16 %v9218, %v9218
    %v9895 = vpack.c.bf16 %v9225, %v9225
    %v9896 = vpack.c.bf16 %v9232, %v9232
    %v9897 = vpack.c.bf16 %v9239, %v9239
    %v9898 = vpack.c.bf16 %v9246, %v9246
    %v9899 = vpack.c.bf16 %v9253, %v9253
    %v9900 = vpack.c.bf16 %v9260, %v9260
    %v9901 = vpack.c.bf16 %v9267, %v9267
    %v9902 = vpack.c.bf16 %v9274, %v9274
    %v9903 = vpack.c.bf16 %v9281, %v9281
    %v9904 = vpack.c.bf16 %v9288, %v9288
    %v9905 = vpack.c.bf16 %v9295, %v9295
    %v9906 = vpack.c.bf16 %v9302, %v9302
    %v9907 = vpack.c.bf16 %v9309, %v9309
    %v9908 = vpack.c.bf16 %v9316, %v9316
    %v9909 = vpack.c.bf16 %v9323, %v9323
    %v9910 = vpack.c.bf16 %v9330, %v9330
    %v9911 = vpack.c.bf16 %v9337, %v9337
    %v9912 = vpack.c.bf16 %v9344, %v9344
    %v9913 = vpack.c.bf16 %v9351, %v9351
    %v9914 = vpack.c.bf16 %v9358, %v9358
    %v9915 = vpack.c.bf16 %v9365, %v9365
    %v9916 = vpack.c.bf16 %v9372, %v9372
    %v9917 = vpack.c.bf16 %v9379, %v9379
    %v9918 = vpack.c.bf16 %v9386, %v9386
    %v9919 = vpack.c.bf16 %v9393, %v9393
    %v9920 = vpack.c.bf16 %v9400, %v9400
    %v9921 = vpack.c.bf16 %v9407, %v9407
    %v9922 = vpack.c.bf16 %v9414, %v9414
    %v9923 = vpack.c.bf16 %v9421, %v9421
    %v9924 = vpack.c.bf16 %v9428, %v9428
    %v9925 = vpack.c.bf16 %v9435, %v9435
    %v9926 = vpack.c.bf16 %v9442, %v9442
    %v9927 = vpack.c.bf16 %v9449, %v9449
    %v9928 = vpack.c.bf16 %v9456, %v9456
    %v9929 = vpack.c.bf16 %v9463, %v9463
    %v9930 = vpack.c.bf16 %v9470, %v9470
    %v9931 = vpack.c.bf16 %v9477, %v9477
    %v9932 = vpack.c.bf16 %v9484, %v9484
    %v9933 = vpack.c.bf16 %v9491, %v9491
    %v9934 = vpack.c.bf16 %v9498, %v9498
    %v9935 = vpack.c.bf16 %v9505, %v9505
    %v9936 = vpack.c.bf16 %v9512, %v9512
    %v9937 = vpack.c.bf16 %v9519, %v9519
    %v9938 = vpack.c.bf16 %v9526, %v9526
    %v9939 = vpack.c.bf16 %v9533, %v9533
    %v9940 = vpack.c.bf16 %v9540, %v9540
    %v9941 = vpack.c.bf16 %v9547, %v9547
    %v9942 = vpack.c.bf16 %v9554, %v9554
    %v9943 = vpack.c.bf16 %v9561, %v9561
    %v9944 = vpack.c.bf16 %v9568, %v9568
    %v9945 = vpack.c.bf16 %v9575, %v9575
    %v9946 = vpack.c.bf16 %v9582, %v9582
    %v9947 = vpack.c.bf16 %v9589, %v9589
    %v9948 = vpack.c.bf16 %v9596, %v9596
    %v9949 = vpack.c.bf16 %v9603, %v9603
    %v9950 = vpack.c.bf16 %v9610, %v9610
    %v9951 = vpack.c.bf16 %v9617, %v9617
    %v9952 = vpack.c.bf16 %v9624, %v9624
    %v9953 = vpack.c.bf16 %v9631, %v9631
    %v9954 = vpack.c.bf16 %v9638, %v9638
    %v9955 = vpack.c.bf16 %v9645, %v9645
    %v9956 = vpack.c.bf16 %v9652, %v9652
    %v9957 = vpack.c.bf16 %v9659, %v9659
    %v9958 = vpack.c.bf16 %v9666, %v9666
    %v9959 = vpack.c.bf16 %v9673, %v9673
    %v9960 = vpack.c.bf16 %v9680, %v9680
    %v9961 = vpack.c.bf16 %v9687, %v9687
    %v9962 = vpack.c.bf16 %v9694, %v9694
    %v9963 = vpack.c.bf16 %v9701, %v9701
    %v9964 = vpack.c.bf16 %v9708, %v9708
    %v10221 = vunpack.c.l.b16 %v9709
    %v10222 = vunpack.c.l.b16 %v9710
    %v10223 = vunpack.c.l.b16 %v9711
    %v10224 = vunpack.c.l.b16 %v9712
    %v10225 = vunpack.c.l.b16 %v9713
    %v10226 = vunpack.c.l.b16 %v9714
    %v10227 = vunpack.c.l.b16 %v9715
    %v10228 = vunpack.c.l.b16 %v9716
    %v10229 = vunpack.c.l.b16 %v9717
    %v10230 = vunpack.c.l.b16 %v9718
    %v10231 = vunpack.c.l.b16 %v9719
    %v10232 = vunpack.c.l.b16 %v9720
    %v10233 = vunpack.c.l.b16 %v9721
    %v10234 = vunpack.c.l.b16 %v9722
    %v10235 = vunpack.c.l.b16 %v9723
    %v10236 = vunpack.c.l.b16 %v9724
    %v10237 = vunpack.c.l.b16 %v9725
    %v10238 = vunpack.c.l.b16 %v9726
    %v10239 = vunpack.c.l.b16 %v9727
    %v10240 = vunpack.c.l.b16 %v9728
    %v10241 = vunpack.c.l.b16 %v9729
    %v10242 = vunpack.c.l.b16 %v9730
    %v10243 = vunpack.c.l.b16 %v9731
    %v10244 = vunpack.c.l.b16 %v9732
    %v10245 = vunpack.c.l.b16 %v9733
    %v10246 = vunpack.c.l.b16 %v9734
    %v10247 = vunpack.c.l.b16 %v9735
    %v10248 = vunpack.c.l.b16 %v9736
    %v10249 = vunpack.c.l.b16 %v9737
    %v10250 = vunpack.c.l.b16 %v9738
    %v10251 = vunpack.c.l.b16 %v9739
    %v10252 = vunpack.c.l.b16 %v9740
    %v10253 = vunpack.c.l.b16 %v9741
    %v10254 = vunpack.c.l.b16 %v9742
    %v10255 = vunpack.c.l.b16 %v9743
    %v10256 = vunpack.c.l.b16 %v9744
    %v10257 = vunpack.c.l.b16 %v9745
    %v10258 = vunpack.c.l.b16 %v9746
    %v10259 = vunpack.c.l.b16 %v9747
    %v10260 = vunpack.c.l.b16 %v9748
    %v10261 = vunpack.c.l.b16 %v9749
    %v10262 = vunpack.c.l.b16 %v9750
    %v10263 = vunpack.c.l.b16 %v9751
    %v10264 = vunpack.c.l.b16 %v9752
    %v10265 = vunpack.c.l.b16 %v9753
    %v10266 = vunpack.c.l.b16 %v9754
    %v10267 = vunpack.c.l.b16 %v9755
    %v10268 = vunpack.c.l.b16 %v9756
    %v10269 = vunpack.c.l.b16 %v9757
    %v10270 = vunpack.c.l.b16 %v9758
    %v10271 = vunpack.c.l.b16 %v9759
    %v10272 = vunpack.c.l.b16 %v9760
    %v10273 = vunpack.c.l.b16 %v9761
    %v10274 = vunpack.c.l.b16 %v9762
    %v10275 = vunpack.c.l.b16 %v9763
    %v10276 = vunpack.c.l.b16 %v9764
    %v10277 = vunpack.c.l.b16 %v9765
    %v10278 = vunpack.c.l.b16 %v9766
    %v10279 = vunpack.c.l.b16 %v9767
    %v10280 = vunpack.c.l.b16 %v9768
    %v10281 = vunpack.c.l.b16 %v9769
    %v10282 = vunpack.c.l.b16 %v9770
    %v10283 = vunpack.c.l.b16 %v9771
    %v10284 = vunpack.c.l.b16 %v9772
    %v10285 = vunpack.c.l.b16 %v9773
    %v10286 = vunpack.c.l.b16 %v9774
    %v10287 = vunpack.c.l.b16 %v9775
    %v10288 = vunpack.c.l.b16 %v9776
    %v10289 = vunpack.c.l.b16 %v9777
    %v10290 = vunpack.c.l.b16 %v9778
    %v10291 = vunpack.c.l.b16 %v9779
    %v10292 = vunpack.c.l.b16 %v9780
    %v10293 = vunpack.c.l.b16 %v9781
    %v10294 = vunpack.c.l.b16 %v9782
    %v10295 = vunpack.c.l.b16 %v9783
    %v10296 = vunpack.c.l.b16 %v9784
    %v10297 = vunpack.c.l.b16 %v9785
    %v10298 = vunpack.c.l.b16 %v9786
    %v10299 = vunpack.c.l.b16 %v9787
    %v10300 = vunpack.c.l.b16 %v9788
    %v10301 = vunpack.c.l.b16 %v9789
    %v10302 = vunpack.c.l.b16 %v9790
    %v10303 = vunpack.c.l.b16 %v9791
    %v10304 = vunpack.c.l.b16 %v9792
    %v10305 = vunpack.c.l.b16 %v9793
    %v10306 = vunpack.c.l.b16 %v9794
    %v10307 = vunpack.c.l.b16 %v9795
    %v10308 = vunpack.c.l.b16 %v9796
    %v10309 = vunpack.c.l.b16 %v9797
    %v10310 = vunpack.c.l.b16 %v9798
    %v10311 = vunpack.c.l.b16 %v9799
    %v10312 = vunpack.c.l.b16 %v9800
    %v10313 = vunpack.c.l.b16 %v9801
    %v10314 = vunpack.c.l.b16 %v9802
    %v10315 = vunpack.c.l.b16 %v9803
    %v10316 = vunpack.c.l.b16 %v9804
    %v10317 = vunpack.c.l.b16 %v9805
    %v10318 = vunpack.c.l.b16 %v9806
    %v10319 = vunpack.c.l.b16 %v9807
    %v10320 = vunpack.c.l.b16 %v9808
    %v10321 = vunpack.c.l.b16 %v9809
    %v10322 = vunpack.c.l.b16 %v9810
    %v10323 = vunpack.c.l.b16 %v9811
    %v10324 = vunpack.c.l.b16 %v9812
    %v10325 = vunpack.c.l.b16 %v9813
    %v10326 = vunpack.c.l.b16 %v9814
    %v10327 = vunpack.c.l.b16 %v9815
    %v10328 = vunpack.c.l.b16 %v9816
    %v10329 = vunpack.c.l.b16 %v9817
    %v10330 = vunpack.c.l.b16 %v9818
    %v10331 = vunpack.c.l.b16 %v9819
    %v10332 = vunpack.c.l.b16 %v9820
    %v10333 = vunpack.c.l.b16 %v9821
    %v10334 = vunpack.c.l.b16 %v9822
    %v10335 = vunpack.c.l.b16 %v9823
    %v10336 = vunpack.c.l.b16 %v9824
    %v10337 = vunpack.c.l.b16 %v9825
    %v10338 = vunpack.c.l.b16 %v9826
    %v10339 = vunpack.c.l.b16 %v9827
    %v10340 = vunpack.c.l.b16 %v9828
    %v10341 = vunpack.c.l.b16 %v9829
    %v10342 = vunpack.c.l.b16 %v9830
    %v10343 = vunpack.c.l.b16 %v9831
    %v10344 = vunpack.c.l.b16 %v9832
    %v10345 = vunpack.c.l.b16 %v9833
    %v10346 = vunpack.c.l.b16 %v9834
    %v10347 = vunpack.c.l.b16 %v9835
    %v10348 = vunpack.c.l.b16 %v9836
    %v10349 = vunpack.c.l.b16 %v9837
    %v10350 = vunpack.c.l.b16 %v9838
    %v10351 = vunpack.c.l.b16 %v9839
    %v10352 = vunpack.c.l.b16 %v9840
    %v10353 = vunpack.c.l.b16 %v9841
    %v10354 = vunpack.c.l.b16 %v9842
    %v10355 = vunpack.c.l.b16 %v9843
    %v10356 = vunpack.c.l.b16 %v9844
    %v10357 = vunpack.c.l.b16 %v9845
    %v10358 = vunpack.c.l.b16 %v9846
    %v10359 = vunpack.c.l.b16 %v9847
    %v10360 = vunpack.c.l.b16 %v9848
    %v10361 = vunpack.c.l.b16 %v9849
    %v10362 = vunpack.c.l.b16 %v9850
    %v10363 = vunpack.c.l.b16 %v9851
    %v10364 = vunpack.c.l.b16 %v9852
    %v10365 = vunpack.c.l.b16 %v9853
    %v10366 = vunpack.c.l.b16 %v9854
    %v10367 = vunpack.c.l.b16 %v9855
    %v10368 = vunpack.c.l.b16 %v9856
    %v10369 = vunpack.c.l.b16 %v9857
    %v10370 = vunpack.c.l.b16 %v9858
    %v10371 = vunpack.c.l.b16 %v9859
    %v10372 = vunpack.c.l.b16 %v9860
    %v10373 = vunpack.c.l.b16 %v9861
    %v10374 = vunpack.c.l.b16 %v9862
    %v10375 = vunpack.c.l.b16 %v9863
    %v10376 = vunpack.c.l.b16 %v9864
    %v10377 = vunpack.c.l.b16 %v9865
    %v10378 = vunpack.c.l.b16 %v9866
    %v10379 = vunpack.c.l.b16 %v9867
    %v10380 = vunpack.c.l.b16 %v9868
    %v10381 = vunpack.c.l.b16 %v9869
    %v10382 = vunpack.c.l.b16 %v9870
    %v10383 = vunpack.c.l.b16 %v9871
    %v10384 = vunpack.c.l.b16 %v9872
    %v10385 = vunpack.c.l.b16 %v9873
    %v10386 = vunpack.c.l.b16 %v9874
    %v10387 = vunpack.c.l.b16 %v9875
    %v10388 = vunpack.c.l.b16 %v9876
    %v10389 = vunpack.c.l.b16 %v9877
    %v10390 = vunpack.c.l.b16 %v9878
    %v10391 = vunpack.c.l.b16 %v9879
    %v10392 = vunpack.c.l.b16 %v9880
    %v10393 = vunpack.c.l.b16 %v9881
    %v10394 = vunpack.c.l.b16 %v9882
    %v10395 = vunpack.c.l.b16 %v9883
    %v10396 = vunpack.c.l.b16 %v9884
    %v10397 = vunpack.c.l.b16 %v9885
    %v10398 = vunpack.c.l.b16 %v9886
    %v10399 = vunpack.c.l.b16 %v9887
    %v10400 = vunpack.c.l.b16 %v9888
    %v10401 = vunpack.c.l.b16 %v9889
    %v10402 = vunpack.c.l.b16 %v9890
    %v10403 = vunpack.c.l.b16 %v9891
    %v10404 = vunpack.c.l.b16 %v9892
    %v10405 = vunpack.c.l.b16 %v9893
    %v10406 = vunpack.c.l.b16 %v9894
    %v10407 = vunpack.c.l.b16 %v9895
    %v10408 = vunpack.c.l.b16 %v9896
    %v10409 = vunpack.c.l.b16 %v9897
    %v10410 = vunpack.c.l.b16 %v9898
    %v10411 = vunpack.c.l.b16 %v9899
    %v10412 = vunpack.c.l.b16 %v9900
    %v10413 = vunpack.c.l.b16 %v9901
    %v10414 = vunpack.c.l.b16 %v9902
    %v10415 = vunpack.c.l.b16 %v9903
    %v10416 = vunpack.c.l.b16 %v9904
    %v10417 = vunpack.c.l.b16 %v9905
    %v10418 = vunpack.c.l.b16 %v9906
    %v10419 = vunpack.c.l.b16 %v9907
    %v10420 = vunpack.c.l.b16 %v9908
    %v10421 = vunpack.c.l.b16 %v9909
    %v10422 = vunpack.c.l.b16 %v9910
    %v10423 = vunpack.c.l.b16 %v9911
    %v10424 = vunpack.c.l.b16 %v9912
    %v10425 = vunpack.c.l.b16 %v9913
    %v10426 = vunpack.c.l.b16 %v9914
    %v10427 = vunpack.c.l.b16 %v9915
    %v10428 = vunpack.c.l.b16 %v9916
    %v10429 = vunpack.c.l.b16 %v9917
    %v10430 = vunpack.c.l.b16 %v9918
    %v10431 = vunpack.c.l.b16 %v9919
    %v10432 = vunpack.c.l.b16 %v9920
    %v10433 = vunpack.c.l.b16 %v9921
    %v10434 = vunpack.c.l.b16 %v9922
    %v10435 = vunpack.c.l.b16 %v9923
    %v10436 = vunpack.c.l.b16 %v9924
    %v10437 = vunpack.c.l.b16 %v9925
    %v10438 = vunpack.c.l.b16 %v9926
    %v10439 = vunpack.c.l.b16 %v9927
    %v10440 = vunpack.c.l.b16 %v9928
    %v10441 = vunpack.c.l.b16 %v9929
    %v10442 = vunpack.c.l.b16 %v9930
    %v10443 = vunpack.c.l.b16 %v9931
    %v10444 = vunpack.c.l.b16 %v9932
    %v10445 = vunpack.c.l.b16 %v9933
    %v10446 = vunpack.c.l.b16 %v9934
    %v10447 = vunpack.c.l.b16 %v9935
    %v10448 = vunpack.c.l.b16 %v9936
    %v10449 = vunpack.c.l.b16 %v9937
    %v10450 = vunpack.c.l.b16 %v9938
    %v10451 = vunpack.c.l.b16 %v9939
    %v10452 = vunpack.c.l.b16 %v9940
    %v10453 = vunpack.c.l.b16 %v9941
    %v10454 = vunpack.c.l.b16 %v9942
    %v10455 = vunpack.c.l.b16 %v9943
    %v10456 = vunpack.c.l.b16 %v9944
    %v10457 = vunpack.c.l.b16 %v9945
    %v10458 = vunpack.c.l.b16 %v9946
    %v10459 = vunpack.c.l.b16 %v9947
    %v10460 = vunpack.c.l.b16 %v9948
    %v10461 = vunpack.c.l.b16 %v9949
    %v10462 = vunpack.c.l.b16 %v9950
    %v10463 = vunpack.c.l.b16 %v9951
    %v10464 = vunpack.c.l.b16 %v9952
    %v10465 = vunpack.c.l.b16 %v9953
    %v10466 = vunpack.c.l.b16 %v9954
    %v10467 = vunpack.c.l.b16 %v9955
    %v10468 = vunpack.c.l.b16 %v9956
    %v10469 = vunpack.c.l.b16 %v9957
    %v10470 = vunpack.c.l.b16 %v9958
    %v10471 = vunpack.c.l.b16 %v9959
    %v10472 = vunpack.c.l.b16 %v9960
    %v10473 = vunpack.c.l.b16 %v9961
    %v10474 = vunpack.c.l.b16 %v9962
    %v10475 = vunpack.c.l.b16 %v9963
    %v10476 = vunpack.c.l.b16 %v9964
    %v10477 = vpack.c.b16 %v10221, %v10221
    %v10478 = vpack.c.b16 %v10222, %v10222
    %v10479 = vpack.c.b16 %v10223, %v10223
    %v10480 = vpack.c.b16 %v10224, %v10224
    %v10481 = vpack.c.b16 %v10225, %v10225
    %v10482 = vpack.c.b16 %v10226, %v10226
    %v10483 = vpack.c.b16 %v10227, %v10227
    %v10484 = vpack.c.b16 %v10228, %v10228
    %v10485 = vpack.c.b16 %v10229, %v10229
    %v10486 = vpack.c.b16 %v10230, %v10230
    %v10487 = vpack.c.b16 %v10231, %v10231
    %v10488 = vpack.c.b16 %v10232, %v10232
    %v10489 = vpack.c.b16 %v10233, %v10233
    %v10490 = vpack.c.b16 %v10234, %v10234
    %v10491 = vpack.c.b16 %v10235, %v10235
    %v10492 = vpack.c.b16 %v10236, %v10236
    %v10493 = vpack.c.b16 %v10237, %v10237
    %v10494 = vpack.c.b16 %v10238, %v10238
    %v10495 = vpack.c.b16 %v10239, %v10239
    %v10496 = vpack.c.b16 %v10240, %v10240
    %v10497 = vpack.c.b16 %v10241, %v10241
    %v10498 = vpack.c.b16 %v10242, %v10242
    %v10499 = vpack.c.b16 %v10243, %v10243
    %v10500 = vpack.c.b16 %v10244, %v10244
    %v10501 = vpack.c.b16 %v10245, %v10245
    %v10502 = vpack.c.b16 %v10246, %v10246
    %v10503 = vpack.c.b16 %v10247, %v10247
    %v10504 = vpack.c.b16 %v10248, %v10248
    %v10505 = vpack.c.b16 %v10249, %v10249
    %v10506 = vpack.c.b16 %v10250, %v10250
    %v10507 = vpack.c.b16 %v10251, %v10251
    %v10508 = vpack.c.b16 %v10252, %v10252
    %v10509 = vpack.c.b16 %v10253, %v10253
    %v10510 = vpack.c.b16 %v10254, %v10254
    %v10511 = vpack.c.b16 %v10255, %v10255
    %v10512 = vpack.c.b16 %v10256, %v10256
    %v10513 = vpack.c.b16 %v10257, %v10257
    %v10514 = vpack.c.b16 %v10258, %v10258
    %v10515 = vpack.c.b16 %v10259, %v10259
    %v10516 = vpack.c.b16 %v10260, %v10260
    %v10517 = vpack.c.b16 %v10261, %v10261
    %v10518 = vpack.c.b16 %v10262, %v10262
    %v10519 = vpack.c.b16 %v10263, %v10263
    %v10520 = vpack.c.b16 %v10264, %v10264
    %v10521 = vpack.c.b16 %v10265, %v10265
    %v10522 = vpack.c.b16 %v10266, %v10266
    %v10523 = vpack.c.b16 %v10267, %v10267
    %v10524 = vpack.c.b16 %v10268, %v10268
    %v10525 = vpack.c.b16 %v10269, %v10269
    %v10526 = vpack.c.b16 %v10270, %v10270
    %v10527 = vpack.c.b16 %v10271, %v10271
    %v10528 = vpack.c.b16 %v10272, %v10272
    %v10529 = vpack.c.b16 %v10273, %v10273
    %v10530 = vpack.c.b16 %v10274, %v10274
    %v10531 = vpack.c.b16 %v10275, %v10275
    %v10532 = vpack.c.b16 %v10276, %v10276
    %v10533 = vpack.c.b16 %v10277, %v10277
    %v10534 = vpack.c.b16 %v10278, %v10278
    %v10535 = vpack.c.b16 %v10279, %v10279
    %v10536 = vpack.c.b16 %v10280, %v10280
    %v10537 = vpack.c.b16 %v10281, %v10281
    %v10538 = vpack.c.b16 %v10282, %v10282
    %v10539 = vpack.c.b16 %v10283, %v10283
    %v10540 = vpack.c.b16 %v10284, %v10284
    %v10541 = vpack.c.b16 %v10285, %v10285
    %v10542 = vpack.c.b16 %v10286, %v10286
    %v10543 = vpack.c.b16 %v10287, %v10287
    %v10544 = vpack.c.b16 %v10288, %v10288
    %v10545 = vpack.c.b16 %v10289, %v10289
    %v10546 = vpack.c.b16 %v10290, %v10290
    %v10547 = vpack.c.b16 %v10291, %v10291
    %v10548 = vpack.c.b16 %v10292, %v10292
    %v10549 = vpack.c.b16 %v10293, %v10293
    %v10550 = vpack.c.b16 %v10294, %v10294
    %v10551 = vpack.c.b16 %v10295, %v10295
    %v10552 = vpack.c.b16 %v10296, %v10296
    %v10553 = vpack.c.b16 %v10297, %v10297
    %v10554 = vpack.c.b16 %v10298, %v10298
    %v10555 = vpack.c.b16 %v10299, %v10299
    %v10556 = vpack.c.b16 %v10300, %v10300
    %v10557 = vpack.c.b16 %v10301, %v10301
    %v10558 = vpack.c.b16 %v10302, %v10302
    %v10559 = vpack.c.b16 %v10303, %v10303
    %v10560 = vpack.c.b16 %v10304, %v10304
    %v10561 = vpack.c.b16 %v10305, %v10305
    %v10562 = vpack.c.b16 %v10306, %v10306
    %v10563 = vpack.c.b16 %v10307, %v10307
    %v10564 = vpack.c.b16 %v10308, %v10308
    %v10565 = vpack.c.b16 %v10309, %v10309
    %v10566 = vpack.c.b16 %v10310, %v10310
    %v10567 = vpack.c.b16 %v10311, %v10311
    %v10568 = vpack.c.b16 %v10312, %v10312
    %v10569 = vpack.c.b16 %v10313, %v10313
    %v10570 = vpack.c.b16 %v10314, %v10314
    %v10571 = vpack.c.b16 %v10315, %v10315
    %v10572 = vpack.c.b16 %v10316, %v10316
    %v10573 = vpack.c.b16 %v10317, %v10317
    %v10574 = vpack.c.b16 %v10318, %v10318
    %v10575 = vpack.c.b16 %v10319, %v10319
    %v10576 = vpack.c.b16 %v10320, %v10320
    %v10577 = vpack.c.b16 %v10321, %v10321
    %v10578 = vpack.c.b16 %v10322, %v10322
    %v10579 = vpack.c.b16 %v10323, %v10323
    %v10580 = vpack.c.b16 %v10324, %v10324
    %v10581 = vpack.c.b16 %v10325, %v10325
    %v10582 = vpack.c.b16 %v10326, %v10326
    %v10583 = vpack.c.b16 %v10327, %v10327
    %v10584 = vpack.c.b16 %v10328, %v10328
    %v10585 = vpack.c.b16 %v10329, %v10329
    %v10586 = vpack.c.b16 %v10330, %v10330
    %v10587 = vpack.c.b16 %v10331, %v10331
    %v10588 = vpack.c.b16 %v10332, %v10332
    %v10589 = vpack.c.b16 %v10333, %v10333
    %v10590 = vpack.c.b16 %v10334, %v10334
    %v10591 = vpack.c.b16 %v10335, %v10335
    %v10592 = vpack.c.b16 %v10336, %v10336
    %v10593 = vpack.c.b16 %v10337, %v10337
    %v10594 = vpack.c.b16 %v10338, %v10338
    %v10595 = vpack.c.b16 %v10339, %v10339
    %v10596 = vpack.c.b16 %v10340, %v10340
    %v10597 = vpack.c.b16 %v10341, %v10341
    %v10598 = vpack.c.b16 %v10342, %v10342
    %v10599 = vpack.c.b16 %v10343, %v10343
    %v10600 = vpack.c.b16 %v10344, %v10344
    %v10601 = vpack.c.b16 %v10345, %v10345
    %v10602 = vpack.c.b16 %v10346, %v10346
    %v10603 = vpack.c.b16 %v10347, %v10347
    %v10604 = vpack.c.b16 %v10348, %v10348
    %v10605 = vpack.c.b16 %v10349, %v10349
    %v10606 = vpack.c.b16 %v10350, %v10350
    %v10607 = vpack.c.b16 %v10351, %v10351
    %v10608 = vpack.c.b16 %v10352, %v10352
    %v10609 = vpack.c.b16 %v10353, %v10353
    %v10610 = vpack.c.b16 %v10354, %v10354
    %v10611 = vpack.c.b16 %v10355, %v10355
    %v10612 = vpack.c.b16 %v10356, %v10356
    %v10613 = vpack.c.b16 %v10357, %v10357
    %v10614 = vpack.c.b16 %v10358, %v10358
    %v10615 = vpack.c.b16 %v10359, %v10359
    %v10616 = vpack.c.b16 %v10360, %v10360
    %v10617 = vpack.c.b16 %v10361, %v10361
    %v10618 = vpack.c.b16 %v10362, %v10362
    %v10619 = vpack.c.b16 %v10363, %v10363
    %v10620 = vpack.c.b16 %v10364, %v10364
    %v10621 = vpack.c.b16 %v10365, %v10365
    %v10622 = vpack.c.b16 %v10366, %v10366
    %v10623 = vpack.c.b16 %v10367, %v10367
    %v10624 = vpack.c.b16 %v10368, %v10368
    %v10625 = vpack.c.b16 %v10369, %v10369
    %v10626 = vpack.c.b16 %v10370, %v10370
    %v10627 = vpack.c.b16 %v10371, %v10371
    %v10628 = vpack.c.b16 %v10372, %v10372
    %v10629 = vpack.c.b16 %v10373, %v10373
    %v10630 = vpack.c.b16 %v10374, %v10374
    %v10631 = vpack.c.b16 %v10375, %v10375
    %v10632 = vpack.c.b16 %v10376, %v10376
    %v10633 = vpack.c.b16 %v10377, %v10377
    %v10634 = vpack.c.b16 %v10378, %v10378
    %v10635 = vpack.c.b16 %v10379, %v10379
    %v10636 = vpack.c.b16 %v10380, %v10380
    %v10637 = vpack.c.b16 %v10381, %v10381
    %v10638 = vpack.c.b16 %v10382, %v10382
    %v10639 = vpack.c.b16 %v10383, %v10383
    %v10640 = vpack.c.b16 %v10384, %v10384
    %v10641 = vpack.c.b16 %v10385, %v10385
    %v10642 = vpack.c.b16 %v10386, %v10386
    %v10643 = vpack.c.b16 %v10387, %v10387
    %v10644 = vpack.c.b16 %v10388, %v10388
    %v10645 = vpack.c.b16 %v10389, %v10389
    %v10646 = vpack.c.b16 %v10390, %v10390
    %v10647 = vpack.c.b16 %v10391, %v10391
    %v10648 = vpack.c.b16 %v10392, %v10392
    %v10649 = vpack.c.b16 %v10393, %v10393
    %v10650 = vpack.c.b16 %v10394, %v10394
    %v10651 = vpack.c.b16 %v10395, %v10395
    %v10652 = vpack.c.b16 %v10396, %v10396
    %v10653 = vpack.c.b16 %v10397, %v10397
    %v10654 = vpack.c.b16 %v10398, %v10398
    %v10655 = vpack.c.b16 %v10399, %v10399
    %v10656 = vpack.c.b16 %v10400, %v10400
    %v10657 = vpack.c.b16 %v10401, %v10401
    %v10658 = vpack.c.b16 %v10402, %v10402
    %v10659 = vpack.c.b16 %v10403, %v10403
    %v10660 = vpack.c.b16 %v10404, %v10404
    %v10661 = vpack.c.b16 %v10405, %v10405
    %v10662 = vpack.c.b16 %v10406, %v10406
    %v10663 = vpack.c.b16 %v10407, %v10407
    %v10664 = vpack.c.b16 %v10408, %v10408
    %v10665 = vpack.c.b16 %v10409, %v10409
    %v10666 = vpack.c.b16 %v10410, %v10410
    %v10667 = vpack.c.b16 %v10411, %v10411
    %v10668 = vpack.c.b16 %v10412, %v10412
    %v10669 = vpack.c.b16 %v10413, %v10413
    %v10670 = vpack.c.b16 %v10414, %v10414
    %v10671 = vpack.c.b16 %v10415, %v10415
    %v10672 = vpack.c.b16 %v10416, %v10416
    %v10673 = vpack.c.b16 %v10417, %v10417
    %v10674 = vpack.c.b16 %v10418, %v10418
    %v10675 = vpack.c.b16 %v10419, %v10419
    %v10676 = vpack.c.b16 %v10420, %v10420
    %v10677 = vpack.c.b16 %v10421, %v10421
    %v10678 = vpack.c.b16 %v10422, %v10422
    %v10679 = vpack.c.b16 %v10423, %v10423
    %v10680 = vpack.c.b16 %v10424, %v10424
    %v10681 = vpack.c.b16 %v10425, %v10425
    %v10682 = vpack.c.b16 %v10426, %v10426
    %v10683 = vpack.c.b16 %v10427, %v10427
    %v10684 = vpack.c.b16 %v10428, %v10428
    %v10685 = vpack.c.b16 %v10429, %v10429
    %v10686 = vpack.c.b16 %v10430, %v10430
    %v10687 = vpack.c.b16 %v10431, %v10431
    %v10688 = vpack.c.b16 %v10432, %v10432
    %v10689 = vpack.c.b16 %v10433, %v10433
    %v10690 = vpack.c.b16 %v10434, %v10434
    %v10691 = vpack.c.b16 %v10435, %v10435
    %v10692 = vpack.c.b16 %v10436, %v10436
    %v10693 = vpack.c.b16 %v10437, %v10437
    %v10694 = vpack.c.b16 %v10438, %v10438
    %v10695 = vpack.c.b16 %v10439, %v10439
    %v10696 = vpack.c.b16 %v10440, %v10440
    %v10697 = vpack.c.b16 %v10441, %v10441
    %v10698 = vpack.c.b16 %v10442, %v10442
    %v10699 = vpack.c.b16 %v10443, %v10443
    %v10700 = vpack.c.b16 %v10444, %v10444
    %v10701 = vpack.c.b16 %v10445, %v10445
    %v10702 = vpack.c.b16 %v10446, %v10446
    %v10703 = vpack.c.b16 %v10447, %v10447
    %v10704 = vpack.c.b16 %v10448, %v10448
    %v10705 = vpack.c.b16 %v10449, %v10449
    %v10706 = vpack.c.b16 %v10450, %v10450
    %v10707 = vpack.c.b16 %v10451, %v10451
    %v10708 = vpack.c.b16 %v10452, %v10452
    %v10709 = vpack.c.b16 %v10453, %v10453
    %v10710 = vpack.c.b16 %v10454, %v10454
    %v10711 = vpack.c.b16 %v10455, %v10455
    %v10712 = vpack.c.b16 %v10456, %v10456
    %v10713 = vpack.c.b16 %v10457, %v10457
    %v10714 = vpack.c.b16 %v10458, %v10458
    %v10715 = vpack.c.b16 %v10459, %v10459
    %v10716 = vpack.c.b16 %v10460, %v10460
    %v10717 = vpack.c.b16 %v10461, %v10461
    %v10718 = vpack.c.b16 %v10462, %v10462
    %v10719 = vpack.c.b16 %v10463, %v10463
    %v10720 = vpack.c.b16 %v10464, %v10464
    %v10721 = vpack.c.b16 %v10465, %v10465
    %v10722 = vpack.c.b16 %v10466, %v10466
    %v10723 = vpack.c.b16 %v10467, %v10467
    %v10724 = vpack.c.b16 %v10468, %v10468
    %v10725 = vpack.c.b16 %v10469, %v10469
    %v10726 = vpack.c.b16 %v10470, %v10470
    %v10727 = vpack.c.b16 %v10471, %v10471
    %v10728 = vpack.c.b16 %v10472, %v10472
    %v10729 = vpack.c.b16 %v10473, %v10473
    %v10730 = vpack.c.b16 %v10474, %v10474
    %v10731 = vpack.c.b16 %v10475, %v10475
    %v10732 = vpack.c.b16 %v10476, %v10476
    %v10733 = vunpack.c.l.b16 %v10477
    %v10734 = vunpack.c.l.b16 %v10478
    %v10735 = vunpack.c.l.b16 %v10479
    %v10736 = vunpack.c.l.b16 %v10480
    %v10737 = vunpack.c.l.b16 %v10481
    %v10738 = vunpack.c.l.b16 %v10482
    %v10739 = vunpack.c.l.b16 %v10483
    %v10740 = vunpack.c.l.b16 %v10484
    %v10741 = vunpack.c.l.b16 %v10485
    %v10742 = vunpack.c.l.b16 %v10486
    %v10743 = vunpack.c.l.b16 %v10487
    %v10744 = vunpack.c.l.b16 %v10488
    %v10745 = vunpack.c.l.b16 %v10489
    %v10746 = vunpack.c.l.b16 %v10490
    %v10747 = vunpack.c.l.b16 %v10491
    %v10748 = vunpack.c.l.b16 %v10492
    %v10749 = vunpack.c.l.b16 %v10493
    %v10750 = vunpack.c.l.b16 %v10494
    %v10751 = vunpack.c.l.b16 %v10495
    %v10752 = vunpack.c.l.b16 %v10496
    %v10753 = vunpack.c.l.b16 %v10497
    %v10754 = vunpack.c.l.b16 %v10498
    %v10755 = vunpack.c.l.b16 %v10499
    %v10756 = vunpack.c.l.b16 %v10500
    %v10757 = vunpack.c.l.b16 %v10501
    %v10758 = vunpack.c.l.b16 %v10502
    %v10759 = vunpack.c.l.b16 %v10503
    %v10760 = vunpack.c.l.b16 %v10504
    %v10761 = vunpack.c.l.b16 %v10505
    %v10762 = vunpack.c.l.b16 %v10506
    %v10763 = vunpack.c.l.b16 %v10507
    %v10764 = vunpack.c.l.b16 %v10508
    %v10765 = vunpack.c.l.b16 %v10509
    %v10766 = vunpack.c.l.b16 %v10510
    %v10767 = vunpack.c.l.b16 %v10511
    %v10768 = vunpack.c.l.b16 %v10512
    %v10769 = vunpack.c.l.b16 %v10513
    %v10770 = vunpack.c.l.b16 %v10514
    %v10771 = vunpack.c.l.b16 %v10515
    %v10772 = vunpack.c.l.b16 %v10516
    %v10773 = vunpack.c.l.b16 %v10517
    %v10774 = vunpack.c.l.b16 %v10518
    %v10775 = vunpack.c.l.b16 %v10519
    %v10776 = vunpack.c.l.b16 %v10520
    %v10777 = vunpack.c.l.b16 %v10521
    %v10778 = vunpack.c.l.b16 %v10522
    %v10779 = vunpack.c.l.b16 %v10523
    %v10780 = vunpack.c.l.b16 %v10524
    %v10781 = vunpack.c.l.b16 %v10525
    %v10782 = vunpack.c.l.b16 %v10526
    %v10783 = vunpack.c.l.b16 %v10527
    %v10784 = vunpack.c.l.b16 %v10528
    %v10785 = vunpack.c.l.b16 %v10529
    %v10786 = vunpack.c.l.b16 %v10530
    %v10787 = vunpack.c.l.b16 %v10531
    %v10788 = vunpack.c.l.b16 %v10532
    %v10789 = vunpack.c.l.b16 %v10533
    %v10790 = vunpack.c.l.b16 %v10534
    %v10791 = vunpack.c.l.b16 %v10535
    %v10792 = vunpack.c.l.b16 %v10536
    %v10793 = vunpack.c.l.b16 %v10537
    %v10794 = vunpack.c.l.b16 %v10538
    %v10795 = vunpack.c.l.b16 %v10539
    %v10796 = vunpack.c.l.b16 %v10540
    %v10797 = vunpack.c.l.b16 %v10541
    %v10798 = vunpack.c.l.b16 %v10542
    %v10799 = vunpack.c.l.b16 %v10543
    %v10800 = vunpack.c.l.b16 %v10544
    %v10801 = vunpack.c.l.b16 %v10545
    %v10802 = vunpack.c.l.b16 %v10546
    %v10803 = vunpack.c.l.b16 %v10547
    %v10804 = vunpack.c.l.b16 %v10548
    %v10805 = vunpack.c.l.b16 %v10549
    %v10806 = vunpack.c.l.b16 %v10550
    %v10807 = vunpack.c.l.b16 %v10551
    %v10808 = vunpack.c.l.b16 %v10552
    %v10809 = vunpack.c.l.b16 %v10553
    %v10810 = vunpack.c.l.b16 %v10554
    %v10811 = vunpack.c.l.b16 %v10555
    %v10812 = vunpack.c.l.b16 %v10556
    %v10813 = vunpack.c.l.b16 %v10557
    %v10814 = vunpack.c.l.b16 %v10558
    %v10815 = vunpack.c.l.b16 %v10559
    %v10816 = vunpack.c.l.b16 %v10560
    %v10817 = vunpack.c.l.b16 %v10561
    %v10818 = vunpack.c.l.b16 %v10562
    %v10819 = vunpack.c.l.b16 %v10563
    %v10820 = vunpack.c.l.b16 %v10564
    %v10821 = vunpack.c.l.b16 %v10565
    %v10822 = vunpack.c.l.b16 %v10566
    %v10823 = vunpack.c.l.b16 %v10567
    %v10824 = vunpack.c.l.b16 %v10568
    %v10825 = vunpack.c.l.b16 %v10569
    %v10826 = vunpack.c.l.b16 %v10570
    %v10827 = vunpack.c.l.b16 %v10571
    %v10828 = vunpack.c.l.b16 %v10572
    %v10829 = vunpack.c.l.b16 %v10573
    %v10830 = vunpack.c.l.b16 %v10574
    %v10831 = vunpack.c.l.b16 %v10575
    %v10832 = vunpack.c.l.b16 %v10576
    %v10833 = vunpack.c.l.b16 %v10577
    %v10834 = vunpack.c.l.b16 %v10578
    %v10835 = vunpack.c.l.b16 %v10579
    %v10836 = vunpack.c.l.b16 %v10580
    %v10837 = vunpack.c.l.b16 %v10581
    %v10838 = vunpack.c.l.b16 %v10582
    %v10839 = vunpack.c.l.b16 %v10583
    %v10840 = vunpack.c.l.b16 %v10584
    %v10841 = vunpack.c.l.b16 %v10585
    %v10842 = vunpack.c.l.b16 %v10586
    %v10843 = vunpack.c.l.b16 %v10587
    %v10844 = vunpack.c.l.b16 %v10588
    %v10845 = vunpack.c.l.b16 %v10589
    %v10846 = vunpack.c.l.b16 %v10590
    %v10847 = vunpack.c.l.b16 %v10591
    %v10848 = vunpack.c.l.b16 %v10592
    %v10849 = vunpack.c.l.b16 %v10593
    %v10850 = vunpack.c.l.b16 %v10594
    %v10851 = vunpack.c.l.b16 %v10595
    %v10852 = vunpack.c.l.b16 %v10596
    %v10853 = vunpack.c.l.b16 %v10597
    %v10854 = vunpack.c.l.b16 %v10598
    %v10855 = vunpack.c.l.b16 %v10599
    %v10856 = vunpack.c.l.b16 %v10600
    %v10857 = vunpack.c.l.b16 %v10601
    %v10858 = vunpack.c.l.b16 %v10602
    %v10859 = vunpack.c.l.b16 %v10603
    %v10860 = vunpack.c.l.b16 %v10604
    %v10861 = vunpack.c.l.b16 %v10605
    %v10862 = vunpack.c.l.b16 %v10606
    %v10863 = vunpack.c.l.b16 %v10607
    %v10864 = vunpack.c.l.b16 %v10608
    %v10865 = vunpack.c.l.b16 %v10609
    %v10866 = vunpack.c.l.b16 %v10610
    %v10867 = vunpack.c.l.b16 %v10611
    %v10868 = vunpack.c.l.b16 %v10612
    %v10869 = vunpack.c.l.b16 %v10613
    %v10870 = vunpack.c.l.b16 %v10614
    %v10871 = vunpack.c.l.b16 %v10615
    %v10872 = vunpack.c.l.b16 %v10616
    %v10873 = vunpack.c.l.b16 %v10617
    %v10874 = vunpack.c.l.b16 %v10618
    %v10875 = vunpack.c.l.b16 %v10619
    %v10876 = vunpack.c.l.b16 %v10620
    %v10877 = vunpack.c.l.b16 %v10621
    %v10878 = vunpack.c.l.b16 %v10622
    %v10879 = vunpack.c.l.b16 %v10623
    %v10880 = vunpack.c.l.b16 %v10624
    %v10881 = vunpack.c.l.b16 %v10625
    %v10882 = vunpack.c.l.b16 %v10626
    %v10883 = vunpack.c.l.b16 %v10627
    %v10884 = vunpack.c.l.b16 %v10628
    %v10885 = vunpack.c.l.b16 %v10629
    %v10886 = vunpack.c.l.b16 %v10630
    %v10887 = vunpack.c.l.b16 %v10631
    %v10888 = vunpack.c.l.b16 %v10632
    %v10889 = vunpack.c.l.b16 %v10633
    %v10890 = vunpack.c.l.b16 %v10634
    %v10891 = vunpack.c.l.b16 %v10635
    %v10892 = vunpack.c.l.b16 %v10636
    %v10893 = vunpack.c.l.b16 %v10637
    %v10894 = vunpack.c.l.b16 %v10638
    %v10895 = vunpack.c.l.b16 %v10639
    %v10896 = vunpack.c.l.b16 %v10640
    %v10897 = vunpack.c.l.b16 %v10641
    %v10898 = vunpack.c.l.b16 %v10642
    %v10899 = vunpack.c.l.b16 %v10643
    %v10900 = vunpack.c.l.b16 %v10644
    %v10901 = vunpack.c.l.b16 %v10645
    %v10902 = vunpack.c.l.b16 %v10646
    %v10903 = vunpack.c.l.b16 %v10647
    %v10904 = vunpack.c.l.b16 %v10648
    %v10905 = vunpack.c.l.b16 %v10649
    %v10906 = vunpack.c.l.b16 %v10650
    %v10907 = vunpack.c.l.b16 %v10651
    %v10908 = vunpack.c.l.b16 %v10652
    %v10909 = vunpack.c.l.b16 %v10653
    %v10910 = vunpack.c.l.b16 %v10654
    %v10911 = vunpack.c.l.b16 %v10655
    %v10912 = vunpack.c.l.b16 %v10656
    %v10913 = vunpack.c.l.b16 %v10657
    %v10914 = vunpack.c.l.b16 %v10658
    %v10915 = vunpack.c.l.b16 %v10659
    %v10916 = vunpack.c.l.b16 %v10660
    %v10917 = vunpack.c.l.b16 %v10661
    %v10918 = vunpack.c.l.b16 %v10662
    %v10919 = vunpack.c.l.b16 %v10663
    %v10920 = vunpack.c.l.b16 %v10664
    %v10921 = vunpack.c.l.b16 %v10665
    %v10922 = vunpack.c.l.b16 %v10666
    %v10923 = vunpack.c.l.b16 %v10667
    %v10924 = vunpack.c.l.b16 %v10668
    %v10925 = vunpack.c.l.b16 %v10669
    %v10926 = vunpack.c.l.b16 %v10670
    %v10927 = vunpack.c.l.b16 %v10671
    %v10928 = vunpack.c.l.b16 %v10672
    %v10929 = vunpack.c.l.b16 %v10673
    %v10930 = vunpack.c.l.b16 %v10674
    %v10931 = vunpack.c.l.b16 %v10675
    %v10932 = vunpack.c.l.b16 %v10676
    %v10933 = vunpack.c.l.b16 %v10677
    %v10934 = vunpack.c.l.b16 %v10678
    %v10935 = vunpack.c.l.b16 %v10679
    %v10936 = vunpack.c.l.b16 %v10680
    %v10937 = vunpack.c.l.b16 %v10681
    %v10938 = vunpack.c.l.b16 %v10682
    %v10939 = vunpack.c.l.b16 %v10683
    %v10940 = vunpack.c.l.b16 %v10684
    %v10941 = vunpack.c.l.b16 %v10685
    %v10942 = vunpack.c.l.b16 %v10686
    %v10943 = vunpack.c.l.b16 %v10687
    %v10944 = vunpack.c.l.b16 %v10688
    %v10945 = vunpack.c.l.b16 %v10689
    %v10946 = vunpack.c.l.b16 %v10690
    %v10947 = vunpack.c.l.b16 %v10691
    %v10948 = vunpack.c.l.b16 %v10692
    %v10949 = vunpack.c.l.b16 %v10693
    %v10950 = vunpack.c.l.b16 %v10694
    %v10951 = vunpack.c.l.b16 %v10695
    %v10952 = vunpack.c.l.b16 %v10696
    %v10953 = vunpack.c.l.b16 %v10697
    %v10954 = vunpack.c.l.b16 %v10698
    %v10955 = vunpack.c.l.b16 %v10699
    %v10956 = vunpack.c.l.b16 %v10700
    %v10957 = vunpack.c.l.b16 %v10701
    %v10958 = vunpack.c.l.b16 %v10702
    %v10959 = vunpack.c.l.b16 %v10703
    %v10960 = vunpack.c.l.b16 %v10704
    %v10961 = vunpack.c.l.b16 %v10705
    %v10962 = vunpack.c.l.b16 %v10706
    %v10963 = vunpack.c.l.b16 %v10707
    %v10964 = vunpack.c.l.b16 %v10708
    %v10965 = vunpack.c.l.b16 %v10709
    %v10966 = vunpack.c.l.b16 %v10710
    %v10967 = vunpack.c.l.b16 %v10711
    %v10968 = vunpack.c.l.b16 %v10712
    %v10969 = vunpack.c.l.b16 %v10713
    %v10970 = vunpack.c.l.b16 %v10714
    %v10971 = vunpack.c.l.b16 %v10715
    %v10972 = vunpack.c.l.b16 %v10716
    %v10973 = vunpack.c.l.b16 %v10717
    %v10974 = vunpack.c.l.b16 %v10718
    %v10975 = vunpack.c.l.b16 %v10719
    %v10976 = vunpack.c.l.b16 %v10720
    %v10977 = vunpack.c.l.b16 %v10721
    %v10978 = vunpack.c.l.b16 %v10722
    %v10979 = vunpack.c.l.b16 %v10723
    %v10980 = vunpack.c.l.b16 %v10724
    %v10981 = vunpack.c.l.b16 %v10725
    %v10982 = vunpack.c.l.b16 %v10726
    %v10983 = vunpack.c.l.b16 %v10727
    %v10984 = vunpack.c.l.b16 %v10728
    %v10985 = vunpack.c.l.b16 %v10729
    %v10986 = vunpack.c.l.b16 %v10730
    %v10987 = vunpack.c.l.b16 %v10731
    %v10988 = vunpack.c.l.b16 %v10732
    %vm10989 = vcmask 1041409
    %v10990 = vsel %vm10989, %v10734, %v10733
    %vm10991 = vcmask 1042434
    %v10992 = vsel %vm10991, %v10735, %v10990
    %vm10993 = vcmask 1043459
    %v10994 = vsel %vm10993, %v10736, %v10992
    %vm10995 = vcmask 1044484
    %v10996 = vsel %vm10995, %v10737, %v10994
    %vm10997 = vcmask 1045509
    %v10998 = vsel %vm10997, %v10738, %v10996
    %vm10999 = vcmask 1046534
    %v11000 = vsel %vm10999, %v10739, %v10998
    %vm11001 = vcmask 1047559
    %v11002 = vsel %vm11001, %v10740, %v11000
    %v11003 = vsel %vm10989, %v10742, %v10741
    %v11004 = vsel %vm10991, %v10743, %v11003
    %v11005 = vsel %vm10993, %v10744, %v11004
    %v11006 = vsel %vm10995, %v10745, %v11005
    %v11007 = vsel %vm10997, %v10746, %v11006
    %v11008 = vsel %vm10999, %v10747, %v11007
    %v11009 = vsel %vm11001, %v10748, %v11008
    %v11010 = vsel %vm10989, %v10750, %v10749
    %v11011 = vsel %vm10991, %v10751, %v11010
    %v11012 = vsel %vm10993, %v10752, %v11011
    %v11013 = vsel %vm10995, %v10753, %v11012
    %v11014 = vsel %vm10997, %v10754, %v11013
    %v11015 = vsel %vm10999, %v10755, %v11014
    %v11016 = vsel %vm11001, %v10756, %v11015
    %v11017 = vsel %vm10989, %v10758, %v10757
    %v11018 = vsel %vm10991, %v10759, %v11017
    %v11019 = vsel %vm10993, %v10760, %v11018
    %v11020 = vsel %vm10995, %v10761, %v11019
    %v11021 = vsel %vm10997, %v10762, %v11020
    %v11022 = vsel %vm10999, %v10763, %v11021
    %v11023 = vsel %vm11001, %v10764, %v11022
    %v11024 = vsel %vm10989, %v10766, %v10765
    %v11025 = vsel %vm10991, %v10767, %v11024
    %v11026 = vsel %vm10993, %v10768, %v11025
    %v11027 = vsel %vm10995, %v10769, %v11026
    %v11028 = vsel %vm10997, %v10770, %v11027
    %v11029 = vsel %vm10999, %v10771, %v11028
    %v11030 = vsel %vm11001, %v10772, %v11029
    %v11031 = vsel %vm10989, %v10774, %v10773
    %v11032 = vsel %vm10991, %v10775, %v11031
    %v11033 = vsel %vm10993, %v10776, %v11032
    %v11034 = vsel %vm10995, %v10777, %v11033
    %v11035 = vsel %vm10997, %v10778, %v11034
    %v11036 = vsel %vm10999, %v10779, %v11035
    %v11037 = vsel %vm11001, %v10780, %v11036
    %v11038 = vsel %vm10989, %v10782, %v10781
    %v11039 = vsel %vm10991, %v10783, %v11038
    %v11040 = vsel %vm10993, %v10784, %v11039
    %v11041 = vsel %vm10995, %v10785, %v11040
    %v11042 = vsel %vm10997, %v10786, %v11041
    %v11043 = vsel %vm10999, %v10787, %v11042
    %v11044 = vsel %vm11001, %v10788, %v11043
    %v11045 = vsel %vm10989, %v10790, %v10789
    %v11046 = vsel %vm10991, %v10791, %v11045
    %v11047 = vsel %vm10993, %v10792, %v11046
    %v11048 = vsel %vm10995, %v10793, %v11047
    %v11049 = vsel %vm10997, %v10794, %v11048
    %v11050 = vsel %vm10999, %v10795, %v11049
    %v11051 = vsel %vm11001, %v10796, %v11050
    %v11052 = vsel %vm10989, %v10798, %v10797
    %v11053 = vsel %vm10991, %v10799, %v11052
    %v11054 = vsel %vm10993, %v10800, %v11053
    %v11055 = vsel %vm10995, %v10801, %v11054
    %v11056 = vsel %vm10997, %v10802, %v11055
    %v11057 = vsel %vm10999, %v10803, %v11056
    %v11058 = vsel %vm11001, %v10804, %v11057
    %v11059 = vsel %vm10989, %v10806, %v10805
    %v11060 = vsel %vm10991, %v10807, %v11059
    %v11061 = vsel %vm10993, %v10808, %v11060
    %v11062 = vsel %vm10995, %v10809, %v11061
    %v11063 = vsel %vm10997, %v10810, %v11062
    %v11064 = vsel %vm10999, %v10811, %v11063
    %v11065 = vsel %vm11001, %v10812, %v11064
    %v11066 = vsel %vm10989, %v10814, %v10813
    %v11067 = vsel %vm10991, %v10815, %v11066
    %v11068 = vsel %vm10993, %v10816, %v11067
    %v11069 = vsel %vm10995, %v10817, %v11068
    %v11070 = vsel %vm10997, %v10818, %v11069
    %v11071 = vsel %vm10999, %v10819, %v11070
    %v11072 = vsel %vm11001, %v10820, %v11071
    %v11073 = vsel %vm10989, %v10822, %v10821
    %v11074 = vsel %vm10991, %v10823, %v11073
    %v11075 = vsel %vm10993, %v10824, %v11074
    %v11076 = vsel %vm10995, %v10825, %v11075
    %v11077 = vsel %vm10997, %v10826, %v11076
    %v11078 = vsel %vm10999, %v10827, %v11077
    %v11079 = vsel %vm11001, %v10828, %v11078
    %v11080 = vsel %vm10989, %v10830, %v10829
    %v11081 = vsel %vm10991, %v10831, %v11080
    %v11082 = vsel %vm10993, %v10832, %v11081
    %v11083 = vsel %vm10995, %v10833, %v11082
    %v11084 = vsel %vm10997, %v10834, %v11083
    %v11085 = vsel %vm10999, %v10835, %v11084
    %v11086 = vsel %vm11001, %v10836, %v11085
    %v11087 = vsel %vm10989, %v10838, %v10837
    %v11088 = vsel %vm10991, %v10839, %v11087
    %v11089 = vsel %vm10993, %v10840, %v11088
    %v11090 = vsel %vm10995, %v10841, %v11089
    %v11091 = vsel %vm10997, %v10842, %v11090
    %v11092 = vsel %vm10999, %v10843, %v11091
    %v11093 = vsel %vm11001, %v10844, %v11092
    %v11094 = vsel %vm10989, %v10846, %v10845
    %v11095 = vsel %vm10991, %v10847, %v11094
    %v11096 = vsel %vm10993, %v10848, %v11095
    %v11097 = vsel %vm10995, %v10849, %v11096
    %v11098 = vsel %vm10997, %v10850, %v11097
    %v11099 = vsel %vm10999, %v10851, %v11098
    %v11100 = vsel %vm11001, %v10852, %v11099
    %v11101 = vsel %vm10989, %v10854, %v10853
    %v11102 = vsel %vm10991, %v10855, %v11101
    %v11103 = vsel %vm10993, %v10856, %v11102
    %v11104 = vsel %vm10995, %v10857, %v11103
    %v11105 = vsel %vm10997, %v10858, %v11104
    %v11106 = vsel %vm10999, %v10859, %v11105
    %v11107 = vsel %vm11001, %v10860, %v11106
    %v11108 = vsel %vm10989, %v10862, %v10861
    %v11109 = vsel %vm10991, %v10863, %v11108
    %v11110 = vsel %vm10993, %v10864, %v11109
    %v11111 = vsel %vm10995, %v10865, %v11110
    %v11112 = vsel %vm10997, %v10866, %v11111
    %v11113 = vsel %vm10999, %v10867, %v11112
    %v11114 = vsel %vm11001, %v10868, %v11113
    %v11115 = vsel %vm10989, %v10870, %v10869
    %v11116 = vsel %vm10991, %v10871, %v11115
    %v11117 = vsel %vm10993, %v10872, %v11116
    %v11118 = vsel %vm10995, %v10873, %v11117
    %v11119 = vsel %vm10997, %v10874, %v11118
    %v11120 = vsel %vm10999, %v10875, %v11119
    %v11121 = vsel %vm11001, %v10876, %v11120
    %v11122 = vsel %vm10989, %v10878, %v10877
    %v11123 = vsel %vm10991, %v10879, %v11122
    %v11124 = vsel %vm10993, %v10880, %v11123
    %v11125 = vsel %vm10995, %v10881, %v11124
    %v11126 = vsel %vm10997, %v10882, %v11125
    %v11127 = vsel %vm10999, %v10883, %v11126
    %v11128 = vsel %vm11001, %v10884, %v11127
    %v11129 = vsel %vm10989, %v10886, %v10885
    %v11130 = vsel %vm10991, %v10887, %v11129
    %v11131 = vsel %vm10993, %v10888, %v11130
    %v11132 = vsel %vm10995, %v10889, %v11131
    %v11133 = vsel %vm10997, %v10890, %v11132
    %v11134 = vsel %vm10999, %v10891, %v11133
    %v11135 = vsel %vm11001, %v10892, %v11134
    %v11136 = vsel %vm10989, %v10894, %v10893
    %v11137 = vsel %vm10991, %v10895, %v11136
    %v11138 = vsel %vm10993, %v10896, %v11137
    %v11139 = vsel %vm10995, %v10897, %v11138
    %v11140 = vsel %vm10997, %v10898, %v11139
    %v11141 = vsel %vm10999, %v10899, %v11140
    %v11142 = vsel %vm11001, %v10900, %v11141
    %v11143 = vsel %vm10989, %v10902, %v10901
    %v11144 = vsel %vm10991, %v10903, %v11143
    %v11145 = vsel %vm10993, %v10904, %v11144
    %v11146 = vsel %vm10995, %v10905, %v11145
    %v11147 = vsel %vm10997, %v10906, %v11146
    %v11148 = vsel %vm10999, %v10907, %v11147
    %v11149 = vsel %vm11001, %v10908, %v11148
    %v11150 = vsel %vm10989, %v10910, %v10909
    %v11151 = vsel %vm10991, %v10911, %v11150
    %v11152 = vsel %vm10993, %v10912, %v11151
    %v11153 = vsel %vm10995, %v10913, %v11152
    %v11154 = vsel %vm10997, %v10914, %v11153
    %v11155 = vsel %vm10999, %v10915, %v11154
    %v11156 = vsel %vm11001, %v10916, %v11155
    %v11157 = vsel %vm10989, %v10918, %v10917
    %v11158 = vsel %vm10991, %v10919, %v11157
    %v11159 = vsel %vm10993, %v10920, %v11158
    %v11160 = vsel %vm10995, %v10921, %v11159
    %v11161 = vsel %vm10997, %v10922, %v11160
    %v11162 = vsel %vm10999, %v10923, %v11161
    %v11163 = vsel %vm11001, %v10924, %v11162
    %v11164 = vsel %vm10989, %v10926, %v10925
    %v11165 = vsel %vm10991, %v10927, %v11164
    %v11166 = vsel %vm10993, %v10928, %v11165
    %v11167 = vsel %vm10995, %v10929, %v11166
    %v11168 = vsel %vm10997, %v10930, %v11167
    %v11169 = vsel %vm10999, %v10931, %v11168
    %v11170 = vsel %vm11001, %v10932, %v11169
    %v11171 = vsel %vm10989, %v10934, %v10933
    %v11172 = vsel %vm10991, %v10935, %v11171
    %v11173 = vsel %vm10993, %v10936, %v11172
    %v11174 = vsel %vm10995, %v10937, %v11173
    %v11175 = vsel %vm10997, %v10938, %v11174
    %v11176 = vsel %vm10999, %v10939, %v11175
    %v11177 = vsel %vm11001, %v10940, %v11176
    %v11178 = vsel %vm10989, %v10942, %v10941
    %v11179 = vsel %vm10991, %v10943, %v11178
    %v11180 = vsel %vm10993, %v10944, %v11179
    %v11181 = vsel %vm10995, %v10945, %v11180
    %v11182 = vsel %vm10997, %v10946, %v11181
    %v11183 = vsel %vm10999, %v10947, %v11182
    %v11184 = vsel %vm11001, %v10948, %v11183
    %v11185 = vsel %vm10989, %v10950, %v10949
    %v11186 = vsel %vm10991, %v10951, %v11185
    %v11187 = vsel %vm10993, %v10952, %v11186
    %v11188 = vsel %vm10995, %v10953, %v11187
    %v11189 = vsel %vm10997, %v10954, %v11188
    %v11190 = vsel %vm10999, %v10955, %v11189
    %v11191 = vsel %vm11001, %v10956, %v11190
    %v11192 = vsel %vm10989, %v10958, %v10957
    %v11193 = vsel %vm10991, %v10959, %v11192
    %v11194 = vsel %vm10993, %v10960, %v11193
    %v11195 = vsel %vm10995, %v10961, %v11194
    %v11196 = vsel %vm10997, %v10962, %v11195
    %v11197 = vsel %vm10999, %v10963, %v11196
    %v11198 = vsel %vm11001, %v10964, %v11197
    %v11199 = vsel %vm10989, %v10966, %v10965
    %v11200 = vsel %vm10991, %v10967, %v11199
    %v11201 = vsel %vm10993, %v10968, %v11200
    %v11202 = vsel %vm10995, %v10969, %v11201
    %v11203 = vsel %vm10997, %v10970, %v11202
    %v11204 = vsel %vm10999, %v10971, %v11203
    %v11205 = vsel %vm11001, %v10972, %v11204
    %v11206 = vsel %vm10989, %v10974, %v10973
    %v11207 = vsel %vm10991, %v10975, %v11206
    %v11208 = vsel %vm10993, %v10976, %v11207
    %v11209 = vsel %vm10995, %v10977, %v11208
    %v11210 = vsel %vm10997, %v10978, %v11209
    %v11211 = vsel %vm10999, %v10979, %v11210
    %v11212 = vsel %vm11001, %v10980, %v11211
    %v11213 = vsel %vm10989, %v10982, %v10981
    %v11214 = vsel %vm10991, %v10983, %v11213
    %v11215 = vsel %vm10993, %v10984, %v11214
    %v11216 = vsel %vm10995, %v10985, %v11215
    %v11217 = vsel %vm10997, %v10986, %v11216
    %v11218 = vsel %vm10999, %v10987, %v11217
    %v11219 = vsel %vm11001, %v10988, %v11218
    %v11220 = vpack.c.b16 %v11002, %v11002
    %v11221 = vpack.c.b16 %v11009, %v11009
    %v11222 = vpack.c.b16 %v11016, %v11016
    %v11223 = vpack.c.b16 %v11023, %v11023
    %v11224 = vpack.c.b16 %v11030, %v11030
    %v11225 = vpack.c.b16 %v11037, %v11037
    %v11226 = vpack.c.b16 %v11044, %v11044
    %v11227 = vpack.c.b16 %v11051, %v11051
    %v11228 = vpack.c.b16 %v11058, %v11058
    %v11229 = vpack.c.b16 %v11065, %v11065
    %v11230 = vpack.c.b16 %v11072, %v11072
    %v11231 = vpack.c.b16 %v11079, %v11079
    %v11232 = vpack.c.b16 %v11086, %v11086
    %v11233 = vpack.c.b16 %v11093, %v11093
    %v11234 = vpack.c.b16 %v11100, %v11100
    %v11235 = vpack.c.b16 %v11107, %v11107
    %v11236 = vpack.c.b16 %v11114, %v11114
    %v11237 = vpack.c.b16 %v11121, %v11121
    %v11238 = vpack.c.b16 %v11128, %v11128
    %v11239 = vpack.c.b16 %v11135, %v11135
    %v11240 = vpack.c.b16 %v11142, %v11142
    %v11241 = vpack.c.b16 %v11149, %v11149
    %v11242 = vpack.c.b16 %v11156, %v11156
    %v11243 = vpack.c.b16 %v11163, %v11163
    %v11244 = vpack.c.b16 %v11170, %v11170
    %v11245 = vpack.c.b16 %v11177, %v11177
    %v11246 = vpack.c.b16 %v11184, %v11184
    %v11247 = vpack.c.b16 %v11191, %v11191
    %v11248 = vpack.c.b16 %v11198, %v11198
    %v11249 = vpack.c.b16 %v11205, %v11205
    %v11250 = vpack.c.b16 %v11212, %v11212
    %v11251 = vpack.c.b16 %v11219, %v11219
    %11284 = vst [vmem:[#allocation11] sm:$0xf] %v11220
    %11285 = vst [vmem:[#allocation11 + $0x4] sm:$0xf] %v11221
    %11286 = vst [vmem:[#allocation11 + $0x8] sm:$0xf] %v11222
    %11287 = vst [vmem:[#allocation11 + $0xc] sm:$0xf] %v11223
    %11288 = vst [vmem:[#allocation11 + $0x10] sm:$0xf] %v11224
    %11289 = vst [vmem:[#allocation11 + $0x14] sm:$0xf] %v11225
    %11290 = vst [vmem:[#allocation11 + $0x18] sm:$0xf] %v11226
    %11291 = vst [vmem:[#allocation11 + $0x1c] sm:$0xf] %v11227
    %11292 = vst [vmem:[#allocation11 + $0x20] sm:$0xf] %v11228
    %11293 = vst [vmem:[#allocation11 + $0x24] sm:$0xf] %v11229
    %11294 = vst [vmem:[#allocation11 + $0x28] sm:$0xf] %v11230
    %11295 = vst [vmem:[#allocation11 + $0x2c] sm:$0xf] %v11231
    %11296 = vst [vmem:[#allocation11 + $0x30] sm:$0xf] %v11232
    %11297 = vst [vmem:[#allocation11 + $0x34] sm:$0xf] %v11233
    %11298 = vst [vmem:[#allocation11 + $0x38] sm:$0xf] %v11234
    %11299 = vst [vmem:[#allocation11 + $0x3c] sm:$0xf] %v11235
    %11300 = vst [vmem:[#allocation11 + $0x40] sm:$0xf] %v11236
    %11301 = vst [vmem:[#allocation11 + $0x44] sm:$0xf] %v11237
    %11302 = vst [vmem:[#allocation11 + $0x48] sm:$0xf] %v11238
    %11303 = vst [vmem:[#allocation11 + $0x4c] sm:$0xf] %v11239
    %11304 = vst [vmem:[#allocation11 + $0x50] sm:$0xf] %v11240
    %11305 = vst [vmem:[#allocation11 + $0x54] sm:$0xf] %v11241
    %11306 = vst [vmem:[#allocation11 + $0x58] sm:$0xf] %v11242
    %11307 = vst [vmem:[#allocation11 + $0x5c] sm:$0xf] %v11243
    %11308 = vst [vmem:[#allocation11 + $0x60] sm:$0xf] %v11244
    %11309 = vst [vmem:[#allocation11 + $0x64] sm:$0xf] %v11245
    %11310 = vst [vmem:[#allocation11 + $0x68] sm:$0xf] %v11246
    %11311 = vst [vmem:[#allocation11 + $0x6c] sm:$0xf] %v11247
    %11312 = vst [vmem:[#allocation11 + $0x70] sm:$0xf] %v11248
    %11313 = vst [vmem:[#allocation11 + $0x74] sm:$0xf] %v11249
    %11314 = vst [vmem:[#allocation11 + $0x78] sm:$0xf] %v11250
    %11315 = vst [vmem:[#allocation11 + $0x7c] sm:$0xf] %v11251
    // Predicated region
    $region38: #{tpu_custom_call.1} parent=1 // pred_check
      _
    $region39: #{tpu_custom_call.1} parent=1 // pred_check_branch
      %11317 = sbr.rel (0) target = $region41
    $region40: #{tpu_custom_call.1} parent=1 // pred_region
      %s11319 = ssub.s32 8192, 8192
      %11320 = vsyncadd [#allocation4], %s11319
      %s11321 = sshll.u32 [#allocation10], 4
      %s11322 = int_to_ptr.vmem [resolvable:$true] %s11321
      %11327 = dma.vmem_to_hbm [thread:$0]  %s11322, 8192, %s5, [#allocation4], 64, 64, 4
    $region41: #{tpu_custom_call.1} parent=1 // pred_fallthru
      _
    // Predicated region
    $region42: #{tpu_custom_call.1} parent=1 // pred_check
      _
    $region43: #{tpu_custom_call.1} parent=1 // pred_check_branch
      %11329 = sbr.rel (0) target = $region45
    $region44: #{tpu_custom_call.1} parent=1 // pred_region
      %s11331 = ssub.s32 2048, 2048
      %11332 = vsyncadd [#allocation12], %s11331
      %s11333 = sshll.u32 [#allocation11], 4
      %s11334 = int_to_ptr.vmem [resolvable:$true] %s11333
      %11339 = dma.vmem_to_hbm [thread:$0]  %s11334, 2048, %s6, [#allocation12], 64, 64, 4
    $region45: #{tpu_custom_call.1} parent=1 // pred_fallthru
      _
    // Predicated region
    $region46: #{tpu_custom_call.1} parent=1 // pred_check
      _
    $region47: #{tpu_custom_call.1} parent=1 // pred_check_branch
      %11341 = sbr.rel (0) target = $region49
    $region48: #{tpu_custom_call.1} parent=1 // pred_region
      %11342 = dma.done [#allocation4], 8192
    $region49: #{tpu_custom_call.1} parent=1 // pred_fallthru
      _
    // Predicated region
    $region50: #{tpu_custom_call.1} parent=1 // pred_check
      _
    $region51: #{tpu_custom_call.1} parent=1 // pred_check_branch
      %11344 = sbr.rel (0) target = $region53
    $region52: #{tpu_custom_call.1} parent=1 // pred_region
      %11345 = dma.done [#allocation12], 2048
    $region53: #{tpu_custom_call.1} parent=1 // pred_fallthru
      _
    %11346 = vsyncpa [#allocation3], 1
    %11347 = vsyncpa [#allocation6], 1
    %11348 = vsyncpa [#allocation9], 1
    %11349 = vsyncpa [#allocation4], 1
    %11350 = vsyncpa [#allocation12], 1

</llo_original>
